<compile_context>
chip_gen: v7x
topology: tpu7x:2x2x1
jax: 0.10.0
libtpu: 0.0.40
codegen_flags: <defaults>
</compile_context>

<pallas_src>
import jax
import jax.numpy as jnp
from jax.experimental import pallas as pl
from jax.experimental.pallas import tpu as pltpu

EPS = 1e-5


# ---------------------------------------------------------------------------
# helpers
# ---------------------------------------------------------------------------
def _pick_tile(n_img, s, bytes_per_col, min_steps=4, vmem_budget=8 << 20):
    """Largest lane tile (multiple of 128) giving >= min_steps grid steps and
    fitting the double-buffered VMEM budget; falls back to the full extent."""
    cands = [t for t in (4096, 2048, 1024, 512, 256, 128) if s % t == 0]
    for t in cands:
        if n_img * (s // t) >= min_steps and 2 * t * bytes_per_col <= vmem_budget:
            return t
    for t in cands:
        if n_img * (s // t) >= 2 and 2 * t * bytes_per_col <= vmem_budget:
            return t
    return s


def fold_bn(gamma, beta, mean, var):
    inv = gamma / jnp.sqrt(var + EPS)
    return inv.reshape(-1, 1), (beta - mean * inv).reshape(-1, 1)


def stats_from_partials(partials, count):
    """partials: (K, C, 2) per-block [sum, sum of squares] -> (mean, biased var)."""
    sums = jnp.sum(partials.astype(jnp.float32), axis=0)
    mean = sums[:, 0] / count
    var = jnp.maximum(sums[:, 1] / count - mean * mean, 0.0)
    return mean, var


# ---------------------------------------------------------------------------
# Kernel 1: the three 1x1 branches that consume x, fused (skip/line_a/share),
# plus fused partial statistics of the "share" output.
# ---------------------------------------------------------------------------
def _triple_1x1_kernel(x_ref, sc_ref, sh_ref, w1_ref, b1_ref, w2_ref, b2_ref,
                       w3_ref, b3_ref, res_ref, ta_ref, s_ref, st_ref):
    x = x_ref[...].astype(jnp.float32)                        # (Cin, st)
    h1 = jnp.maximum(x * sc_ref[0] + sh_ref[0], 0.0).astype(jnp.bfloat16)
    res = jnp.dot(w1_ref[...], h1, preferred_element_type=jnp.float32) + b1_ref[...]
    res_ref[...] = res.astype(res_ref.dtype)
    h2 = jnp.maximum(x * sc_ref[1] + sh_ref[1], 0.0).astype(jnp.bfloat16)
    ta = jnp.dot(w2_ref[...], h2, preferred_element_type=jnp.float32) + b2_ref[...]
    ta_ref[...] = ta.astype(ta_ref.dtype)
    h3 = jnp.maximum(x * sc_ref[2] + sh_ref[2], 0.0).astype(jnp.bfloat16)
    s = jnp.dot(w3_ref[...], h3, preferred_element_type=jnp.float32) + b3_ref[...]
    s_ref[...] = s.astype(s_ref.dtype)
    st_ref[:, 0:1] = jnp.sum(s, axis=1, keepdims=True)        # f32 stats
    st_ref[:, 1:2] = jnp.sum(s * s, axis=1, keepdims=True)


def fused_input_branches(x, sc_all, sh_all, w_skip, b_skip, w_line, b_line,
                         w_share, b_share):
    """x: (N, Cin, S) f32 -> (res f32, line_a bf16, share bf16, share partials)."""
    n, cin, s = x.shape
    cout = w_skip.shape[0]
    ch = w_line.shape[0]
    st = _pick_tile(n, s, 4 * (cin + cout) + 2 * 2 * ch)
    ns = s // st

    bspec = lambda c: pl.BlockSpec((None, c, st), lambda b, i: (b, 0, i))
    full = lambda shape: pl.BlockSpec(shape, lambda b, i: (0,) * len(shape))

    return pl.pallas_call(
        _triple_1x1_kernel,
        out_shape=(
            jax.ShapeDtypeStruct((n, cout, s), jnp.float32),
            jax.ShapeDtypeStruct((n, ch, s), jnp.bfloat16),
            jax.ShapeDtypeStruct((n, ch, s), jnp.bfloat16),
            jax.ShapeDtypeStruct((n * ns, ch, 2), jnp.float32),
        ),
        grid=(n, ns),
        in_specs=[
            bspec(cin),
            full((3, cin, 1)), full((3, cin, 1)),
            full((cout, cin)), full((cout, 1)),
            full((ch, cin)), full((ch, 1)),
            full((ch, cin)), full((ch, 1)),
        ],
        out_specs=[
            bspec(cout), bspec(ch), bspec(ch),
            pl.BlockSpec((None, ch, 2), lambda b, i: (b * ns + i, 0, 0)),
        ],
        compiler_params=pltpu.CompilerParams(
            dimension_semantics=("parallel", "parallel")),
    )(x, sc_all, sh_all,
      w_skip.astype(jnp.bfloat16), b_skip.reshape(cout, 1),
      w_line.astype(jnp.bfloat16), b_line.reshape(ch, 1),
      w_share.astype(jnp.bfloat16), b_share.reshape(ch, 1))


# ---------------------------------------------------------------------------
# Kernel 2: generic fused BN -> ReLU -> 1x1 conv (+ optional fused residuals).
# ---------------------------------------------------------------------------
def _bn_relu_1x1_kernel(x_ref, sc_ref, sh_ref, w_ref, b_ref, *rest):
    *add_refs, o_ref = rest
    h = jnp.maximum(x_ref[...].astype(jnp.float32) * sc_ref[...] + sh_ref[...],
                    0.0).astype(jnp.bfloat16)
    out = jnp.dot(w_ref[...], h, preferred_element_type=jnp.float32) + b_ref[...]
    for r in add_refs:
        out = out + r[...].astype(jnp.float32)
    o_ref[...] = out.astype(o_ref.dtype)


def bn_relu_conv1x1(x, scale, shift, w, b, adds=(), out_dtype=jnp.float32):
    """x: (N, Cin, S); scale/shift (Cin,1); w (Cout, Cin); b (Cout,)."""
    n, cin, s = x.shape
    cout = w.shape[0]
    st = _pick_tile(n, s, 4 * (cin + cout * (1 + len(adds))))
    ns = s // st

    bspec = lambda c: pl.BlockSpec((None, c, st), lambda b_, i: (b_, 0, i))
    full = lambda shape: pl.BlockSpec(shape, lambda b_, i: (0,) * len(shape))

    return pl.pallas_call(
        _bn_relu_1x1_kernel,
        out_shape=jax.ShapeDtypeStruct((n, cout, s), out_dtype),
        grid=(n, ns),
        in_specs=[bspec(cin), full((cin, 1)), full((cin, 1)),
                  full((cout, cin)), full((cout, 1))]
                 + [bspec(cout) for _ in adds],
        out_specs=bspec(cout),
        compiler_params=pltpu.CompilerParams(
            dimension_semantics=("parallel", "parallel")),
    )(x, scale, shift, w.astype(jnp.bfloat16), b.reshape(cout, 1), *adds)


# ---------------------------------------------------------------------------
# Kernel 3: fused multi-dilation 3x3 block (per image).
#   out = sum_d Conv3x3_{dilation=d}( ReLU( BN_d(x) ) ),   padding == d
# Per-tap contiguous lane slices of a flattened zero-padded buffer feed
# accumulating MXU dots; also emits per-image (sum, sum^2) of the output.
# ---------------------------------------------------------------------------
def _make_conv3x3_kernel(dilations, h, w, pad, cout):
    wp = w + 2 * pad
    span = h * wp

    def kernel(xp_ref, mask_ref, sc_ref, sh_ref, w_ref, b_ref, o_ref, st_ref):
        xp = xp_ref[...].astype(jnp.float32)      # (Cin, L) raw, zero halo
        mask = mask_ref[...]                       # (1, L) interior indicator
        acc = jnp.zeros((cout, span), jnp.float32)
        for bidx, d in enumerate(dilations):
            # BN -> ReLU, then re-zero the halo (pad-after-ReLU semantics).
            a = (jnp.maximum(xp * sc_ref[bidx] + sh_ref[bidx], 0.0) * mask)
            a = a.astype(jnp.bfloat16)
            for di in range(3):
                for dj in range(3):
                    start = pad + (pad + (di - 1) * d) * wp + (dj - 1) * d
                    tap = a[:, start:start + span]
                    widx = bidx * 9 + di * 3 + dj
                    acc = acc + jnp.dot(w_ref[widx], tap,
                                        preferred_element_type=jnp.float32)
        acc = acc + b_ref[...]
        # statistics over the valid H*W positions only (halo columns masked).
        om = mask[:, pad + pad * wp: pad + pad * wp + span]
        st_ref[:, 0:1] = jnp.sum(acc * om, axis=1, keepdims=True)
        st_ref[:, 1:2] = jnp.sum(acc * acc * om, axis=1, keepdims=True)
        # drop halo columns row by row into the lane-dense output block.
        accb = acc.astype(o_ref.dtype)
        for r in range(h):
            o_ref[:, r * w:(r + 1) * w] = accb[:, r * wp + pad: r * wp + pad + w]

    return kernel


def conv3x3_block(x, scales, shifts, weights, biases, dilations,
                  out_dtype=jnp.bfloat16):
    """x: (N, Cin, H, W).  Per-branch folded BN scale/shift (Cin,1), weights
    (3,3,Cin,Cout), biases (Cout,).  Returns (sum of branch outputs as
    (N, Cout, H*W), per-image [sum, sum^2] partials (N, Cout, 2))."""
    n, cin, h, w = x.shape
    cout = weights[0].shape[-1]
    nd = len(dilations)
    pad = max(dilations)
    hp, wp = h + 2 * pad, w + 2 * pad
    l_flat = hp * wp + 2 * pad

    xp = jnp.pad(x, ((0, 0), (0, 0), (pad, pad), (pad, pad)))
    xp = jnp.pad(xp.reshape(n, cin, hp * wp), ((0, 0), (0, 0), (pad, pad)))
    mask = jnp.pad(jnp.ones((h, w), jnp.float32), ((pad, pad), (pad, pad)))
    mask = jnp.pad(mask.reshape(1, hp * wp), ((0, 0), (pad, pad)))

    sc_all = jnp.stack([s.reshape(cin, 1) for s in scales], axis=0)
    sh_all = jnp.stack([s.reshape(cin, 1) for s in shifts], axis=0)
    w_all = jnp.stack([jnp.transpose(wt, (0, 1, 3, 2)).reshape(9, cout, cin)
                       for wt in weights], axis=0).reshape(nd * 9, cout, cin)
    b_sum = sum(biases).reshape(cout, 1)

    full = lambda shape: pl.BlockSpec(shape, lambda i: (0,) * len(shape))
    out, stats = pl.pallas_call(
        _make_conv3x3_kernel(dilations, h, w, pad, cout),
        out_shape=(jax.ShapeDtypeStruct((n, cout, h * w), out_dtype),
                   jax.ShapeDtypeStruct((n, cout, 2), jnp.float32)),
        grid=(n,),
        in_specs=[
            pl.BlockSpec((None, cin, l_flat), lambda i: (i, 0, 0)),
            full((1, l_flat)),
            full((nd, cin, 1)), full((nd, cin, 1)),
            full((nd * 9, cout, cin)), full((cout, 1)),
        ],
        out_specs=[pl.BlockSpec((None, cout, h * w), lambda i: (i, 0, 0)),
                   pl.BlockSpec((None, cout, 2), lambda i: (i, 0, 0))],
        compiler_params=pltpu.CompilerParams(dimension_semantics=("parallel",)),
    )(xp, mask, sc_all, sh_all, w_all.astype(jnp.bfloat16), b_sum)
    return out, stats


# ---------------------------------------------------------------------------
# Tiny plain-JAX glue (layout-level ops on the small line branch).
# ---------------------------------------------------------------------------
def maxpool2x2(x, h, w):
    n, c, _ = x.shape
    return x.reshape(n, c, h // 2, 2, w // 2, 2).max(axis=(3, 5))


# ---------------------------------------------------------------------------
# Parameter init (deterministic, synthetic) and full PRM_D forward.
# ---------------------------------------------------------------------------
def init_params(key, cin, cout):
    ch = cout // 2
    keys = iter(jax.random.split(key, 80))

    def bn(c):
        return (1.0 + 0.1 * jax.random.normal(next(keys), (c,), jnp.float32),
                0.1 * jax.random.normal(next(keys), (c,), jnp.float32))

    def conv1(ci, co):  # stored as (Cout, Cin) == W^T for channels-first dots
        return (0.1 * jax.random.normal(next(keys), (co, ci), jnp.float32),
                0.1 * jax.random.normal(next(keys), (co,), jnp.float32))

    def conv3(ci, co):
        return (0.1 * jax.random.normal(next(keys), (3, 3, ci, co), jnp.float32),
                0.1 * jax.random.normal(next(keys), (co,), jnp.float32))

    p = {
        "skip": bn(cin) + conv1(cin, cout),
        "line_a": bn(cin) + conv1(cin, ch),
        "line_b": bn(ch) + conv3(ch, ch),
        "line_c": bn(ch) + conv1(ch, cout),
        "share": bn(cin) + conv1(cin, ch),
        "conv_g": bn(ch) + conv1(ch, cout),
    }
    for d in range(1, 5):
        p[f"dil{d}"] = bn(ch) + conv3(ch, ch)
    return p


def prm_d_forward(x_nchw, p):
    n, cin, h, w = x_nchw.shape
    assert h % 2 == 0 and w % 2 == 0, "nearest-2x line branch needs even H, W"
    s = h * w
    hh, wh = h // 2, w // 2
    sl = hh * wh
    x = x_nchw.astype(jnp.float32).reshape(n, cin, s)      # channels-first flat

    # batch statistics of x, shared by the skip / line_a / conv_share BNs
    x_mean = jnp.mean(x, axis=(0, 2))
    x_var = jnp.var(x, axis=(0, 2))

    g1, b1, w1, c1 = p["skip"]
    g2, b2, w2, c2 = p["line_a"]
    g3, b3, w3, c3 = p["share"]
    folded = [fold_bn(g, b, x_mean, x_var)
              for g, b in ((g1, b1), (g2, b2), (g3, b3))]
    sc_all = jnp.stack([f[0] for f in folded], axis=0)
    sh_all = jnp.stack([f[1] for f in folded], axis=0)

    # one fused kernel: x read once -> res (skip), line_a, share (+ s stats)
    res, t_a, s_share, s_part = fused_input_branches(
        x, sc_all, sh_all, w1, c1, w2, c2, w3, c3)

    cout = w1.shape[0]
    ch = w2.shape[0]

    # ---- line branch (evaluated at half resolution) -----------------------
    t_pool = maxpool2x2(t_a, h, w)                          # (N, ch, hh, wh)
    tp32 = t_pool.astype(jnp.float32)
    g, b, w33, cb = p["line_b"]
    sc, sh = fold_bn(g, b, jnp.mean(tp32, axis=(0, 2, 3)),
                     jnp.var(tp32, axis=(0, 2, 3)))
    t2, t2_part = conv3x3_block(t_pool, [sc], [sh], [w33], [cb], dilations=(1,))
    # BN stats / ReLU / 1x1 conv commute exactly with nearest 2x upsampling,
    # so line_c runs at low resolution and only its result is upsampled.
    g, b, wc, cb = p["line_c"]
    sc, sh = fold_bn(g, b, *stats_from_partials(t2_part, n * sl))
    x0_low = bn_relu_conv1x1(t2, sc, sh, wc, cb)            # (N, cout, sl) f32
    # TODO(synk): fold this nearest-2x upsample into the conv_g addend
    # BlockSpec instead of materializing the full-resolution tensor in HBM.
    x0 = x0_low.reshape(n, cout, hh, wh)
    x0 = jnp.repeat(jnp.repeat(x0, 2, axis=2), 2, axis=3).reshape(n, cout, s)

    # ---- all 4 dilated 3x3 branches in one kernel --------------------------
    s_mean, s_var = stats_from_partials(s_part, n * s)
    scs, shs, ws, bs = [], [], [], []
    for d in range(1, 5):
        g, b, w33, cb = p[f"dil{d}"]
        sc, sh = fold_bn(g, b, s_mean, s_var)
        scs.append(sc)
        shs.append(sh)
        ws.append(w33)
        bs.append(cb)
    acc, acc_part = conv3x3_block(s_share.reshape(n, ch, h, w),
                                  scs, shs, ws, bs, dilations=(1, 2, 3, 4))

    # ---- conv_g with the final three-way residual sum fused in -------------
    g, b, wg, cb = p["conv_g"]
    sc, sh = fold_bn(g, b, *stats_from_partials(acc_part, n * s))
    out = bn_relu_conv1x1(acc, sc, sh, wg, cb, adds=(res, x0))
    return out.reshape(n, cout, h, w)


if __name__ == "__main__":
    N, CIN, COUT, H, W = 2, 4, 8, 16, 16
    key = jax.random.PRNGKey(0)
    kx, kp = jax.random.split(key)
    x = jax.random.normal(kx, (N, CIN, H, W), jnp.float32)
    params = init_params(kp, CIN, COUT)

    fwd = jax.jit(prm_d_forward)
    out = jax.block_until_ready(fwd(x, params))
    assert out.shape == (N, COUT, H, W), out.shape
    assert bool(jnp.all(jnp.isfinite(out)))
    print("KERNEL_OK")
</pallas_src>

<mosaic_0001>
module attributes {stable_mosaic.version = 11 : i64} {
  func.func @_triple_1x1_kernel(%arg0: i32, %arg1: i32, %arg2: memref<1x4x128xf32, #tpu.memory_space<vmem>>, %arg3: memref<3x4x1xf32, #tpu.memory_space<vmem>>, %arg4: memref<3x4x1xf32, #tpu.memory_space<vmem>>, %arg5: memref<8x4xbf16, #tpu.memory_space<vmem>>, %arg6: memref<8x1xf32, #tpu.memory_space<vmem>>, %arg7: memref<4x4xbf16, #tpu.memory_space<vmem>>, %arg8: memref<4x1xf32, #tpu.memory_space<vmem>>, %arg9: memref<4x4xbf16, #tpu.memory_space<vmem>>, %arg10: memref<4x1xf32, #tpu.memory_space<vmem>>, %arg11: memref<1x8x128xf32, #tpu.memory_space<vmem>>, %arg12: memref<1x4x128xbf16, #tpu.memory_space<vmem>>, %arg13: memref<1x4x128xbf16, #tpu.memory_space<vmem>>, %arg14: memref<1x4x2xf32, #tpu.memory_space<vmem>>) attributes {dimension_semantics = [#tpu.dimension_semantics<parallel>, #tpu.dimension_semantics<parallel>], iteration_bounds = array<i64: 2, 2>, scalar_prefetch = 0 : i64, scratch_operands = 0 : i64, tpu.core_type = #tpu.core_type<tc>, window_params = [{transform_indices = @transform_0, window_bounds = array<i64: 1, 4, 128>}, {pipeline_mode = #tpu.pipeline_mode<synchronous>, transform_indices = @transform_1, window_bounds = array<i64: 3, 4, 1>}, {pipeline_mode = #tpu.pipeline_mode<synchronous>, transform_indices = @transform_2, window_bounds = array<i64: 3, 4, 1>}, {pipeline_mode = #tpu.pipeline_mode<synchronous>, transform_indices = @transform_3, window_bounds = array<i64: 8, 4>}, {pipeline_mode = #tpu.pipeline_mode<synchronous>, transform_indices = @transform_4, window_bounds = array<i64: 8, 1>}, {pipeline_mode = #tpu.pipeline_mode<synchronous>, transform_indices = @transform_5, window_bounds = array<i64: 4, 4>}, {pipeline_mode = #tpu.pipeline_mode<synchronous>, transform_indices = @transform_6, window_bounds = array<i64: 4, 1>}, {pipeline_mode = #tpu.pipeline_mode<synchronous>, transform_indices = @transform_7, window_bounds = array<i64: 4, 4>}, {pipeline_mode = #tpu.pipeline_mode<synchronous>, transform_indices = @transform_8, window_bounds = array<i64: 4, 1>}, {transform_indices = @transform_9, window_bounds = array<i64: 1, 8, 128>}, {transform_indices = @transform_10, window_bounds = array<i64: 1, 4, 128>}, {transform_indices = @transform_11, window_bounds = array<i64: 1, 4, 128>}, {transform_indices = @transform_12, window_bounds = array<i64: 1, 4, 2>}]} {
    %c0 = arith.constant 0 : index
    %c0_0 = arith.constant 0 : index
    %c0_1 = arith.constant 0 : index
    %0 = vector.load %arg2[%c0, %c0_0, %c0_1] : memref<1x4x128xf32, #tpu.memory_space<vmem>>, vector<1x4x128xf32>
    %1 = vector.shape_cast %0 : vector<1x4x128xf32> to vector<4x128xf32>
    %c0_2 = arith.constant 0 : index
    %c0_3 = arith.constant 0 : index
    %c0_4 = arith.constant 0 : index
    %2 = vector.load %arg3[%c0_2, %c0_3, %c0_4] : memref<3x4x1xf32, #tpu.memory_space<vmem>>, vector<1x4x1xf32>
    %3 = vector.shape_cast %2 : vector<1x4x1xf32> to vector<4x1xf32>
    %4 = vector.broadcast %3 : vector<4x1xf32> to vector<4x128xf32>
    %5 = arith.mulf %1, %4 : vector<4x128xf32>
    %c0_5 = arith.constant 0 : index
    %c0_6 = arith.constant 0 : index
    %c0_7 = arith.constant 0 : index
    %6 = vector.load %arg4[%c0_5, %c0_6, %c0_7] : memref<3x4x1xf32, #tpu.memory_space<vmem>>, vector<1x4x1xf32>
    %7 = vector.shape_cast %6 : vector<1x4x1xf32> to vector<4x1xf32>
    %8 = vector.broadcast %7 : vector<4x1xf32> to vector<4x128xf32>
    %9 = arith.addf %5, %8 : vector<4x128xf32>
    %cst = arith.constant 0.000000e+00 : f32
    %10 = vector.broadcast %cst : f32 to vector<4x128xf32>
    %11 = arith.maximumf %9, %10 : vector<4x128xf32>
    %12 = arith.truncf %11 : vector<4x128xf32> to vector<4x128xbf16>
    %c0_8 = arith.constant 0 : index
    %c0_9 = arith.constant 0 : index
    %13 = vector.load %arg5[%c0_8, %c0_9] : memref<8x4xbf16, #tpu.memory_space<vmem>>, vector<8x4xbf16>
    %cst_10 = arith.constant dense<0.000000e+00> : vector<8x128xf32>
    %14 = tpu.matmul %13, %12, %cst_10 {dimension_numbers = #tpu.dot_dimension_numbers<[1], [0], [0], [1], [0, 0, 1, 1], [], []>} : vector<8x4xbf16>, vector<4x128xbf16>, vector<8x128xf32> -> vector<8x128xf32>
    %c0_11 = arith.constant 0 : index
    %c0_12 = arith.constant 0 : index
    %15 = vector.load %arg6[%c0_11, %c0_12] : memref<8x1xf32, #tpu.memory_space<vmem>>, vector<8x1xf32>
    %16 = vector.broadcast %15 : vector<8x1xf32> to vector<8x128xf32>
    %17 = arith.addf %14, %16 : vector<8x128xf32>
    %c0_13 = arith.constant 0 : index
    %c0_14 = arith.constant 0 : index
    %c0_15 = arith.constant 0 : index
    %18 = vector.load %arg11[%c0_13, %c0_14, %c0_15] : memref<1x8x128xf32, #tpu.memory_space<vmem>>, vector<1x8x128xf32>
    %19 = vector.shape_cast %18 : vector<1x8x128xf32> to vector<8x128xf32>
    %20 = vector.shape_cast %17 : vector<8x128xf32> to vector<1x8x128xf32>
    tpu.vector_store %arg11[%c0_13, %c0_14, %c0_15], %20 {strides = array<i32>} : memref<1x8x128xf32, #tpu.memory_space<vmem>>, vector<1x8x128xf32>,
    %c1 = arith.constant 1 : index
    %c0_16 = arith.constant 0 : index
    %c0_17 = arith.constant 0 : index
    %21 = vector.load %arg3[%c1, %c0_16, %c0_17] : memref<3x4x1xf32, #tpu.memory_space<vmem>>, vector<1x4x1xf32>
    %22 = vector.shape_cast %21 : vector<1x4x1xf32> to vector<4x1xf32>
    %23 = vector.broadcast %22 : vector<4x1xf32> to vector<4x128xf32>
    %24 = arith.mulf %1, %23 : vector<4x128xf32>
    %c1_18 = arith.constant 1 : index
    %c0_19 = arith.constant 0 : index
    %c0_20 = arith.constant 0 : index
    %25 = vector.load %arg4[%c1_18, %c0_19, %c0_20] : memref<3x4x1xf32, #tpu.memory_space<vmem>>, vector<1x4x1xf32>
    %26 = vector.shape_cast %25 : vector<1x4x1xf32> to vector<4x1xf32>
    %27 = vector.broadcast %26 : vector<4x1xf32> to vector<4x128xf32>
    %28 = arith.addf %24, %27 : vector<4x128xf32>
    %cst_21 = arith.constant 0.000000e+00 : f32
    %29 = vector.broadcast %cst_21 : f32 to vector<4x128xf32>
    %30 = arith.maximumf %28, %29 : vector<4x128xf32>
    %31 = arith.truncf %30 : vector<4x128xf32> to vector<4x128xbf16>
    %c0_22 = arith.constant 0 : index
    %c0_23 = arith.constant 0 : index
    %32 = vector.load %arg7[%c0_22, %c0_23] : memref<4x4xbf16, #tpu.memory_space<vmem>>, vector<4x4xbf16>
    %cst_24 = arith.constant dense<0.000000e+00> : vector<4x128xf32>
    %33 = tpu.matmul %32, %31, %cst_24 {dimension_numbers = #tpu.dot_dimension_numbers<[1], [0], [0], [1], [0, 0, 1, 1], [], []>} : vector<4x4xbf16>, vector<4x128xbf16>, vector<4x128xf32> -> vector<4x128xf32>
    %c0_25 = arith.constant 0 : index
    %c0_26 = arith.constant 0 : index
    %34 = vector.load %arg8[%c0_25, %c0_26] : memref<4x1xf32, #tpu.memory_space<vmem>>, vector<4x1xf32>
    %35 = vector.broadcast %34 : vector<4x1xf32> to vector<4x128xf32>
    %36 = arith.addf %33, %35 : vector<4x128xf32>
    %37 = arith.truncf %36 : vector<4x128xf32> to vector<4x128xbf16>
    %c0_27 = arith.constant 0 : index
    %c0_28 = arith.constant 0 : index
    %c0_29 = arith.constant 0 : index
    %38 = vector.load %arg12[%c0_27, %c0_28, %c0_29] : memref<1x4x128xbf16, #tpu.memory_space<vmem>>, vector<1x4x128xbf16>
    %39 = vector.shape_cast %38 : vector<1x4x128xbf16> to vector<4x128xbf16>
    %40 = vector.shape_cast %37 : vector<4x128xbf16> to vector<1x4x128xbf16>
    tpu.vector_store %arg12[%c0_27, %c0_28, %c0_29], %40 {strides = array<i32>} : memref<1x4x128xbf16, #tpu.memory_space<vmem>>, vector<1x4x128xbf16>,
    %c2 = arith.constant 2 : index
    %c0_30 = arith.constant 0 : index
    %c0_31 = arith.constant 0 : index
    %41 = vector.load %arg3[%c2, %c0_30, %c0_31] : memref<3x4x1xf32, #tpu.memory_space<vmem>>, vector<1x4x1xf32>
    %42 = vector.shape_cast %41 : vector<1x4x1xf32> to vector<4x1xf32>
    %43 = vector.broadcast %42 : vector<4x1xf32> to vector<4x128xf32>
    %44 = arith.mulf %1, %43 : vector<4x128xf32>
    %c2_32 = arith.constant 2 : index
    %c0_33 = arith.constant 0 : index
    %c0_34 = arith.constant 0 : index
    %45 = vector.load %arg4[%c2_32, %c0_33, %c0_34] : memref<3x4x1xf32, #tpu.memory_space<vmem>>, vector<1x4x1xf32>
    %46 = vector.shape_cast %45 : vector<1x4x1xf32> to vector<4x1xf32>
    %47 = vector.broadcast %46 : vector<4x1xf32> to vector<4x128xf32>
    %48 = arith.addf %44, %47 : vector<4x128xf32>
    %cst_35 = arith.constant 0.000000e+00 : f32
    %49 = vector.broadcast %cst_35 : f32 to vector<4x128xf32>
    %50 = arith.maximumf %48, %49 : vector<4x128xf32>
    %51 = arith.truncf %50 : vector<4x128xf32> to vector<4x128xbf16>
    %c0_36 = arith.constant 0 : index
    %c0_37 = arith.constant 0 : index
    %52 = vector.load %arg9[%c0_36, %c0_37] : memref<4x4xbf16, #tpu.memory_space<vmem>>, vector<4x4xbf16>
    %cst_38 = arith.constant dense<0.000000e+00> : vector<4x128xf32>
    %53 = tpu.matmul %52, %51, %cst_38 {dimension_numbers = #tpu.dot_dimension_numbers<[1], [0], [0], [1], [0, 0, 1, 1], [], []>} : vector<4x4xbf16>, vector<4x128xbf16>, vector<4x128xf32> -> vector<4x128xf32>
    %c0_39 = arith.constant 0 : index
    %c0_40 = arith.constant 0 : index
    %54 = vector.load %arg10[%c0_39, %c0_40] : memref<4x1xf32, #tpu.memory_space<vmem>>, vector<4x1xf32>
    %55 = vector.broadcast %54 : vector<4x1xf32> to vector<4x128xf32>
    %56 = arith.addf %53, %55 : vector<4x128xf32>
    %57 = arith.truncf %56 : vector<4x128xf32> to vector<4x128xbf16>
    %c0_41 = arith.constant 0 : index
    %c0_42 = arith.constant 0 : index
    %c0_43 = arith.constant 0 : index
    %58 = vector.load %arg13[%c0_41, %c0_42, %c0_43] : memref<1x4x128xbf16, #tpu.memory_space<vmem>>, vector<1x4x128xbf16>
    %59 = vector.shape_cast %58 : vector<1x4x128xbf16> to vector<4x128xbf16>
    %60 = vector.shape_cast %57 : vector<4x128xbf16> to vector<1x4x128xbf16>
    tpu.vector_store %arg13[%c0_41, %c0_42, %c0_43], %60 {strides = array<i32>} : memref<1x4x128xbf16, #tpu.memory_space<vmem>>, vector<1x4x128xbf16>,
    %cst_44 = arith.constant dense<0.000000e+00> : vector<4xf32>
    %61 = vector.multi_reduction <add>, %56, %cst_44 [1] : vector<4x128xf32> to vector<4xf32>
    %62 = vector.shape_cast %61 : vector<4xf32> to vector<4x1xf32>
    %c0_45 = arith.constant 0 : index
    %c0_46 = arith.constant 0 : index
    %c0_47 = arith.constant 0 : index
    %63 = vector.load %arg14[%c0_45, %c0_46, %c0_47] : memref<1x4x2xf32, #tpu.memory_space<vmem>>, vector<1x4x1xf32>
    %64 = vector.shape_cast %63 : vector<1x4x1xf32> to vector<4x1xf32>
    %65 = vector.shape_cast %62 : vector<4x1xf32> to vector<1x4x1xf32>
    tpu.vector_store %arg14[%c0_45, %c0_46, %c0_47], %65 {strides = array<i32>} : memref<1x4x2xf32, #tpu.memory_space<vmem>>, vector<1x4x1xf32>,
    %66 = arith.mulf %56, %56 : vector<4x128xf32>
    %cst_48 = arith.constant dense<0.000000e+00> : vector<4xf32>
    %67 = vector.multi_reduction <add>, %66, %cst_48 [1] : vector<4x128xf32> to vector<4xf32>
    %68 = vector.shape_cast %67 : vector<4xf32> to vector<4x1xf32>
    %c0_49 = arith.constant 0 : index
    %c0_50 = arith.constant 0 : index
    %c1_51 = arith.constant 1 : index
    %69 = vector.load %arg14[%c0_49, %c0_50, %c1_51] : memref<1x4x2xf32, #tpu.memory_space<vmem>>, vector<1x4x1xf32>
    %70 = vector.shape_cast %69 : vector<1x4x1xf32> to vector<4x1xf32>
    %71 = vector.shape_cast %68 : vector<4x1xf32> to vector<1x4x1xf32>
    tpu.vector_store %arg14[%c0_49, %c0_50, %c1_51], %71 {strides = array<i32>} : memref<1x4x2xf32, #tpu.memory_space<vmem>>, vector<1x4x1xf32>,
    return
  }
  func.func @transform_0(%arg0: i32, %arg1: i32) -> (i32, i32, i32) {
    %c0_i32 = arith.constant 0 : i32
    %c0_i32_0 = arith.constant 0 : i32
    return %arg0, %c0_i32, %arg1 : i32, i32, i32
  }
  func.func @transform_1(%arg0: i32, %arg1: i32) -> (i32, i32, i32) {
    %c0_i32 = arith.constant 0 : i32
    %c0_i32_0 = arith.constant 0 : i32
    %c0_i32_1 = arith.constant 0 : i32
    %c0_i32_2 = arith.constant 0 : i32
    return %c0_i32, %c0_i32_0, %c0_i32_1 : i32, i32, i32
  }
  func.func @transform_2(%arg0: i32, %arg1: i32) -> (i32, i32, i32) {
    %c0_i32 = arith.constant 0 : i32
    %c0_i32_0 = arith.constant 0 : i32
    %c0_i32_1 = arith.constant 0 : i32
    %c0_i32_2 = arith.constant 0 : i32
    return %c0_i32, %c0_i32_0, %c0_i32_1 : i32, i32, i32
  }
  func.func @transform_3(%arg0: i32, %arg1: i32) -> (i32, i32) {
    %c0_i32 = arith.constant 0 : i32
    %c0_i32_0 = arith.constant 0 : i32
    %c0_i32_1 = arith.constant 0 : i32
    return %c0_i32, %c0_i32_0 : i32, i32
  }
  func.func @transform_4(%arg0: i32, %arg1: i32) -> (i32, i32) {
    %c0_i32 = arith.constant 0 : i32
    %c0_i32_0 = arith.constant 0 : i32
    %c0_i32_1 = arith.constant 0 : i32
    return %c0_i32, %c0_i32_0 : i32, i32
  }
  func.func @transform_5(%arg0: i32, %arg1: i32) -> (i32, i32) {
    %c0_i32 = arith.constant 0 : i32
    %c0_i32_0 = arith.constant 0 : i32
    %c0_i32_1 = arith.constant 0 : i32
    return %c0_i32, %c0_i32_0 : i32, i32
  }
  func.func @transform_6(%arg0: i32, %arg1: i32) -> (i32, i32) {
    %c0_i32 = arith.constant 0 : i32
    %c0_i32_0 = arith.constant 0 : i32
    %c0_i32_1 = arith.constant 0 : i32
    return %c0_i32, %c0_i32_0 : i32, i32
  }
  func.func @transform_7(%arg0: i32, %arg1: i32) -> (i32, i32) {
    %c0_i32 = arith.constant 0 : i32
    %c0_i32_0 = arith.constant 0 : i32
    %c0_i32_1 = arith.constant 0 : i32
    return %c0_i32, %c0_i32_0 : i32, i32
  }
  func.func @transform_8(%arg0: i32, %arg1: i32) -> (i32, i32) {
    %c0_i32 = arith.constant 0 : i32
    %c0_i32_0 = arith.constant 0 : i32
    %c0_i32_1 = arith.constant 0 : i32
    return %c0_i32, %c0_i32_0 : i32, i32
  }
  func.func @transform_9(%arg0: i32, %arg1: i32) -> (i32, i32, i32) {
    %c0_i32 = arith.constant 0 : i32
    %c0_i32_0 = arith.constant 0 : i32
    return %arg0, %c0_i32, %arg1 : i32, i32, i32
  }
  func.func @transform_10(%arg0: i32, %arg1: i32) -> (i32, i32, i32) {
    %c0_i32 = arith.constant 0 : i32
    %c0_i32_0 = arith.constant 0 : i32
    return %arg0, %c0_i32, %arg1 : i32, i32, i32
  }
  func.func @transform_11(%arg0: i32, %arg1: i32) -> (i32, i32, i32) {
    %c0_i32 = arith.constant 0 : i32
    %c0_i32_0 = arith.constant 0 : i32
    return %arg0, %c0_i32, %arg1 : i32, i32, i32
  }
  func.func @transform_12(%arg0: i32, %arg1: i32) -> (i32, i32, i32) {
    %c2_i32 = arith.constant 2 : i32
    %0 = arith.muli %arg0, %c2_i32 : i32
    %1 = arith.addi %0, %arg1 : i32
    %c0_i32 = arith.constant 0 : i32
    %c0_i32_0 = arith.constant 0 : i32
    %c0_i32_1 = arith.constant 0 : i32
    return %1, %c0_i32, %c0_i32_0 : i32, i32, i32
  }
}

module attributes {stable_mosaic.version = 11 : i64} {
  func.func @kernel(%arg0: i32, %arg1: memref<1x4x102xbf16, #tpu.memory_space<vmem>>, %arg2: memref<1x102xf32, #tpu.memory_space<vmem>>, %arg3: memref<1x4x1xf32, #tpu.memory_space<vmem>>, %arg4: memref<1x4x1xf32, #tpu.memory_space<vmem>>, %arg5: memref<9x4x4xbf16, #tpu.memory_space<vmem>>, %arg6: memref<4x1xf32, #tpu.memory_space<vmem>>, %arg7: memref<1x4x64xbf16, #tpu.memory_space<vmem>>, %arg8: memref<1x4x2xf32, #tpu.memory_space<vmem>>) attributes {dimension_semantics = [#tpu.dimension_semantics<parallel>], iteration_bounds = array<i64: 2>, scalar_prefetch = 0 : i64, scratch_operands = 0 : i64, tpu.core_type = #tpu.core_type<tc>, window_params = [{transform_indices = @transform_0, window_bounds = array<i64: 1, 4, 102>}, {pipeline_mode = #tpu.pipeline_mode<synchronous>, transform_indices = @transform_1, window_bounds = array<i64: 1, 102>}, {pipeline_mode = #tpu.pipeline_mode<synchronous>, transform_indices = @transform_2, window_bounds = array<i64: 1, 4, 1>}, {pipeline_mode = #tpu.pipeline_mode<synchronous>, transform_indices = @transform_3, window_bounds = array<i64: 1, 4, 1>}, {pipeline_mode = #tpu.pipeline_mode<synchronous>, transform_indices = @transform_4, window_bounds = array<i64: 9, 4, 4>}, {pipeline_mode = #tpu.pipeline_mode<synchronous>, transform_indices = @transform_5, window_bounds = array<i64: 4, 1>}, {transform_indices = @transform_6, window_bounds = array<i64: 1, 4, 64>}, {transform_indices = @transform_7, window_bounds = array<i64: 1, 4, 2>}]} {
    %c0 = arith.constant 0 : index
    %c0_0 = arith.constant 0 : index
    %c0_1 = arith.constant 0 : index
    %0 = vector.load %arg1[%c0, %c0_0, %c0_1] : memref<1x4x102xbf16, #tpu.memory_space<vmem>>, vector<1x4x102xbf16>
    %1 = vector.shape_cast %0 : vector<1x4x102xbf16> to vector<4x102xbf16>
    %2 = arith.extf %1 : vector<4x102xbf16> to vector<4x102xf32>
    %c0_2 = arith.constant 0 : index
    %c0_3 = arith.constant 0 : index
    %3 = vector.load %arg2[%c0_2, %c0_3] : memref<1x102xf32, #tpu.memory_space<vmem>>, vector<1x102xf32>
    %cst = arith.constant 0.000000e+00 : f32
    %4 = vector.broadcast %cst : f32 to vector<4x80xf32>
    %c0_4 = arith.constant 0 : index
    %c0_5 = arith.constant 0 : index
    %c0_6 = arith.constant 0 : index
    %5 = vector.load %arg3[%c0_4, %c0_5, %c0_6] : memref<1x4x1xf32, #tpu.memory_space<vmem>>, vector<1x4x1xf32>
    %6 = vector.shape_cast %5 : vector<1x4x1xf32> to vector<4x1xf32>
    %7 = vector.broadcast %6 : vector<4x1xf32> to vector<4x102xf32>
    %8 = arith.mulf %2, %7 : vector<4x102xf32>
    %c0_7 = arith.constant 0 : index
    %c0_8 = arith.constant 0 : index
    %c0_9 = arith.constant 0 : index
    %9 = vector.load %arg4[%c0_7, %c0_8, %c0_9] : memref<1x4x1xf32, #tpu.memory_space<vmem>>, vector<1x4x1xf32>
    %10 = vector.shape_cast %9 : vector<1x4x1xf32> to vector<4x1xf32>
    %11 = vector.broadcast %10 : vector<4x1xf32> to vector<4x102xf32>
    %12 = arith.addf %8, %11 : vector<4x102xf32>
    %cst_10 = arith.constant 0.000000e+00 : f32
    %13 = vector.broadcast %cst_10 : f32 to vector<4x102xf32>
    %14 = arith.maximumf %12, %13 : vector<4x102xf32>
    %15 = vector.broadcast %3 : vector<1x102xf32> to vector<4x102xf32>
    %16 = arith.mulf %14, %15 : vector<4x102xf32>
    %17 = arith.truncf %16 : vector<4x102xf32> to vector<4x102xbf16>
    %18 = vector.extract_strided_slice %17 {offsets = [0, 0], sizes = [4, 80], strides = [1, 1]} : vector<4x102xbf16> to vector<4x80xbf16>
    %c0_11 = arith.constant 0 : index
    %c0_12 = arith.constant 0 : index
    %c0_13 = arith.constant 0 : index
    %19 = vector.load %arg5[%c0_11, %c0_12, %c0_13] : memref<9x4x4xbf16, #tpu.memory_space<vmem>>, vector<1x4x4xbf16>
    %20 = vector.shape_cast %19 : vector<1x4x4xbf16> to vector<4x4xbf16>
    %cst_14 = arith.constant dense<0.000000e+00> : vector<4x80xf32>
    %21 = tpu.matmul %20, %18, %cst_14 {dimension_numbers = #tpu.dot_dimension_numbers<[1], [0], [0], [1], [0, 0, 1, 1], [], []>} : vector<4x4xbf16>, vector<4x80xbf16>, vector<4x80xf32> -> vector<4x80xf32>
    %22 = arith.addf %4, %21 : vector<4x80xf32>
    %23 = vector.extract_strided_slice %17 {offsets = [0, 1], sizes = [4, 80], strides = [1, 1]} : vector<4x102xbf16> to vector<4x80xbf16>
    %c1 = arith.constant 1 : index
    %c0_15 = arith.constant 0 : index
    %c0_16 = arith.constant 0 : index
    %24 = vector.load %arg5[%c1, %c0_15, %c0_16] : memref<9x4x4xbf16, #tpu.memory_space<vmem>>, vector<1x4x4xbf16>
    %25 = vector.shape_cast %24 : vector<1x4x4xbf16> to vector<4x4xbf16>
    %cst_17 = arith.constant dense<0.000000e+00> : vector<4x80xf32>
    %26 = tpu.matmul %25, %23, %cst_17 {dimension_numbers = #tpu.dot_dimension_numbers<[1], [0], [0], [1], [0, 0, 1, 1], [], []>} : vector<4x4xbf16>, vector<4x80xbf16>, vector<4x80xf32> -> vector<4x80xf32>
    %27 = arith.addf %22, %26 : vector<4x80xf32>
    %28 = vector.extract_strided_slice %17 {offsets = [0, 2], sizes = [4, 80], strides = [1, 1]} : vector<4x102xbf16> to vector<4x80xbf16>
    %c2 = arith.constant 2 : index
    %c0_18 = arith.constant 0 : index
    %c0_19 = arith.constant 0 : index
    %29 = vector.load %arg5[%c2, %c0_18, %c0_19] : memref<9x4x4xbf16, #tpu.memory_space<vmem>>, vector<1x4x4xbf16>
    %30 = vector.shape_cast %29 : vector<1x4x4xbf16> to vector<4x4xbf16>
    %cst_20 = arith.constant dense<0.000000e+00> : vector<4x80xf32>
    %31 = tpu.matmul %30, %28, %cst_20 {dimension_numbers = #tpu.dot_dimension_numbers<[1], [0], [0], [1], [0, 0, 1, 1], [], []>} : vector<4x4xbf16>, vector<4x80xbf16>, vector<4x80xf32> -> vector<4x80xf32>
    %32 = arith.addf %27, %31 : vector<4x80xf32>
    %33 = vector.extract_strided_slice %17 {offsets = [0, 10], sizes = [4, 80], strides = [1, 1]} : vector<4x102xbf16> to vector<4x80xbf16>
    %c3 = arith.constant 3 : index
    %c0_21 = arith.constant 0 : index
    %c0_22 = arith.constant 0 : index
    %34 = vector.load %arg5[%c3, %c0_21, %c0_22] : memref<9x4x4xbf16, #tpu.memory_space<vmem>>, vector<1x4x4xbf16>
    %35 = vector.shape_cast %34 : vector<1x4x4xbf16> to vector<4x4xbf16>
    %cst_23 = arith.constant dense<0.000000e+00> : vector<4x80xf32>
    %36 = tpu.matmul %35, %33, %cst_23 {dimension_numbers = #tpu.dot_dimension_numbers<[1], [0], [0], [1], [0, 0, 1, 1], [], []>} : vector<4x4xbf16>, vector<4x80xbf16>, vector<4x80xf32> -> vector<4x80xf32>
    %37 = arith.addf %32, %36 : vector<4x80xf32>
    %38 = vector.extract_strided_slice %17 {offsets = [0, 11], sizes = [4, 80], strides = [1, 1]} : vector<4x102xbf16> to vector<4x80xbf16>
    %c4 = arith.constant 4 : index
    %c0_24 = arith.constant 0 : index
    %c0_25 = arith.constant 0 : index
    %39 = vector.load %arg5[%c4, %c0_24, %c0_25] : memref<9x4x4xbf16, #tpu.memory_space<vmem>>, vector<1x4x4xbf16>
    %40 = vector.shape_cast %39 : vector<1x4x4xbf16> to vector<4x4xbf16>
    %cst_26 = arith.constant dense<0.000000e+00> : vector<4x80xf32>
    %41 = tpu.matmul %40, %38, %cst_26 {dimension_numbers = #tpu.dot_dimension_numbers<[1], [0], [0], [1], [0, 0, 1, 1], [], []>} : vector<4x4xbf16>, vector<4x80xbf16>, vector<4x80xf32> -> vector<4x80xf32>
    %42 = arith.addf %37, %41 : vector<4x80xf32>
    %43 = vector.extract_strided_slice %17 {offsets = [0, 12], sizes = [4, 80], strides = [1, 1]} : vector<4x102xbf16> to vector<4x80xbf16>
    %c5 = arith.constant 5 : index
    %c0_27 = arith.constant 0 : index
    %c0_28 = arith.constant 0 : index
    %44 = vector.load %arg5[%c5, %c0_27, %c0_28] : memref<9x4x4xbf16, #tpu.memory_space<vmem>>, vector<1x4x4xbf16>
    %45 = vector.shape_cast %44 : vector<1x4x4xbf16> to vector<4x4xbf16>
    %cst_29 = arith.constant dense<0.000000e+00> : vector<4x80xf32>
    %46 = tpu.matmul %45, %43, %cst_29 {dimension_numbers = #tpu.dot_dimension_numbers<[1], [0], [0], [1], [0, 0, 1, 1], [], []>} : vector<4x4xbf16>, vector<4x80xbf16>, vector<4x80xf32> -> vector<4x80xf32>
    %47 = arith.addf %42, %46 : vector<4x80xf32>
    %48 = vector.extract_strided_slice %17 {offsets = [0, 20], sizes = [4, 80], strides = [1, 1]} : vector<4x102xbf16> to vector<4x80xbf16>
    %c6 = arith.constant 6 : index
    %c0_30 = arith.constant 0 : index
    %c0_31 = arith.constant 0 : index
    %49 = vector.load %arg5[%c6, %c0_30, %c0_31] : memref<9x4x4xbf16, #tpu.memory_space<vmem>>, vector<1x4x4xbf16>
    %50 = vector.shape_cast %49 : vector<1x4x4xbf16> to vector<4x4xbf16>
    %cst_32 = arith.constant dense<0.000000e+00> : vector<4x80xf32>
    %51 = tpu.matmul %50, %48, %cst_32 {dimension_numbers = #tpu.dot_dimension_numbers<[1], [0], [0], [1], [0, 0, 1, 1], [], []>} : vector<4x4xbf16>, vector<4x80xbf16>, vector<4x80xf32> -> vector<4x80xf32>
    %52 = arith.addf %47, %51 : vector<4x80xf32>
    %53 = vector.extract_strided_slice %17 {offsets = [0, 21], sizes = [4, 80], strides = [1, 1]} : vector<4x102xbf16> to vector<4x80xbf16>
    %c7 = arith.constant 7 : index
    %c0_33 = arith.constant 0 : index
    %c0_34 = arith.constant 0 : index
    %54 = vector.load %arg5[%c7, %c0_33, %c0_34] : memref<9x4x4xbf16, #tpu.memory_space<vmem>>, vector<1x4x4xbf16>
    %55 = vector.shape_cast %54 : vector<1x4x4xbf16> to vector<4x4xbf16>
    %cst_35 = arith.constant dense<0.000000e+00> : vector<4x80xf32>
    %56 = tpu.matmul %55, %53, %cst_35 {dimension_numbers = #tpu.dot_dimension_numbers<[1], [0], [0], [1], [0, 0, 1, 1], [], []>} : vector<4x4xbf16>, vector<4x80xbf16>, vector<4x80xf32> -> vector<4x80xf32>
    %57 = arith.addf %52, %56 : vector<4x80xf32>
    %58 = vector.extract_strided_slice %17 {offsets = [0, 22], sizes = [4, 80], strides = [1, 1]} : vector<4x102xbf16> to vector<4x80xbf16>
    %c8 = arith.constant 8 : index
    %c0_36 = arith.constant 0 : index
    %c0_37 = arith.constant 0 : index
    %59 = vector.load %arg5[%c8, %c0_36, %c0_37] : memref<9x4x4xbf16, #tpu.memory_space<vmem>>, vector<1x4x4xbf16>
    %60 = vector.shape_cast %59 : vector<1x4x4xbf16> to vector<4x4xbf16>
    %cst_38 = arith.constant dense<0.000000e+00> : vector<4x80xf32>
    %61 = tpu.matmul %60, %58, %cst_38 {dimension_numbers = #tpu.dot_dimension_numbers<[1], [0], [0], [1], [0, 0, 1, 1], [], []>} : vector<4x4xbf16>, vector<4x80xbf16>, vector<4x80xf32> -> vector<4x80xf32>
    %62 = arith.addf %57, %61 : vector<4x80xf32>
    %c0_39 = arith.constant 0 : index
    %c0_40 = arith.constant 0 : index
    %63 = vector.load %arg6[%c0_39, %c0_40] : memref<4x1xf32, #tpu.memory_space<vmem>>, vector<4x1xf32>
    %64 = vector.broadcast %63 : vector<4x1xf32> to vector<4x80xf32>
    %65 = arith.addf %62, %64 : vector<4x80xf32>
    %66 = vector.extract_strided_slice %3 {offsets = [0, 11], sizes = [1, 80], strides = [1, 1]} : vector<1x102xf32> to vector<1x80xf32>
    %67 = vector.broadcast %66 : vector<1x80xf32> to vector<4x80xf32>
    %68 = arith.mulf %65, %67 : vector<4x80xf32>
    %cst_41 = arith.constant dense<0.000000e+00> : vector<4xf32>
    %69 = vector.multi_reduction <add>, %68, %cst_41 [1] : vector<4x80xf32> to vector<4xf32>
    %70 = vector.shape_cast %69 : vector<4xf32> to vector<4x1xf32>
    %c0_42 = arith.constant 0 : index
    %c0_43 = arith.constant 0 : index
    %c0_44 = arith.constant 0 : index
    %71 = vector.load %arg8[%c0_42, %c0_43, %c0_44] : memref<1x4x2xf32, #tpu.memory_space<vmem>>, vector<1x4x1xf32>
    %72 = vector.shape_cast %71 : vector<1x4x1xf32> to vector<4x1xf32>
    %73 = vector.shape_cast %70 : vector<4x1xf32> to vector<1x4x1xf32>
    tpu.vector_store %arg8[%c0_42, %c0_43, %c0_44], %73 {strides = array<i32>} : memref<1x4x2xf32, #tpu.memory_space<vmem>>, vector<1x4x1xf32>,
    %74 = arith.mulf %65, %65 : vector<4x80xf32>
    %75 = vector.broadcast %66 : vector<1x80xf32> to vector<4x80xf32>
    %76 = arith.mulf %74, %75 : vector<4x80xf32>
    %cst_45 = arith.constant dense<0.000000e+00> : vector<4xf32>
    %77 = vector.multi_reduction <add>, %76, %cst_45 [1] : vector<4x80xf32> to vector<4xf32>
    %78 = vector.shape_cast %77 : vector<4xf32> to vector<4x1xf32>
    %c0_46 = arith.constant 0 : index
    %c0_47 = arith.constant 0 : index
    %c1_48 = arith.constant 1 : index
    %79 = vector.load %arg8[%c0_46, %c0_47, %c1_48] : memref<1x4x2xf32, #tpu.memory_space<vmem>>, vector<1x4x1xf32>
    %80 = vector.shape_cast %79 : vector<1x4x1xf32> to vector<4x1xf32>
    %81 = vector.shape_cast %78 : vector<4x1xf32> to vector<1x4x1xf32>
    tpu.vector_store %arg8[%c0_46, %c0_47, %c1_48], %81 {strides = array<i32>} : memref<1x4x2xf32, #tpu.memory_space<vmem>>, vector<1x4x1xf32>,
    %82 = arith.truncf %65 : vector<4x80xf32> to vector<4x80xbf16>
    %83 = vector.extract_strided_slice %82 {offsets = [0, 1], sizes = [4, 8], strides = [1, 1]} : vector<4x80xbf16> to vector<4x8xbf16>
    %c0_49 = arith.constant 0 : index
    %c0_50 = arith.constant 0 : index
    %c0_51 = arith.constant 0 : index
    %84 = vector.load %arg7[%c0_49, %c0_50, %c0_51] : memref<1x4x64xbf16, #tpu.memory_space<vmem>>, vector<1x4x8xbf16>
    %85 = vector.shape_cast %84 : vector<1x4x8xbf16> to vector<4x8xbf16>
    %86 = vector.shape_cast %83 : vector<4x8xbf16> to vector<1x4x8xbf16>
    tpu.vector_store %arg7[%c0_49, %c0_50, %c0_51], %86 {strides = array<i32>} : memref<1x4x64xbf16, #tpu.memory_space<vmem>>, vector<1x4x8xbf16>,
    %87 = vector.extract_strided_slice %82 {offsets = [0, 11], sizes = [4, 8], strides = [1, 1]} : vector<4x80xbf16> to vector<4x8xbf16>
    %c0_52 = arith.constant 0 : index
    %c0_53 = arith.constant 0 : index
    %c8_54 = arith.constant 8 : index
    %88 = vector.load %arg7[%c0_52, %c0_53, %c8_54] : memref<1x4x64xbf16, #tpu.memory_space<vmem>>, vector<1x4x8xbf16>
    %89 = vector.shape_cast %88 : vector<1x4x8xbf16> to vector<4x8xbf16>
    %90 = vector.shape_cast %87 : vector<4x8xbf16> to vector<1x4x8xbf16>
    tpu.vector_store %arg7[%c0_52, %c0_53, %c8_54], %90 {strides = array<i32>} : memref<1x4x64xbf16, #tpu.memory_space<vmem>>, vector<1x4x8xbf16>,
    %91 = vector.extract_strided_slice %82 {offsets = [0, 21], sizes = [4, 8], strides = [1, 1]} : vector<4x80xbf16> to vector<4x8xbf16>
    %c0_55 = arith.constant 0 : index
    %c0_56 = arith.constant 0 : index
    %c16 = arith.constant 16 : index
    %92 = vector.load %arg7[%c0_55, %c0_56, %c16] : memref<1x4x64xbf16, #tpu.memory_space<vmem>>, vector<1x4x8xbf16>
    %93 = vector.shape_cast %92 : vector<1x4x8xbf16> to vector<4x8xbf16>
    %94 = vector.shape_cast %91 : vector<4x8xbf16> to vector<1x4x8xbf16>
    tpu.vector_store %arg7[%c0_55, %c0_56, %c16], %94 {strides = array<i32>} : memref<1x4x64xbf16, #tpu.memory_space<vmem>>, vector<1x4x8xbf16>,
    %95 = vector.extract_strided_slice %82 {offsets = [0, 31], sizes = [4, 8], strides = [1, 1]} : vector<4x80xbf16> to vector<4x8xbf16>
    %c0_57 = arith.constant 0 : index
    %c0_58 = arith.constant 0 : index
    %c24 = arith.constant 24 : index
    %96 = vector.load %arg7[%c0_57, %c0_58, %c24] : memref<1x4x64xbf16, #tpu.memory_space<vmem>>, vector<1x4x8xbf16>
    %97 = vector.shape_cast %96 : vector<1x4x8xbf16> to vector<4x8xbf16>
    %98 = vector.shape_cast %95 : vector<4x8xbf16> to vector<1x4x8xbf16>
    tpu.vector_store %arg7[%c0_57, %c0_58, %c24], %98 {strides = array<i32>} : memref<1x4x64xbf16, #tpu.memory_space<vmem>>, vector<1x4x8xbf16>,
    %99 = vector.extract_strided_slice %82 {offsets = [0, 41], sizes = [4, 8], strides = [1, 1]} : vector<4x80xbf16> to vector<4x8xbf16>
    %c0_59 = arith.constant 0 : index
    %c0_60 = arith.constant 0 : index
    %c32 = arith.constant 32 : index
    %100 = vector.load %arg7[%c0_59, %c0_60, %c32] : memref<1x4x64xbf16, #tpu.memory_space<vmem>>, vector<1x4x8xbf16>
    %101 = vector.shape_cast %100 : vector<1x4x8xbf16> to vector<4x8xbf16>
    %102 = vector.shape_cast %99 : vector<4x8xbf16> to vector<1x4x8xbf16>
    tpu.vector_store %arg7[%c0_59, %c0_60, %c32], %102 {strides = array<i32>} : memref<1x4x64xbf16, #tpu.memory_space<vmem>>, vector<1x4x8xbf16>,
    %103 = vector.extract_strided_slice %82 {offsets = [0, 51], sizes = [4, 8], strides = [1, 1]} : vector<4x80xbf16> to vector<4x8xbf16>
    %c0_61 = arith.constant 0 : index
    %c0_62 = arith.constant 0 : index
    %c40 = arith.constant 40 : index
    %104 = vector.load %arg7[%c0_61, %c0_62, %c40] : memref<1x4x64xbf16, #tpu.memory_space<vmem>>, vector<1x4x8xbf16>
    %105 = vector.shape_cast %104 : vector<1x4x8xbf16> to vector<4x8xbf16>
    %106 = vector.shape_cast %103 : vector<4x8xbf16> to vector<1x4x8xbf16>
    tpu.vector_store %arg7[%c0_61, %c0_62, %c40], %106 {strides = array<i32>} : memref<1x4x64xbf16, #tpu.memory_space<vmem>>, vector<1x4x8xbf16>,
    %107 = vector.extract_strided_slice %82 {offsets = [0, 61], sizes = [4, 8], strides = [1, 1]} : vector<4x80xbf16> to vector<4x8xbf16>
    %c0_63 = arith.constant 0 : index
    %c0_64 = arith.constant 0 : index
    %c48 = arith.constant 48 : index
    %108 = vector.load %arg7[%c0_63, %c0_64, %c48] : memref<1x4x64xbf16, #tpu.memory_space<vmem>>, vector<1x4x8xbf16>
    %109 = vector.shape_cast %108 : vector<1x4x8xbf16> to vector<4x8xbf16>
    %110 = vector.shape_cast %107 : vector<4x8xbf16> to vector<1x4x8xbf16>
    tpu.vector_store %arg7[%c0_63, %c0_64, %c48], %110 {strides = array<i32>} : memref<1x4x64xbf16, #tpu.memory_space<vmem>>, vector<1x4x8xbf16>,
    %111 = vector.extract_strided_slice %82 {offsets = [0, 71], sizes = [4, 8], strides = [1, 1]} : vector<4x80xbf16> to vector<4x8xbf16>
    %c0_65 = arith.constant 0 : index
    %c0_66 = arith.constant 0 : index
    %c56 = arith.constant 56 : index
    %112 = vector.load %arg7[%c0_65, %c0_66, %c56] : memref<1x4x64xbf16, #tpu.memory_space<vmem>>, vector<1x4x8xbf16>
    %113 = vector.shape_cast %112 : vector<1x4x8xbf16> to vector<4x8xbf16>
    %114 = vector.shape_cast %111 : vector<4x8xbf16> to vector<1x4x8xbf16>
    tpu.vector_store %arg7[%c0_65, %c0_66, %c56], %114 {strides = array<i32>} : memref<1x4x64xbf16, #tpu.memory_space<vmem>>, vector<1x4x8xbf16>,
    return
  }
  func.func @transform_0(%arg0: i32) -> (i32, i32, i32) {
    %c0_i32 = arith.constant 0 : i32
    %c0_i32_0 = arith.constant 0 : i32
    %c0_i32_1 = arith.constant 0 : i32
    return %arg0, %c0_i32, %c0_i32_0 : i32, i32, i32
  }
  func.func @transform_1(%arg0: i32) -> (i32, i32) {
    %c0_i32 = arith.constant 0 : i32
    %c0_i32_0 = arith.constant 0 : i32
    %c0_i32_1 = arith.constant 0 : i32
    return %c0_i32, %c0_i32_0 : i32, i32
  }
  func.func @transform_2(%arg0: i32) -> (i32, i32, i32) {
    %c0_i32 = arith.constant 0 : i32
    %c0_i32_0 = arith.constant 0 : i32
    %c0_i32_1 = arith.constant 0 : i32
    %c0_i32_2 = arith.constant 0 : i32
    return %c0_i32, %c0_i32_0, %c0_i32_1 : i32, i32, i32
  }
  func.func @transform_3(%arg0: i32) -> (i32, i32, i32) {
    %c0_i32 = arith.constant 0 : i32
    %c0_i32_0 = arith.constant 0 : i32
    %c0_i32_1 = arith.constant 0 : i32
    %c0_i32_2 = arith.constant 0 : i32
    return %c0_i32, %c0_i32_0, %c0_i32_1 : i32, i32, i32
  }
  func.func @transform_4(%arg0: i32) -> (i32, i32, i32) {
    %c0_i32 = arith.constant 0 : i32
    %c0_i32_0 = arith.constant 0 : i32
    %c0_i32_1 = arith.constant 0 : i32
    %c0_i32_2 = arith.constant 0 : i32
    return %c0_i32, %c0_i32_0, %c0_i32_1 : i32, i32, i32
  }
  func.func @transform_5(%arg0: i32) -> (i32, i32) {
    %c0_i32 = arith.constant 0 : i32
    %c0_i32_0 = arith.constant 0 : i32
    %c0_i32_1 = arith.constant 0 : i32
    return %c0_i32, %c0_i32_0 : i32, i32
  }
  func.func @transform_6(%arg0: i32) -> (i32, i32, i32) {
    %c0_i32 = arith.constant 0 : i32
    %c0_i32_0 = arith.constant 0 : i32
    %c0_i32_1 = arith.constant 0 : i32
    return %arg0, %c0_i32, %c0_i32_0 : i32, i32, i32
  }
  func.func @transform_7(%arg0: i32) -> (i32, i32, i32) {
    %c0_i32 = arith.constant 0 : i32
    %c0_i32_0 = arith.constant 0 : i32
    %c0_i32_1 = arith.constant 0 : i32
    return %arg0, %c0_i32, %c0_i32_0 : i32, i32, i32
  }
}

module attributes {stable_mosaic.version = 11 : i64} {
  func.func @_bn_relu_1x1_kernel(%arg0: i32, %arg1: i32, %arg2: memref<1x4x64xbf16, #tpu.memory_space<vmem>>, %arg3: memref<4x1xf32, #tpu.memory_space<vmem>>, %arg4: memref<4x1xf32, #tpu.memory_space<vmem>>, %arg5: memref<8x4xbf16, #tpu.memory_space<vmem>>, %arg6: memref<8x1xf32, #tpu.memory_space<vmem>>, %arg7: memref<1x8x64xf32, #tpu.memory_space<vmem>>) attributes {dimension_semantics = [#tpu.dimension_semantics<parallel>, #tpu.dimension_semantics<parallel>], iteration_bounds = array<i64: 2, 1>, scalar_prefetch = 0 : i64, scratch_operands = 0 : i64, tpu.core_type = #tpu.core_type<tc>, window_params = [{transform_indices = @transform_0, window_bounds = array<i64: 1, 4, 64>}, {pipeline_mode = #tpu.pipeline_mode<synchronous>, transform_indices = @transform_1, window_bounds = array<i64: 4, 1>}, {pipeline_mode = #tpu.pipeline_mode<synchronous>, transform_indices = @transform_2, window_bounds = array<i64: 4, 1>}, {pipeline_mode = #tpu.pipeline_mode<synchronous>, transform_indices = @transform_3, window_bounds = array<i64: 8, 4>}, {pipeline_mode = #tpu.pipeline_mode<synchronous>, transform_indices = @transform_4, window_bounds = array<i64: 8, 1>}, {transform_indices = @transform_5, window_bounds = array<i64: 1, 8, 64>}]} {
    %c0 = arith.constant 0 : index
    %c0_0 = arith.constant 0 : index
    %c0_1 = arith.constant 0 : index
    %0 = vector.load %arg2[%c0, %c0_0, %c0_1] : memref<1x4x64xbf16, #tpu.memory_space<vmem>>, vector<1x4x64xbf16>
    %1 = vector.shape_cast %0 : vector<1x4x64xbf16> to vector<4x64xbf16>
    %2 = arith.extf %1 : vector<4x64xbf16> to vector<4x64xf32>
    %c0_2 = arith.constant 0 : index
    %c0_3 = arith.constant 0 : index
    %3 = vector.load %arg3[%c0_2, %c0_3] : memref<4x1xf32, #tpu.memory_space<vmem>>, vector<4x1xf32>
    %4 = vector.broadcast %3 : vector<4x1xf32> to vector<4x64xf32>
    %5 = arith.mulf %2, %4 : vector<4x64xf32>
    %c0_4 = arith.constant 0 : index
    %c0_5 = arith.constant 0 : index
    %6 = vector.load %arg4[%c0_4, %c0_5] : memref<4x1xf32, #tpu.memory_space<vmem>>, vector<4x1xf32>
    %7 = vector.broadcast %6 : vector<4x1xf32> to vector<4x64xf32>
    %8 = arith.addf %5, %7 : vector<4x64xf32>
    %cst = arith.constant 0.000000e+00 : f32
    %9 = vector.broadcast %cst : f32 to vector<4x64xf32>
    %10 = arith.maximumf %8, %9 : vector<4x64xf32>
    %11 = arith.truncf %10 : vector<4x64xf32> to vector<4x64xbf16>
    %c0_6 = arith.constant 0 : index
    %c0_7 = arith.constant 0 : index
    %12 = vector.load %arg5[%c0_6, %c0_7] : memref<8x4xbf16, #tpu.memory_space<vmem>>, vector<8x4xbf16>
    %cst_8 = arith.constant dense<0.000000e+00> : vector<8x64xf32>
    %13 = tpu.matmul %12, %11, %cst_8 {dimension_numbers = #tpu.dot_dimension_numbers<[1], [0], [0], [1], [0, 0, 1, 1], [], []>} : vector<8x4xbf16>, vector<4x64xbf16>, vector<8x64xf32> -> vector<8x64xf32>
    %c0_9 = arith.constant 0 : index
    %c0_10 = arith.constant 0 : index
    %14 = vector.load %arg6[%c0_9, %c0_10] : memref<8x1xf32, #tpu.memory_space<vmem>>, vector<8x1xf32>
    %15 = vector.broadcast %14 : vector<8x1xf32> to vector<8x64xf32>
    %16 = arith.addf %13, %15 : vector<8x64xf32>
    %c0_11 = arith.constant 0 : index
    %c0_12 = arith.constant 0 : index
    %c0_13 = arith.constant 0 : index
    %17 = vector.load %arg7[%c0_11, %c0_12, %c0_13] : memref<1x8x64xf32, #tpu.memory_space<vmem>>, vector<1x8x64xf32>
    %18 = vector.shape_cast %17 : vector<1x8x64xf32> to vector<8x64xf32>
    %19 = vector.shape_cast %16 : vector<8x64xf32> to vector<1x8x64xf32>
    tpu.vector_store %arg7[%c0_11, %c0_12, %c0_13], %19 {strides = array<i32>} : memref<1x8x64xf32, #tpu.memory_space<vmem>>, vector<1x8x64xf32>,
    return
  }
  func.func @transform_0(%arg0: i32, %arg1: i32) -> (i32, i32, i32) {
    %c0_i32 = arith.constant 0 : i32
    %c0_i32_0 = arith.constant 0 : i32
    return %arg0, %c0_i32, %arg1 : i32, i32, i32
  }
  func.func @transform_1(%arg0: i32, %arg1: i32) -> (i32, i32) {
    %c0_i32 = arith.constant 0 : i32
    %c0_i32_0 = arith.constant 0 : i32
    %c0_i32_1 = arith.constant 0 : i32
    return %c0_i32, %c0_i32_0 : i32, i32
  }
  func.func @transform_2(%arg0: i32, %arg1: i32) -> (i32, i32) {
    %c0_i32 = arith.constant 0 : i32
    %c0_i32_0 = arith.constant 0 : i32
    %c0_i32_1 = arith.constant 0 : i32
    return %c0_i32, %c0_i32_0 : i32, i32
  }
  func.func @transform_3(%arg0: i32, %arg1: i32) -> (i32, i32) {
    %c0_i32 = arith.constant 0 : i32
    %c0_i32_0 = arith.constant 0 : i32
    %c0_i32_1 = arith.constant 0 : i32
    return %c0_i32, %c0_i32_0 : i32, i32
  }
  func.func @transform_4(%arg0: i32, %arg1: i32) -> (i32, i32) {
    %c0_i32 = arith.constant 0 : i32
    %c0_i32_0 = arith.constant 0 : i32
    %c0_i32_1 = arith.constant 0 : i32
    return %c0_i32, %c0_i32_0 : i32, i32
  }
  func.func @transform_5(%arg0: i32, %arg1: i32) -> (i32, i32, i32) {
    %c0_i32 = arith.constant 0 : i32
    %c0_i32_0 = arith.constant 0 : i32
    return %arg0, %c0_i32, %arg1 : i32, i32, i32
  }
}

module attributes {stable_mosaic.version = 11 : i64} {
  func.func @_bn_relu_1x1_kernel(%arg0: i32, %arg1: i32, %arg2: memref<1x4x128xbf16, #tpu.memory_space<vmem>>, %arg3: memref<4x1xf32, #tpu.memory_space<vmem>>, %arg4: memref<4x1xf32, #tpu.memory_space<vmem>>, %arg5: memref<8x4xbf16, #tpu.memory_space<vmem>>, %arg6: memref<8x1xf32, #tpu.memory_space<vmem>>, %arg7: memref<1x8x128xf32, #tpu.memory_space<vmem>>, %arg8: memref<1x8x128xf32, #tpu.memory_space<vmem>>, %arg9: memref<1x8x128xf32, #tpu.memory_space<vmem>>) attributes {dimension_semantics = [#tpu.dimension_semantics<parallel>, #tpu.dimension_semantics<parallel>], iteration_bounds = array<i64: 2, 2>, scalar_prefetch = 0 : i64, scratch_operands = 0 : i64, tpu.core_type = #tpu.core_type<tc>, window_params = [{transform_indices = @transform_0, window_bounds = array<i64: 1, 4, 128>}, {pipeline_mode = #tpu.pipeline_mode<synchronous>, transform_indices = @transform_1, window_bounds = array<i64: 4, 1>}, {pipeline_mode = #tpu.pipeline_mode<synchronous>, transform_indices = @transform_2, window_bounds = array<i64: 4, 1>}, {pipeline_mode = #tpu.pipeline_mode<synchronous>, transform_indices = @transform_3, window_bounds = array<i64: 8, 4>}, {pipeline_mode = #tpu.pipeline_mode<synchronous>, transform_indices = @transform_4, window_bounds = array<i64: 8, 1>}, {transform_indices = @transform_5, window_bounds = array<i64: 1, 8, 128>}, {transform_indices = @transform_6, window_bounds = array<i64: 1, 8, 128>}, {transform_indices = @transform_7, window_bounds = array<i64: 1, 8, 128>}]} {
    %c0 = arith.constant 0 : index
    %c0_0 = arith.constant 0 : index
    %c0_1 = arith.constant 0 : index
    %0 = vector.load %arg2[%c0, %c0_0, %c0_1] : memref<1x4x128xbf16, #tpu.memory_space<vmem>>, vector<1x4x128xbf16>
    %1 = vector.shape_cast %0 : vector<1x4x128xbf16> to vector<4x128xbf16>
    %2 = arith.extf %1 : vector<4x128xbf16> to vector<4x128xf32>
    %c0_2 = arith.constant 0 : index
    %c0_3 = arith.constant 0 : index
    %3 = vector.load %arg3[%c0_2, %c0_3] : memref<4x1xf32, #tpu.memory_space<vmem>>, vector<4x1xf32>
    %4 = vector.broadcast %3 : vector<4x1xf32> to vector<4x128xf32>
    %5 = arith.mulf %2, %4 : vector<4x128xf32>
    %c0_4 = arith.constant 0 : index
    %c0_5 = arith.constant 0 : index
    %6 = vector.load %arg4[%c0_4, %c0_5] : memref<4x1xf32, #tpu.memory_space<vmem>>, vector<4x1xf32>
    %7 = vector.broadcast %6 : vector<4x1xf32> to vector<4x128xf32>
    %8 = arith.addf %5, %7 : vector<4x128xf32>
    %cst = arith.constant 0.000000e+00 : f32
    %9 = vector.broadcast %cst : f32 to vector<4x128xf32>
    %10 = arith.maximumf %8, %9 : vector<4x128xf32>
    %11 = arith.truncf %10 : vector<4x128xf32> to vector<4x128xbf16>
    %c0_6 = arith.constant 0 : index
    %c0_7 = arith.constant 0 : index
    %12 = vector.load %arg5[%c0_6, %c0_7] : memref<8x4xbf16, #tpu.memory_space<vmem>>, vector<8x4xbf16>
    %cst_8 = arith.constant dense<0.000000e+00> : vector<8x128xf32>
    %13 = tpu.matmul %12, %11, %cst_8 {dimension_numbers = #tpu.dot_dimension_numbers<[1], [0], [0], [1], [0, 0, 1, 1], [], []>} : vector<8x4xbf16>, vector<4x128xbf16>, vector<8x128xf32> -> vector<8x128xf32>
    %c0_9 = arith.constant 0 : index
    %c0_10 = arith.constant 0 : index
    %14 = vector.load %arg6[%c0_9, %c0_10] : memref<8x1xf32, #tpu.memory_space<vmem>>, vector<8x1xf32>
    %15 = vector.broadcast %14 : vector<8x1xf32> to vector<8x128xf32>
    %16 = arith.addf %13, %15 : vector<8x128xf32>
    %c0_11 = arith.constant 0 : index
    %c0_12 = arith.constant 0 : index
    %c0_13 = arith.constant 0 : index
    %17 = vector.load %arg7[%c0_11, %c0_12, %c0_13] : memref<1x8x128xf32, #tpu.memory_space<vmem>>, vector<1x8x128xf32>
    %18 = vector.shape_cast %17 : vector<1x8x128xf32> to vector<8x128xf32>
    %19 = arith.addf %16, %18 : vector<8x128xf32>
    %c0_14 = arith.constant 0 : index
    %c0_15 = arith.constant 0 : index
    %c0_16 = arith.constant 0 : index
    %20 = vector.load %arg8[%c0_14, %c0_15, %c0_16] : memref<1x8x128xf32, #tpu.memory_space<vmem>>, vector<1x8x128xf32>
    %21 = vector.shape_cast %20 : vector<1x8x128xf32> to vector<8x128xf32>
    %22 = arith.addf %19, %21 : vector<8x128xf32>
    %c0_17 = arith.constant 0 : index
    %c0_18 = arith.constant 0 : index
    %c0_19 = arith.constant 0 : index
    %23 = vector.load %arg9[%c0_17, %c0_18, %c0_19] : memref<1x8x128xf32, #tpu.memory_space<vmem>>, vector<1x8x128xf32>
    %24 = vector.shape_cast %23 : vector<1x8x128xf32> to vector<8x128xf32>
    %25 = vector.shape_cast %22 : vector<8x128xf32> to vector<1x8x128xf32>
    tpu.vector_store %arg9[%c0_17, %c0_18, %c0_19], %25 {strides = array<i32>} : memref<1x8x128xf32, #tpu.memory_space<vmem>>, vector<1x8x128xf32>,
    return
  }
  func.func @transform_0(%arg0: i32, %arg1: i32) -> (i32, i32, i32) {
    %c0_i32 = arith.constant 0 : i32
    %c0_i32_0 = arith.constant 0 : i32
    return %arg0, %c0_i32, %arg1 : i32, i32, i32
  }
  func.func @transform_1(%arg0: i32, %arg1: i32) -> (i32, i32) {
    %c0_i32 = arith.constant 0 : i32
    %c0_i32_0 = arith.constant 0 : i32
    %c0_i32_1 = arith.constant 0 : i32
    return %c0_i32, %c0_i32_0 : i32, i32
  }
  func.func @transform_2(%arg0: i32, %arg1: i32) -> (i32, i32) {
    %c0_i32 = arith.constant 0 : i32
    %c0_i32_0 = arith.constant 0 : i32
    %c0_i32_1 = arith.constant 0 : i32
    return %c0_i32, %c0_i32_0 : i32, i32
  }
  func.func @transform_3(%arg0: i32, %arg1: i32) -> (i32, i32) {
    %c0_i32 = arith.constant 0 : i32
    %c0_i32_0 = arith.constant 0 : i32
    %c0_i32_1 = arith.constant 0 : i32
    return %c0_i32, %c0_i32_0 : i32, i32
  }
  func.func @transform_4(%arg0: i32, %arg1: i32) -> (i32, i32) {
    %c0_i32 = arith.constant 0 : i32
    %c0_i32_0 = arith.constant 0 : i32
    %c0_i32_1 = arith.constant 0 : i32
    return %c0_i32, %c0_i32_0 : i32, i32
  }
  func.func @transform_5(%arg0: i32, %arg1: i32) -> (i32, i32, i32) {
    %c0_i32 = arith.constant 0 : i32
    %c0_i32_0 = arith.constant 0 : i32
    return %arg0, %c0_i32, %arg1 : i32, i32, i32
  }
  func.func @transform_6(%arg0: i32, %arg1: i32) -> (i32, i32, i32) {
    %c0_i32 = arith.constant 0 : i32
    %c0_i32_0 = arith.constant 0 : i32
    return %arg0, %c0_i32, %arg1 : i32, i32, i32
  }
  func.func @transform_7(%arg0: i32, %arg1: i32) -> (i32, i32, i32) {
    %c0_i32 = arith.constant 0 : i32
    %c0_i32_0 = arith.constant 0 : i32
    return %arg0, %c0_i32, %arg1 : i32, i32, i32
  }
}

module attributes {stable_mosaic.version = 11 : i64} {
  func.func @kernel(%arg0: i32, %arg1: memref<1x4x584xbf16, #tpu.memory_space<vmem>>, %arg2: memref<1x584xf32, #tpu.memory_space<vmem>>, %arg3: memref<4x4x1xf32, #tpu.memory_space<vmem>>, %arg4: memref<4x4x1xf32, #tpu.memory_space<vmem>>, %arg5: memref<36x4x4xbf16, #tpu.memory_space<vmem>>, %arg6: memref<4x1xf32, #tpu.memory_space<vmem>>, %arg7: memref<1x4x256xbf16, #tpu.memory_space<vmem>>, %arg8: memref<1x4x2xf32, #tpu.memory_space<vmem>>) attributes {dimension_semantics = [#tpu.dimension_semantics<parallel>], iteration_bounds = array<i64: 2>, scalar_prefetch = 0 : i64, scratch_operands = 0 : i64, tpu.core_type = #tpu.core_type<tc>, window_params = [{transform_indices = @transform_0, window_bounds = array<i64: 1, 4, 584>}, {pipeline_mode = #tpu.pipeline_mode<synchronous>, transform_indices = @transform_1, window_bounds = array<i64: 1, 584>}, {pipeline_mode = #tpu.pipeline_mode<synchronous>, transform_indices = @transform_2, window_bounds = array<i64: 4, 4, 1>}, {pipeline_mode = #tpu.pipeline_mode<synchronous>, transform_indices = @transform_3, window_bounds = array<i64: 4, 4, 1>}, {pipeline_mode = #tpu.pipeline_mode<synchronous>, transform_indices = @transform_4, window_bounds = array<i64: 36, 4, 4>}, {pipeline_mode = #tpu.pipeline_mode<synchronous>, transform_indices = @transform_5, window_bounds = array<i64: 4, 1>}, {transform_indices = @transform_6, window_bounds = array<i64: 1, 4, 256>}, {transform_indices = @transform_7, window_bounds = array<i64: 1, 4, 2>}]} {
    %c0 = arith.constant 0 : index
    %c0_0 = arith.constant 0 : index
    %c0_1 = arith.constant 0 : index
    %0 = vector.load %arg1[%c0, %c0_0, %c0_1] : memref<1x4x584xbf16, #tpu.memory_space<vmem>>, vector<1x4x584xbf16>
    %1 = vector.shape_cast %0 : vector<1x4x584xbf16> to vector<4x584xbf16>
    %2 = arith.extf %1 : vector<4x584xbf16> to vector<4x584xf32>
    %c0_2 = arith.constant 0 : index
    %c0_3 = arith.constant 0 : index
    %3 = vector.load %arg2[%c0_2, %c0_3] : memref<1x584xf32, #tpu.memory_space<vmem>>, vector<1x584xf32>
    %cst = arith.constant 0.000000e+00 : f32
    %4 = vector.broadcast %cst : f32 to vector<4x384xf32>
    %c0_4 = arith.constant 0 : index
    %c0_5 = arith.constant 0 : index
    %c0_6 = arith.constant 0 : index
    %5 = vector.load %arg3[%c0_4, %c0_5, %c0_6] : memref<4x4x1xf32, #tpu.memory_space<vmem>>, vector<1x4x1xf32>
    %6 = vector.shape_cast %5 : vector<1x4x1xf32> to vector<4x1xf32>
    %7 = vector.broadcast %6 : vector<4x1xf32> to vector<4x584xf32>
    %8 = arith.mulf %2, %7 : vector<4x584xf32>
    %c0_7 = arith.constant 0 : index
    %c0_8 = arith.constant 0 : index
    %c0_9 = arith.constant 0 : index
    %9 = vector.load %arg4[%c0_7, %c0_8, %c0_9] : memref<4x4x1xf32, #tpu.memory_space<vmem>>, vector<1x4x1xf32>
    %10 = vector.shape_cast %9 : vector<1x4x1xf32> to vector<4x1xf32>
    %11 = vector.broadcast %10 : vector<4x1xf32> to vector<4x584xf32>
    %12 = arith.addf %8, %11 : vector<4x584xf32>
    %cst_10 = arith.constant 0.000000e+00 : f32
    %13 = vector.broadcast %cst_10 : f32 to vector<4x584xf32>
    %14 = arith.maximumf %12, %13 : vector<4x584xf32>
    %15 = vector.broadcast %3 : vector<1x584xf32> to vector<4x584xf32>
    %16 = arith.mulf %14, %15 : vector<4x584xf32>
    %17 = arith.truncf %16 : vector<4x584xf32> to vector<4x584xbf16>
    %18 = vector.extract_strided_slice %17 {offsets = [0, 75], sizes = [4, 384], strides = [1, 1]} : vector<4x584xbf16> to vector<4x384xbf16>
    %c0_11 = arith.constant 0 : index
    %c0_12 = arith.constant 0 : index
    %c0_13 = arith.constant 0 : index
    %19 = vector.load %arg5[%c0_11, %c0_12, %c0_13] : memref<36x4x4xbf16, #tpu.memory_space<vmem>>, vector<1x4x4xbf16>
    %20 = vector.shape_cast %19 : vector<1x4x4xbf16> to vector<4x4xbf16>
    %cst_14 = arith.constant dense<0.000000e+00> : vector<4x384xf32>
    %21 = tpu.matmul %20, %18, %cst_14 {dimension_numbers = #tpu.dot_dimension_numbers<[1], [0], [0], [1], [0, 0, 1, 1], [], []>} : vector<4x4xbf16>, vector<4x384xbf16>, vector<4x384xf32> -> vector<4x384xf32>
    %22 = arith.addf %4, %21 : vector<4x384xf32>
    %23 = vector.extract_strided_slice %17 {offsets = [0, 76], sizes = [4, 384], strides = [1, 1]} : vector<4x584xbf16> to vector<4x384xbf16>
    %c1 = arith.constant 1 : index
    %c0_15 = arith.constant 0 : index
    %c0_16 = arith.constant 0 : index
    %24 = vector.load %arg5[%c1, %c0_15, %c0_16] : memref<36x4x4xbf16, #tpu.memory_space<vmem>>, vector<1x4x4xbf16>
    %25 = vector.shape_cast %24 : vector<1x4x4xbf16> to vector<4x4xbf16>
    %cst_17 = arith.constant dense<0.000000e+00> : vector<4x384xf32>
    %26 = tpu.matmul %25, %23, %cst_17 {dimension_numbers = #tpu.dot_dimension_numbers<[1], [0], [0], [1], [0, 0, 1, 1], [], []>} : vector<4x4xbf16>, vector<4x384xbf16>, vector<4x384xf32> -> vector<4x384xf32>
    %27 = arith.addf %22, %26 : vector<4x384xf32>
    %28 = vector.extract_strided_slice %17 {offsets = [0, 77], sizes = [4, 384], strides = [1, 1]} : vector<4x584xbf16> to vector<4x384xbf16>
    %c2 = arith.constant 2 : index
    %c0_18 = arith.constant 0 : index
    %c0_19 = arith.constant 0 : index
    %29 = vector.load %arg5[%c2, %c0_18, %c0_19] : memref<36x4x4xbf16, #tpu.memory_space<vmem>>, vector<1x4x4xbf16>
    %30 = vector.shape_cast %29 : vector<1x4x4xbf16> to vector<4x4xbf16>
    %cst_20 = arith.constant dense<0.000000e+00> : vector<4x384xf32>
    %31 = tpu.matmul %30, %28, %cst_20 {dimension_numbers = #tpu.dot_dimension_numbers<[1], [0], [0], [1], [0, 0, 1, 1], [], []>} : vector<4x4xbf16>, vector<4x384xbf16>, vector<4x384xf32> -> vector<4x384xf32>
    %32 = arith.addf %27, %31 : vector<4x384xf32>
    %33 = vector.extract_strided_slice %17 {offsets = [0, 99], sizes = [4, 384], strides = [1, 1]} : vector<4x584xbf16> to vector<4x384xbf16>
    %c3 = arith.constant 3 : index
    %c0_21 = arith.constant 0 : index
    %c0_22 = arith.constant 0 : index
    %34 = vector.load %arg5[%c3, %c0_21, %c0_22] : memref<36x4x4xbf16, #tpu.memory_space<vmem>>, vector<1x4x4xbf16>
    %35 = vector.shape_cast %34 : vector<1x4x4xbf16> to vector<4x4xbf16>
    %cst_23 = arith.constant dense<0.000000e+00> : vector<4x384xf32>
    %36 = tpu.matmul %35, %33, %cst_23 {dimension_numbers = #tpu.dot_dimension_numbers<[1], [0], [0], [1], [0, 0, 1, 1], [], []>} : vector<4x4xbf16>, vector<4x384xbf16>, vector<4x384xf32> -> vector<4x384xf32>
    %37 = arith.addf %32, %36 : vector<4x384xf32>
    %38 = vector.extract_strided_slice %17 {offsets = [0, 100], sizes = [4, 384], strides = [1, 1]} : vector<4x584xbf16> to vector<4x384xbf16>
    %c4 = arith.constant 4 : index
    %c0_24 = arith.constant 0 : index
    %c0_25 = arith.constant 0 : index
    %39 = vector.load %arg5[%c4, %c0_24, %c0_25] : memref<36x4x4xbf16, #tpu.memory_space<vmem>>, vector<1x4x4xbf16>
    %40 = vector.shape_cast %39 : vector<1x4x4xbf16> to vector<4x4xbf16>
    %cst_26 = arith.constant dense<0.000000e+00> : vector<4x384xf32>
    %41 = tpu.matmul %40, %38, %cst_26 {dimension_numbers = #tpu.dot_dimension_numbers<[1], [0], [0], [1], [0, 0, 1, 1], [], []>} : vector<4x4xbf16>, vector<4x384xbf16>, vector<4x384xf32> -> vector<4x384xf32>
    %42 = arith.addf %37, %41 : vector<4x384xf32>
    %43 = vector.extract_strided_slice %17 {offsets = [0, 101], sizes = [4, 384], strides = [1, 1]} : vector<4x584xbf16> to vector<4x384xbf16>
    %c5 = arith.constant 5 : index
    %c0_27 = arith.constant 0 : index
    %c0_28 = arith.constant 0 : index
    %44 = vector.load %arg5[%c5, %c0_27, %c0_28] : memref<36x4x4xbf16, #tpu.memory_space<vmem>>, vector<1x4x4xbf16>
    %45 = vector.shape_cast %44 : vector<1x4x4xbf16> to vector<4x4xbf16>
    %cst_29 = arith.constant dense<0.000000e+00> : vector<4x384xf32>
    %46 = tpu.matmul %45, %43, %cst_29 {dimension_numbers = #tpu.dot_dimension_numbers<[1], [0], [0], [1], [0, 0, 1, 1], [], []>} : vector<4x4xbf16>, vector<4x384xbf16>, vector<4x384xf32> -> vector<4x384xf32>
    %47 = arith.addf %42, %46 : vector<4x384xf32>
    %48 = vector.extract_strided_slice %17 {offsets = [0, 123], sizes = [4, 384], strides = [1, 1]} : vector<4x584xbf16> to vector<4x384xbf16>
    %c6 = arith.constant 6 : index
    %c0_30 = arith.constant 0 : index
    %c0_31 = arith.constant 0 : index
    %49 = vector.load %arg5[%c6, %c0_30, %c0_31] : memref<36x4x4xbf16, #tpu.memory_space<vmem>>, vector<1x4x4xbf16>
    %50 = vector.shape_cast %49 : vector<1x4x4xbf16> to vector<4x4xbf16>
    %cst_32 = arith.constant dense<0.000000e+00> : vector<4x384xf32>
    %51 = tpu.matmul %50, %48, %cst_32 {dimension_numbers = #tpu.dot_dimension_numbers<[1], [0], [0], [1], [0, 0, 1, 1], [], []>} : vector<4x4xbf16>, vector<4x384xbf16>, vector<4x384xf32> -> vector<4x384xf32>
    %52 = arith.addf %47, %51 : vector<4x384xf32>
    %53 = vector.extract_strided_slice %17 {offsets = [0, 124], sizes = [4, 384], strides = [1, 1]} : vector<4x584xbf16> to vector<4x384xbf16>
    %c7 = arith.constant 7 : index
    %c0_33 = arith.constant 0 : index
    %c0_34 = arith.constant 0 : index
    %54 = vector.load %arg5[%c7, %c0_33, %c0_34] : memref<36x4x4xbf16, #tpu.memory_space<vmem>>, vector<1x4x4xbf16>
    %55 = vector.shape_cast %54 : vector<1x4x4xbf16> to vector<4x4xbf16>
    %cst_35 = arith.constant dense<0.000000e+00> : vector<4x384xf32>
    %56 = tpu.matmul %55, %53, %cst_35 {dimension_numbers = #tpu.dot_dimension_numbers<[1], [0], [0], [1], [0, 0, 1, 1], [], []>} : vector<4x4xbf16>, vector<4x384xbf16>, vector<4x384xf32> -> vector<4x384xf32>
    %57 = arith.addf %52, %56 : vector<4x384xf32>
    %58 = vector.extract_strided_slice %17 {offsets = [0, 125], sizes = [4, 384], strides = [1, 1]} : vector<4x584xbf16> to vector<4x384xbf16>
    %c8 = arith.constant 8 : index
    %c0_36 = arith.constant 0 : index
    %c0_37 = arith.constant 0 : index
    %59 = vector.load %arg5[%c8, %c0_36, %c0_37] : memref<36x4x4xbf16, #tpu.memory_space<vmem>>, vector<1x4x4xbf16>
    %60 = vector.shape_cast %59 : vector<1x4x4xbf16> to vector<4x4xbf16>
    %cst_38 = arith.constant dense<0.000000e+00> : vector<4x384xf32>
    %61 = tpu.matmul %60, %58, %cst_38 {dimension_numbers = #tpu.dot_dimension_numbers<[1], [0], [0], [1], [0, 0, 1, 1], [], []>} : vector<4x4xbf16>, vector<4x384xbf16>, vector<4x384xf32> -> vector<4x384xf32>
    %62 = arith.addf %57, %61 : vector<4x384xf32>
    %c1_39 = arith.constant 1 : index
    %c0_40 = arith.constant 0 : index
    %c0_41 = arith.constant 0 : index
    %63 = vector.load %arg3[%c1_39, %c0_40, %c0_41] : memref<4x4x1xf32, #tpu.memory_space<vmem>>, vector<1x4x1xf32>
    %64 = vector.shape_cast %63 : vector<1x4x1xf32> to vector<4x1xf32>
    %65 = vector.broadcast %64 : vector<4x1xf32> to vector<4x584xf32>
    %66 = arith.mulf %2, %65 : vector<4x584xf32>
    %c1_42 = arith.constant 1 : index
    %c0_43 = arith.constant 0 : index
    %c0_44 = arith.constant 0 : index
    %67 = vector.load %arg4[%c1_42, %c0_43, %c0_44] : memref<4x4x1xf32, #tpu.memory_space<vmem>>, vector<1x4x1xf32>
    %68 = vector.shape_cast %67 : vector<1x4x1xf32> to vector<4x1xf32>
    %69 = vector.broadcast %68 : vector<4x1xf32> to vector<4x584xf32>
    %70 = arith.addf %66, %69 : vector<4x584xf32>
    %cst_45 = arith.constant 0.000000e+00 : f32
    %71 = vector.broadcast %cst_45 : f32 to vector<4x584xf32>
    %72 = arith.maximumf %70, %71 : vector<4x584xf32>
    %73 = vector.broadcast %3 : vector<1x584xf32> to vector<4x584xf32>
    %74 = arith.mulf %72, %73 : vector<4x584xf32>
    %75 = arith.truncf %74 : vector<4x584xf32> to vector<4x584xbf16>
    %76 = vector.extract_strided_slice %75 {offsets = [0, 50], sizes = [4, 384], strides = [1, 1]} : vector<4x584xbf16> to vector<4x384xbf16>
    %c9 = arith.constant 9 : index
    %c0_46 = arith.constant 0 : index
    %c0_47 = arith.constant 0 : index
    %77 = vector.load %arg5[%c9, %c0_46, %c0_47] : memref<36x4x4xbf16, #tpu.memory_space<vmem>>, vector<1x4x4xbf16>
    %78 = vector.shape_cast %77 : vector<1x4x4xbf16> to vector<4x4xbf16>
    %cst_48 = arith.constant dense<0.000000e+00> : vector<4x384xf32>
    %79 = tpu.matmul %78, %76, %cst_48 {dimension_numbers = #tpu.dot_dimension_numbers<[1], [0], [0], [1], [0, 0, 1, 1], [], []>} : vector<4x4xbf16>, vector<4x384xbf16>, vector<4x384xf32> -> vector<4x384xf32>
    %80 = arith.addf %62, %79 : vector<4x384xf32>
    %81 = vector.extract_strided_slice %75 {offsets = [0, 52], sizes = [4, 384], strides = [1, 1]} : vector<4x584xbf16> to vector<4x384xbf16>
    %c10 = arith.constant 10 : index
    %c0_49 = arith.constant 0 : index
    %c0_50 = arith.constant 0 : index
    %82 = vector.load %arg5[%c10, %c0_49, %c0_50] : memref<36x4x4xbf16, #tpu.memory_space<vmem>>, vector<1x4x4xbf16>
    %83 = vector.shape_cast %82 : vector<1x4x4xbf16> to vector<4x4xbf16>
    %cst_51 = arith.constant dense<0.000000e+00> : vector<4x384xf32>
    %84 = tpu.matmul %83, %81, %cst_51 {dimension_numbers = #tpu.dot_dimension_numbers<[1], [0], [0], [1], [0, 0, 1, 1], [], []>} : vector<4x4xbf16>, vector<4x384xbf16>, vector<4x384xf32> -> vector<4x384xf32>
    %85 = arith.addf %80, %84 : vector<4x384xf32>
    %86 = vector.extract_strided_slice %75 {offsets = [0, 54], sizes = [4, 384], strides = [1, 1]} : vector<4x584xbf16> to vector<4x384xbf16>
    %c11 = arith.constant 11 : index
    %c0_52 = arith.constant 0 : index
    %c0_53 = arith.constant 0 : index
    %87 = vector.load %arg5[%c11, %c0_52, %c0_53] : memref<36x4x4xbf16, #tpu.memory_space<vmem>>, vector<1x4x4xbf16>
    %88 = vector.shape_cast %87 : vector<1x4x4xbf16> to vector<4x4xbf16>
    %cst_54 = arith.constant dense<0.000000e+00> : vector<4x384xf32>
    %89 = tpu.matmul %88, %86, %cst_54 {dimension_numbers = #tpu.dot_dimension_numbers<[1], [0], [0], [1], [0, 0, 1, 1], [], []>} : vector<4x4xbf16>, vector<4x384xbf16>, vector<4x384xf32> -> vector<4x384xf32>
    %90 = arith.addf %85, %89 : vector<4x384xf32>
    %91 = vector.extract_strided_slice %75 {offsets = [0, 98], sizes = [4, 384], strides = [1, 1]} : vector<4x584xbf16> to vector<4x384xbf16>
    %c12 = arith.constant 12 : index
    %c0_55 = arith.constant 0 : index
    %c0_56 = arith.constant 0 : index
    %92 = vector.load %arg5[%c12, %c0_55, %c0_56] : memref<36x4x4xbf16, #tpu.memory_space<vmem>>, vector<1x4x4xbf16>
    %93 = vector.shape_cast %92 : vector<1x4x4xbf16> to vector<4x4xbf16>
    %cst_57 = arith.constant dense<0.000000e+00> : vector<4x384xf32>
    %94 = tpu.matmul %93, %91, %cst_57 {dimension_numbers = #tpu.dot_dimension_numbers<[1], [0], [0], [1], [0, 0, 1, 1], [], []>} : vector<4x4xbf16>, vector<4x384xbf16>, vector<4x384xf32> -> vector<4x384xf32>
    %95 = arith.addf %90, %94 : vector<4x384xf32>
    %96 = vector.extract_strided_slice %75 {offsets = [0, 100], sizes = [4, 384], strides = [1, 1]} : vector<4x584xbf16> to vector<4x384xbf16>
    %c13 = arith.constant 13 : index
    %c0_58 = arith.constant 0 : index
    %c0_59 = arith.constant 0 : index
    %97 = vector.load %arg5[%c13, %c0_58, %c0_59] : memref<36x4x4xbf16, #tpu.memory_space<vmem>>, vector<1x4x4xbf16>
    %98 = vector.shape_cast %97 : vector<1x4x4xbf16> to vector<4x4xbf16>
    %cst_60 = arith.constant dense<0.000000e+00> : vector<4x384xf32>
    %99 = tpu.matmul %98, %96, %cst_60 {dimension_numbers = #tpu.dot_dimension_numbers<[1], [0], [0], [1], [0, 0, 1, 1], [], []>} : vector<4x4xbf16>, vector<4x384xbf16>, vector<4x384xf32> -> vector<4x384xf32>
    %100 = arith.addf %95, %99 : vector<4x384xf32>
    %101 = vector.extract_strided_slice %75 {offsets = [0, 102], sizes = [4, 384], strides = [1, 1]} : vector<4x584xbf16> to vector<4x384xbf16>
    %c14 = arith.constant 14 : index
    %c0_61 = arith.constant 0 : index
    %c0_62 = arith.constant 0 : index
    %102 = vector.load %arg5[%c14, %c0_61, %c0_62] : memref<36x4x4xbf16, #tpu.memory_space<vmem>>, vector<1x4x4xbf16>
    %103 = vector.shape_cast %102 : vector<1x4x4xbf16> to vector<4x4xbf16>
    %cst_63 = arith.constant dense<0.000000e+00> : vector<4x384xf32>
    %104 = tpu.matmul %103, %101, %cst_63 {dimension_numbers = #tpu.dot_dimension_numbers<[1], [0], [0], [1], [0, 0, 1, 1], [], []>} : vector<4x4xbf16>, vector<4x384xbf16>, vector<4x384xf32> -> vector<4x384xf32>
    %105 = arith.addf %100, %104 : vector<4x384xf32>
    %106 = vector.extract_strided_slice %75 {offsets = [0, 146], sizes = [4, 384], strides = [1, 1]} : vector<4x584xbf16> to vector<4x384xbf16>
    %c15 = arith.constant 15 : index
    %c0_64 = arith.constant 0 : index
    %c0_65 = arith.constant 0 : index
    %107 = vector.load %arg5[%c15, %c0_64, %c0_65] : memref<36x4x4xbf16, #tpu.memory_space<vmem>>, vector<1x4x4xbf16>
    %108 = vector.shape_cast %107 : vector<1x4x4xbf16> to vector<4x4xbf16>
    %cst_66 = arith.constant dense<0.000000e+00> : vector<4x384xf32>
    %109 = tpu.matmul %108, %106, %cst_66 {dimension_numbers = #tpu.dot_dimension_numbers<[1], [0], [0], [1], [0, 0, 1, 1], [], []>} : vector<4x4xbf16>, vector<4x384xbf16>, vector<4x384xf32> -> vector<4x384xf32>
    %110 = arith.addf %105, %109 : vector<4x384xf32>
    %111 = vector.extract_strided_slice %75 {offsets = [0, 148], sizes = [4, 384], strides = [1, 1]} : vector<4x584xbf16> to vector<4x384xbf16>
    %c16 = arith.constant 16 : index
    %c0_67 = arith.constant 0 : index
    %c0_68 = arith.constant 0 : index
    %112 = vector.load %arg5[%c16, %c0_67, %c0_68] : memref<36x4x4xbf16, #tpu.memory_space<vmem>>, vector<1x4x4xbf16>
    %113 = vector.shape_cast %112 : vector<1x4x4xbf16> to vector<4x4xbf16>
    %cst_69 = arith.constant dense<0.000000e+00> : vector<4x384xf32>
    %114 = tpu.matmul %113, %111, %cst_69 {dimension_numbers = #tpu.dot_dimension_numbers<[1], [0], [0], [1], [0, 0, 1, 1], [], []>} : vector<4x4xbf16>, vector<4x384xbf16>, vector<4x384xf32> -> vector<4x384xf32>
    %115 = arith.addf %110, %114 : vector<4x384xf32>
    %116 = vector.extract_strided_slice %75 {offsets = [0, 150], sizes = [4, 384], strides = [1, 1]} : vector<4x584xbf16> to vector<4x384xbf16>
    %c17 = arith.constant 17 : index
    %c0_70 = arith.constant 0 : index
    %c0_71 = arith.constant 0 : index
    %117 = vector.load %arg5[%c17, %c0_70, %c0_71] : memref<36x4x4xbf16, #tpu.memory_space<vmem>>, vector<1x4x4xbf16>
    %118 = vector.shape_cast %117 : vector<1x4x4xbf16> to vector<4x4xbf16>
    %cst_72 = arith.constant dense<0.000000e+00> : vector<4x384xf32>
    %119 = tpu.matmul %118, %116, %cst_72 {dimension_numbers = #tpu.dot_dimension_numbers<[1], [0], [0], [1], [0, 0, 1, 1], [], []>} : vector<4x4xbf16>, vector<4x384xbf16>, vector<4x384xf32> -> vector<4x384xf32>
    %120 = arith.addf %115, %119 : vector<4x384xf32>
    %c2_73 = arith.constant 2 : index
    %c0_74 = arith.constant 0 : index
    %c0_75 = arith.constant 0 : index
    %121 = vector.load %arg3[%c2_73, %c0_74, %c0_75] : memref<4x4x1xf32, #tpu.memory_space<vmem>>, vector<1x4x1xf32>
    %122 = vector.shape_cast %121 : vector<1x4x1xf32> to vector<4x1xf32>
    %123 = vector.broadcast %122 : vector<4x1xf32> to vector<4x584xf32>
    %124 = arith.mulf %2, %123 : vector<4x584xf32>
    %c2_76 = arith.constant 2 : index
    %c0_77 = arith.constant 0 : index
    %c0_78 = arith.constant 0 : index
    %125 = vector.load %arg4[%c2_76, %c0_77, %c0_78] : memref<4x4x1xf32, #tpu.memory_space<vmem>>, vector<1x4x1xf32>
    %126 = vector.shape_cast %125 : vector<1x4x1xf32> to vector<4x1xf32>
    %127 = vector.broadcast %126 : vector<4x1xf32> to vector<4x584xf32>
    %128 = arith.addf %124, %127 : vector<4x584xf32>
    %cst_79 = arith.constant 0.000000e+00 : f32
    %129 = vector.broadcast %cst_79 : f32 to vector<4x584xf32>
    %130 = arith.maximumf %128, %129 : vector<4x584xf32>
    %131 = vector.broadcast %3 : vector<1x584xf32> to vector<4x584xf32>
    %132 = arith.mulf %130, %131 : vector<4x584xf32>
    %133 = arith.truncf %132 : vector<4x584xf32> to vector<4x584xbf16>
    %134 = vector.extract_strided_slice %133 {offsets = [0, 25], sizes = [4, 384], strides = [1, 1]} : vector<4x584xbf16> to vector<4x384xbf16>
    %c18 = arith.constant 18 : index
    %c0_80 = arith.constant 0 : index
    %c0_81 = arith.constant 0 : index
    %135 = vector.load %arg5[%c18, %c0_80, %c0_81] : memref<36x4x4xbf16, #tpu.memory_space<vmem>>, vector<1x4x4xbf16>
    %136 = vector.shape_cast %135 : vector<1x4x4xbf16> to vector<4x4xbf16>
    %cst_82 = arith.constant dense<0.000000e+00> : vector<4x384xf32>
    %137 = tpu.matmul %136, %134, %cst_82 {dimension_numbers = #tpu.dot_dimension_numbers<[1], [0], [0], [1], [0, 0, 1, 1], [], []>} : vector<4x4xbf16>, vector<4x384xbf16>, vector<4x384xf32> -> vector<4x384xf32>
    %138 = arith.addf %120, %137 : vector<4x384xf32>
    %139 = vector.extract_strided_slice %133 {offsets = [0, 28], sizes = [4, 384], strides = [1, 1]} : vector<4x584xbf16> to vector<4x384xbf16>
    %c19 = arith.constant 19 : index
    %c0_83 = arith.constant 0 : index
    %c0_84 = arith.constant 0 : index
    %140 = vector.load %arg5[%c19, %c0_83, %c0_84] : memref<36x4x4xbf16, #tpu.memory_space<vmem>>, vector<1x4x4xbf16>
    %141 = vector.shape_cast %140 : vector<1x4x4xbf16> to vector<4x4xbf16>
    %cst_85 = arith.constant dense<0.000000e+00> : vector<4x384xf32>
    %142 = tpu.matmul %141, %139, %cst_85 {dimension_numbers = #tpu.dot_dimension_numbers<[1], [0], [0], [1], [0, 0, 1, 1], [], []>} : vector<4x4xbf16>, vector<4x384xbf16>, vector<4x384xf32> -> vector<4x384xf32>
    %143 = arith.addf %138, %142 : vector<4x384xf32>
    %144 = vector.extract_strided_slice %133 {offsets = [0, 31], sizes = [4, 384], strides = [1, 1]} : vector<4x584xbf16> to vector<4x384xbf16>
    %c20 = arith.constant 20 : index
    %c0_86 = arith.constant 0 : index
    %c0_87 = arith.constant 0 : index
    %145 = vector.load %arg5[%c20, %c0_86, %c0_87] : memref<36x4x4xbf16, #tpu.memory_space<vmem>>, vector<1x4x4xbf16>
    %146 = vector.shape_cast %145 : vector<1x4x4xbf16> to vector<4x4xbf16>
    %cst_88 = arith.constant dense<0.000000e+00> : vector<4x384xf32>
    %147 = tpu.matmul %146, %144, %cst_88 {dimension_numbers = #tpu.dot_dimension_numbers<[1], [0], [0], [1], [0, 0, 1, 1], [], []>} : vector<4x4xbf16>, vector<4x384xbf16>, vector<4x384xf32> -> vector<4x384xf32>
    %148 = arith.addf %143, %147 : vector<4x384xf32>
    %149 = vector.extract_strided_slice %133 {offsets = [0, 97], sizes = [4, 384], strides = [1, 1]} : vector<4x584xbf16> to vector<4x384xbf16>
    %c21 = arith.constant 21 : index
    %c0_89 = arith.constant 0 : index
    %c0_90 = arith.constant 0 : index
    %150 = vector.load %arg5[%c21, %c0_89, %c0_90] : memref<36x4x4xbf16, #tpu.memory_space<vmem>>, vector<1x4x4xbf16>
    %151 = vector.shape_cast %150 : vector<1x4x4xbf16> to vector<4x4xbf16>
    %cst_91 = arith.constant dense<0.000000e+00> : vector<4x384xf32>
    %152 = tpu.matmul %151, %149, %cst_91 {dimension_numbers = #tpu.dot_dimension_numbers<[1], [0], [0], [1], [0, 0, 1, 1], [], []>} : vector<4x4xbf16>, vector<4x384xbf16>, vector<4x384xf32> -> vector<4x384xf32>
    %153 = arith.addf %148, %152 : vector<4x384xf32>
    %154 = vector.extract_strided_slice %133 {offsets = [0, 100], sizes = [4, 384], strides = [1, 1]} : vector<4x584xbf16> to vector<4x384xbf16>
    %c22 = arith.constant 22 : index
    %c0_92 = arith.constant 0 : index
    %c0_93 = arith.constant 0 : index
    %155 = vector.load %arg5[%c22, %c0_92, %c0_93] : memref<36x4x4xbf16, #tpu.memory_space<vmem>>, vector<1x4x4xbf16>
    %156 = vector.shape_cast %155 : vector<1x4x4xbf16> to vector<4x4xbf16>
    %cst_94 = arith.constant dense<0.000000e+00> : vector<4x384xf32>
    %157 = tpu.matmul %156, %154, %cst_94 {dimension_numbers = #tpu.dot_dimension_numbers<[1], [0], [0], [1], [0, 0, 1, 1], [], []>} : vector<4x4xbf16>, vector<4x384xbf16>, vector<4x384xf32> -> vector<4x384xf32>
    %158 = arith.addf %153, %157 : vector<4x384xf32>
    %159 = vector.extract_strided_slice %133 {offsets = [0, 103], sizes = [4, 384], strides = [1, 1]} : vector<4x584xbf16> to vector<4x384xbf16>
    %c23 = arith.constant 23 : index
    %c0_95 = arith.constant 0 : index
    %c0_96 = arith.constant 0 : index
    %160 = vector.load %arg5[%c23, %c0_95, %c0_96] : memref<36x4x4xbf16, #tpu.memory_space<vmem>>, vector<1x4x4xbf16>
    %161 = vector.shape_cast %160 : vector<1x4x4xbf16> to vector<4x4xbf16>
    %cst_97 = arith.constant dense<0.000000e+00> : vector<4x384xf32>
    %162 = tpu.matmul %161, %159, %cst_97 {dimension_numbers = #tpu.dot_dimension_numbers<[1], [0], [0], [1], [0, 0, 1, 1], [], []>} : vector<4x4xbf16>, vector<4x384xbf16>, vector<4x384xf32> -> vector<4x384xf32>
    %163 = arith.addf %158, %162 : vector<4x384xf32>
    %164 = vector.extract_strided_slice %133 {offsets = [0, 169], sizes = [4, 384], strides = [1, 1]} : vector<4x584xbf16> to vector<4x384xbf16>
    %c24 = arith.constant 24 : index
    %c0_98 = arith.constant 0 : index
    %c0_99 = arith.constant 0 : index
    %165 = vector.load %arg5[%c24, %c0_98, %c0_99] : memref<36x4x4xbf16, #tpu.memory_space<vmem>>, vector<1x4x4xbf16>
    %166 = vector.shape_cast %165 : vector<1x4x4xbf16> to vector<4x4xbf16>
    %cst_100 = arith.constant dense<0.000000e+00> : vector<4x384xf32>
    %167 = tpu.matmul %166, %164, %cst_100 {dimension_numbers = #tpu.dot_dimension_numbers<[1], [0], [0], [1], [0, 0, 1, 1], [], []>} : vector<4x4xbf16>, vector<4x384xbf16>, vector<4x384xf32> -> vector<4x384xf32>
    %168 = arith.addf %163, %167 : vector<4x384xf32>
    %169 = vector.extract_strided_slice %133 {offsets = [0, 172], sizes = [4, 384], strides = [1, 1]} : vector<4x584xbf16> to vector<4x384xbf16>
    %c25 = arith.constant 25 : index
    %c0_101 = arith.constant 0 : index
    %c0_102 = arith.constant 0 : index
    %170 = vector.load %arg5[%c25, %c0_101, %c0_102] : memref<36x4x4xbf16, #tpu.memory_space<vmem>>, vector<1x4x4xbf16>
    %171 = vector.shape_cast %170 : vector<1x4x4xbf16> to vector<4x4xbf16>
    %cst_103 = arith.constant dense<0.000000e+00> : vector<4x384xf32>
    %172 = tpu.matmul %171, %169, %cst_103 {dimension_numbers = #tpu.dot_dimension_numbers<[1], [0], [0], [1], [0, 0, 1, 1], [], []>} : vector<4x4xbf16>, vector<4x384xbf16>, vector<4x384xf32> -> vector<4x384xf32>
    %173 = arith.addf %168, %172 : vector<4x384xf32>
    %174 = vector.extract_strided_slice %133 {offsets = [0, 175], sizes = [4, 384], strides = [1, 1]} : vector<4x584xbf16> to vector<4x384xbf16>
    %c26 = arith.constant 26 : index
    %c0_104 = arith.constant 0 : index
    %c0_105 = arith.constant 0 : index
    %175 = vector.load %arg5[%c26, %c0_104, %c0_105] : memref<36x4x4xbf16, #tpu.memory_space<vmem>>, vector<1x4x4xbf16>
    %176 = vector.shape_cast %175 : vector<1x4x4xbf16> to vector<4x4xbf16>
    %cst_106 = arith.constant dense<0.000000e+00> : vector<4x384xf32>
    %177 = tpu.matmul %176, %174, %cst_106 {dimension_numbers = #tpu.dot_dimension_numbers<[1], [0], [0], [1], [0, 0, 1, 1], [], []>} : vector<4x4xbf16>, vector<4x384xbf16>, vector<4x384xf32> -> vector<4x384xf32>
    %178 = arith.addf %173, %177 : vector<4x384xf32>
    %c3_107 = arith.constant 3 : index
    %c0_108 = arith.constant 0 : index
    %c0_109 = arith.constant 0 : index
    %179 = vector.load %arg3[%c3_107, %c0_108, %c0_109] : memref<4x4x1xf32, #tpu.memory_space<vmem>>, vector<1x4x1xf32>
    %180 = vector.shape_cast %179 : vector<1x4x1xf32> to vector<4x1xf32>
    %181 = vector.broadcast %180 : vector<4x1xf32> to vector<4x584xf32>
    %182 = arith.mulf %2, %181 : vector<4x584xf32>
    %c3_110 = arith.constant 3 : index
    %c0_111 = arith.constant 0 : index
    %c0_112 = arith.constant 0 : index
    %183 = vector.load %arg4[%c3_110, %c0_111, %c0_112] : memref<4x4x1xf32, #tpu.memory_space<vmem>>, vector<1x4x1xf32>
    %184 = vector.shape_cast %183 : vector<1x4x1xf32> to vector<4x1xf32>
    %185 = vector.broadcast %184 : vector<4x1xf32> to vector<4x584xf32>
    %186 = arith.addf %182, %185 : vector<4x584xf32>
    %cst_113 = arith.constant 0.000000e+00 : f32
    %187 = vector.broadcast %cst_113 : f32 to vector<4x584xf32>
    %188 = arith.maximumf %186, %187 : vector<4x584xf32>
    %189 = vector.broadcast %3 : vector<1x584xf32> to vector<4x584xf32>
    %190 = arith.mulf %188, %189 : vector<4x584xf32>
    %191 = arith.truncf %190 : vector<4x584xf32> to vector<4x584xbf16>
    %192 = vector.extract_strided_slice %191 {offsets = [0, 0], sizes = [4, 384], strides = [1, 1]} : vector<4x584xbf16> to vector<4x384xbf16>
    %c27 = arith.constant 27 : index
    %c0_114 = arith.constant 0 : index
    %c0_115 = arith.constant 0 : index
    %193 = vector.load %arg5[%c27, %c0_114, %c0_115] : memref<36x4x4xbf16, #tpu.memory_space<vmem>>, vector<1x4x4xbf16>
    %194 = vector.shape_cast %193 : vector<1x4x4xbf16> to vector<4x4xbf16>
    %cst_116 = arith.constant dense<0.000000e+00> : vector<4x384xf32>
    %195 = tpu.matmul %194, %192, %cst_116 {dimension_numbers = #tpu.dot_dimension_numbers<[1], [0], [0], [1], [0, 0, 1, 1], [], []>} : vector<4x4xbf16>, vector<4x384xbf16>, vector<4x384xf32> -> vector<4x384xf32>
    %196 = arith.addf %178, %195 : vector<4x384xf32>
    %197 = vector.extract_strided_slice %191 {offsets = [0, 4], sizes = [4, 384], strides = [1, 1]} : vector<4x584xbf16> to vector<4x384xbf16>
    %c28 = arith.constant 28 : index
    %c0_117 = arith.constant 0 : index
    %c0_118 = arith.constant 0 : index
    %198 = vector.load %arg5[%c28, %c0_117, %c0_118] : memref<36x4x4xbf16, #tpu.memory_space<vmem>>, vector<1x4x4xbf16>
    %199 = vector.shape_cast %198 : vector<1x4x4xbf16> to vector<4x4xbf16>
    %cst_119 = arith.constant dense<0.000000e+00> : vector<4x384xf32>
    %200 = tpu.matmul %199, %197, %cst_119 {dimension_numbers = #tpu.dot_dimension_numbers<[1], [0], [0], [1], [0, 0, 1, 1], [], []>} : vector<4x4xbf16>, vector<4x384xbf16>, vector<4x384xf32> -> vector<4x384xf32>
    %201 = arith.addf %196, %200 : vector<4x384xf32>
    %202 = vector.extract_strided_slice %191 {offsets = [0, 8], sizes = [4, 384], strides = [1, 1]} : vector<4x584xbf16> to vector<4x384xbf16>
    %c29 = arith.constant 29 : index
    %c0_120 = arith.constant 0 : index
    %c0_121 = arith.constant 0 : index
    %203 = vector.load %arg5[%c29, %c0_120, %c0_121] : memref<36x4x4xbf16, #tpu.memory_space<vmem>>, vector<1x4x4xbf16>
    %204 = vector.shape_cast %203 : vector<1x4x4xbf16> to vector<4x4xbf16>
    %cst_122 = arith.constant dense<0.000000e+00> : vector<4x384xf32>
    %205 = tpu.matmul %204, %202, %cst_122 {dimension_numbers = #tpu.dot_dimension_numbers<[1], [0], [0], [1], [0, 0, 1, 1], [], []>} : vector<4x4xbf16>, vector<4x384xbf16>, vector<4x384xf32> -> vector<4x384xf32>
    %206 = arith.addf %201, %205 : vector<4x384xf32>
    %207 = vector.extract_strided_slice %191 {offsets = [0, 96], sizes = [4, 384], strides = [1, 1]} : vector<4x584xbf16> to vector<4x384xbf16>
    %c30 = arith.constant 30 : index
    %c0_123 = arith.constant 0 : index
    %c0_124 = arith.constant 0 : index
    %208 = vector.load %arg5[%c30, %c0_123, %c0_124] : memref<36x4x4xbf16, #tpu.memory_space<vmem>>, vector<1x4x4xbf16>
    %209 = vector.shape_cast %208 : vector<1x4x4xbf16> to vector<4x4xbf16>
    %cst_125 = arith.constant dense<0.000000e+00> : vector<4x384xf32>
    %210 = tpu.matmul %209, %207, %cst_125 {dimension_numbers = #tpu.dot_dimension_numbers<[1], [0], [0], [1], [0, 0, 1, 1], [], []>} : vector<4x4xbf16>, vector<4x384xbf16>, vector<4x384xf32> -> vector<4x384xf32>
    %211 = arith.addf %206, %210 : vector<4x384xf32>
    %212 = vector.extract_strided_slice %191 {offsets = [0, 100], sizes = [4, 384], strides = [1, 1]} : vector<4x584xbf16> to vector<4x384xbf16>
    %c31 = arith.constant 31 : index
    %c0_126 = arith.constant 0 : index
    %c0_127 = arith.constant 0 : index
    %213 = vector.load %arg5[%c31, %c0_126, %c0_127] : memref<36x4x4xbf16, #tpu.memory_space<vmem>>, vector<1x4x4xbf16>
    %214 = vector.shape_cast %213 : vector<1x4x4xbf16> to vector<4x4xbf16>
    %cst_128 = arith.constant dense<0.000000e+00> : vector<4x384xf32>
    %215 = tpu.matmul %214, %212, %cst_128 {dimension_numbers = #tpu.dot_dimension_numbers<[1], [0], [0], [1], [0, 0, 1, 1], [], []>} : vector<4x4xbf16>, vector<4x384xbf16>, vector<4x384xf32> -> vector<4x384xf32>
    %216 = arith.addf %211, %215 : vector<4x384xf32>
    %217 = vector.extract_strided_slice %191 {offsets = [0, 104], sizes = [4, 384], strides = [1, 1]} : vector<4x584xbf16> to vector<4x384xbf16>
    %c32 = arith.constant 32 : index
    %c0_129 = arith.constant 0 : index
    %c0_130 = arith.constant 0 : index
    %218 = vector.load %arg5[%c32, %c0_129, %c0_130] : memref<36x4x4xbf16, #tpu.memory_space<vmem>>, vector<1x4x4xbf16>
    %219 = vector.shape_cast %218 : vector<1x4x4xbf16> to vector<4x4xbf16>
    %cst_131 = arith.constant dense<0.000000e+00> : vector<4x384xf32>
    %220 = tpu.matmul %219, %217, %cst_131 {dimension_numbers = #tpu.dot_dimension_numbers<[1], [0], [0], [1], [0, 0, 1, 1], [], []>} : vector<4x4xbf16>, vector<4x384xbf16>, vector<4x384xf32> -> vector<4x384xf32>
    %221 = arith.addf %216, %220 : vector<4x384xf32>
    %222 = vector.extract_strided_slice %191 {offsets = [0, 192], sizes = [4, 384], strides = [1, 1]} : vector<4x584xbf16> to vector<4x384xbf16>
    %c33 = arith.constant 33 : index
    %c0_132 = arith.constant 0 : index
    %c0_133 = arith.constant 0 : index
    %223 = vector.load %arg5[%c33, %c0_132, %c0_133] : memref<36x4x4xbf16, #tpu.memory_space<vmem>>, vector<1x4x4xbf16>
    %224 = vector.shape_cast %223 : vector<1x4x4xbf16> to vector<4x4xbf16>
    %cst_134 = arith.constant dense<0.000000e+00> : vector<4x384xf32>
    %225 = tpu.matmul %224, %222, %cst_134 {dimension_numbers = #tpu.dot_dimension_numbers<[1], [0], [0], [1], [0, 0, 1, 1], [], []>} : vector<4x4xbf16>, vector<4x384xbf16>, vector<4x384xf32> -> vector<4x384xf32>
    %226 = arith.addf %221, %225 : vector<4x384xf32>
    %227 = vector.extract_strided_slice %191 {offsets = [0, 196], sizes = [4, 384], strides = [1, 1]} : vector<4x584xbf16> to vector<4x384xbf16>
    %c34 = arith.constant 34 : index
    %c0_135 = arith.constant 0 : index
    %c0_136 = arith.constant 0 : index
    %228 = vector.load %arg5[%c34, %c0_135, %c0_136] : memref<36x4x4xbf16, #tpu.memory_space<vmem>>, vector<1x4x4xbf16>
    %229 = vector.shape_cast %228 : vector<1x4x4xbf16> to vector<4x4xbf16>
    %cst_137 = arith.constant dense<0.000000e+00> : vector<4x384xf32>
    %230 = tpu.matmul %229, %227, %cst_137 {dimension_numbers = #tpu.dot_dimension_numbers<[1], [0], [0], [1], [0, 0, 1, 1], [], []>} : vector<4x4xbf16>, vector<4x384xbf16>, vector<4x384xf32> -> vector<4x384xf32>
    %231 = arith.addf %226, %230 : vector<4x384xf32>
    %232 = vector.extract_strided_slice %191 {offsets = [0, 200], sizes = [4, 384], strides = [1, 1]} : vector<4x584xbf16> to vector<4x384xbf16>
    %c35 = arith.constant 35 : index
    %c0_138 = arith.constant 0 : index
    %c0_139 = arith.constant 0 : index
    %233 = vector.load %arg5[%c35, %c0_138, %c0_139] : memref<36x4x4xbf16, #tpu.memory_space<vmem>>, vector<1x4x4xbf16>
    %234 = vector.shape_cast %233 : vector<1x4x4xbf16> to vector<4x4xbf16>
    %cst_140 = arith.constant dense<0.000000e+00> : vector<4x384xf32>
    %235 = tpu.matmul %234, %232, %cst_140 {dimension_numbers = #tpu.dot_dimension_numbers<[1], [0], [0], [1], [0, 0, 1, 1], [], []>} : vector<4x4xbf16>, vector<4x384xbf16>, vector<4x384xf32> -> vector<4x384xf32>
    %236 = arith.addf %231, %235 : vector<4x384xf32>
    %c0_141 = arith.constant 0 : index
    %c0_142 = arith.constant 0 : index
    %237 = vector.load %arg6[%c0_141, %c0_142] : memref<4x1xf32, #tpu.memory_space<vmem>>, vector<4x1xf32>
    %238 = vector.broadcast %237 : vector<4x1xf32> to vector<4x384xf32>
    %239 = arith.addf %236, %238 : vector<4x384xf32>
    %240 = vector.extract_strided_slice %3 {offsets = [0, 100], sizes = [1, 384], strides = [1, 1]} : vector<1x584xf32> to vector<1x384xf32>
    %241 = vector.broadcast %240 : vector<1x384xf32> to vector<4x384xf32>
    %242 = arith.mulf %239, %241 : vector<4x384xf32>
    %cst_143 = arith.constant dense<0.000000e+00> : vector<4xf32>
    %243 = vector.multi_reduction <add>, %242, %cst_143 [1] : vector<4x384xf32> to vector<4xf32>
    %244 = vector.shape_cast %243 : vector<4xf32> to vector<4x1xf32>
    %c0_144 = arith.constant 0 : index
    %c0_145 = arith.constant 0 : index
    %c0_146 = arith.constant 0 : index
    %245 = vector.load %arg8[%c0_144, %c0_145, %c0_146] : memref<1x4x2xf32, #tpu.memory_space<vmem>>, vector<1x4x1xf32>
    %246 = vector.shape_cast %245 : vector<1x4x1xf32> to vector<4x1xf32>
    %247 = vector.shape_cast %244 : vector<4x1xf32> to vector<1x4x1xf32>
    tpu.vector_store %arg8[%c0_144, %c0_145, %c0_146], %247 {strides = array<i32>} : memref<1x4x2xf32, #tpu.memory_space<vmem>>, vector<1x4x1xf32>,
    %248 = arith.mulf %239, %239 : vector<4x384xf32>
    %249 = vector.broadcast %240 : vector<1x384xf32> to vector<4x384xf32>
    %250 = arith.mulf %248, %249 : vector<4x384xf32>
    %cst_147 = arith.constant dense<0.000000e+00> : vector<4xf32>
    %251 = vector.multi_reduction <add>, %250, %cst_147 [1] : vector<4x384xf32> to vector<4xf32>
    %252 = vector.shape_cast %251 : vector<4xf32> to vector<4x1xf32>
    %c0_148 = arith.constant 0 : index
    %c0_149 = arith.constant 0 : index
    %c1_150 = arith.constant 1 : index
    %253 = vector.load %arg8[%c0_148, %c0_149, %c1_150] : memref<1x4x2xf32, #tpu.memory_space<vmem>>, vector<1x4x1xf32>
    %254 = vector.shape_cast %253 : vector<1x4x1xf32> to vector<4x1xf32>
    %255 = vector.shape_cast %252 : vector<4x1xf32> to vector<1x4x1xf32>
    tpu.vector_store %arg8[%c0_148, %c0_149, %c1_150], %255 {strides = array<i32>} : memref<1x4x2xf32, #tpu.memory_space<vmem>>, vector<1x4x1xf32>,
    %256 = arith.truncf %239 : vector<4x384xf32> to vector<4x384xbf16>
    %257 = vector.extract_strided_slice %256 {offsets = [0, 4], sizes = [4, 16], strides = [1, 1]} : vector<4x384xbf16> to vector<4x16xbf16>
    %c0_151 = arith.constant 0 : index
    %c0_152 = arith.constant 0 : index
    %c0_153 = arith.constant 0 : index
    %258 = vector.load %arg7[%c0_151, %c0_152, %c0_153] : memref<1x4x256xbf16, #tpu.memory_space<vmem>>, vector<1x4x16xbf16>
    %259 = vector.shape_cast %258 : vector<1x4x16xbf16> to vector<4x16xbf16>
    %260 = vector.shape_cast %257 : vector<4x16xbf16> to vector<1x4x16xbf16>
    tpu.vector_store %arg7[%c0_151, %c0_152, %c0_153], %260 {strides = array<i32>} : memref<1x4x256xbf16, #tpu.memory_space<vmem>>, vector<1x4x16xbf16>,
    %261 = vector.extract_strided_slice %256 {offsets = [0, 28], sizes = [4, 16], strides = [1, 1]} : vector<4x384xbf16> to vector<4x16xbf16>
    %c0_154 = arith.constant 0 : index
    %c0_155 = arith.constant 0 : index
    %c16_156 = arith.constant 16 : index
    %262 = vector.load %arg7[%c0_154, %c0_155, %c16_156] : memref<1x4x256xbf16, #tpu.memory_space<vmem>>, vector<1x4x16xbf16>
    %263 = vector.shape_cast %262 : vector<1x4x16xbf16> to vector<4x16xbf16>
    %264 = vector.shape_cast %261 : vector<4x16xbf16> to vector<1x4x16xbf16>
    tpu.vector_store %arg7[%c0_154, %c0_155, %c16_156], %264 {strides = array<i32>} : memref<1x4x256xbf16, #tpu.memory_space<vmem>>, vector<1x4x16xbf16>,
    %265 = vector.extract_strided_slice %256 {offsets = [0, 52], sizes = [4, 16], strides = [1, 1]} : vector<4x384xbf16> to vector<4x16xbf16>
    %c0_157 = arith.constant 0 : index
    %c0_158 = arith.constant 0 : index
    %c32_159 = arith.constant 32 : index
    %266 = vector.load %arg7[%c0_157, %c0_158, %c32_159] : memref<1x4x256xbf16, #tpu.memory_space<vmem>>, vector<1x4x16xbf16>
    %267 = vector.shape_cast %266 : vector<1x4x16xbf16> to vector<4x16xbf16>
    %268 = vector.shape_cast %265 : vector<4x16xbf16> to vector<1x4x16xbf16>
    tpu.vector_store %arg7[%c0_157, %c0_158, %c32_159], %268 {strides = array<i32>} : memref<1x4x256xbf16, #tpu.memory_space<vmem>>, vector<1x4x16xbf16>,
    %269 = vector.extract_strided_slice %256 {offsets = [0, 76], sizes = [4, 16], strides = [1, 1]} : vector<4x384xbf16> to vector<4x16xbf16>
    %c0_160 = arith.constant 0 : index
    %c0_161 = arith.constant 0 : index
    %c48 = arith.constant 48 : index
    %270 = vector.load %arg7[%c0_160, %c0_161, %c48] : memref<1x4x256xbf16, #tpu.memory_space<vmem>>, vector<1x4x16xbf16>
    %271 = vector.shape_cast %270 : vector<1x4x16xbf16> to vector<4x16xbf16>
    %272 = vector.shape_cast %269 : vector<4x16xbf16> to vector<1x4x16xbf16>
    tpu.vector_store %arg7[%c0_160, %c0_161, %c48], %272 {strides = array<i32>} : memref<1x4x256xbf16, #tpu.memory_space<vmem>>, vector<1x4x16xbf16>,
    %273 = vector.extract_strided_slice %256 {offsets = [0, 100], sizes = [4, 16], strides = [1, 1]} : vector<4x384xbf16> to vector<4x16xbf16>
    %c0_162 = arith.constant 0 : index
    %c0_163 = arith.constant 0 : index
    %c64 = arith.constant 64 : index
    %274 = vector.load %arg7[%c0_162, %c0_163, %c64] : memref<1x4x256xbf16, #tpu.memory_space<vmem>>, vector<1x4x16xbf16>
    %275 = vector.shape_cast %274 : vector<1x4x16xbf16> to vector<4x16xbf16>
    %276 = vector.shape_cast %273 : vector<4x16xbf16> to vector<1x4x16xbf16>
    tpu.vector_store %arg7[%c0_162, %c0_163, %c64], %276 {strides = array<i32>} : memref<1x4x256xbf16, #tpu.memory_space<vmem>>, vector<1x4x16xbf16>,
    %277 = vector.extract_strided_slice %256 {offsets = [0, 124], sizes = [4, 16], strides = [1, 1]} : vector<4x384xbf16> to vector<4x16xbf16>
    %c0_164 = arith.constant 0 : index
    %c0_165 = arith.constant 0 : index
    %c80 = arith.constant 80 : index
    %278 = vector.load %arg7[%c0_164, %c0_165, %c80] : memref<1x4x256xbf16, #tpu.memory_space<vmem>>, vector<1x4x16xbf16>
    %279 = vector.shape_cast %278 : vector<1x4x16xbf16> to vector<4x16xbf16>
    %280 = vector.shape_cast %277 : vector<4x16xbf16> to vector<1x4x16xbf16>
    tpu.vector_store %arg7[%c0_164, %c0_165, %c80], %280 {strides = array<i32>} : memref<1x4x256xbf16, #tpu.memory_space<vmem>>, vector<1x4x16xbf16>,
    %281 = vector.extract_strided_slice %256 {offsets = [0, 148], sizes = [4, 16], strides = [1, 1]} : vector<4x384xbf16> to vector<4x16xbf16>
    %c0_166 = arith.constant 0 : index
    %c0_167 = arith.constant 0 : index
    %c96 = arith.constant 96 : index
    %282 = vector.load %arg7[%c0_166, %c0_167, %c96] : memref<1x4x256xbf16, #tpu.memory_space<vmem>>, vector<1x4x16xbf16>
    %283 = vector.shape_cast %282 : vector<1x4x16xbf16> to vector<4x16xbf16>
    %284 = vector.shape_cast %281 : vector<4x16xbf16> to vector<1x4x16xbf16>
    tpu.vector_store %arg7[%c0_166, %c0_167, %c96], %284 {strides = array<i32>} : memref<1x4x256xbf16, #tpu.memory_space<vmem>>, vector<1x4x16xbf16>,
    %285 = vector.extract_strided_slice %256 {offsets = [0, 172], sizes = [4, 16], strides = [1, 1]} : vector<4x384xbf16> to vector<4x16xbf16>
    %c0_168 = arith.constant 0 : index
    %c0_169 = arith.constant 0 : index
    %c112 = arith.constant 112 : index
    %286 = vector.load %arg7[%c0_168, %c0_169, %c112] : memref<1x4x256xbf16, #tpu.memory_space<vmem>>, vector<1x4x16xbf16>
    %287 = vector.shape_cast %286 : vector<1x4x16xbf16> to vector<4x16xbf16>
    %288 = vector.shape_cast %285 : vector<4x16xbf16> to vector<1x4x16xbf16>
    tpu.vector_store %arg7[%c0_168, %c0_169, %c112], %288 {strides = array<i32>} : memref<1x4x256xbf16, #tpu.memory_space<vmem>>, vector<1x4x16xbf16>,
    %289 = vector.extract_strided_slice %256 {offsets = [0, 196], sizes = [4, 16], strides = [1, 1]} : vector<4x384xbf16> to vector<4x16xbf16>
    %c0_170 = arith.constant 0 : index
    %c0_171 = arith.constant 0 : index
    %c128 = arith.constant 128 : index
    %290 = vector.load %arg7[%c0_170, %c0_171, %c128] : memref<1x4x256xbf16, #tpu.memory_space<vmem>>, vector<1x4x16xbf16>
    %291 = vector.shape_cast %290 : vector<1x4x16xbf16> to vector<4x16xbf16>
    %292 = vector.shape_cast %289 : vector<4x16xbf16> to vector<1x4x16xbf16>
    tpu.vector_store %arg7[%c0_170, %c0_171, %c128], %292 {strides = array<i32>} : memref<1x4x256xbf16, #tpu.memory_space<vmem>>, vector<1x4x16xbf16>,
    %293 = vector.extract_strided_slice %256 {offsets = [0, 220], sizes = [4, 16], strides = [1, 1]} : vector<4x384xbf16> to vector<4x16xbf16>
    %c0_172 = arith.constant 0 : index
    %c0_173 = arith.constant 0 : index
    %c144 = arith.constant 144 : index
    %294 = vector.load %arg7[%c0_172, %c0_173, %c144] : memref<1x4x256xbf16, #tpu.memory_space<vmem>>, vector<1x4x16xbf16>
    %295 = vector.shape_cast %294 : vector<1x4x16xbf16> to vector<4x16xbf16>
    %296 = vector.shape_cast %293 : vector<4x16xbf16> to vector<1x4x16xbf16>
    tpu.vector_store %arg7[%c0_172, %c0_173, %c144], %296 {strides = array<i32>} : memref<1x4x256xbf16, #tpu.memory_space<vmem>>, vector<1x4x16xbf16>,
    %297 = vector.extract_strided_slice %256 {offsets = [0, 244], sizes = [4, 16], strides = [1, 1]} : vector<4x384xbf16> to vector<4x16xbf16>
    %c0_174 = arith.constant 0 : index
    %c0_175 = arith.constant 0 : index
    %c160 = arith.constant 160 : index
    %298 = vector.load %arg7[%c0_174, %c0_175, %c160] : memref<1x4x256xbf16, #tpu.memory_space<vmem>>, vector<1x4x16xbf16>
    %299 = vector.shape_cast %298 : vector<1x4x16xbf16> to vector<4x16xbf16>
    %300 = vector.shape_cast %297 : vector<4x16xbf16> to vector<1x4x16xbf16>
    tpu.vector_store %arg7[%c0_174, %c0_175, %c160], %300 {strides = array<i32>} : memref<1x4x256xbf16, #tpu.memory_space<vmem>>, vector<1x4x16xbf16>,
    %301 = vector.extract_strided_slice %256 {offsets = [0, 268], sizes = [4, 16], strides = [1, 1]} : vector<4x384xbf16> to vector<4x16xbf16>
    %c0_176 = arith.constant 0 : index
    %c0_177 = arith.constant 0 : index
    %c176 = arith.constant 176 : index
    %302 = vector.load %arg7[%c0_176, %c0_177, %c176] : memref<1x4x256xbf16, #tpu.memory_space<vmem>>, vector<1x4x16xbf16>
    %303 = vector.shape_cast %302 : vector<1x4x16xbf16> to vector<4x16xbf16>
    %304 = vector.shape_cast %301 : vector<4x16xbf16> to vector<1x4x16xbf16>
    tpu.vector_store %arg7[%c0_176, %c0_177, %c176], %304 {strides = array<i32>} : memref<1x4x256xbf16, #tpu.memory_space<vmem>>, vector<1x4x16xbf16>,
    %305 = vector.extract_strided_slice %256 {offsets = [0, 292], sizes = [4, 16], strides = [1, 1]} : vector<4x384xbf16> to vector<4x16xbf16>
    %c0_178 = arith.constant 0 : index
    %c0_179 = arith.constant 0 : index
    %c192 = arith.constant 192 : index
    %306 = vector.load %arg7[%c0_178, %c0_179, %c192] : memref<1x4x256xbf16, #tpu.memory_space<vmem>>, vector<1x4x16xbf16>
    %307 = vector.shape_cast %306 : vector<1x4x16xbf16> to vector<4x16xbf16>
    %308 = vector.shape_cast %305 : vector<4x16xbf16> to vector<1x4x16xbf16>
    tpu.vector_store %arg7[%c0_178, %c0_179, %c192], %308 {strides = array<i32>} : memref<1x4x256xbf16, #tpu.memory_space<vmem>>, vector<1x4x16xbf16>,
    %309 = vector.extract_strided_slice %256 {offsets = [0, 316], sizes = [4, 16], strides = [1, 1]} : vector<4x384xbf16> to vector<4x16xbf16>
    %c0_180 = arith.constant 0 : index
    %c0_181 = arith.constant 0 : index
    %c208 = arith.constant 208 : index
    %310 = vector.load %arg7[%c0_180, %c0_181, %c208] : memref<1x4x256xbf16, #tpu.memory_space<vmem>>, vector<1x4x16xbf16>
    %311 = vector.shape_cast %310 : vector<1x4x16xbf16> to vector<4x16xbf16>
    %312 = vector.shape_cast %309 : vector<4x16xbf16> to vector<1x4x16xbf16>
    tpu.vector_store %arg7[%c0_180, %c0_181, %c208], %312 {strides = array<i32>} : memref<1x4x256xbf16, #tpu.memory_space<vmem>>, vector<1x4x16xbf16>,
    %313 = vector.extract_strided_slice %256 {offsets = [0, 340], sizes = [4, 16], strides = [1, 1]} : vector<4x384xbf16> to vector<4x16xbf16>
    %c0_182 = arith.constant 0 : index
    %c0_183 = arith.constant 0 : index
    %c224 = arith.constant 224 : index
    %314 = vector.load %arg7[%c0_182, %c0_183, %c224] : memref<1x4x256xbf16, #tpu.memory_space<vmem>>, vector<1x4x16xbf16>
    %315 = vector.shape_cast %314 : vector<1x4x16xbf16> to vector<4x16xbf16>
    %316 = vector.shape_cast %313 : vector<4x16xbf16> to vector<1x4x16xbf16>
    tpu.vector_store %arg7[%c0_182, %c0_183, %c224], %316 {strides = array<i32>} : memref<1x4x256xbf16, #tpu.memory_space<vmem>>, vector<1x4x16xbf16>,
    %317 = vector.extract_strided_slice %256 {offsets = [0, 364], sizes = [4, 16], strides = [1, 1]} : vector<4x384xbf16> to vector<4x16xbf16>
    %c0_184 = arith.constant 0 : index
    %c0_185 = arith.constant 0 : index
    %c240 = arith.constant 240 : index
    %318 = vector.load %arg7[%c0_184, %c0_185, %c240] : memref<1x4x256xbf16, #tpu.memory_space<vmem>>, vector<1x4x16xbf16>
    %319 = vector.shape_cast %318 : vector<1x4x16xbf16> to vector<4x16xbf16>
    %320 = vector.shape_cast %317 : vector<4x16xbf16> to vector<1x4x16xbf16>
    tpu.vector_store %arg7[%c0_184, %c0_185, %c240], %320 {strides = array<i32>} : memref<1x4x256xbf16, #tpu.memory_space<vmem>>, vector<1x4x16xbf16>,
    return
  }
  func.func @transform_0(%arg0: i32) -> (i32, i32, i32) {
    %c0_i32 = arith.constant 0 : i32
    %c0_i32_0 = arith.constant 0 : i32
    %c0_i32_1 = arith.constant 0 : i32
    return %arg0, %c0_i32, %c0_i32_0 : i32, i32, i32
  }
  func.func @transform_1(%arg0: i32) -> (i32, i32) {
    %c0_i32 = arith.constant 0 : i32
    %c0_i32_0 = arith.constant 0 : i32
    %c0_i32_1 = arith.constant 0 : i32
    return %c0_i32, %c0_i32_0 : i32, i32
  }
  func.func @transform_2(%arg0: i32) -> (i32, i32, i32) {
    %c0_i32 = arith.constant 0 : i32
    %c0_i32_0 = arith.constant 0 : i32
    %c0_i32_1 = arith.constant 0 : i32
    %c0_i32_2 = arith.constant 0 : i32
    return %c0_i32, %c0_i32_0, %c0_i32_1 : i32, i32, i32
  }
  func.func @transform_3(%arg0: i32) -> (i32, i32, i32) {
    %c0_i32 = arith.constant 0 : i32
    %c0_i32_0 = arith.constant 0 : i32
    %c0_i32_1 = arith.constant 0 : i32
    %c0_i32_2 = arith.constant 0 : i32
    return %c0_i32, %c0_i32_0, %c0_i32_1 : i32, i32, i32
  }
  func.func @transform_4(%arg0: i32) -> (i32, i32, i32) {
    %c0_i32 = arith.constant 0 : i32
    %c0_i32_0 = arith.constant 0 : i32
    %c0_i32_1 = arith.constant 0 : i32
    %c0_i32_2 = arith.constant 0 : i32
    return %c0_i32, %c0_i32_0, %c0_i32_1 : i32, i32, i32
  }
  func.func @transform_5(%arg0: i32) -> (i32, i32) {
    %c0_i32 = arith.constant 0 : i32
    %c0_i32_0 = arith.constant 0 : i32
    %c0_i32_1 = arith.constant 0 : i32
    return %c0_i32, %c0_i32_0 : i32, i32
  }
  func.func @transform_6(%arg0: i32) -> (i32, i32, i32) {
    %c0_i32 = arith.constant 0 : i32
    %c0_i32_0 = arith.constant 0 : i32
    %c0_i32_1 = arith.constant 0 : i32
    return %arg0, %c0_i32, %c0_i32_0 : i32, i32, i32
  }
  func.func @transform_7(%arg0: i32) -> (i32, i32, i32) {
    %c0_i32 = arith.constant 0 : i32
    %c0_i32_0 = arith.constant 0 : i32
    %c0_i32_1 = arith.constant 0 : i32
    return %arg0, %c0_i32, %c0_i32_0 : i32, i32, i32
  }
}

</mosaic_0001>

<llo_original>
// kernel: prm_d_forward.5
$region0: #{prm_d_forward.5}
  #allocation0 [shape = 'u32[]', space=smem, size = 0x4, offset = 0x4, fixed_abs, tag = 'smem constant byte address 0x4 - core index']
  #allocation1 [shape = 'u32[144,128]{1,0:T(1,128)}', space=vmem, size = 0x12000, scoped, tag = 'internal scratch']
  %s0 = inlined_call_operand.vmem [shape: f32[2,4,256], index: 0, kind: input, shape index: {}]
  %s1 = inlined_call_operand.vmem [shape: f32[3,4,1], index: 1, kind: input, shape index: {}]
  %s2 = inlined_call_operand.vmem [shape: f32[3,4,1], index: 2, kind: input, shape index: {}]
  %s3 = inlined_call_operand.vmem [shape: bf16[8,4], index: 3, kind: input, shape index: {}]
  %s4 = inlined_call_operand.vmem [shape: f32[8,1], index: 4, kind: input, shape index: {}]
  %s5 = inlined_call_operand.vmem [shape: bf16[4,4], index: 5, kind: input, shape index: {}]
  %s6 = inlined_call_operand.vmem [shape: f32[4,1], index: 6, kind: input, shape index: {}]
  %s7 = inlined_call_operand.vmem [shape: bf16[4,4], index: 7, kind: input, shape index: {}]
  %s8 = inlined_call_operand.vmem [shape: f32[4,1], index: 8, kind: input, shape index: {}]
  %s9 = inlined_call_operand.vmem [shape: f32[2,8,256], index: 9, kind: output, shape index: {0}]
  %s10 = inlined_call_operand.vmem [shape: bf16[2,4,256], index: 10, kind: output, shape index: {1}]
  %s11 = inlined_call_operand.vmem [shape: bf16[2,4,256], index: 11, kind: output, shape index: {2}]
  %s12 = inlined_call_operand.vmem [shape: f32[4,4,2], index: 12, kind: output, shape index: {3}]
  %13 = xla_tuple %s9, %s10, %s11, %s12
  %s14 = sld [smem:[#allocation0]]
  $region93: #{prm_d_forward.5} parent=0
    _
  %s16 = ssub.s32 1, %s14
  %s17 = scalar_select 0, %s16, %s14
  loop: start=0, step=1, limit=6
  $region2: #{prm_d_forward.5} parent=0 // loop_pre_header
    _
  $region3: #{prm_d_forward.5} parent=0 // loop_header
    %s19 = sphi 0, %s23
    %p20 = scmp.ge.s32.totalorder %s19, 6
    %s26 = sphi 0, %s38
    %s27 = sphi 0, %s34
    %s28 = sphi 0, %s26
    %s29 = sphi 0, %s27
    %s30 = sphi 0, %s28
    %s31 = sphi 0, %s29
    %s43 = sphi 0, %s45
    %s46 = sphi 0, %s43
    %s47 = sphi 0, %s46
    %s63 = sphi 0, %s47
    %s67 = sphi 0, %s67
    %s69 = sphi 0, %s67
    %s70 = sphi 0, %s69
    %s84 = sphi 0, %s70
    %s88 = sphi 0, %s88
    %s90 = sphi 0, %s88
    %s91 = sphi 0, %s90
    %s105 = sphi 0, %s91
    %s109 = sphi 0, %s109
    %s111 = sphi 0, %s109
    %s112 = sphi 0, %s111
    %s126 = sphi 0, %s112
    %s130 = sphi 0, %s130
    %s132 = sphi 0, %s130
    %s133 = sphi 0, %s132
    %s147 = sphi 0, %s133
    %s151 = sphi 0, %s151
    %s153 = sphi 0, %s151
    %s154 = sphi 0, %s153
    %s168 = sphi 0, %s154
    %s172 = sphi 0, %s172
    %s174 = sphi 0, %s172
    %s175 = sphi 0, %s174
    %s189 = sphi 0, %s175
    %s193 = sphi 0, %s193
    %s195 = sphi 0, %s193
    %s196 = sphi 0, %s195
    %s210 = sphi 0, %s196
    %s214 = sphi 0, %s214
    %s216 = sphi 0, %s214
    %s217 = sphi 0, %s216
    %s231 = sphi 0, %s217
    %s239 = sphi 0, %s241
    %s242 = sphi 0, %s239
    %s243 = sphi 0, %s242
    %s259 = sphi 0, %s243
    %s267 = sphi 0, %s269
    %s270 = sphi 0, %s267
    %s271 = sphi 0, %s270
    %s287 = sphi 0, %s271
    %s295 = sphi 0, %s297
    %s298 = sphi 0, %s295
    %s299 = sphi 0, %s298
    %s315 = sphi 0, %s299
    %s325 = sphi 0, %s327
    %s328 = sphi 0, %s325
    %s329 = sphi 0, %s328
    %s345 = sphi 0, %s329
  $region4: #{prm_d_forward.5} parent=0 // loop_header_branch
    %22 = sbr.rel (%p20) target = $region8
  $region5: #{prm_d_forward.5} parent=0 // loop_body
    %s24 = ssub.s32 %s19, 1
    %s25 = ssub.s32 %s19, 2
    %s32 = sadd.s32 1, %s27
    %p33 = scmp.ge.s32.totalorder %s32, 2
    %s34 = scalar_select %p33, 0, %s32
    %s35 = sadd.s32 1, %s26
    %s36 = scalar_select %p33, %s35, %s26
    %p37 = scmp.ge.s32.totalorder %s36, 2
    %s38 = scalar_select %p37, 0, %s36
    %s39 = ssub.s32 %s26, %s38
    %s40 = ssub.s32 %s27, %s34
    %s41 = sor.u32 %s39, %s40
    %p42 = scmp.eq.s32.totalorder %s41, 0
    %s44 = sadd.s32 %s43, 1
    %s45 = scalar_select %p42, %s43, %s44
    %p48 = pneg %p42
    %p49 = scmp.eq.s32.totalorder %s19, 3
    %p50 = por %p48, %p49
    %p51 = scmp.ne.s32.totalorder %s43, %s46
    %p52 = scmp.eq.s32.totalorder %s19, 0
    %p53 = por %p51, %p52
    %p54 = scmp.ne.s32.totalorder %s43, %s46
    %p55 = scmp.eq.s32.totalorder %s24, 3
    %p56 = por %p54, %p55
    %p57 = scmp.ne.s32.totalorder %s46, %s47
    %p58 = scmp.eq.s32.totalorder %s24, 0
    %p59 = por %p57, %p58
    %p60 = scmp.ne.s32.totalorder %s46, %s47
    %p61 = scmp.eq.s32.totalorder %s25, 3
    %p62 = por %p60, %p61
    %p64 = scmp.ne.s32.totalorder %s47, %s63
    %p65 = scmp.eq.s32.totalorder %s25, 0
    %p66 = por %p64, %p65
    %s68 = sadd.s32 %s67, 1
    %p71 = scmp.eq.s32.totalorder %s19, 3
    %p72 = scmp.ne.s32.totalorder %s67, %s69
    %p73 = scmp.eq.s32.totalorder %s19, 0
    %p74 = por %p72, %p73
    %p75 = scmp.ne.s32.totalorder %s67, %s69
    %p76 = scmp.eq.s32.totalorder %s24, 3
    %p77 = por %p75, %p76
    %p78 = scmp.ne.s32.totalorder %s69, %s70
    %p79 = scmp.eq.s32.totalorder %s24, 0
    %p80 = por %p78, %p79
    %p81 = scmp.ne.s32.totalorder %s69, %s70
    %p82 = scmp.eq.s32.totalorder %s25, 3
    %p83 = por %p81, %p82
    %p85 = scmp.ne.s32.totalorder %s70, %s84
    %p86 = scmp.eq.s32.totalorder %s25, 0
    %p87 = por %p85, %p86
    %s89 = sadd.s32 %s88, 1
    %p92 = scmp.eq.s32.totalorder %s19, 3
    %p93 = scmp.ne.s32.totalorder %s88, %s90
    %p94 = scmp.eq.s32.totalorder %s19, 0
    %p95 = por %p93, %p94
    %p96 = scmp.ne.s32.totalorder %s88, %s90
    %p97 = scmp.eq.s32.totalorder %s24, 3
    %p98 = por %p96, %p97
    %p99 = scmp.ne.s32.totalorder %s90, %s91
    %p100 = scmp.eq.s32.totalorder %s24, 0
    %p101 = por %p99, %p100
    %p102 = scmp.ne.s32.totalorder %s90, %s91
    %p103 = scmp.eq.s32.totalorder %s25, 3
    %p104 = por %p102, %p103
    %p106 = scmp.ne.s32.totalorder %s91, %s105
    %p107 = scmp.eq.s32.totalorder %s25, 0
    %p108 = por %p106, %p107
    %s110 = sadd.s32 %s109, 1
    %p113 = scmp.eq.s32.totalorder %s19, 3
    %p114 = scmp.ne.s32.totalorder %s109, %s111
    %p115 = scmp.eq.s32.totalorder %s19, 0
    %p116 = por %p114, %p115
    %p117 = scmp.ne.s32.totalorder %s109, %s111
    %p118 = scmp.eq.s32.totalorder %s24, 3
    %p119 = por %p117, %p118
    %p120 = scmp.ne.s32.totalorder %s111, %s112
    %p121 = scmp.eq.s32.totalorder %s24, 0
    %p122 = por %p120, %p121
    %p123 = scmp.ne.s32.totalorder %s111, %s112
    %p124 = scmp.eq.s32.totalorder %s25, 3
    %p125 = por %p123, %p124
    %p127 = scmp.ne.s32.totalorder %s112, %s126
    %p128 = scmp.eq.s32.totalorder %s25, 0
    %p129 = por %p127, %p128
    %s131 = sadd.s32 %s130, 1
    %p134 = scmp.eq.s32.totalorder %s19, 3
    %p135 = scmp.ne.s32.totalorder %s130, %s132
    %p136 = scmp.eq.s32.totalorder %s19, 0
    %p137 = por %p135, %p136
    %p138 = scmp.ne.s32.totalorder %s130, %s132
    %p139 = scmp.eq.s32.totalorder %s24, 3
    %p140 = por %p138, %p139
    %p141 = scmp.ne.s32.totalorder %s132, %s133
    %p142 = scmp.eq.s32.totalorder %s24, 0
    %p143 = por %p141, %p142
    %p144 = scmp.ne.s32.totalorder %s132, %s133
    %p145 = scmp.eq.s32.totalorder %s25, 3
    %p146 = por %p144, %p145
    %p148 = scmp.ne.s32.totalorder %s133, %s147
    %p149 = scmp.eq.s32.totalorder %s25, 0
    %p150 = por %p148, %p149
    %s152 = sadd.s32 %s151, 1
    %p155 = scmp.eq.s32.totalorder %s19, 3
    %p156 = scmp.ne.s32.totalorder %s151, %s153
    %p157 = scmp.eq.s32.totalorder %s19, 0
    %p158 = por %p156, %p157
    %p159 = scmp.ne.s32.totalorder %s151, %s153
    %p160 = scmp.eq.s32.totalorder %s24, 3
    %p161 = por %p159, %p160
    %p162 = scmp.ne.s32.totalorder %s153, %s154
    %p163 = scmp.eq.s32.totalorder %s24, 0
    %p164 = por %p162, %p163
    %p165 = scmp.ne.s32.totalorder %s153, %s154
    %p166 = scmp.eq.s32.totalorder %s25, 3
    %p167 = por %p165, %p166
    %p169 = scmp.ne.s32.totalorder %s154, %s168
    %p170 = scmp.eq.s32.totalorder %s25, 0
    %p171 = por %p169, %p170
    %s173 = sadd.s32 %s172, 1
    %p176 = scmp.eq.s32.totalorder %s19, 3
    %p177 = scmp.ne.s32.totalorder %s172, %s174
    %p178 = scmp.eq.s32.totalorder %s19, 0
    %p179 = por %p177, %p178
    %p180 = scmp.ne.s32.totalorder %s172, %s174
    %p181 = scmp.eq.s32.totalorder %s24, 3
    %p182 = por %p180, %p181
    %p183 = scmp.ne.s32.totalorder %s174, %s175
    %p184 = scmp.eq.s32.totalorder %s24, 0
    %p185 = por %p183, %p184
    %p186 = scmp.ne.s32.totalorder %s174, %s175
    %p187 = scmp.eq.s32.totalorder %s25, 3
    %p188 = por %p186, %p187
    %p190 = scmp.ne.s32.totalorder %s175, %s189
    %p191 = scmp.eq.s32.totalorder %s25, 0
    %p192 = por %p190, %p191
    %s194 = sadd.s32 %s193, 1
    %p197 = scmp.eq.s32.totalorder %s19, 3
    %p198 = scmp.ne.s32.totalorder %s193, %s195
    %p199 = scmp.eq.s32.totalorder %s19, 0
    %p200 = por %p198, %p199
    %p201 = scmp.ne.s32.totalorder %s193, %s195
    %p202 = scmp.eq.s32.totalorder %s24, 3
    %p203 = por %p201, %p202
    %p204 = scmp.ne.s32.totalorder %s195, %s196
    %p205 = scmp.eq.s32.totalorder %s24, 0
    %p206 = por %p204, %p205
    %p207 = scmp.ne.s32.totalorder %s195, %s196
    %p208 = scmp.eq.s32.totalorder %s25, 3
    %p209 = por %p207, %p208
    %p211 = scmp.ne.s32.totalorder %s196, %s210
    %p212 = scmp.eq.s32.totalorder %s25, 0
    %p213 = por %p211, %p212
    %s215 = sadd.s32 %s214, 1
    %p218 = scmp.eq.s32.totalorder %s19, 3
    %p219 = scmp.ne.s32.totalorder %s214, %s216
    %p220 = scmp.eq.s32.totalorder %s19, 0
    %p221 = por %p219, %p220
    %p222 = scmp.ne.s32.totalorder %s214, %s216
    %p223 = scmp.eq.s32.totalorder %s24, 3
    %p224 = por %p222, %p223
    %p225 = scmp.ne.s32.totalorder %s216, %s217
    %p226 = scmp.eq.s32.totalorder %s24, 0
    %p227 = por %p225, %p226
    %p228 = scmp.ne.s32.totalorder %s216, %s217
    %p229 = scmp.eq.s32.totalorder %s25, 3
    %p230 = por %p228, %p229
    %p232 = scmp.ne.s32.totalorder %s217, %s231
    %p233 = scmp.eq.s32.totalorder %s25, 0
    %p234 = por %p232, %p233
    %s235 = ssub.s32 %s26, %s38
    %s236 = ssub.s32 %s27, %s34
    %s237 = sor.u32 %s235, %s236
    %p238 = scmp.eq.s32.totalorder %s237, 0
    %s240 = sadd.s32 %s239, 1
    %s241 = scalar_select %p238, %s239, %s240
    %p244 = pneg %p238
    %p245 = scmp.eq.s32.totalorder %s19, 3
    %p246 = por %p244, %p245
    %p247 = scmp.ne.s32.totalorder %s239, %s242
    %p248 = scmp.eq.s32.totalorder %s19, 0
    %p249 = por %p247, %p248
    %p250 = scmp.ne.s32.totalorder %s239, %s242
    %p251 = scmp.eq.s32.totalorder %s24, 3
    %p252 = por %p250, %p251
    %p253 = scmp.ne.s32.totalorder %s242, %s243
    %p254 = scmp.eq.s32.totalorder %s24, 0
    %p255 = por %p253, %p254
    %p256 = scmp.ne.s32.totalorder %s242, %s243
    %p257 = scmp.eq.s32.totalorder %s25, 3
    %p258 = por %p256, %p257
    %p260 = scmp.ne.s32.totalorder %s243, %s259
    %p261 = scmp.eq.s32.totalorder %s25, 0
    %p262 = por %p260, %p261
    %s263 = ssub.s32 %s26, %s38
    %s264 = ssub.s32 %s27, %s34
    %s265 = sor.u32 %s263, %s264
    %p266 = scmp.eq.s32.totalorder %s265, 0
    %s268 = sadd.s32 %s267, 1
    %s269 = scalar_select %p266, %s267, %s268
    %p272 = pneg %p266
    %p273 = scmp.eq.s32.totalorder %s19, 3
    %p274 = por %p272, %p273
    %p275 = scmp.ne.s32.totalorder %s267, %s270
    %p276 = scmp.eq.s32.totalorder %s19, 0
    %p277 = por %p275, %p276
    %p278 = scmp.ne.s32.totalorder %s267, %s270
    %p279 = scmp.eq.s32.totalorder %s24, 3
    %p280 = por %p278, %p279
    %p281 = scmp.ne.s32.totalorder %s270, %s271
    %p282 = scmp.eq.s32.totalorder %s24, 0
    %p283 = por %p281, %p282
    %p284 = scmp.ne.s32.totalorder %s270, %s271
    %p285 = scmp.eq.s32.totalorder %s25, 3
    %p286 = por %p284, %p285
    %p288 = scmp.ne.s32.totalorder %s271, %s287
    %p289 = scmp.eq.s32.totalorder %s25, 0
    %p290 = por %p288, %p289
    %s291 = ssub.s32 %s26, %s38
    %s292 = ssub.s32 %s27, %s34
    %s293 = sor.u32 %s291, %s292
    %p294 = scmp.eq.s32.totalorder %s293, 0
    %s296 = sadd.s32 %s295, 1
    %s297 = scalar_select %p294, %s295, %s296
    %p300 = pneg %p294
    %p301 = scmp.eq.s32.totalorder %s19, 3
    %p302 = por %p300, %p301
    %p303 = scmp.ne.s32.totalorder %s295, %s298
    %p304 = scmp.eq.s32.totalorder %s19, 0
    %p305 = por %p303, %p304
    %p306 = scmp.ne.s32.totalorder %s295, %s298
    %p307 = scmp.eq.s32.totalorder %s24, 3
    %p308 = por %p306, %p307
    %p309 = scmp.ne.s32.totalorder %s298, %s299
    %p310 = scmp.eq.s32.totalorder %s24, 0
    %p311 = por %p309, %p310
    %p312 = scmp.ne.s32.totalorder %s298, %s299
    %p313 = scmp.eq.s32.totalorder %s25, 3
    %p314 = por %p312, %p313
    %p316 = scmp.ne.s32.totalorder %s299, %s315
    %p317 = scmp.eq.s32.totalorder %s25, 0
    %p318 = por %p316, %p317
    %s319 = smul.u32 %s26, 2
    %s320 = sadd.s32 %s319, %s27
    %s321 = smul.u32 %s38, 2
    %s322 = sadd.s32 %s321, %s34
    %s323 = ssub.s32 %s320, %s322
    %p324 = scmp.eq.s32.totalorder %s323, 0
    %s326 = sadd.s32 %s325, 1
    %s327 = scalar_select %p324, %s325, %s326
    %p330 = pneg %p324
    %p331 = scmp.eq.s32.totalorder %s19, 3
    %p332 = por %p330, %p331
    %p333 = scmp.ne.s32.totalorder %s325, %s328
    %p334 = scmp.eq.s32.totalorder %s19, 0
    %p335 = por %p333, %p334
    %p336 = scmp.ne.s32.totalorder %s325, %s328
    %p337 = scmp.eq.s32.totalorder %s24, 3
    %p338 = por %p336, %p337
    %p339 = scmp.ne.s32.totalorder %s328, %s329
    %p340 = scmp.eq.s32.totalorder %s24, 0
    %p341 = por %p339, %p340
    %p342 = scmp.ne.s32.totalorder %s328, %s329
    %p343 = scmp.eq.s32.totalorder %s25, 3
    %p344 = por %p342, %p343
    %p346 = scmp.ne.s32.totalorder %s329, %s345
    %p347 = scmp.eq.s32.totalorder %s25, 0
    %p348 = por %p346, %p347
    %p349 = scmp.le.s32.totalorder 1, %s19
    %p350 = scmp.lt.s32.totalorder %s19, 5
    %p351 = pnand %p349, %p350
    %p352 = pneg %p351
    // Predicated region
    $region9: #{prm_d_forward.5} parent=5 // pred_check
      _
    $region10: #{prm_d_forward.5} parent=5 // pred_check_branch
      %354 = sbr.rel (%p351) target = $region12
    $region11: #{prm_d_forward.5} parent=5 // pred_region
      %s355 = ssub.s32 %s19, 1
      // Predicated region
      $region13: #{prm_d_forward.5} parent=11 // pred_check
        %p356 = pneg %p80
      $region14: #{prm_d_forward.5} parent=11 // pred_check_branch
        %358 = sbr.rel (%p356) target = $region16
      $region15: #{prm_d_forward.5} parent=11 // pred_region
        _
      $region16: #{prm_d_forward.5} parent=11 // pred_fallthru
        _
      // Predicated region
      $region17: #{prm_d_forward.5} parent=11 // pred_check
        %p359 = pneg %p101
      $region18: #{prm_d_forward.5} parent=11 // pred_check_branch
        %361 = sbr.rel (%p359) target = $region20
      $region19: #{prm_d_forward.5} parent=11 // pred_region
        _
      $region20: #{prm_d_forward.5} parent=11 // pred_fallthru
        _
      // Predicated region
      $region21: #{prm_d_forward.5} parent=11 // pred_check
        %p362 = pneg %p122
      $region22: #{prm_d_forward.5} parent=11 // pred_check_branch
        %364 = sbr.rel (%p362) target = $region24
      $region23: #{prm_d_forward.5} parent=11 // pred_region
        _
      $region24: #{prm_d_forward.5} parent=11 // pred_fallthru
        _
      // Predicated region
      $region25: #{prm_d_forward.5} parent=11 // pred_check
        %p365 = pneg %p143
      $region26: #{prm_d_forward.5} parent=11 // pred_check_branch
        %367 = sbr.rel (%p365) target = $region28
      $region27: #{prm_d_forward.5} parent=11 // pred_region
        _
      $region28: #{prm_d_forward.5} parent=11 // pred_fallthru
        _
      // Predicated region
      $region29: #{prm_d_forward.5} parent=11 // pred_check
        %p368 = pneg %p164
      $region30: #{prm_d_forward.5} parent=11 // pred_check_branch
        %370 = sbr.rel (%p368) target = $region32
      $region31: #{prm_d_forward.5} parent=11 // pred_region
        _
      $region32: #{prm_d_forward.5} parent=11 // pred_fallthru
        _
      // Predicated region
      $region33: #{prm_d_forward.5} parent=11 // pred_check
        %p371 = pneg %p185
      $region34: #{prm_d_forward.5} parent=11 // pred_check_branch
        %373 = sbr.rel (%p371) target = $region36
      $region35: #{prm_d_forward.5} parent=11 // pred_region
        _
      $region36: #{prm_d_forward.5} parent=11 // pred_fallthru
        _
      // Predicated region
      $region37: #{prm_d_forward.5} parent=11 // pred_check
        %p374 = pneg %p206
      $region38: #{prm_d_forward.5} parent=11 // pred_check_branch
        %376 = sbr.rel (%p374) target = $region40
      $region39: #{prm_d_forward.5} parent=11 // pred_region
        _
      $region40: #{prm_d_forward.5} parent=11 // pred_fallthru
        _
      // Predicated region
      $region41: #{prm_d_forward.5} parent=11 // pred_check
        %p377 = pneg %p227
      $region42: #{prm_d_forward.5} parent=11 // pred_check_branch
        %379 = sbr.rel (%p377) target = $region44
      $region43: #{prm_d_forward.5} parent=11 // pred_region
        _
      $region44: #{prm_d_forward.5} parent=11 // pred_fallthru
        _
    $region12: #{prm_d_forward.5} parent=5 // pred_fallthru
      _
    %p380 = scmp.lt.s32.totalorder %s19, 4
    // Predicated region
    $region45: #{prm_d_forward.5} parent=5 // pred_check
      %p381 = pneg %p380
    $region46: #{prm_d_forward.5} parent=5 // pred_check_branch
      %383 = sbr.rel (%p381) target = $region48
    $region47: #{prm_d_forward.5} parent=5 // pred_region
      // Predicated region
      $region49: #{prm_d_forward.5} parent=47 // pred_check
        %p384 = pneg %p53
      $region50: #{prm_d_forward.5} parent=47 // pred_check_branch
        %386 = sbr.rel (%p384) target = $region52
      $region51: #{prm_d_forward.5} parent=47 // pred_region
        %p387 = scmp.lt.s32.totalorder %s26, 1
        %s388 = scalar_select %p387, %s26, 1
        %p389 = scmp.lt.s32.totalorder %s27, 1
        %s390 = scalar_select %p389, %s27, 1
        %s391 = smul.addr %s388, 2
        %s392 = sadd.s32 %s390, %s391
        %s393 = smul.addr %s392, 4
        %s394 = scalar_lea.vmem %s0, %s393
      $region52: #{prm_d_forward.5} parent=47 // pred_fallthru
        _
    $region48: #{prm_d_forward.5} parent=5 // pred_fallthru
      _
    %p395 = scmp.le.s32.totalorder 1, %s19
    %p396 = scmp.lt.s32.totalorder %s19, 5
    %p397 = pnand %p395, %p396
    %p398 = pneg %p397
    // Predicated region
    $region53: #{prm_d_forward.5} parent=5 // pred_check
      _
    $region54: #{prm_d_forward.5} parent=5 // pred_check_branch
      %400 = sbr.rel (%p397) target = $region56
    $region55: #{prm_d_forward.5} parent=5 // pred_region
      %s401 = ssub.s32 %s19, 1
      %p402 = scmp.lt.s32.totalorder %s28, 1
      %s403 = scalar_select %p402, %s28, 1
      %p404 = scmp.lt.s32.totalorder %s29, 1
      %s405 = scalar_select %p404, %s29, 1
      %s406 = smul.addr %s403, 2
      %s407 = sadd.s32 %s405, %s406
      %s408 = smul.addr %s407, 4
      %s409 = scalar_lea.vmem %s0, %s408
      %p410 = pneg %p59
      %p411 = pneg %p56
      %p412 = pneg %p80
      %p413 = pneg %p77
      %p414 = pneg %p101
      %p415 = pneg %p98
      %p416 = pneg %p122
      %p417 = pneg %p119
      %p418 = pneg %p143
      %p419 = pneg %p140
      %p420 = pneg %p164
      %p421 = pneg %p161
      %p422 = pneg %p185
      %p423 = pneg %p182
      %p424 = pneg %p206
      %p425 = pneg %p203
      %p426 = pneg %p227
      %p427 = pneg %p224
      %p428 = pneg %p255
      %p429 = pneg %p252
      %p430 = scmp.lt.s32.totalorder %s28, 1
      %s431 = scalar_select %p430, %s28, 1
      %p432 = scmp.lt.s32.totalorder %s29, 1
      %s433 = scalar_select %p432, %s29, 1
      %s434 = smul.addr %s431, 2
      %s435 = sadd.s32 %s433, %s434
      %s436 = smul.addr %s435, 8
      %s437 = scalar_lea.vmem %s9, %s436
      %p438 = pneg %p283
      %p439 = pneg %p280
      %p440 = scmp.lt.s32.totalorder %s28, 1
      %s441 = scalar_select %p440, %s28, 1
      %p442 = scmp.lt.s32.totalorder %s29, 1
      %s443 = scalar_select %p442, %s29, 1
      %s444 = smul.addr %s441, 2
      %s445 = sadd.s32 %s443, %s444
      %s446 = smul.addr %s445, 2
      %s447 = scalar_lea.vmem %s10, %s446
      %p448 = pneg %p311
      %p449 = pneg %p308
      %p450 = scmp.lt.s32.totalorder %s28, 1
      %s451 = scalar_select %p450, %s28, 1
      %p452 = scmp.lt.s32.totalorder %s29, 1
      %s453 = scalar_select %p452, %s29, 1
      %s454 = smul.addr %s451, 2
      %s455 = sadd.s32 %s453, %s454
      %s456 = smul.addr %s455, 2
      %s457 = scalar_lea.vmem %s11, %s456
      %p458 = pneg %p341
      %p459 = pneg %p338
      %s460 = smul.u32 %s28, 2
      %s461 = sadd.s32 %s460, %s29
      %p462 = scmp.lt.s32.totalorder %s461, 3
      %s463 = scalar_select %p462, %s461, 3
      %s464 = smul.addr %s463, 4
      %s465 = scalar_lea.vmem %s12, %s464
      %p466 = scmp.lt.s32.totalorder %s28, 1
      %s467 = scalar_select %p466, %s28, 1
      %p468 = scmp.lt.s32.totalorder %s29, 1
      %s469 = scalar_select %p468, %s29, 1
      %s470 = smul.addr %s467, 2
      %s471 = sadd.s32 %s469, %s470
      %s472 = smul.addr %s471, 4
      %s473 = scalar_lea.vmem %s0, %s472
      %p474 = scmp.lt.s32.totalorder %s28, 1
      %s475 = scalar_select %p474, %s28, 1
      %p476 = scmp.lt.s32.totalorder %s29, 1
      %s477 = scalar_select %p476, %s29, 1
      %s478 = smul.addr %s475, 2
      %s479 = sadd.s32 %s477, %s478
      %s480 = smul.addr %s479, 8
      %s481 = scalar_lea.vmem %s9, %s480
      %p482 = scmp.lt.s32.totalorder %s28, 1
      %s483 = scalar_select %p482, %s28, 1
      %p484 = scmp.lt.s32.totalorder %s29, 1
      %s485 = scalar_select %p484, %s29, 1
      %s486 = smul.addr %s483, 2
      %s487 = sadd.s32 %s485, %s486
      %s488 = smul.addr %s487, 2
      %s489 = scalar_lea.vmem %s10, %s488
      %p490 = scmp.lt.s32.totalorder %s28, 1
      %s491 = scalar_select %p490, %s28, 1
      %p492 = scmp.lt.s32.totalorder %s29, 1
      %s493 = scalar_select %p492, %s29, 1
      %s494 = smul.addr %s491, 2
      %s495 = sadd.s32 %s493, %s494
      %s496 = smul.addr %s495, 2
      %s497 = scalar_lea.vmem %s11, %s496
      %s498 = smul.u32 %s28, 2
      %s499 = sadd.s32 %s498, %s29
      %p500 = scmp.lt.s32.totalorder %s499, 3
      %s501 = scalar_select %p500, %s499, 3
      %s502 = smul.addr %s501, 4
      %s503 = scalar_lea.vmem %s12, %s502
      %s504 = smul.u32 %s28, 2
      %s505 = sadd.s32 %s504, %s29
      %v507 = vld [vmem:[%s473] sm:$0xf]
      %v508 = vld [vmem:[%s1] sm:$0xf]
      %510 = vset.pattern.permute.xlu0 0
      %511 = vperm.xlu0 %510, %v508
      %v512 = vpop.permute.xlu0 %511
      %v514 = vmul.f32 %v507, %v512
      %v515 = vld [vmem:[%s2] sm:$0xf]
      %517 = vset.pattern.permute.xlu0 0
      %518 = vperm.xlu0 %517, %v515
      %v519 = vpop.permute.xlu0 %518
      %v521 = vadd.f32 %v514, %v519
      %v522 = vmax.f32 %v521, 0.0
      %v523 = vpack.c.bf16 %v522, %v522
      %v524 = vld [vmem:[%s3] sm:$0xf]
      %v525 = vld [vmem:[%s4] sm:$0xff]
      %527 = vset.pattern.permute.xlu0 0
      %528 = vperm.xlu0 %527, %v525
      %v529 = vpop.permute.xlu0 %528
      %vm531 = vcmask 31744
      %v533 = vsel %vm531, %v524, 0
      %vm535 = vcmask 1041408
      %v537 = vsel %vm535, %v523, 0
      %539 = vmatprep.subr.bf16.mxu0 0
      %540 = vmatpush1.bf16.msra.mxu0 %v537
      %541 = vmatprep.subr.bf16.mxu0 0
      %542 = vmatpush1.bf16.msra.mxu0 0
      %543 = vmatprep.subr.bf16.mxu0 0
      %544 = vmatpush1.bf16.msra.mxu0 0
      %545 = vmatprep.subr.bf16.mxu0 0
      %546 = vmatpush1.bf16.msra.mxu0 0
      %547 = vmatprep.subr.bf16.mxu0 0
      %548 = vmatpush1.bf16.msra.mxu0 0
      %549 = vmatprep.subr.bf16.mxu0 0
      %550 = vmatpush1.bf16.msra.mxu0 0
      %551 = vmatprep.subr.bf16.mxu0 0
      %552 = vmatpush1.bf16.msra.mxu0 0
      %553 = vmatprep.subr.bf16.mxu0 0
      %554 = vmatpush1.bf16.msra.mxu0 0
      %555 = vmatprep.subr.bf16.mxu0 0
      %556 = vmatpush1.bf16.msra.mxu0 0
      %557 = vmatprep.subr.bf16.mxu0 0
      %558 = vmatpush1.bf16.msra.mxu0 0
      %559 = vmatprep.subr.bf16.mxu0 0
      %560 = vmatpush1.bf16.msra.mxu0 0
      %561 = vmatprep.subr.bf16.mxu0 0
      %562 = vmatpush1.bf16.msra.mxu0 0
      %563 = vmatprep.subr.bf16.mxu0 0
      %564 = vmatpush1.bf16.msra.mxu0 0
      %565 = vmatprep.subr.bf16.mxu0 0
      %566 = vmatpush1.bf16.msra.mxu0 0
      %567 = vmatprep.subr.bf16.mxu0 0
      %568 = vmatpush1.bf16.msra.mxu0 0
      %569 = vmatprep.subr.bf16.mxu0 0
      %570 = vmatpush1.bf16.msra.mxu0 0
      %571 = vmatprep.mubr.bf16.mxu0 0
      %572 = vmatmul.mubr.bf16.gmra.mrb[0].mxu0 %v533
      %v573 = vpop.f32.mrb[0].mxu0
      %v574 = vadd.f32 %v529, %v573
      %v575 = vpop.f32.mrb[0].mxu0
      %v576 = vpop.f32.mrb[0].mxu0
      %v577 = vpop.f32.mrb[0].mxu0
      %578 = vdwg.mxu0
      %579 = vst [vmem:[%s481] sm:$0xff] %v574
      %s580 = scalar_lea.vmem %s1, 4
      %v581 = vld [vmem:[%s580] sm:$0xf]
      %583 = vset.pattern.permute.xlu0 0
      %584 = vperm.xlu0 %583, %v581
      %v585 = vpop.permute.xlu0 %584
      %v587 = vmul.f32 %v507, %v585
      %s588 = scalar_lea.vmem %s2, 4
      %v589 = vld [vmem:[%s588] sm:$0xf]
      %591 = vset.pattern.permute.xlu0 0
      %592 = vperm.xlu0 %591, %v589
      %v593 = vpop.permute.xlu0 %592
      %v595 = vadd.f32 %v587, %v593
      %v596 = vmax.f32 %v595, 0.0
      %v597 = vpack.c.bf16 %v596, %v596
      %v598 = vld [vmem:[%s5] sm:$0x3]
      %v599 = vld [vmem:[%s6] sm:$0xf]
      %601 = vset.pattern.permute.xlu0 0
      %602 = vperm.xlu0 %601, %v599
      %v603 = vpop.permute.xlu0 %602
      %v606 = vsel %vm531, %v598, 0
      %v609 = vsel %vm535, %v597, 0
      %611 = vmatprep.subr.bf16.mxu0 0
      %612 = vmatpush1.bf16.msra.mxu0 %v609
      %613 = vmatprep.subr.bf16.mxu0 0
      %614 = vmatpush1.bf16.msra.mxu0 0
      %615 = vmatprep.subr.bf16.mxu0 0
      %616 = vmatpush1.bf16.msra.mxu0 0
      %617 = vmatprep.subr.bf16.mxu0 0
      %618 = vmatpush1.bf16.msra.mxu0 0
      %619 = vmatprep.subr.bf16.mxu0 0
      %620 = vmatpush1.bf16.msra.mxu0 0
      %621 = vmatprep.subr.bf16.mxu0 0
      %622 = vmatpush1.bf16.msra.mxu0 0
      %623 = vmatprep.subr.bf16.mxu0 0
      %624 = vmatpush1.bf16.msra.mxu0 0
      %625 = vmatprep.subr.bf16.mxu0 0
      %626 = vmatpush1.bf16.msra.mxu0 0
      %627 = vmatprep.subr.bf16.mxu0 0
      %628 = vmatpush1.bf16.msra.mxu0 0
      %629 = vmatprep.subr.bf16.mxu0 0
      %630 = vmatpush1.bf16.msra.mxu0 0
      %631 = vmatprep.subr.bf16.mxu0 0
      %632 = vmatpush1.bf16.msra.mxu0 0
      %633 = vmatprep.subr.bf16.mxu0 0
      %634 = vmatpush1.bf16.msra.mxu0 0
      %635 = vmatprep.subr.bf16.mxu0 0
      %636 = vmatpush1.bf16.msra.mxu0 0
      %637 = vmatprep.subr.bf16.mxu0 0
      %638 = vmatpush1.bf16.msra.mxu0 0
      %639 = vmatprep.subr.bf16.mxu0 0
      %640 = vmatpush1.bf16.msra.mxu0 0
      %641 = vmatprep.subr.bf16.mxu0 0
      %642 = vmatpush1.bf16.msra.mxu0 0
      %643 = vmatprep.mubr.bf16.mxu0 0
      %644 = vmatmul.mubr.bf16.gmra.mrb[0].mxu0 %v606
      %v645 = vpop.f32.mrb[0].mxu0
      %v646 = vadd.f32 %v603, %v645
      %v647 = vpop.f32.mrb[0].mxu0
      %v648 = vpop.f32.mrb[0].mxu0
      %v649 = vpop.f32.mrb[0].mxu0
      %650 = vdwg.mxu0
      %v651 = vpack.c.bf16 %v646, %v646
      %652 = vst [vmem:[%s489] sm:$0x3] %v651
      %s653 = scalar_lea.vmem %s1, 8
      %v654 = vld [vmem:[%s653] sm:$0xf]
      %656 = vset.pattern.permute.xlu0 0
      %657 = vperm.xlu0 %656, %v654
      %v658 = vpop.permute.xlu0 %657
      %v660 = vmul.f32 %v507, %v658
      %s661 = scalar_lea.vmem %s2, 8
      %v662 = vld [vmem:[%s661] sm:$0xf]
      %664 = vset.pattern.permute.xlu0 0
      %665 = vperm.xlu0 %664, %v662
      %v666 = vpop.permute.xlu0 %665
      %v668 = vadd.f32 %v660, %v666
      %v669 = vmax.f32 %v668, 0.0
      %v670 = vpack.c.bf16 %v669, %v669
      %v671 = vld [vmem:[%s7] sm:$0x3]
      %v672 = vld [vmem:[%s8] sm:$0xf]
      %674 = vset.pattern.permute.xlu0 0
      %675 = vperm.xlu0 %674, %v672
      %v676 = vpop.permute.xlu0 %675
      %v679 = vsel %vm531, %v671, 0
      %v682 = vsel %vm535, %v670, 0
      %684 = vmatprep.subr.bf16.mxu0 0
      %685 = vmatpush1.bf16.msra.mxu0 %v682
      %686 = vmatprep.subr.bf16.mxu0 0
      %687 = vmatpush1.bf16.msra.mxu0 0
      %688 = vmatprep.subr.bf16.mxu0 0
      %689 = vmatpush1.bf16.msra.mxu0 0
      %690 = vmatprep.subr.bf16.mxu0 0
      %691 = vmatpush1.bf16.msra.mxu0 0
      %692 = vmatprep.subr.bf16.mxu0 0
      %693 = vmatpush1.bf16.msra.mxu0 0
      %694 = vmatprep.subr.bf16.mxu0 0
      %695 = vmatpush1.bf16.msra.mxu0 0
      %696 = vmatprep.subr.bf16.mxu0 0
      %697 = vmatpush1.bf16.msra.mxu0 0
      %698 = vmatprep.subr.bf16.mxu0 0
      %699 = vmatpush1.bf16.msra.mxu0 0
      %700 = vmatprep.subr.bf16.mxu0 0
      %701 = vmatpush1.bf16.msra.mxu0 0
      %702 = vmatprep.subr.bf16.mxu0 0
      %703 = vmatpush1.bf16.msra.mxu0 0
      %704 = vmatprep.subr.bf16.mxu0 0
      %705 = vmatpush1.bf16.msra.mxu0 0
      %706 = vmatprep.subr.bf16.mxu0 0
      %707 = vmatpush1.bf16.msra.mxu0 0
      %708 = vmatprep.subr.bf16.mxu0 0
      %709 = vmatpush1.bf16.msra.mxu0 0
      %710 = vmatprep.subr.bf16.mxu0 0
      %711 = vmatpush1.bf16.msra.mxu0 0
      %712 = vmatprep.subr.bf16.mxu0 0
      %713 = vmatpush1.bf16.msra.mxu0 0
      %714 = vmatprep.subr.bf16.mxu0 0
      %715 = vmatpush1.bf16.msra.mxu0 0
      %716 = vmatprep.mubr.bf16.mxu0 0
      %717 = vmatmul.mubr.bf16.gmra.mrb[0].mxu0 %v679
      %v718 = vpop.f32.mrb[0].mxu0
      %v719 = vadd.f32 %v676, %v718
      %v720 = vpop.f32.mrb[0].mxu0
      %v721 = vpop.f32.mrb[0].mxu0
      %v722 = vpop.f32.mrb[0].mxu0
      %723 = vdwg.mxu0
      %v724 = vpack.c.bf16 %v719, %v719
      %725 = vst [vmem:[%s497] sm:$0x3] %v724
      %vm726 = vcmask 1043456
      %v727 = vsel %vm726, %v719, 0.0
      %728 = vadd.xlane.f32.xlu0 %v727
      %v729 = vpop.xlane.xlu0 %728
      %vm730 = vcmask 3072
      %731 = vst.msk [vmem:[%s503] sm:$0xf] %vm730, %v729
      %v732 = vmul.f32 %v719, %v719
      %v733 = vsel %vm726, %v732, 0.0
      %734 = vadd.xlane.f32.xlu0 %v733
      %v735 = vpop.xlane.xlu0 %734
      %vm736 = vcmask 11272
      %737 = vst.msk [vmem:[%s503] sm:$0xf] %vm736, %v735
      %p738 = scmp.lt.s32.totalorder %s28, 1
      %s739 = scalar_select %p738, %s28, 1
      %p740 = scmp.lt.s32.totalorder %s29, 1
      %s741 = scalar_select %p740, %s29, 1
      %s742 = smul.addr %s739, 2
      %s743 = sadd.s32 %s741, %s742
      %s744 = smul.addr %s743, 8
      %s745 = scalar_lea.vmem %s9, %s744
      %p746 = scmp.lt.s32.totalorder %s28, 1
      %s747 = scalar_select %p746, %s28, 1
      %p748 = scmp.lt.s32.totalorder %s29, 1
      %s749 = scalar_select %p748, %s29, 1
      %s750 = smul.addr %s747, 2
      %s751 = sadd.s32 %s749, %s750
      %s752 = smul.addr %s751, 2
      %s753 = scalar_lea.vmem %s10, %s752
      %p754 = scmp.lt.s32.totalorder %s28, 1
      %s755 = scalar_select %p754, %s28, 1
      %p756 = scmp.lt.s32.totalorder %s29, 1
      %s757 = scalar_select %p756, %s29, 1
      %s758 = smul.addr %s755, 2
      %s759 = sadd.s32 %s757, %s758
      %s760 = smul.addr %s759, 2
      %s761 = scalar_lea.vmem %s11, %s760
      %s762 = smul.u32 %s28, 2
      %s763 = sadd.s32 %s762, %s29
      %p764 = scmp.lt.s32.totalorder %s763, 3
      %s765 = scalar_select %p764, %s763, 3
      %s766 = smul.addr %s765, 4
      %s767 = scalar_lea.vmem %s12, %s766
      // Predicated region
      $region57: #{prm_d_forward.5} parent=55 // pred_check
        %p768 = pneg %p252
      $region58: #{prm_d_forward.5} parent=55 // pred_check_branch
        %770 = sbr.rel (%p768) target = $region60
      $region59: #{prm_d_forward.5} parent=55 // pred_region
        _
      $region60: #{prm_d_forward.5} parent=55 // pred_fallthru
        _
      // Predicated region
      $region61: #{prm_d_forward.5} parent=55 // pred_check
        %p771 = pneg %p280
      $region62: #{prm_d_forward.5} parent=55 // pred_check_branch
        %773 = sbr.rel (%p771) target = $region64
      $region63: #{prm_d_forward.5} parent=55 // pred_region
        _
      $region64: #{prm_d_forward.5} parent=55 // pred_fallthru
        _
      // Predicated region
      $region65: #{prm_d_forward.5} parent=55 // pred_check
        %p774 = pneg %p308
      $region66: #{prm_d_forward.5} parent=55 // pred_check_branch
        %776 = sbr.rel (%p774) target = $region68
      $region67: #{prm_d_forward.5} parent=55 // pred_region
        _
      $region68: #{prm_d_forward.5} parent=55 // pred_fallthru
        _
      // Predicated region
      $region69: #{prm_d_forward.5} parent=55 // pred_check
        %p777 = pneg %p338
      $region70: #{prm_d_forward.5} parent=55 // pred_check_branch
        %779 = sbr.rel (%p777) target = $region72
      $region71: #{prm_d_forward.5} parent=55 // pred_region
        %s780 = smul.u32 %s28, 2
        %s781 = sadd.s32 %s780, %s29
      $region72: #{prm_d_forward.5} parent=55 // pred_fallthru
        _
    $region56: #{prm_d_forward.5} parent=5 // pred_fallthru
      _
    %p782 = scmp.le.s32.totalorder 2, %s19
    // Predicated region
    $region73: #{prm_d_forward.5} parent=5 // pred_check
      %p783 = pneg %p782
    $region74: #{prm_d_forward.5} parent=5 // pred_check_branch
      %785 = sbr.rel (%p783) target = $region76
    $region75: #{prm_d_forward.5} parent=5 // pred_region
      %s786 = ssub.s32 %s19, 2
      // Predicated region
      $region77: #{prm_d_forward.5} parent=75 // pred_check
        %p787 = pneg %p258
      $region78: #{prm_d_forward.5} parent=75 // pred_check_branch
        %789 = sbr.rel (%p787) target = $region80
      $region79: #{prm_d_forward.5} parent=75 // pred_region
        %p790 = scmp.lt.s32.totalorder %s30, 1
        %s791 = scalar_select %p790, %s30, 1
        %p792 = scmp.lt.s32.totalorder %s31, 1
        %s793 = scalar_select %p792, %s31, 1
        %s794 = smul.addr %s791, 2
        %s795 = sadd.s32 %s793, %s794
        %s796 = smul.addr %s795, 8
        %s797 = scalar_lea.vmem %s9, %s796
      $region80: #{prm_d_forward.5} parent=75 // pred_fallthru
        _
      // Predicated region
      $region81: #{prm_d_forward.5} parent=75 // pred_check
        %p798 = pneg %p286
      $region82: #{prm_d_forward.5} parent=75 // pred_check_branch
        %800 = sbr.rel (%p798) target = $region84
      $region83: #{prm_d_forward.5} parent=75 // pred_region
        %p801 = scmp.lt.s32.totalorder %s30, 1
        %s802 = scalar_select %p801, %s30, 1
        %p803 = scmp.lt.s32.totalorder %s31, 1
        %s804 = scalar_select %p803, %s31, 1
        %s805 = smul.addr %s802, 2
        %s806 = sadd.s32 %s804, %s805
        %s807 = smul.addr %s806, 2
        %s808 = scalar_lea.vmem %s10, %s807
      $region84: #{prm_d_forward.5} parent=75 // pred_fallthru
        _
      // Predicated region
      $region85: #{prm_d_forward.5} parent=75 // pred_check
        %p809 = pneg %p314
      $region86: #{prm_d_forward.5} parent=75 // pred_check_branch
        %811 = sbr.rel (%p809) target = $region88
      $region87: #{prm_d_forward.5} parent=75 // pred_region
        %p812 = scmp.lt.s32.totalorder %s30, 1
        %s813 = scalar_select %p812, %s30, 1
        %p814 = scmp.lt.s32.totalorder %s31, 1
        %s815 = scalar_select %p814, %s31, 1
        %s816 = smul.addr %s813, 2
        %s817 = sadd.s32 %s815, %s816
        %s818 = smul.addr %s817, 2
        %s819 = scalar_lea.vmem %s11, %s818
      $region88: #{prm_d_forward.5} parent=75 // pred_fallthru
        _
      // Predicated region
      $region89: #{prm_d_forward.5} parent=75 // pred_check
        %p820 = pneg %p344
      $region90: #{prm_d_forward.5} parent=75 // pred_check_branch
        %822 = sbr.rel (%p820) target = $region92
      $region91: #{prm_d_forward.5} parent=75 // pred_region
        %s823 = smul.u32 %s30, 2
        %s824 = sadd.s32 %s823, %s31
        %p825 = scmp.lt.s32.totalorder %s824, 3
        %s826 = scalar_select %p825, %s824, 3
        %s827 = smul.addr %s826, 4
        %s828 = scalar_lea.vmem %s12, %s827
      $region92: #{prm_d_forward.5} parent=75 // pred_fallthru
        _
    $region76: #{prm_d_forward.5} parent=5 // pred_fallthru
      _
  $region6: #{prm_d_forward.5} parent=0 // loop_footer
    %s23 = sadd.s32 1, %s19
  $region7: #{prm_d_forward.5} parent=0 // loop_footer_branch
    %18 = sbr.rel target = $region3
  $region8: #{prm_d_forward.5} parent=0 // loop_exit
    _

// kernel: prm_d_forward.7
$region0: #{prm_d_forward.7}
  #allocation0 [shape = 'u32[]', space=smem, size = 0x4, offset = 0x4, fixed_abs, tag = 'smem constant byte address 0x4 - core index']
  #allocation1 [shape = 'u32[144,128]{1,0:T(1,128)}', space=vmem, size = 0x12000, scoped, tag = 'internal scratch']
  %s0 = inlined_call_operand.vmem [shape: bf16[2,4,64], index: 0, kind: input, shape index: {}]
  %s1 = inlined_call_operand.vmem [shape: f32[4,1], index: 1, kind: input, shape index: {}]
  %s2 = inlined_call_operand.vmem [shape: f32[4,1], index: 2, kind: input, shape index: {}]
  %s3 = inlined_call_operand.vmem [shape: bf16[8,4], index: 3, kind: input, shape index: {}]
  %s4 = inlined_call_operand.vmem [shape: f32[8,1], index: 4, kind: input, shape index: {}]
  %s5 = inlined_call_operand.vmem [shape: f32[2,8,64], index: 5, kind: output, shape index: {}]
  %s6 = sld [smem:[#allocation0]]
  $region53: #{prm_d_forward.7} parent=0
    _
  %s8 = ssub.s32 1, %s6
  %s9 = scalar_select 0, %s8, %s6
  loop: start=0, step=1, limit=4
  $region2: #{prm_d_forward.7} parent=0 // loop_pre_header
    _
  $region3: #{prm_d_forward.7} parent=0 // loop_header
    %s11 = sphi 0, %s15
    %p12 = scmp.ge.s32.totalorder %s11, 4
    %s18 = sphi 0, %s30
    %s19 = sphi 0, %s26
    %s20 = sphi 0, %s18
    %s21 = sphi 0, %s19
    %s22 = sphi 0, %s20
    %s23 = sphi 0, %s21
    %s35 = sphi 0, %s37
    %s38 = sphi 0, %s35
    %s39 = sphi 0, %s38
    %s55 = sphi 0, %s39
    %s59 = sphi 0, %s59
    %s61 = sphi 0, %s59
    %s62 = sphi 0, %s61
    %s76 = sphi 0, %s62
    %s80 = sphi 0, %s80
    %s82 = sphi 0, %s80
    %s83 = sphi 0, %s82
    %s97 = sphi 0, %s83
    %s101 = sphi 0, %s101
    %s103 = sphi 0, %s101
    %s104 = sphi 0, %s103
    %s118 = sphi 0, %s104
    %s122 = sphi 0, %s122
    %s124 = sphi 0, %s122
    %s125 = sphi 0, %s124
    %s139 = sphi 0, %s125
    %s147 = sphi 0, %s149
    %s150 = sphi 0, %s147
    %s151 = sphi 0, %s150
    %s167 = sphi 0, %s151
  $region4: #{prm_d_forward.7} parent=0 // loop_header_branch
    %14 = sbr.rel (%p12) target = $region8
  $region5: #{prm_d_forward.7} parent=0 // loop_body
    %s16 = ssub.s32 %s11, 1
    %s17 = ssub.s32 %s11, 2
    %s24 = sadd.s32 1, %s19
    %p25 = scmp.ge.s32.totalorder %s24, 1
    %s26 = scalar_select %p25, 0, %s24
    %s27 = sadd.s32 1, %s18
    %s28 = scalar_select %p25, %s27, %s18
    %p29 = scmp.ge.s32.totalorder %s28, 2
    %s30 = scalar_select %p29, 0, %s28
    %s31 = ssub.s32 %s18, %s30
    %s32 = ssub.s32 %s19, %s26
    %s33 = sor.u32 %s31, %s32
    %p34 = scmp.eq.s32.totalorder %s33, 0
    %s36 = sadd.s32 %s35, 1
    %s37 = scalar_select %p34, %s35, %s36
    %p40 = pneg %p34
    %p41 = scmp.eq.s32.totalorder %s11, 1
    %p42 = por %p40, %p41
    %p43 = scmp.ne.s32.totalorder %s35, %s38
    %p44 = scmp.eq.s32.totalorder %s11, 0
    %p45 = por %p43, %p44
    %p46 = scmp.ne.s32.totalorder %s35, %s38
    %p47 = scmp.eq.s32.totalorder %s16, 1
    %p48 = por %p46, %p47
    %p49 = scmp.ne.s32.totalorder %s38, %s39
    %p50 = scmp.eq.s32.totalorder %s16, 0
    %p51 = por %p49, %p50
    %p52 = scmp.ne.s32.totalorder %s38, %s39
    %p53 = scmp.eq.s32.totalorder %s17, 1
    %p54 = por %p52, %p53
    %p56 = scmp.ne.s32.totalorder %s39, %s55
    %p57 = scmp.eq.s32.totalorder %s17, 0
    %p58 = por %p56, %p57
    %s60 = sadd.s32 %s59, 1
    %p63 = scmp.eq.s32.totalorder %s11, 1
    %p64 = scmp.ne.s32.totalorder %s59, %s61
    %p65 = scmp.eq.s32.totalorder %s11, 0
    %p66 = por %p64, %p65
    %p67 = scmp.ne.s32.totalorder %s59, %s61
    %p68 = scmp.eq.s32.totalorder %s16, 1
    %p69 = por %p67, %p68
    %p70 = scmp.ne.s32.totalorder %s61, %s62
    %p71 = scmp.eq.s32.totalorder %s16, 0
    %p72 = por %p70, %p71
    %p73 = scmp.ne.s32.totalorder %s61, %s62
    %p74 = scmp.eq.s32.totalorder %s17, 1
    %p75 = por %p73, %p74
    %p77 = scmp.ne.s32.totalorder %s62, %s76
    %p78 = scmp.eq.s32.totalorder %s17, 0
    %p79 = por %p77, %p78
    %s81 = sadd.s32 %s80, 1
    %p84 = scmp.eq.s32.totalorder %s11, 1
    %p85 = scmp.ne.s32.totalorder %s80, %s82
    %p86 = scmp.eq.s32.totalorder %s11, 0
    %p87 = por %p85, %p86
    %p88 = scmp.ne.s32.totalorder %s80, %s82
    %p89 = scmp.eq.s32.totalorder %s16, 1
    %p90 = por %p88, %p89
    %p91 = scmp.ne.s32.totalorder %s82, %s83
    %p92 = scmp.eq.s32.totalorder %s16, 0
    %p93 = por %p91, %p92
    %p94 = scmp.ne.s32.totalorder %s82, %s83
    %p95 = scmp.eq.s32.totalorder %s17, 1
    %p96 = por %p94, %p95
    %p98 = scmp.ne.s32.totalorder %s83, %s97
    %p99 = scmp.eq.s32.totalorder %s17, 0
    %p100 = por %p98, %p99
    %s102 = sadd.s32 %s101, 1
    %p105 = scmp.eq.s32.totalorder %s11, 1
    %p106 = scmp.ne.s32.totalorder %s101, %s103
    %p107 = scmp.eq.s32.totalorder %s11, 0
    %p108 = por %p106, %p107
    %p109 = scmp.ne.s32.totalorder %s101, %s103
    %p110 = scmp.eq.s32.totalorder %s16, 1
    %p111 = por %p109, %p110
    %p112 = scmp.ne.s32.totalorder %s103, %s104
    %p113 = scmp.eq.s32.totalorder %s16, 0
    %p114 = por %p112, %p113
    %p115 = scmp.ne.s32.totalorder %s103, %s104
    %p116 = scmp.eq.s32.totalorder %s17, 1
    %p117 = por %p115, %p116
    %p119 = scmp.ne.s32.totalorder %s104, %s118
    %p120 = scmp.eq.s32.totalorder %s17, 0
    %p121 = por %p119, %p120
    %s123 = sadd.s32 %s122, 1
    %p126 = scmp.eq.s32.totalorder %s11, 1
    %p127 = scmp.ne.s32.totalorder %s122, %s124
    %p128 = scmp.eq.s32.totalorder %s11, 0
    %p129 = por %p127, %p128
    %p130 = scmp.ne.s32.totalorder %s122, %s124
    %p131 = scmp.eq.s32.totalorder %s16, 1
    %p132 = por %p130, %p131
    %p133 = scmp.ne.s32.totalorder %s124, %s125
    %p134 = scmp.eq.s32.totalorder %s16, 0
    %p135 = por %p133, %p134
    %p136 = scmp.ne.s32.totalorder %s124, %s125
    %p137 = scmp.eq.s32.totalorder %s17, 1
    %p138 = por %p136, %p137
    %p140 = scmp.ne.s32.totalorder %s125, %s139
    %p141 = scmp.eq.s32.totalorder %s17, 0
    %p142 = por %p140, %p141
    %s143 = ssub.s32 %s18, %s30
    %s144 = ssub.s32 %s19, %s26
    %s145 = sor.u32 %s143, %s144
    %p146 = scmp.eq.s32.totalorder %s145, 0
    %s148 = sadd.s32 %s147, 1
    %s149 = scalar_select %p146, %s147, %s148
    %p152 = pneg %p146
    %p153 = scmp.eq.s32.totalorder %s11, 1
    %p154 = por %p152, %p153
    %p155 = scmp.ne.s32.totalorder %s147, %s150
    %p156 = scmp.eq.s32.totalorder %s11, 0
    %p157 = por %p155, %p156
    %p158 = scmp.ne.s32.totalorder %s147, %s150
    %p159 = scmp.eq.s32.totalorder %s16, 1
    %p160 = por %p158, %p159
    %p161 = scmp.ne.s32.totalorder %s150, %s151
    %p162 = scmp.eq.s32.totalorder %s16, 0
    %p163 = por %p161, %p162
    %p164 = scmp.ne.s32.totalorder %s150, %s151
    %p165 = scmp.eq.s32.totalorder %s17, 1
    %p166 = por %p164, %p165
    %p168 = scmp.ne.s32.totalorder %s151, %s167
    %p169 = scmp.eq.s32.totalorder %s17, 0
    %p170 = por %p168, %p169
    %p171 = scmp.le.s32.totalorder 1, %s11
    %p172 = scmp.lt.s32.totalorder %s11, 3
    %p173 = pnand %p171, %p172
    %p174 = pneg %p173
    // Predicated region
    $region9: #{prm_d_forward.7} parent=5 // pred_check
      _
    $region10: #{prm_d_forward.7} parent=5 // pred_check_branch
      %176 = sbr.rel (%p173) target = $region12
    $region11: #{prm_d_forward.7} parent=5 // pred_region
      %s177 = ssub.s32 %s11, 1
      // Predicated region
      $region13: #{prm_d_forward.7} parent=11 // pred_check
        %p178 = pneg %p72
      $region14: #{prm_d_forward.7} parent=11 // pred_check_branch
        %180 = sbr.rel (%p178) target = $region16
      $region15: #{prm_d_forward.7} parent=11 // pred_region
        _
      $region16: #{prm_d_forward.7} parent=11 // pred_fallthru
        _
      // Predicated region
      $region17: #{prm_d_forward.7} parent=11 // pred_check
        %p181 = pneg %p93
      $region18: #{prm_d_forward.7} parent=11 // pred_check_branch
        %183 = sbr.rel (%p181) target = $region20
      $region19: #{prm_d_forward.7} parent=11 // pred_region
        _
      $region20: #{prm_d_forward.7} parent=11 // pred_fallthru
        _
      // Predicated region
      $region21: #{prm_d_forward.7} parent=11 // pred_check
        %p184 = pneg %p114
      $region22: #{prm_d_forward.7} parent=11 // pred_check_branch
        %186 = sbr.rel (%p184) target = $region24
      $region23: #{prm_d_forward.7} parent=11 // pred_region
        _
      $region24: #{prm_d_forward.7} parent=11 // pred_fallthru
        _
      // Predicated region
      $region25: #{prm_d_forward.7} parent=11 // pred_check
        %p187 = pneg %p135
      $region26: #{prm_d_forward.7} parent=11 // pred_check_branch
        %189 = sbr.rel (%p187) target = $region28
      $region27: #{prm_d_forward.7} parent=11 // pred_region
        _
      $region28: #{prm_d_forward.7} parent=11 // pred_fallthru
        _
    $region12: #{prm_d_forward.7} parent=5 // pred_fallthru
      _
    %p190 = scmp.lt.s32.totalorder %s11, 2
    // Predicated region
    $region29: #{prm_d_forward.7} parent=5 // pred_check
      %p191 = pneg %p190
    $region30: #{prm_d_forward.7} parent=5 // pred_check_branch
      %193 = sbr.rel (%p191) target = $region32
    $region31: #{prm_d_forward.7} parent=5 // pred_region
      // Predicated region
      $region33: #{prm_d_forward.7} parent=31 // pred_check
        %p194 = pneg %p45
      $region34: #{prm_d_forward.7} parent=31 // pred_check_branch
        %196 = sbr.rel (%p194) target = $region36
      $region35: #{prm_d_forward.7} parent=31 // pred_region
        %p197 = scmp.lt.s32.totalorder %s18, 1
        %s198 = scalar_select %p197, %s18, 1
        %p199 = scmp.lt.s32.totalorder %s19, 0
        %s200 = scalar_select %p199, %s19, 0
        %s201 = sadd.s32 %s200, %s198
        %s202 = smul.addr %s201, 2
        %s203 = scalar_lea.vmem %s0, %s202
      $region36: #{prm_d_forward.7} parent=31 // pred_fallthru
        _
    $region32: #{prm_d_forward.7} parent=5 // pred_fallthru
      _
    %p204 = scmp.le.s32.totalorder 1, %s11
    %p205 = scmp.lt.s32.totalorder %s11, 3
    %p206 = pnand %p204, %p205
    %p207 = pneg %p206
    // Predicated region
    $region37: #{prm_d_forward.7} parent=5 // pred_check
      _
    $region38: #{prm_d_forward.7} parent=5 // pred_check_branch
      %209 = sbr.rel (%p206) target = $region40
    $region39: #{prm_d_forward.7} parent=5 // pred_region
      %s210 = ssub.s32 %s11, 1
      %p211 = scmp.lt.s32.totalorder %s20, 1
      %s212 = scalar_select %p211, %s20, 1
      %p213 = scmp.lt.s32.totalorder %s21, 0
      %s214 = scalar_select %p213, %s21, 0
      %s215 = sadd.s32 %s214, %s212
      %s216 = smul.addr %s215, 2
      %s217 = scalar_lea.vmem %s0, %s216
      %p218 = pneg %p51
      %p219 = pneg %p48
      %p220 = pneg %p72
      %p221 = pneg %p69
      %p222 = pneg %p93
      %p223 = pneg %p90
      %p224 = pneg %p114
      %p225 = pneg %p111
      %p226 = pneg %p135
      %p227 = pneg %p132
      %p228 = pneg %p163
      %p229 = pneg %p160
      %p230 = scmp.lt.s32.totalorder %s20, 1
      %s231 = scalar_select %p230, %s20, 1
      %p232 = scmp.lt.s32.totalorder %s21, 0
      %s233 = scalar_select %p232, %s21, 0
      %s234 = sadd.s32 %s233, %s231
      %s235 = smul.addr %s234, 8
      %s236 = scalar_lea.vmem %s5, %s235
      %p237 = scmp.lt.s32.totalorder %s20, 1
      %s238 = scalar_select %p237, %s20, 1
      %p239 = scmp.lt.s32.totalorder %s21, 0
      %s240 = scalar_select %p239, %s21, 0
      %s241 = sadd.s32 %s240, %s238
      %s242 = smul.addr %s241, 2
      %s243 = scalar_lea.vmem %s0, %s242
      %p244 = scmp.lt.s32.totalorder %s20, 1
      %s245 = scalar_select %p244, %s20, 1
      %p246 = scmp.lt.s32.totalorder %s21, 0
      %s247 = scalar_select %p246, %s21, 0
      %s248 = sadd.s32 %s247, %s245
      %s249 = smul.addr %s248, 8
      %s250 = scalar_lea.vmem %s5, %s249
      %v252 = vld [vmem:[%s243] sm:$0x3]
      %v253 = vunpack.c.l.bf16 %v252
      %v254 = vld [vmem:[%s1] sm:$0xf]
      %256 = vset.pattern.permute.xlu0 0
      %257 = vperm.xlu0 %256, %v254
      %v258 = vpop.permute.xlu0 %257
      %v260 = vmul.f32 %v253, %v258
      %v261 = vld [vmem:[%s2] sm:$0xf]
      %263 = vset.pattern.permute.xlu0 0
      %264 = vperm.xlu0 %263, %v261
      %v265 = vpop.permute.xlu0 %264
      %v267 = vadd.f32 %v260, %v265
      %v268 = vmax.f32 %v267, 0.0
      %v269 = vpack.c.bf16 %v268, %v268
      %v270 = vld [vmem:[%s3] sm:$0xf]
      %v271 = vld [vmem:[%s4] sm:$0xff]
      %273 = vset.pattern.permute.xlu0 0
      %274 = vperm.xlu0 %273, %v271
      %v275 = vpop.permute.xlu0 %274
      %vm277 = vcmask 31744
      %v279 = vsel %vm277, %v270, 0
      %vm281 = vcmask 1041408
      %v283 = vsel %vm281, %v269, 0
      %285 = vmatprep.subr.bf16.mxu0 0
      %286 = vmatpush1.bf16.msra.mxu0 %v283
      %287 = vmatprep.subr.bf16.mxu0 0
      %288 = vmatpush1.bf16.msra.mxu0 0
      %289 = vmatprep.subr.bf16.mxu0 0
      %290 = vmatpush1.bf16.msra.mxu0 0
      %291 = vmatprep.subr.bf16.mxu0 0
      %292 = vmatpush1.bf16.msra.mxu0 0
      %293 = vmatprep.subr.bf16.mxu0 0
      %294 = vmatpush1.bf16.msra.mxu0 0
      %295 = vmatprep.subr.bf16.mxu0 0
      %296 = vmatpush1.bf16.msra.mxu0 0
      %297 = vmatprep.subr.bf16.mxu0 0
      %298 = vmatpush1.bf16.msra.mxu0 0
      %299 = vmatprep.subr.bf16.mxu0 0
      %300 = vmatpush1.bf16.msra.mxu0 0
      %301 = vmatprep.subr.bf16.mxu0 0
      %302 = vmatpush1.bf16.msra.mxu0 0
      %303 = vmatprep.subr.bf16.mxu0 0
      %304 = vmatpush1.bf16.msra.mxu0 0
      %305 = vmatprep.subr.bf16.mxu0 0
      %306 = vmatpush1.bf16.msra.mxu0 0
      %307 = vmatprep.subr.bf16.mxu0 0
      %308 = vmatpush1.bf16.msra.mxu0 0
      %309 = vmatprep.subr.bf16.mxu0 0
      %310 = vmatpush1.bf16.msra.mxu0 0
      %311 = vmatprep.subr.bf16.mxu0 0
      %312 = vmatpush1.bf16.msra.mxu0 0
      %313 = vmatprep.subr.bf16.mxu0 0
      %314 = vmatpush1.bf16.msra.mxu0 0
      %315 = vmatprep.subr.bf16.mxu0 0
      %316 = vmatpush1.bf16.msra.mxu0 0
      %317 = vmatprep.mubr.bf16.mxu0 0
      %318 = vmatmul.mubr.bf16.gmra.mrb[0].mxu0 %v279
      %v319 = vpop.f32.mrb[0].mxu0
      %v320 = vadd.f32 %v275, %v319
      %v321 = vpop.f32.mrb[0].mxu0
      %v322 = vpop.f32.mrb[0].mxu0
      %v323 = vpop.f32.mrb[0].mxu0
      %324 = vdwg.mxu0
      %vm325 = vcmask 523264
      %326 = vst.msk [vmem:[%s250] sm:$0xff] %vm325, %v320
      %p327 = scmp.lt.s32.totalorder %s20, 1
      %s328 = scalar_select %p327, %s20, 1
      %p329 = scmp.lt.s32.totalorder %s21, 0
      %s330 = scalar_select %p329, %s21, 0
      %s331 = sadd.s32 %s330, %s328
      %s332 = smul.addr %s331, 8
      %s333 = scalar_lea.vmem %s5, %s332
      // Predicated region
      $region41: #{prm_d_forward.7} parent=39 // pred_check
        %p334 = pneg %p160
      $region42: #{prm_d_forward.7} parent=39 // pred_check_branch
        %336 = sbr.rel (%p334) target = $region44
      $region43: #{prm_d_forward.7} parent=39 // pred_region
        _
      $region44: #{prm_d_forward.7} parent=39 // pred_fallthru
        _
    $region40: #{prm_d_forward.7} parent=5 // pred_fallthru
      _
    %p337 = scmp.le.s32.totalorder 2, %s11
    // Predicated region
    $region45: #{prm_d_forward.7} parent=5 // pred_check
      %p338 = pneg %p337
    $region46: #{prm_d_forward.7} parent=5 // pred_check_branch
      %340 = sbr.rel (%p338) target = $region48
    $region47: #{prm_d_forward.7} parent=5 // pred_region
      %s341 = ssub.s32 %s11, 2
      // Predicated region
      $region49: #{prm_d_forward.7} parent=47 // pred_check
        %p342 = pneg %p166
      $region50: #{prm_d_forward.7} parent=47 // pred_check_branch
        %344 = sbr.rel (%p342) target = $region52
      $region51: #{prm_d_forward.7} parent=47 // pred_region
        %p345 = scmp.lt.s32.totalorder %s22, 1
        %s346 = scalar_select %p345, %s22, 1
        %p347 = scmp.lt.s32.totalorder %s23, 0
        %s348 = scalar_select %p347, %s23, 0
        %s349 = sadd.s32 %s348, %s346
        %s350 = smul.addr %s349, 8
        %s351 = scalar_lea.vmem %s5, %s350
      $region52: #{prm_d_forward.7} parent=47 // pred_fallthru
        _
    $region48: #{prm_d_forward.7} parent=5 // pred_fallthru
      _
  $region6: #{prm_d_forward.7} parent=0 // loop_footer
    %s15 = sadd.s32 1, %s11
  $region7: #{prm_d_forward.7} parent=0 // loop_footer_branch
    %10 = sbr.rel target = $region3
  $region8: #{prm_d_forward.7} parent=0 // loop_exit
    _

// kernel: prm_d_forward.6
$region0: #{prm_d_forward.6}
  #allocation0 [shape = 'u32[]', space=smem, size = 0x4, offset = 0x4, fixed_abs, tag = 'smem constant byte address 0x4 - core index']
  #allocation1 [shape = 'u32[144,128]{1,0:T(1,128)}', space=vmem, size = 0x12000, scoped, tag = 'internal scratch']
  %s0 = inlined_call_operand.vmem [shape: bf16[2,4,102], index: 0, kind: input, shape index: {}]
  %s1 = inlined_call_operand.vmem [shape: f32[1,102], index: 1, kind: input, shape index: {}]
  %s2 = inlined_call_operand.vmem [shape: f32[1,4,1], index: 2, kind: input, shape index: {}]
  %s3 = inlined_call_operand.vmem [shape: f32[1,4,1], index: 3, kind: input, shape index: {}]
  %s4 = inlined_call_operand.vmem [shape: bf16[9,4,4], index: 4, kind: input, shape index: {}]
  %s5 = inlined_call_operand.vmem [shape: f32[4,1], index: 5, kind: input, shape index: {}]
  %s6 = inlined_call_operand.vmem [shape: bf16[2,4,64], index: 6, kind: output, shape index: {0}]
  %s7 = inlined_call_operand.vmem [shape: f32[2,4,2], index: 7, kind: output, shape index: {1}]
  %8 = xla_tuple %s6, %s7
  %s9 = sld [smem:[#allocation0]]
  $region65: #{prm_d_forward.6} parent=0
    _
  %s11 = ssub.s32 1, %s9
  %s12 = scalar_select 0, %s11, %s9
  loop: start=0, step=1, limit=4
  $region2: #{prm_d_forward.6} parent=0 // loop_pre_header
    _
  $region3: #{prm_d_forward.6} parent=0 // loop_header
    %s14 = sphi 0, %s18
    %p15 = scmp.ge.s32.totalorder %s14, 4
    %s24 = sphi 0, %s26
    %s27 = sphi 0, %s24
    %s28 = sphi 0, %s27
    %s44 = sphi 0, %s28
    %s48 = sphi 0, %s48
    %s50 = sphi 0, %s48
    %s51 = sphi 0, %s50
    %s65 = sphi 0, %s51
    %s69 = sphi 0, %s69
    %s71 = sphi 0, %s69
    %s72 = sphi 0, %s71
    %s86 = sphi 0, %s72
    %s90 = sphi 0, %s90
    %s92 = sphi 0, %s90
    %s93 = sphi 0, %s92
    %s107 = sphi 0, %s93
    %s111 = sphi 0, %s111
    %s113 = sphi 0, %s111
    %s114 = sphi 0, %s113
    %s128 = sphi 0, %s114
    %s132 = sphi 0, %s132
    %s134 = sphi 0, %s132
    %s135 = sphi 0, %s134
    %s149 = sphi 0, %s135
    %s155 = sphi 0, %s157
    %s158 = sphi 0, %s155
    %s159 = sphi 0, %s158
    %s175 = sphi 0, %s159
    %s181 = sphi 0, %s183
    %s184 = sphi 0, %s181
    %s185 = sphi 0, %s184
    %s201 = sphi 0, %s185
  $region4: #{prm_d_forward.6} parent=0 // loop_header_branch
    %17 = sbr.rel (%p15) target = $region8
  $region5: #{prm_d_forward.6} parent=0 // loop_body
    %s19 = ssub.s32 %s14, 1
    %s20 = ssub.s32 %s14, 2
    %s21 = sadd.s32 %s14, 1
    %s22 = ssub.s32 %s14, %s21
    %p23 = scmp.eq.s32.totalorder %s22, 0
    %s25 = sadd.s32 %s24, 1
    %s26 = scalar_select %p23, %s24, %s25
    %p29 = pneg %p23
    %p30 = scmp.eq.s32.totalorder %s14, 1
    %p31 = por %p29, %p30
    %p32 = scmp.ne.s32.totalorder %s24, %s27
    %p33 = scmp.eq.s32.totalorder %s14, 0
    %p34 = por %p32, %p33
    %p35 = scmp.ne.s32.totalorder %s24, %s27
    %p36 = scmp.eq.s32.totalorder %s19, 1
    %p37 = por %p35, %p36
    %p38 = scmp.ne.s32.totalorder %s27, %s28
    %p39 = scmp.eq.s32.totalorder %s19, 0
    %p40 = por %p38, %p39
    %p41 = scmp.ne.s32.totalorder %s27, %s28
    %p42 = scmp.eq.s32.totalorder %s20, 1
    %p43 = por %p41, %p42
    %p45 = scmp.ne.s32.totalorder %s28, %s44
    %p46 = scmp.eq.s32.totalorder %s20, 0
    %p47 = por %p45, %p46
    %s49 = sadd.s32 %s48, 1
    %p52 = scmp.eq.s32.totalorder %s14, 1
    %p53 = scmp.ne.s32.totalorder %s48, %s50
    %p54 = scmp.eq.s32.totalorder %s14, 0
    %p55 = por %p53, %p54
    %p56 = scmp.ne.s32.totalorder %s48, %s50
    %p57 = scmp.eq.s32.totalorder %s19, 1
    %p58 = por %p56, %p57
    %p59 = scmp.ne.s32.totalorder %s50, %s51
    %p60 = scmp.eq.s32.totalorder %s19, 0
    %p61 = por %p59, %p60
    %p62 = scmp.ne.s32.totalorder %s50, %s51
    %p63 = scmp.eq.s32.totalorder %s20, 1
    %p64 = por %p62, %p63
    %p66 = scmp.ne.s32.totalorder %s51, %s65
    %p67 = scmp.eq.s32.totalorder %s20, 0
    %p68 = por %p66, %p67
    %s70 = sadd.s32 %s69, 1
    %p73 = scmp.eq.s32.totalorder %s14, 1
    %p74 = scmp.ne.s32.totalorder %s69, %s71
    %p75 = scmp.eq.s32.totalorder %s14, 0
    %p76 = por %p74, %p75
    %p77 = scmp.ne.s32.totalorder %s69, %s71
    %p78 = scmp.eq.s32.totalorder %s19, 1
    %p79 = por %p77, %p78
    %p80 = scmp.ne.s32.totalorder %s71, %s72
    %p81 = scmp.eq.s32.totalorder %s19, 0
    %p82 = por %p80, %p81
    %p83 = scmp.ne.s32.totalorder %s71, %s72
    %p84 = scmp.eq.s32.totalorder %s20, 1
    %p85 = por %p83, %p84
    %p87 = scmp.ne.s32.totalorder %s72, %s86
    %p88 = scmp.eq.s32.totalorder %s20, 0
    %p89 = por %p87, %p88
    %s91 = sadd.s32 %s90, 1
    %p94 = scmp.eq.s32.totalorder %s14, 1
    %p95 = scmp.ne.s32.totalorder %s90, %s92
    %p96 = scmp.eq.s32.totalorder %s14, 0
    %p97 = por %p95, %p96
    %p98 = scmp.ne.s32.totalorder %s90, %s92
    %p99 = scmp.eq.s32.totalorder %s19, 1
    %p100 = por %p98, %p99
    %p101 = scmp.ne.s32.totalorder %s92, %s93
    %p102 = scmp.eq.s32.totalorder %s19, 0
    %p103 = por %p101, %p102
    %p104 = scmp.ne.s32.totalorder %s92, %s93
    %p105 = scmp.eq.s32.totalorder %s20, 1
    %p106 = por %p104, %p105
    %p108 = scmp.ne.s32.totalorder %s93, %s107
    %p109 = scmp.eq.s32.totalorder %s20, 0
    %p110 = por %p108, %p109
    %s112 = sadd.s32 %s111, 1
    %p115 = scmp.eq.s32.totalorder %s14, 1
    %p116 = scmp.ne.s32.totalorder %s111, %s113
    %p117 = scmp.eq.s32.totalorder %s14, 0
    %p118 = por %p116, %p117
    %p119 = scmp.ne.s32.totalorder %s111, %s113
    %p120 = scmp.eq.s32.totalorder %s19, 1
    %p121 = por %p119, %p120
    %p122 = scmp.ne.s32.totalorder %s113, %s114
    %p123 = scmp.eq.s32.totalorder %s19, 0
    %p124 = por %p122, %p123
    %p125 = scmp.ne.s32.totalorder %s113, %s114
    %p126 = scmp.eq.s32.totalorder %s20, 1
    %p127 = por %p125, %p126
    %p129 = scmp.ne.s32.totalorder %s114, %s128
    %p130 = scmp.eq.s32.totalorder %s20, 0
    %p131 = por %p129, %p130
    %s133 = sadd.s32 %s132, 1
    %p136 = scmp.eq.s32.totalorder %s14, 1
    %p137 = scmp.ne.s32.totalorder %s132, %s134
    %p138 = scmp.eq.s32.totalorder %s14, 0
    %p139 = por %p137, %p138
    %p140 = scmp.ne.s32.totalorder %s132, %s134
    %p141 = scmp.eq.s32.totalorder %s19, 1
    %p142 = por %p140, %p141
    %p143 = scmp.ne.s32.totalorder %s134, %s135
    %p144 = scmp.eq.s32.totalorder %s19, 0
    %p145 = por %p143, %p144
    %p146 = scmp.ne.s32.totalorder %s134, %s135
    %p147 = scmp.eq.s32.totalorder %s20, 1
    %p148 = por %p146, %p147
    %p150 = scmp.ne.s32.totalorder %s135, %s149
    %p151 = scmp.eq.s32.totalorder %s20, 0
    %p152 = por %p150, %p151
    %s153 = ssub.s32 %s14, %s21
    %p154 = scmp.eq.s32.totalorder %s153, 0
    %s156 = sadd.s32 %s155, 1
    %s157 = scalar_select %p154, %s155, %s156
    %p160 = pneg %p154
    %p161 = scmp.eq.s32.totalorder %s14, 1
    %p162 = por %p160, %p161
    %p163 = scmp.ne.s32.totalorder %s155, %s158
    %p164 = scmp.eq.s32.totalorder %s14, 0
    %p165 = por %p163, %p164
    %p166 = scmp.ne.s32.totalorder %s155, %s158
    %p167 = scmp.eq.s32.totalorder %s19, 1
    %p168 = por %p166, %p167
    %p169 = scmp.ne.s32.totalorder %s158, %s159
    %p170 = scmp.eq.s32.totalorder %s19, 0
    %p171 = por %p169, %p170
    %p172 = scmp.ne.s32.totalorder %s158, %s159
    %p173 = scmp.eq.s32.totalorder %s20, 1
    %p174 = por %p172, %p173
    %p176 = scmp.ne.s32.totalorder %s159, %s175
    %p177 = scmp.eq.s32.totalorder %s20, 0
    %p178 = por %p176, %p177
    %s179 = ssub.s32 %s14, %s21
    %p180 = scmp.eq.s32.totalorder %s179, 0
    %s182 = sadd.s32 %s181, 1
    %s183 = scalar_select %p180, %s181, %s182
    %p186 = pneg %p180
    %p187 = scmp.eq.s32.totalorder %s14, 1
    %p188 = por %p186, %p187
    %p189 = scmp.ne.s32.totalorder %s181, %s184
    %p190 = scmp.eq.s32.totalorder %s14, 0
    %p191 = por %p189, %p190
    %p192 = scmp.ne.s32.totalorder %s181, %s184
    %p193 = scmp.eq.s32.totalorder %s19, 1
    %p194 = por %p192, %p193
    %p195 = scmp.ne.s32.totalorder %s184, %s185
    %p196 = scmp.eq.s32.totalorder %s19, 0
    %p197 = por %p195, %p196
    %p198 = scmp.ne.s32.totalorder %s184, %s185
    %p199 = scmp.eq.s32.totalorder %s20, 1
    %p200 = por %p198, %p199
    %p202 = scmp.ne.s32.totalorder %s185, %s201
    %p203 = scmp.eq.s32.totalorder %s20, 0
    %p204 = por %p202, %p203
    %p205 = scmp.le.s32.totalorder 1, %s14
    %p206 = scmp.lt.s32.totalorder %s14, 3
    %p207 = pnand %p205, %p206
    %p208 = pneg %p207
    // Predicated region
    $region9: #{prm_d_forward.6} parent=5 // pred_check
      _
    $region10: #{prm_d_forward.6} parent=5 // pred_check_branch
      %210 = sbr.rel (%p207) target = $region12
    $region11: #{prm_d_forward.6} parent=5 // pred_region
      %s211 = ssub.s32 %s14, 1
      // Predicated region
      $region13: #{prm_d_forward.6} parent=11 // pred_check
        %p212 = pneg %p61
      $region14: #{prm_d_forward.6} parent=11 // pred_check_branch
        %214 = sbr.rel (%p212) target = $region16
      $region15: #{prm_d_forward.6} parent=11 // pred_region
        _
      $region16: #{prm_d_forward.6} parent=11 // pred_fallthru
        _
      // Predicated region
      $region17: #{prm_d_forward.6} parent=11 // pred_check
        %p215 = pneg %p82
      $region18: #{prm_d_forward.6} parent=11 // pred_check_branch
        %217 = sbr.rel (%p215) target = $region20
      $region19: #{prm_d_forward.6} parent=11 // pred_region
        _
      $region20: #{prm_d_forward.6} parent=11 // pred_fallthru
        _
      // Predicated region
      $region21: #{prm_d_forward.6} parent=11 // pred_check
        %p218 = pneg %p103
      $region22: #{prm_d_forward.6} parent=11 // pred_check_branch
        %220 = sbr.rel (%p218) target = $region24
      $region23: #{prm_d_forward.6} parent=11 // pred_region
        _
      $region24: #{prm_d_forward.6} parent=11 // pred_fallthru
        _
      // Predicated region
      $region25: #{prm_d_forward.6} parent=11 // pred_check
        %p221 = pneg %p124
      $region26: #{prm_d_forward.6} parent=11 // pred_check_branch
        %223 = sbr.rel (%p221) target = $region28
      $region27: #{prm_d_forward.6} parent=11 // pred_region
        _
      $region28: #{prm_d_forward.6} parent=11 // pred_fallthru
        _
      // Predicated region
      $region29: #{prm_d_forward.6} parent=11 // pred_check
        %p224 = pneg %p145
      $region30: #{prm_d_forward.6} parent=11 // pred_check_branch
        %226 = sbr.rel (%p224) target = $region32
      $region31: #{prm_d_forward.6} parent=11 // pred_region
        _
      $region32: #{prm_d_forward.6} parent=11 // pred_fallthru
        _
    $region12: #{prm_d_forward.6} parent=5 // pred_fallthru
      _
    %p227 = scmp.lt.s32.totalorder %s14, 2
    // Predicated region
    $region33: #{prm_d_forward.6} parent=5 // pred_check
      %p228 = pneg %p227
    $region34: #{prm_d_forward.6} parent=5 // pred_check_branch
      %230 = sbr.rel (%p228) target = $region36
    $region35: #{prm_d_forward.6} parent=5 // pred_region
      // Predicated region
      $region37: #{prm_d_forward.6} parent=35 // pred_check
        %p231 = pneg %p34
      $region38: #{prm_d_forward.6} parent=35 // pred_check_branch
        %233 = sbr.rel (%p231) target = $region40
      $region39: #{prm_d_forward.6} parent=35 // pred_region
        %p234 = scmp.lt.s32.totalorder %s14, 1
        %s235 = scalar_select %p234, %s14, 1
        %s236 = smul.addr %s235, 2
        %s237 = scalar_lea.vmem %s0, %s236
      $region40: #{prm_d_forward.6} parent=35 // pred_fallthru
        _
    $region36: #{prm_d_forward.6} parent=5 // pred_fallthru
      _
    %p238 = scmp.le.s32.totalorder 1, %s14
    %p239 = scmp.lt.s32.totalorder %s14, 3
    %p240 = pnand %p238, %p239
    %p241 = pneg %p240
    // Predicated region
    $region41: #{prm_d_forward.6} parent=5 // pred_check
      _
    $region42: #{prm_d_forward.6} parent=5 // pred_check_branch
      %243 = sbr.rel (%p240) target = $region44
    $region43: #{prm_d_forward.6} parent=5 // pred_region
      %s244 = ssub.s32 %s14, 1
      %p245 = scmp.lt.s32.totalorder %s19, 1
      %s246 = scalar_select %p245, %s19, 1
      %s247 = smul.addr %s246, 2
      %s248 = scalar_lea.vmem %s0, %s247
      %p249 = pneg %p40
      %p250 = pneg %p37
      %p251 = pneg %p61
      %p252 = pneg %p58
      %p253 = pneg %p82
      %p254 = pneg %p79
      %p255 = pneg %p103
      %p256 = pneg %p100
      %p257 = pneg %p124
      %p258 = pneg %p121
      %p259 = pneg %p145
      %p260 = pneg %p142
      %p261 = pneg %p171
      %p262 = pneg %p168
      %p263 = scmp.lt.s32.totalorder %s19, 1
      %s264 = scalar_select %p263, %s19, 1
      %s265 = smul.addr %s264, 2
      %s266 = scalar_lea.vmem %s6, %s265
      %p267 = pneg %p197
      %p268 = pneg %p194
      %p269 = scmp.lt.s32.totalorder %s19, 1
      %s270 = scalar_select %p269, %s19, 1
      %s271 = smul.addr %s270, 4
      %s272 = scalar_lea.vmem %s7, %s271
      %p273 = scmp.lt.s32.totalorder %s19, 1
      %s274 = scalar_select %p273, %s19, 1
      %s275 = smul.addr %s274, 2
      %s276 = scalar_lea.vmem %s0, %s275
      %p277 = scmp.lt.s32.totalorder %s19, 1
      %s278 = scalar_select %p277, %s19, 1
      %s279 = smul.addr %s278, 2
      %s280 = scalar_lea.vmem %s6, %s279
      %p281 = scmp.lt.s32.totalorder %s19, 1
      %s282 = scalar_select %p281, %s19, 1
      %s283 = smul.addr %s282, 4
      %s284 = scalar_lea.vmem %s7, %s283
      %v286 = vld [vmem:[%s276] sm:$0x3]
      %v287 = vunpack.c.l.bf16 %v286
      %v288 = vld [vmem:[%s1] sm:$0x1]
      %v289 = vld [vmem:[%s2] sm:$0xf]
      %291 = vset.pattern.permute.xlu0 0
      %292 = vperm.xlu0 %291, %v289
      %v293 = vpop.permute.xlu0 %292
      %v295 = vmul.f32 %v287, %v293
      %v296 = vld [vmem:[%s3] sm:$0xf]
      %298 = vset.pattern.permute.xlu0 0
      %299 = vperm.xlu0 %298, %v296
      %v300 = vpop.permute.xlu0 %299
      %v302 = vadd.f32 %v295, %v300
      %v303 = vmax.f32 %v302, 0.0
      %v305 = vlaneseq
      %v306 = vshrl.u32 %v305, 7
      %v307 = vsub.s32 0, %v306
      %v308 = vrot.slane %v288, %v307
      %v310 = vmul.f32 %v303, %v308
      %v311 = vpack.c.bf16 %v310, %v310
      %v312 = vld [vmem:[%s4] sm:$0x3]
      %s313 = scalar_lea.vmem %s4, 2
      %v314 = vld [vmem:[%s313] sm:$0x3]
      %316 = vrot.lane.b32.xlu0 %v311, 127
      %v317 = vpop.permute.xlu0 %316
      %vm318 = vcmask 31744
      %v320 = vsel %vm318, %v314, 0
      %vm322 = vcmask 1041408
      %v324 = vsel %vm322, %v317, 0
      %326 = vmatprep.subr.bf16.mxu0 0
      %327 = vmatpush1.bf16.msra.mxu0 %v324
      %328 = vmatprep.subr.bf16.mxu0 0
      %329 = vmatpush1.bf16.msra.mxu0 0
      %330 = vmatprep.subr.bf16.mxu0 0
      %331 = vmatpush1.bf16.msra.mxu0 0
      %332 = vmatprep.subr.bf16.mxu0 0
      %333 = vmatpush1.bf16.msra.mxu0 0
      %334 = vmatprep.subr.bf16.mxu0 0
      %335 = vmatpush1.bf16.msra.mxu0 0
      %336 = vmatprep.subr.bf16.mxu0 0
      %337 = vmatpush1.bf16.msra.mxu0 0
      %338 = vmatprep.subr.bf16.mxu0 0
      %339 = vmatpush1.bf16.msra.mxu0 0
      %340 = vmatprep.subr.bf16.mxu0 0
      %341 = vmatpush1.bf16.msra.mxu0 0
      %342 = vmatprep.subr.bf16.mxu0 0
      %343 = vmatpush1.bf16.msra.mxu0 0
      %344 = vmatprep.subr.bf16.mxu0 0
      %345 = vmatpush1.bf16.msra.mxu0 0
      %346 = vmatprep.subr.bf16.mxu0 0
      %347 = vmatpush1.bf16.msra.mxu0 0
      %348 = vmatprep.subr.bf16.mxu0 0
      %349 = vmatpush1.bf16.msra.mxu0 0
      %350 = vmatprep.subr.bf16.mxu0 0
      %351 = vmatpush1.bf16.msra.mxu0 0
      %352 = vmatprep.subr.bf16.mxu0 0
      %353 = vmatpush1.bf16.msra.mxu0 0
      %354 = vmatprep.subr.bf16.mxu0 0
      %355 = vmatpush1.bf16.msra.mxu0 0
      %356 = vmatprep.subr.bf16.mxu0 0
      %357 = vmatpush1.bf16.msra.mxu0 0
      %358 = vmatprep.mubr.bf16.mxu0 0
      %359 = vmatmul.mubr.bf16.gmra.mrb[0].mxu0 %v320
      %v360 = vpop.f32.mrb[0].mxu0
      %v361 = vadd.f32 0.0, %v360
      %v362 = vpop.f32.mrb[0].mxu0
      %v363 = vpop.f32.mrb[0].mxu0
      %v364 = vpop.f32.mrb[0].mxu0
      %365 = vdwg.mxu0
      %v367 = vsel %vm318, %v312, 0
      %v370 = vsel %vm322, %v311, 0
      %372 = vmatprep.subr.bf16.mxu0 0
      %373 = vmatpush1.bf16.msra.mxu0 %v370
      %374 = vmatprep.subr.bf16.mxu0 0
      %375 = vmatpush1.bf16.msra.mxu0 0
      %376 = vmatprep.subr.bf16.mxu0 0
      %377 = vmatpush1.bf16.msra.mxu0 0
      %378 = vmatprep.subr.bf16.mxu0 0
      %379 = vmatpush1.bf16.msra.mxu0 0
      %380 = vmatprep.subr.bf16.mxu0 0
      %381 = vmatpush1.bf16.msra.mxu0 0
      %382 = vmatprep.subr.bf16.mxu0 0
      %383 = vmatpush1.bf16.msra.mxu0 0
      %384 = vmatprep.subr.bf16.mxu0 0
      %385 = vmatpush1.bf16.msra.mxu0 0
      %386 = vmatprep.subr.bf16.mxu0 0
      %387 = vmatpush1.bf16.msra.mxu0 0
      %388 = vmatprep.subr.bf16.mxu0 0
      %389 = vmatpush1.bf16.msra.mxu0 0
      %390 = vmatprep.subr.bf16.mxu0 0
      %391 = vmatpush1.bf16.msra.mxu0 0
      %392 = vmatprep.subr.bf16.mxu0 0
      %393 = vmatpush1.bf16.msra.mxu0 0
      %394 = vmatprep.subr.bf16.mxu0 0
      %395 = vmatpush1.bf16.msra.mxu0 0
      %396 = vmatprep.subr.bf16.mxu0 0
      %397 = vmatpush1.bf16.msra.mxu0 0
      %398 = vmatprep.subr.bf16.mxu0 0
      %399 = vmatpush1.bf16.msra.mxu0 0
      %400 = vmatprep.subr.bf16.mxu0 0
      %401 = vmatpush1.bf16.msra.mxu0 0
      %402 = vmatprep.subr.bf16.mxu0 0
      %403 = vmatpush1.bf16.msra.mxu0 0
      %404 = vmatprep.mubr.bf16.mxu0 0
      %405 = vmatmul.mubr.bf16.gmra.mrb[0].mxu0 %v367
      %v406 = vpop.f32.mrb[0].mxu0
      %v407 = vadd.f32 %v361, %v406
      %v408 = vpop.f32.mrb[0].mxu0
      %v409 = vpop.f32.mrb[0].mxu0
      %v410 = vpop.f32.mrb[0].mxu0
      %411 = vdwg.mxu0
      %s412 = scalar_lea.vmem %s4, 4
      %v413 = vld [vmem:[%s412] sm:$0x3]
      %414 = vrot.lane.b32.xlu0 %v311, 126
      %v415 = vpop.permute.xlu0 %414
      %v417 = vsel %vm318, %v413, 0
      %v420 = vsel %vm322, %v415, 0
      %422 = vmatprep.subr.bf16.mxu0 0
      %423 = vmatpush1.bf16.msra.mxu0 %v420
      %424 = vmatprep.subr.bf16.mxu0 0
      %425 = vmatpush1.bf16.msra.mxu0 0
      %426 = vmatprep.subr.bf16.mxu0 0
      %427 = vmatpush1.bf16.msra.mxu0 0
      %428 = vmatprep.subr.bf16.mxu0 0
      %429 = vmatpush1.bf16.msra.mxu0 0
      %430 = vmatprep.subr.bf16.mxu0 0
      %431 = vmatpush1.bf16.msra.mxu0 0
      %432 = vmatprep.subr.bf16.mxu0 0
      %433 = vmatpush1.bf16.msra.mxu0 0
      %434 = vmatprep.subr.bf16.mxu0 0
      %435 = vmatpush1.bf16.msra.mxu0 0
      %436 = vmatprep.subr.bf16.mxu0 0
      %437 = vmatpush1.bf16.msra.mxu0 0
      %438 = vmatprep.subr.bf16.mxu0 0
      %439 = vmatpush1.bf16.msra.mxu0 0
      %440 = vmatprep.subr.bf16.mxu0 0
      %441 = vmatpush1.bf16.msra.mxu0 0
      %442 = vmatprep.subr.bf16.mxu0 0
      %443 = vmatpush1.bf16.msra.mxu0 0
      %444 = vmatprep.subr.bf16.mxu0 0
      %445 = vmatpush1.bf16.msra.mxu0 0
      %446 = vmatprep.subr.bf16.mxu0 0
      %447 = vmatpush1.bf16.msra.mxu0 0
      %448 = vmatprep.subr.bf16.mxu0 0
      %449 = vmatpush1.bf16.msra.mxu0 0
      %450 = vmatprep.subr.bf16.mxu0 0
      %451 = vmatpush1.bf16.msra.mxu0 0
      %452 = vmatprep.subr.bf16.mxu0 0
      %453 = vmatpush1.bf16.msra.mxu0 0
      %454 = vmatprep.mubr.bf16.mxu0 0
      %455 = vmatmul.mubr.bf16.gmra.mrb[0].mxu0 %v417
      %v456 = vpop.f32.mrb[0].mxu0
      %v457 = vadd.f32 0.0, %v456
      %v458 = vpop.f32.mrb[0].mxu0
      %v459 = vpop.f32.mrb[0].mxu0
      %v460 = vpop.f32.mrb[0].mxu0
      %461 = vdwg.mxu0
      %v462 = vadd.f32 %v407, %v457
      %s463 = scalar_lea.vmem %s4, 6
      %v464 = vld [vmem:[%s463] sm:$0x3]
      %465 = vrot.lane.b32.xlu0 %v311, 118
      %v466 = vpop.permute.xlu0 %465
      %v468 = vsel %vm318, %v464, 0
      %v471 = vsel %vm322, %v466, 0
      %473 = vmatprep.subr.bf16.mxu0 0
      %474 = vmatpush1.bf16.msra.mxu0 %v471
      %475 = vmatprep.subr.bf16.mxu0 0
      %476 = vmatpush1.bf16.msra.mxu0 0
      %477 = vmatprep.subr.bf16.mxu0 0
      %478 = vmatpush1.bf16.msra.mxu0 0
      %479 = vmatprep.subr.bf16.mxu0 0
      %480 = vmatpush1.bf16.msra.mxu0 0
      %481 = vmatprep.subr.bf16.mxu0 0
      %482 = vmatpush1.bf16.msra.mxu0 0
      %483 = vmatprep.subr.bf16.mxu0 0
      %484 = vmatpush1.bf16.msra.mxu0 0
      %485 = vmatprep.subr.bf16.mxu0 0
      %486 = vmatpush1.bf16.msra.mxu0 0
      %487 = vmatprep.subr.bf16.mxu0 0
      %488 = vmatpush1.bf16.msra.mxu0 0
      %489 = vmatprep.subr.bf16.mxu0 0
      %490 = vmatpush1.bf16.msra.mxu0 0
      %491 = vmatprep.subr.bf16.mxu0 0
      %492 = vmatpush1.bf16.msra.mxu0 0
      %493 = vmatprep.subr.bf16.mxu0 0
      %494 = vmatpush1.bf16.msra.mxu0 0
      %495 = vmatprep.subr.bf16.mxu0 0
      %496 = vmatpush1.bf16.msra.mxu0 0
      %497 = vmatprep.subr.bf16.mxu0 0
      %498 = vmatpush1.bf16.msra.mxu0 0
      %499 = vmatprep.subr.bf16.mxu0 0
      %500 = vmatpush1.bf16.msra.mxu0 0
      %501 = vmatprep.subr.bf16.mxu0 0
      %502 = vmatpush1.bf16.msra.mxu0 0
      %503 = vmatprep.subr.bf16.mxu0 0
      %504 = vmatpush1.bf16.msra.mxu0 0
      %505 = vmatprep.mubr.bf16.mxu0 0
      %506 = vmatmul.mubr.bf16.gmra.mrb[0].mxu0 %v468
      %v507 = vpop.f32.mrb[0].mxu0
      %v508 = vadd.f32 0.0, %v507
      %v509 = vpop.f32.mrb[0].mxu0
      %v510 = vpop.f32.mrb[0].mxu0
      %v511 = vpop.f32.mrb[0].mxu0
      %512 = vdwg.mxu0
      %v513 = vadd.f32 %v462, %v508
      %s514 = scalar_lea.vmem %s4, 8
      %v515 = vld [vmem:[%s514] sm:$0x3]
      %516 = vrot.lane.b32.xlu0 %v311, 117
      %v517 = vpop.permute.xlu0 %516
      %v519 = vsel %vm318, %v515, 0
      %v522 = vsel %vm322, %v517, 0
      %524 = vmatprep.subr.bf16.mxu0 0
      %525 = vmatpush1.bf16.msra.mxu0 %v522
      %526 = vmatprep.subr.bf16.mxu0 0
      %527 = vmatpush1.bf16.msra.mxu0 0
      %528 = vmatprep.subr.bf16.mxu0 0
      %529 = vmatpush1.bf16.msra.mxu0 0
      %530 = vmatprep.subr.bf16.mxu0 0
      %531 = vmatpush1.bf16.msra.mxu0 0
      %532 = vmatprep.subr.bf16.mxu0 0
      %533 = vmatpush1.bf16.msra.mxu0 0
      %534 = vmatprep.subr.bf16.mxu0 0
      %535 = vmatpush1.bf16.msra.mxu0 0
      %536 = vmatprep.subr.bf16.mxu0 0
      %537 = vmatpush1.bf16.msra.mxu0 0
      %538 = vmatprep.subr.bf16.mxu0 0
      %539 = vmatpush1.bf16.msra.mxu0 0
      %540 = vmatprep.subr.bf16.mxu0 0
      %541 = vmatpush1.bf16.msra.mxu0 0
      %542 = vmatprep.subr.bf16.mxu0 0
      %543 = vmatpush1.bf16.msra.mxu0 0
      %544 = vmatprep.subr.bf16.mxu0 0
      %545 = vmatpush1.bf16.msra.mxu0 0
      %546 = vmatprep.subr.bf16.mxu0 0
      %547 = vmatpush1.bf16.msra.mxu0 0
      %548 = vmatprep.subr.bf16.mxu0 0
      %549 = vmatpush1.bf16.msra.mxu0 0
      %550 = vmatprep.subr.bf16.mxu0 0
      %551 = vmatpush1.bf16.msra.mxu0 0
      %552 = vmatprep.subr.bf16.mxu0 0
      %553 = vmatpush1.bf16.msra.mxu0 0
      %554 = vmatprep.subr.bf16.mxu0 0
      %555 = vmatpush1.bf16.msra.mxu0 0
      %556 = vmatprep.mubr.bf16.mxu0 0
      %557 = vmatmul.mubr.bf16.gmra.mrb[0].mxu0 %v519
      %v558 = vpop.f32.mrb[0].mxu0
      %v559 = vadd.f32 0.0, %v558
      %v560 = vpop.f32.mrb[0].mxu0
      %v561 = vpop.f32.mrb[0].mxu0
      %v562 = vpop.f32.mrb[0].mxu0
      %563 = vdwg.mxu0
      %v564 = vadd.f32 %v513, %v559
      %s565 = scalar_lea.vmem %s4, 10
      %v566 = vld [vmem:[%s565] sm:$0x3]
      %567 = vrot.lane.b32.xlu0 %v311, 116
      %v568 = vpop.permute.xlu0 %567
      %v570 = vsel %vm318, %v566, 0
      %v573 = vsel %vm322, %v568, 0
      %575 = vmatprep.subr.bf16.mxu0 0
      %576 = vmatpush1.bf16.msra.mxu0 %v573
      %577 = vmatprep.subr.bf16.mxu0 0
      %578 = vmatpush1.bf16.msra.mxu0 0
      %579 = vmatprep.subr.bf16.mxu0 0
      %580 = vmatpush1.bf16.msra.mxu0 0
      %581 = vmatprep.subr.bf16.mxu0 0
      %582 = vmatpush1.bf16.msra.mxu0 0
      %583 = vmatprep.subr.bf16.mxu0 0
      %584 = vmatpush1.bf16.msra.mxu0 0
      %585 = vmatprep.subr.bf16.mxu0 0
      %586 = vmatpush1.bf16.msra.mxu0 0
      %587 = vmatprep.subr.bf16.mxu0 0
      %588 = vmatpush1.bf16.msra.mxu0 0
      %589 = vmatprep.subr.bf16.mxu0 0
      %590 = vmatpush1.bf16.msra.mxu0 0
      %591 = vmatprep.subr.bf16.mxu0 0
      %592 = vmatpush1.bf16.msra.mxu0 0
      %593 = vmatprep.subr.bf16.mxu0 0
      %594 = vmatpush1.bf16.msra.mxu0 0
      %595 = vmatprep.subr.bf16.mxu0 0
      %596 = vmatpush1.bf16.msra.mxu0 0
      %597 = vmatprep.subr.bf16.mxu0 0
      %598 = vmatpush1.bf16.msra.mxu0 0
      %599 = vmatprep.subr.bf16.mxu0 0
      %600 = vmatpush1.bf16.msra.mxu0 0
      %601 = vmatprep.subr.bf16.mxu0 0
      %602 = vmatpush1.bf16.msra.mxu0 0
      %603 = vmatprep.subr.bf16.mxu0 0
      %604 = vmatpush1.bf16.msra.mxu0 0
      %605 = vmatprep.subr.bf16.mxu0 0
      %606 = vmatpush1.bf16.msra.mxu0 0
      %607 = vmatprep.mubr.bf16.mxu0 0
      %608 = vmatmul.mubr.bf16.gmra.mrb[0].mxu0 %v570
      %v609 = vpop.f32.mrb[0].mxu0
      %v610 = vadd.f32 0.0, %v609
      %v611 = vpop.f32.mrb[0].mxu0
      %v612 = vpop.f32.mrb[0].mxu0
      %v613 = vpop.f32.mrb[0].mxu0
      %614 = vdwg.mxu0
      %v615 = vadd.f32 %v564, %v610
      %s616 = scalar_lea.vmem %s4, 12
      %v617 = vld [vmem:[%s616] sm:$0x3]
      %618 = vrot.lane.b32.xlu0 %v311, 108
      %v619 = vpop.permute.xlu0 %618
      %v621 = vsel %vm318, %v617, 0
      %v624 = vsel %vm322, %v619, 0
      %626 = vmatprep.subr.bf16.mxu0 0
      %627 = vmatpush1.bf16.msra.mxu0 %v624
      %628 = vmatprep.subr.bf16.mxu0 0
      %629 = vmatpush1.bf16.msra.mxu0 0
      %630 = vmatprep.subr.bf16.mxu0 0
      %631 = vmatpush1.bf16.msra.mxu0 0
      %632 = vmatprep.subr.bf16.mxu0 0
      %633 = vmatpush1.bf16.msra.mxu0 0
      %634 = vmatprep.subr.bf16.mxu0 0
      %635 = vmatpush1.bf16.msra.mxu0 0
      %636 = vmatprep.subr.bf16.mxu0 0
      %637 = vmatpush1.bf16.msra.mxu0 0
      %638 = vmatprep.subr.bf16.mxu0 0
      %639 = vmatpush1.bf16.msra.mxu0 0
      %640 = vmatprep.subr.bf16.mxu0 0
      %641 = vmatpush1.bf16.msra.mxu0 0
      %642 = vmatprep.subr.bf16.mxu0 0
      %643 = vmatpush1.bf16.msra.mxu0 0
      %644 = vmatprep.subr.bf16.mxu0 0
      %645 = vmatpush1.bf16.msra.mxu0 0
      %646 = vmatprep.subr.bf16.mxu0 0
      %647 = vmatpush1.bf16.msra.mxu0 0
      %648 = vmatprep.subr.bf16.mxu0 0
      %649 = vmatpush1.bf16.msra.mxu0 0
      %650 = vmatprep.subr.bf16.mxu0 0
      %651 = vmatpush1.bf16.msra.mxu0 0
      %652 = vmatprep.subr.bf16.mxu0 0
      %653 = vmatpush1.bf16.msra.mxu0 0
      %654 = vmatprep.subr.bf16.mxu0 0
      %655 = vmatpush1.bf16.msra.mxu0 0
      %656 = vmatprep.subr.bf16.mxu0 0
      %657 = vmatpush1.bf16.msra.mxu0 0
      %658 = vmatprep.mubr.bf16.mxu0 0
      %659 = vmatmul.mubr.bf16.gmra.mrb[0].mxu0 %v621
      %v660 = vpop.f32.mrb[0].mxu0
      %v661 = vadd.f32 0.0, %v660
      %v662 = vpop.f32.mrb[0].mxu0
      %v663 = vpop.f32.mrb[0].mxu0
      %v664 = vpop.f32.mrb[0].mxu0
      %665 = vdwg.mxu0
      %v666 = vadd.f32 %v615, %v661
      %s667 = scalar_lea.vmem %s4, 14
      %v668 = vld [vmem:[%s667] sm:$0x3]
      %669 = vrot.lane.b32.xlu0 %v311, 107
      %v670 = vpop.permute.xlu0 %669
      %v672 = vsel %vm318, %v668, 0
      %v675 = vsel %vm322, %v670, 0
      %677 = vmatprep.subr.bf16.mxu0 0
      %678 = vmatpush1.bf16.msra.mxu0 %v675
      %679 = vmatprep.subr.bf16.mxu0 0
      %680 = vmatpush1.bf16.msra.mxu0 0
      %681 = vmatprep.subr.bf16.mxu0 0
      %682 = vmatpush1.bf16.msra.mxu0 0
      %683 = vmatprep.subr.bf16.mxu0 0
      %684 = vmatpush1.bf16.msra.mxu0 0
      %685 = vmatprep.subr.bf16.mxu0 0
      %686 = vmatpush1.bf16.msra.mxu0 0
      %687 = vmatprep.subr.bf16.mxu0 0
      %688 = vmatpush1.bf16.msra.mxu0 0
      %689 = vmatprep.subr.bf16.mxu0 0
      %690 = vmatpush1.bf16.msra.mxu0 0
      %691 = vmatprep.subr.bf16.mxu0 0
      %692 = vmatpush1.bf16.msra.mxu0 0
      %693 = vmatprep.subr.bf16.mxu0 0
      %694 = vmatpush1.bf16.msra.mxu0 0
      %695 = vmatprep.subr.bf16.mxu0 0
      %696 = vmatpush1.bf16.msra.mxu0 0
      %697 = vmatprep.subr.bf16.mxu0 0
      %698 = vmatpush1.bf16.msra.mxu0 0
      %699 = vmatprep.subr.bf16.mxu0 0
      %700 = vmatpush1.bf16.msra.mxu0 0
      %701 = vmatprep.subr.bf16.mxu0 0
      %702 = vmatpush1.bf16.msra.mxu0 0
      %703 = vmatprep.subr.bf16.mxu0 0
      %704 = vmatpush1.bf16.msra.mxu0 0
      %705 = vmatprep.subr.bf16.mxu0 0
      %706 = vmatpush1.bf16.msra.mxu0 0
      %707 = vmatprep.subr.bf16.mxu0 0
      %708 = vmatpush1.bf16.msra.mxu0 0
      %709 = vmatprep.mubr.bf16.mxu0 0
      %710 = vmatmul.mubr.bf16.gmra.mrb[0].mxu0 %v672
      %v711 = vpop.f32.mrb[0].mxu0
      %v712 = vadd.f32 0.0, %v711
      %v713 = vpop.f32.mrb[0].mxu0
      %v714 = vpop.f32.mrb[0].mxu0
      %v715 = vpop.f32.mrb[0].mxu0
      %716 = vdwg.mxu0
      %v717 = vadd.f32 %v666, %v712
      %s718 = scalar_lea.vmem %s4, 16
      %v719 = vld [vmem:[%s718] sm:$0x3]
      %720 = vrot.lane.b32.xlu0 %v311, 106
      %v721 = vpop.permute.xlu0 %720
      %v723 = vsel %vm318, %v719, 0
      %v726 = vsel %vm322, %v721, 0
      %728 = vmatprep.subr.bf16.mxu0 0
      %729 = vmatpush1.bf16.msra.mxu0 %v726
      %730 = vmatprep.subr.bf16.mxu0 0
      %731 = vmatpush1.bf16.msra.mxu0 0
      %732 = vmatprep.subr.bf16.mxu0 0
      %733 = vmatpush1.bf16.msra.mxu0 0
      %734 = vmatprep.subr.bf16.mxu0 0
      %735 = vmatpush1.bf16.msra.mxu0 0
      %736 = vmatprep.subr.bf16.mxu0 0
      %737 = vmatpush1.bf16.msra.mxu0 0
      %738 = vmatprep.subr.bf16.mxu0 0
      %739 = vmatpush1.bf16.msra.mxu0 0
      %740 = vmatprep.subr.bf16.mxu0 0
      %741 = vmatpush1.bf16.msra.mxu0 0
      %742 = vmatprep.subr.bf16.mxu0 0
      %743 = vmatpush1.bf16.msra.mxu0 0
      %744 = vmatprep.subr.bf16.mxu0 0
      %745 = vmatpush1.bf16.msra.mxu0 0
      %746 = vmatprep.subr.bf16.mxu0 0
      %747 = vmatpush1.bf16.msra.mxu0 0
      %748 = vmatprep.subr.bf16.mxu0 0
      %749 = vmatpush1.bf16.msra.mxu0 0
      %750 = vmatprep.subr.bf16.mxu0 0
      %751 = vmatpush1.bf16.msra.mxu0 0
      %752 = vmatprep.subr.bf16.mxu0 0
      %753 = vmatpush1.bf16.msra.mxu0 0
      %754 = vmatprep.subr.bf16.mxu0 0
      %755 = vmatpush1.bf16.msra.mxu0 0
      %756 = vmatprep.subr.bf16.mxu0 0
      %757 = vmatpush1.bf16.msra.mxu0 0
      %758 = vmatprep.subr.bf16.mxu0 0
      %759 = vmatpush1.bf16.msra.mxu0 0
      %760 = vmatprep.mubr.bf16.mxu0 0
      %761 = vmatmul.mubr.bf16.gmra.mrb[0].mxu0 %v723
      %v762 = vpop.f32.mrb[0].mxu0
      %v763 = vadd.f32 0.0, %v762
      %v764 = vpop.f32.mrb[0].mxu0
      %v765 = vpop.f32.mrb[0].mxu0
      %v766 = vpop.f32.mrb[0].mxu0
      %767 = vdwg.mxu0
      %v768 = vadd.f32 %v717, %v763
      %v769 = vld [vmem:[%s5] sm:$0xf]
      %771 = vset.pattern.permute.xlu0 0
      %772 = vperm.xlu0 %771, %v769
      %v773 = vpop.permute.xlu0 %772
      %v775 = vadd.f32 %v768, %v773
      %776 = vrot.lane.b32.xlu0 %v308, 117
      %v777 = vpop.permute.xlu0 %776
      %v779 = vmul.f32 %v775, %v777
      %vm780 = vcmask 650240
      %v781 = vsel %vm780, %v779, 0.0
      %782 = vadd.xlane.f32.xlu0 %v781
      %v783 = vpop.xlane.xlu0 %782
      %vm784 = vcmask 3072
      %785 = vst.msk [vmem:[%s284] sm:$0xf] %vm784, %v783
      %v786 = vmul.f32 %v775, %v775
      %v787 = vmul.f32 %v786, %v777
      %v788 = vsel %vm780, %v787, 0.0
      %789 = vadd.xlane.f32.xlu0 %v788
      %v790 = vpop.xlane.xlu0 %789
      %vm791 = vcmask 11272
      %792 = vst.msk [vmem:[%s284] sm:$0xf] %vm791, %v790
      %v793 = vpack.c.bf16 %v775, %v775
      %v796 = vunpack.c.l.s4 1983009808
      %v797 = vunpack.c.0.s8 %v796
      %v798 = vlaneseq
      %v799 = vshrl.u32 %v798, 7
      %v800 = vsub.s32 %v797, %v799
      %v801 = vrot.slane %v793, %v800
      %802 = vrot.lane.b32.xlu0 %v801, 127
      %v803 = vpop.permute.xlu0 %802
      %vm805 = vcmask 58368
      %806 = vst.msk [vmem:[%s280] sm:$0x3] %vm805, %v803
      %807 = vrot.lane.b32.xlu0 %v801, 125
      %v808 = vpop.permute.xlu0 %807
      %vm810 = vcmask 123968
      %811 = vst.msk [vmem:[%s280] sm:$0x3] %vm810, %v808
      %812 = vrot.lane.b32.xlu0 %v801, 123
      %v813 = vpop.permute.xlu0 %812
      %vm815 = vcmask 189568
      %816 = vst.msk [vmem:[%s280] sm:$0x3] %vm815, %v813
      %817 = vrot.lane.b32.xlu0 %v801, 121
      %v818 = vpop.permute.xlu0 %817
      %vm820 = vcmask 255168
      %821 = vst.msk [vmem:[%s280] sm:$0x3] %vm820, %v818
      %822 = vrot.lane.b32.xlu0 %v801, 119
      %v823 = vpop.permute.xlu0 %822
      %vm825 = vcmask 320768
      %826 = vst.msk [vmem:[%s280] sm:$0x3] %vm825, %v823
      %827 = vrot.lane.b32.xlu0 %v801, 117
      %v828 = vpop.permute.xlu0 %827
      %vm830 = vcmask 386368
      %831 = vst.msk [vmem:[%s280] sm:$0x3] %vm830, %v828
      %832 = vrot.lane.b32.xlu0 %v801, 115
      %v833 = vpop.permute.xlu0 %832
      %vm835 = vcmask 451968
      %836 = vst.msk [vmem:[%s280] sm:$0x3] %vm835, %v833
      %837 = vrot.lane.b32.xlu0 %v801, 113
      %v838 = vpop.permute.xlu0 %837
      %vm840 = vcmask 517568
      %841 = vst.msk [vmem:[%s280] sm:$0x3] %vm840, %v838
      %p842 = scmp.lt.s32.totalorder %s19, 1
      %s843 = scalar_select %p842, %s19, 1
      %s844 = smul.addr %s843, 2
      %s845 = scalar_lea.vmem %s6, %s844
      %p846 = scmp.lt.s32.totalorder %s19, 1
      %s847 = scalar_select %p846, %s19, 1
      %s848 = smul.addr %s847, 4
      %s849 = scalar_lea.vmem %s7, %s848
      // Predicated region
      $region45: #{prm_d_forward.6} parent=43 // pred_check
        %p850 = pneg %p168
      $region46: #{prm_d_forward.6} parent=43 // pred_check_branch
        %852 = sbr.rel (%p850) target = $region48
      $region47: #{prm_d_forward.6} parent=43 // pred_region
        _
      $region48: #{prm_d_forward.6} parent=43 // pred_fallthru
        _
      // Predicated region
      $region49: #{prm_d_forward.6} parent=43 // pred_check
        %p853 = pneg %p194
      $region50: #{prm_d_forward.6} parent=43 // pred_check_branch
        %855 = sbr.rel (%p853) target = $region52
      $region51: #{prm_d_forward.6} parent=43 // pred_region
        _
      $region52: #{prm_d_forward.6} parent=43 // pred_fallthru
        _
    $region44: #{prm_d_forward.6} parent=5 // pred_fallthru
      _
    %p856 = scmp.le.s32.totalorder 2, %s14
    // Predicated region
    $region53: #{prm_d_forward.6} parent=5 // pred_check
      %p857 = pneg %p856
    $region54: #{prm_d_forward.6} parent=5 // pred_check_branch
      %859 = sbr.rel (%p857) target = $region56
    $region55: #{prm_d_forward.6} parent=5 // pred_region
      %s860 = ssub.s32 %s14, 2
      // Predicated region
      $region57: #{prm_d_forward.6} parent=55 // pred_check
        %p861 = pneg %p174
      $region58: #{prm_d_forward.6} parent=55 // pred_check_branch
        %863 = sbr.rel (%p861) target = $region60
      $region59: #{prm_d_forward.6} parent=55 // pred_region
        %p864 = scmp.lt.s32.totalorder %s20, 1
        %s865 = scalar_select %p864, %s20, 1
        %s866 = smul.addr %s865, 2
        %s867 = scalar_lea.vmem %s6, %s866
      $region60: #{prm_d_forward.6} parent=55 // pred_fallthru
        _
      // Predicated region
      $region61: #{prm_d_forward.6} parent=55 // pred_check
        %p868 = pneg %p200
      $region62: #{prm_d_forward.6} parent=55 // pred_check_branch
        %870 = sbr.rel (%p868) target = $region64
      $region63: #{prm_d_forward.6} parent=55 // pred_region
        %p871 = scmp.lt.s32.totalorder %s20, 1
        %s872 = scalar_select %p871, %s20, 1
        %s873 = smul.addr %s872, 4
        %s874 = scalar_lea.vmem %s7, %s873
      $region64: #{prm_d_forward.6} parent=55 // pred_fallthru
        _
    $region56: #{prm_d_forward.6} parent=5 // pred_fallthru
      _
  $region6: #{prm_d_forward.6} parent=0 // loop_footer
    %s18 = sadd.s32 1, %s14
  $region7: #{prm_d_forward.6} parent=0 // loop_footer_branch
    %13 = sbr.rel target = $region3
  $region8: #{prm_d_forward.6} parent=0 // loop_exit
    _

// kernel: prm_d_forward.9
$region0: #{prm_d_forward.9}
  #allocation0 [shape = 'u32[]', space=smem, size = 0x4, offset = 0x4, fixed_abs, tag = 'smem constant byte address 0x4 - core index']
  #allocation1 [shape = 'u32[144,128]{1,0:T(1,128)}', space=vmem, size = 0x12000, scoped, tag = 'internal scratch']
  %s0 = inlined_call_operand.vmem [shape: bf16[2,4,256], index: 0, kind: input, shape index: {}]
  %s1 = inlined_call_operand.vmem [shape: f32[4,1], index: 1, kind: input, shape index: {}]
  %s2 = inlined_call_operand.vmem [shape: f32[4,1], index: 2, kind: input, shape index: {}]
  %s3 = inlined_call_operand.vmem [shape: bf16[8,4], index: 3, kind: input, shape index: {}]
  %s4 = inlined_call_operand.vmem [shape: f32[8,1], index: 4, kind: input, shape index: {}]
  %s5 = inlined_call_operand.vmem [shape: f32[2,8,256], index: 5, kind: input, shape index: {}]
  %s6 = inlined_call_operand.vmem [shape: f32[2,8,256], index: 6, kind: input, shape index: {}]
  %s7 = inlined_call_operand.vmem [shape: f32[2,8,256], index: 7, kind: output, shape index: {}]
  %s8 = sld [smem:[#allocation0]]
  $region61: #{prm_d_forward.9} parent=0
    _
  %s10 = ssub.s32 1, %s8
  %s11 = scalar_select 0, %s10, %s8
  loop: start=0, step=1, limit=6
  $region2: #{prm_d_forward.9} parent=0 // loop_pre_header
    _
  $region3: #{prm_d_forward.9} parent=0 // loop_header
    %s13 = sphi 0, %s17
    %p14 = scmp.ge.s32.totalorder %s13, 6
    %s20 = sphi 0, %s32
    %s21 = sphi 0, %s28
    %s22 = sphi 0, %s20
    %s23 = sphi 0, %s21
    %s24 = sphi 0, %s22
    %s25 = sphi 0, %s23
    %s37 = sphi 0, %s39
    %s40 = sphi 0, %s37
    %s41 = sphi 0, %s40
    %s57 = sphi 0, %s41
    %s61 = sphi 0, %s61
    %s63 = sphi 0, %s61
    %s64 = sphi 0, %s63
    %s78 = sphi 0, %s64
    %s82 = sphi 0, %s82
    %s84 = sphi 0, %s82
    %s85 = sphi 0, %s84
    %s99 = sphi 0, %s85
    %s103 = sphi 0, %s103
    %s105 = sphi 0, %s103
    %s106 = sphi 0, %s105
    %s120 = sphi 0, %s106
    %s124 = sphi 0, %s124
    %s126 = sphi 0, %s124
    %s127 = sphi 0, %s126
    %s141 = sphi 0, %s127
    %s149 = sphi 0, %s151
    %s152 = sphi 0, %s149
    %s153 = sphi 0, %s152
    %s169 = sphi 0, %s153
    %s177 = sphi 0, %s179
    %s180 = sphi 0, %s177
    %s181 = sphi 0, %s180
    %s197 = sphi 0, %s181
    %s205 = sphi 0, %s207
    %s208 = sphi 0, %s205
    %s209 = sphi 0, %s208
    %s225 = sphi 0, %s209
  $region4: #{prm_d_forward.9} parent=0 // loop_header_branch
    %16 = sbr.rel (%p14) target = $region8
  $region5: #{prm_d_forward.9} parent=0 // loop_body
    %s18 = ssub.s32 %s13, 1
    %s19 = ssub.s32 %s13, 2
    %s26 = sadd.s32 1, %s21
    %p27 = scmp.ge.s32.totalorder %s26, 2
    %s28 = scalar_select %p27, 0, %s26
    %s29 = sadd.s32 1, %s20
    %s30 = scalar_select %p27, %s29, %s20
    %p31 = scmp.ge.s32.totalorder %s30, 2
    %s32 = scalar_select %p31, 0, %s30
    %s33 = ssub.s32 %s20, %s32
    %s34 = ssub.s32 %s21, %s28
    %s35 = sor.u32 %s33, %s34
    %p36 = scmp.eq.s32.totalorder %s35, 0
    %s38 = sadd.s32 %s37, 1
    %s39 = scalar_select %p36, %s37, %s38
    %p42 = pneg %p36
    %p43 = scmp.eq.s32.totalorder %s13, 3
    %p44 = por %p42, %p43
    %p45 = scmp.ne.s32.totalorder %s37, %s40
    %p46 = scmp.eq.s32.totalorder %s13, 0
    %p47 = por %p45, %p46
    %p48 = scmp.ne.s32.totalorder %s37, %s40
    %p49 = scmp.eq.s32.totalorder %s18, 3
    %p50 = por %p48, %p49
    %p51 = scmp.ne.s32.totalorder %s40, %s41
    %p52 = scmp.eq.s32.totalorder %s18, 0
    %p53 = por %p51, %p52
    %p54 = scmp.ne.s32.totalorder %s40, %s41
    %p55 = scmp.eq.s32.totalorder %s19, 3
    %p56 = por %p54, %p55
    %p58 = scmp.ne.s32.totalorder %s41, %s57
    %p59 = scmp.eq.s32.totalorder %s19, 0
    %p60 = por %p58, %p59
    %s62 = sadd.s32 %s61, 1
    %p65 = scmp.eq.s32.totalorder %s13, 3
    %p66 = scmp.ne.s32.totalorder %s61, %s63
    %p67 = scmp.eq.s32.totalorder %s13, 0
    %p68 = por %p66, %p67
    %p69 = scmp.ne.s32.totalorder %s61, %s63
    %p70 = scmp.eq.s32.totalorder %s18, 3
    %p71 = por %p69, %p70
    %p72 = scmp.ne.s32.totalorder %s63, %s64
    %p73 = scmp.eq.s32.totalorder %s18, 0
    %p74 = por %p72, %p73
    %p75 = scmp.ne.s32.totalorder %s63, %s64
    %p76 = scmp.eq.s32.totalorder %s19, 3
    %p77 = por %p75, %p76
    %p79 = scmp.ne.s32.totalorder %s64, %s78
    %p80 = scmp.eq.s32.totalorder %s19, 0
    %p81 = por %p79, %p80
    %s83 = sadd.s32 %s82, 1
    %p86 = scmp.eq.s32.totalorder %s13, 3
    %p87 = scmp.ne.s32.totalorder %s82, %s84
    %p88 = scmp.eq.s32.totalorder %s13, 0
    %p89 = por %p87, %p88
    %p90 = scmp.ne.s32.totalorder %s82, %s84
    %p91 = scmp.eq.s32.totalorder %s18, 3
    %p92 = por %p90, %p91
    %p93 = scmp.ne.s32.totalorder %s84, %s85
    %p94 = scmp.eq.s32.totalorder %s18, 0
    %p95 = por %p93, %p94
    %p96 = scmp.ne.s32.totalorder %s84, %s85
    %p97 = scmp.eq.s32.totalorder %s19, 3
    %p98 = por %p96, %p97
    %p100 = scmp.ne.s32.totalorder %s85, %s99
    %p101 = scmp.eq.s32.totalorder %s19, 0
    %p102 = por %p100, %p101
    %s104 = sadd.s32 %s103, 1
    %p107 = scmp.eq.s32.totalorder %s13, 3
    %p108 = scmp.ne.s32.totalorder %s103, %s105
    %p109 = scmp.eq.s32.totalorder %s13, 0
    %p110 = por %p108, %p109
    %p111 = scmp.ne.s32.totalorder %s103, %s105
    %p112 = scmp.eq.s32.totalorder %s18, 3
    %p113 = por %p111, %p112
    %p114 = scmp.ne.s32.totalorder %s105, %s106
    %p115 = scmp.eq.s32.totalorder %s18, 0
    %p116 = por %p114, %p115
    %p117 = scmp.ne.s32.totalorder %s105, %s106
    %p118 = scmp.eq.s32.totalorder %s19, 3
    %p119 = por %p117, %p118
    %p121 = scmp.ne.s32.totalorder %s106, %s120
    %p122 = scmp.eq.s32.totalorder %s19, 0
    %p123 = por %p121, %p122
    %s125 = sadd.s32 %s124, 1
    %p128 = scmp.eq.s32.totalorder %s13, 3
    %p129 = scmp.ne.s32.totalorder %s124, %s126
    %p130 = scmp.eq.s32.totalorder %s13, 0
    %p131 = por %p129, %p130
    %p132 = scmp.ne.s32.totalorder %s124, %s126
    %p133 = scmp.eq.s32.totalorder %s18, 3
    %p134 = por %p132, %p133
    %p135 = scmp.ne.s32.totalorder %s126, %s127
    %p136 = scmp.eq.s32.totalorder %s18, 0
    %p137 = por %p135, %p136
    %p138 = scmp.ne.s32.totalorder %s126, %s127
    %p139 = scmp.eq.s32.totalorder %s19, 3
    %p140 = por %p138, %p139
    %p142 = scmp.ne.s32.totalorder %s127, %s141
    %p143 = scmp.eq.s32.totalorder %s19, 0
    %p144 = por %p142, %p143
    %s145 = ssub.s32 %s20, %s32
    %s146 = ssub.s32 %s21, %s28
    %s147 = sor.u32 %s145, %s146
    %p148 = scmp.eq.s32.totalorder %s147, 0
    %s150 = sadd.s32 %s149, 1
    %s151 = scalar_select %p148, %s149, %s150
    %p154 = pneg %p148
    %p155 = scmp.eq.s32.totalorder %s13, 3
    %p156 = por %p154, %p155
    %p157 = scmp.ne.s32.totalorder %s149, %s152
    %p158 = scmp.eq.s32.totalorder %s13, 0
    %p159 = por %p157, %p158
    %p160 = scmp.ne.s32.totalorder %s149, %s152
    %p161 = scmp.eq.s32.totalorder %s18, 3
    %p162 = por %p160, %p161
    %p163 = scmp.ne.s32.totalorder %s152, %s153
    %p164 = scmp.eq.s32.totalorder %s18, 0
    %p165 = por %p163, %p164
    %p166 = scmp.ne.s32.totalorder %s152, %s153
    %p167 = scmp.eq.s32.totalorder %s19, 3
    %p168 = por %p166, %p167
    %p170 = scmp.ne.s32.totalorder %s153, %s169
    %p171 = scmp.eq.s32.totalorder %s19, 0
    %p172 = por %p170, %p171
    %s173 = ssub.s32 %s20, %s32
    %s174 = ssub.s32 %s21, %s28
    %s175 = sor.u32 %s173, %s174
    %p176 = scmp.eq.s32.totalorder %s175, 0
    %s178 = sadd.s32 %s177, 1
    %s179 = scalar_select %p176, %s177, %s178
    %p182 = pneg %p176
    %p183 = scmp.eq.s32.totalorder %s13, 3
    %p184 = por %p182, %p183
    %p185 = scmp.ne.s32.totalorder %s177, %s180
    %p186 = scmp.eq.s32.totalorder %s13, 0
    %p187 = por %p185, %p186
    %p188 = scmp.ne.s32.totalorder %s177, %s180
    %p189 = scmp.eq.s32.totalorder %s18, 3
    %p190 = por %p188, %p189
    %p191 = scmp.ne.s32.totalorder %s180, %s181
    %p192 = scmp.eq.s32.totalorder %s18, 0
    %p193 = por %p191, %p192
    %p194 = scmp.ne.s32.totalorder %s180, %s181
    %p195 = scmp.eq.s32.totalorder %s19, 3
    %p196 = por %p194, %p195
    %p198 = scmp.ne.s32.totalorder %s181, %s197
    %p199 = scmp.eq.s32.totalorder %s19, 0
    %p200 = por %p198, %p199
    %s201 = ssub.s32 %s20, %s32
    %s202 = ssub.s32 %s21, %s28
    %s203 = sor.u32 %s201, %s202
    %p204 = scmp.eq.s32.totalorder %s203, 0
    %s206 = sadd.s32 %s205, 1
    %s207 = scalar_select %p204, %s205, %s206
    %p210 = pneg %p204
    %p211 = scmp.eq.s32.totalorder %s13, 3
    %p212 = por %p210, %p211
    %p213 = scmp.ne.s32.totalorder %s205, %s208
    %p214 = scmp.eq.s32.totalorder %s13, 0
    %p215 = por %p213, %p214
    %p216 = scmp.ne.s32.totalorder %s205, %s208
    %p217 = scmp.eq.s32.totalorder %s18, 3
    %p218 = por %p216, %p217
    %p219 = scmp.ne.s32.totalorder %s208, %s209
    %p220 = scmp.eq.s32.totalorder %s18, 0
    %p221 = por %p219, %p220
    %p222 = scmp.ne.s32.totalorder %s208, %s209
    %p223 = scmp.eq.s32.totalorder %s19, 3
    %p224 = por %p222, %p223
    %p226 = scmp.ne.s32.totalorder %s209, %s225
    %p227 = scmp.eq.s32.totalorder %s19, 0
    %p228 = por %p226, %p227
    %p229 = scmp.le.s32.totalorder 1, %s13
    %p230 = scmp.lt.s32.totalorder %s13, 5
    %p231 = pnand %p229, %p230
    %p232 = pneg %p231
    // Predicated region
    $region9: #{prm_d_forward.9} parent=5 // pred_check
      _
    $region10: #{prm_d_forward.9} parent=5 // pred_check_branch
      %234 = sbr.rel (%p231) target = $region12
    $region11: #{prm_d_forward.9} parent=5 // pred_region
      %s235 = ssub.s32 %s13, 1
      // Predicated region
      $region13: #{prm_d_forward.9} parent=11 // pred_check
        %p236 = pneg %p74
      $region14: #{prm_d_forward.9} parent=11 // pred_check_branch
        %238 = sbr.rel (%p236) target = $region16
      $region15: #{prm_d_forward.9} parent=11 // pred_region
        _
      $region16: #{prm_d_forward.9} parent=11 // pred_fallthru
        _
      // Predicated region
      $region17: #{prm_d_forward.9} parent=11 // pred_check
        %p239 = pneg %p95
      $region18: #{prm_d_forward.9} parent=11 // pred_check_branch
        %241 = sbr.rel (%p239) target = $region20
      $region19: #{prm_d_forward.9} parent=11 // pred_region
        _
      $region20: #{prm_d_forward.9} parent=11 // pred_fallthru
        _
      // Predicated region
      $region21: #{prm_d_forward.9} parent=11 // pred_check
        %p242 = pneg %p116
      $region22: #{prm_d_forward.9} parent=11 // pred_check_branch
        %244 = sbr.rel (%p242) target = $region24
      $region23: #{prm_d_forward.9} parent=11 // pred_region
        _
      $region24: #{prm_d_forward.9} parent=11 // pred_fallthru
        _
      // Predicated region
      $region25: #{prm_d_forward.9} parent=11 // pred_check
        %p245 = pneg %p137
      $region26: #{prm_d_forward.9} parent=11 // pred_check_branch
        %247 = sbr.rel (%p245) target = $region28
      $region27: #{prm_d_forward.9} parent=11 // pred_region
        _
      $region28: #{prm_d_forward.9} parent=11 // pred_fallthru
        _
    $region12: #{prm_d_forward.9} parent=5 // pred_fallthru
      _
    %p248 = scmp.lt.s32.totalorder %s13, 4
    // Predicated region
    $region29: #{prm_d_forward.9} parent=5 // pred_check
      %p249 = pneg %p248
    $region30: #{prm_d_forward.9} parent=5 // pred_check_branch
      %251 = sbr.rel (%p249) target = $region32
    $region31: #{prm_d_forward.9} parent=5 // pred_region
      // Predicated region
      $region33: #{prm_d_forward.9} parent=31 // pred_check
        %p252 = pneg %p47
      $region34: #{prm_d_forward.9} parent=31 // pred_check_branch
        %254 = sbr.rel (%p252) target = $region36
      $region35: #{prm_d_forward.9} parent=31 // pred_region
        %p255 = scmp.lt.s32.totalorder %s20, 1
        %s256 = scalar_select %p255, %s20, 1
        %p257 = scmp.lt.s32.totalorder %s21, 1
        %s258 = scalar_select %p257, %s21, 1
        %s259 = smul.addr %s256, 2
        %s260 = sadd.s32 %s258, %s259
        %s261 = smul.addr %s260, 2
        %s262 = scalar_lea.vmem %s0, %s261
      $region36: #{prm_d_forward.9} parent=31 // pred_fallthru
        _
      // Predicated region
      $region37: #{prm_d_forward.9} parent=31 // pred_check
        %p263 = pneg %p159
      $region38: #{prm_d_forward.9} parent=31 // pred_check_branch
        %265 = sbr.rel (%p263) target = $region40
      $region39: #{prm_d_forward.9} parent=31 // pred_region
        %p266 = scmp.lt.s32.totalorder %s20, 1
        %s267 = scalar_select %p266, %s20, 1
        %p268 = scmp.lt.s32.totalorder %s21, 1
        %s269 = scalar_select %p268, %s21, 1
        %s270 = smul.addr %s267, 2
        %s271 = sadd.s32 %s269, %s270
        %s272 = smul.addr %s271, 8
        %s273 = scalar_lea.vmem %s5, %s272
      $region40: #{prm_d_forward.9} parent=31 // pred_fallthru
        _
      // Predicated region
      $region41: #{prm_d_forward.9} parent=31 // pred_check
        %p274 = pneg %p187
      $region42: #{prm_d_forward.9} parent=31 // pred_check_branch
        %276 = sbr.rel (%p274) target = $region44
      $region43: #{prm_d_forward.9} parent=31 // pred_region
        %p277 = scmp.lt.s32.totalorder %s20, 1
        %s278 = scalar_select %p277, %s20, 1
        %p279 = scmp.lt.s32.totalorder %s21, 1
        %s280 = scalar_select %p279, %s21, 1
        %s281 = smul.addr %s278, 2
        %s282 = sadd.s32 %s280, %s281
        %s283 = smul.addr %s282, 8
        %s284 = scalar_lea.vmem %s6, %s283
      $region44: #{prm_d_forward.9} parent=31 // pred_fallthru
        _
    $region32: #{prm_d_forward.9} parent=5 // pred_fallthru
      _
    %p285 = scmp.le.s32.totalorder 1, %s13
    %p286 = scmp.lt.s32.totalorder %s13, 5
    %p287 = pnand %p285, %p286
    %p288 = pneg %p287
    // Predicated region
    $region45: #{prm_d_forward.9} parent=5 // pred_check
      _
    $region46: #{prm_d_forward.9} parent=5 // pred_check_branch
      %290 = sbr.rel (%p287) target = $region48
    $region47: #{prm_d_forward.9} parent=5 // pred_region
      %s291 = ssub.s32 %s13, 1
      %p292 = scmp.lt.s32.totalorder %s22, 1
      %s293 = scalar_select %p292, %s22, 1
      %p294 = scmp.lt.s32.totalorder %s23, 1
      %s295 = scalar_select %p294, %s23, 1
      %s296 = smul.addr %s293, 2
      %s297 = sadd.s32 %s295, %s296
      %s298 = smul.addr %s297, 2
      %s299 = scalar_lea.vmem %s0, %s298
      %p300 = pneg %p53
      %p301 = pneg %p50
      %p302 = pneg %p74
      %p303 = pneg %p71
      %p304 = pneg %p95
      %p305 = pneg %p92
      %p306 = pneg %p116
      %p307 = pneg %p113
      %p308 = pneg %p137
      %p309 = pneg %p134
      %p310 = scmp.lt.s32.totalorder %s22, 1
      %s311 = scalar_select %p310, %s22, 1
      %p312 = scmp.lt.s32.totalorder %s23, 1
      %s313 = scalar_select %p312, %s23, 1
      %s314 = smul.addr %s311, 2
      %s315 = sadd.s32 %s313, %s314
      %s316 = smul.addr %s315, 8
      %s317 = scalar_lea.vmem %s5, %s316
      %p318 = pneg %p165
      %p319 = pneg %p162
      %p320 = scmp.lt.s32.totalorder %s22, 1
      %s321 = scalar_select %p320, %s22, 1
      %p322 = scmp.lt.s32.totalorder %s23, 1
      %s323 = scalar_select %p322, %s23, 1
      %s324 = smul.addr %s321, 2
      %s325 = sadd.s32 %s323, %s324
      %s326 = smul.addr %s325, 8
      %s327 = scalar_lea.vmem %s6, %s326
      %p328 = pneg %p193
      %p329 = pneg %p190
      %p330 = pneg %p221
      %p331 = pneg %p218
      %p332 = scmp.lt.s32.totalorder %s22, 1
      %s333 = scalar_select %p332, %s22, 1
      %p334 = scmp.lt.s32.totalorder %s23, 1
      %s335 = scalar_select %p334, %s23, 1
      %s336 = smul.addr %s333, 2
      %s337 = sadd.s32 %s335, %s336
      %s338 = smul.addr %s337, 8
      %s339 = scalar_lea.vmem %s7, %s338
      %p340 = scmp.lt.s32.totalorder %s22, 1
      %s341 = scalar_select %p340, %s22, 1
      %p342 = scmp.lt.s32.totalorder %s23, 1
      %s343 = scalar_select %p342, %s23, 1
      %s344 = smul.addr %s341, 2
      %s345 = sadd.s32 %s343, %s344
      %s346 = smul.addr %s345, 2
      %s347 = scalar_lea.vmem %s0, %s346
      %p348 = scmp.lt.s32.totalorder %s22, 1
      %s349 = scalar_select %p348, %s22, 1
      %p350 = scmp.lt.s32.totalorder %s23, 1
      %s351 = scalar_select %p350, %s23, 1
      %s352 = smul.addr %s349, 2
      %s353 = sadd.s32 %s351, %s352
      %s354 = smul.addr %s353, 8
      %s355 = scalar_lea.vmem %s5, %s354
      %p356 = scmp.lt.s32.totalorder %s22, 1
      %s357 = scalar_select %p356, %s22, 1
      %p358 = scmp.lt.s32.totalorder %s23, 1
      %s359 = scalar_select %p358, %s23, 1
      %s360 = smul.addr %s357, 2
      %s361 = sadd.s32 %s359, %s360
      %s362 = smul.addr %s361, 8
      %s363 = scalar_lea.vmem %s6, %s362
      %p364 = scmp.lt.s32.totalorder %s22, 1
      %s365 = scalar_select %p364, %s22, 1
      %p366 = scmp.lt.s32.totalorder %s23, 1
      %s367 = scalar_select %p366, %s23, 1
      %s368 = smul.addr %s365, 2
      %s369 = sadd.s32 %s367, %s368
      %s370 = smul.addr %s369, 8
      %s371 = scalar_lea.vmem %s7, %s370
      %v373 = vld [vmem:[%s347] sm:$0x3]
      %v374 = vunpack.c.l.bf16 %v373
      %v375 = vld [vmem:[%s1] sm:$0xf]
      %377 = vset.pattern.permute.xlu0 0
      %378 = vperm.xlu0 %377, %v375
      %v379 = vpop.permute.xlu0 %378
      %v381 = vmul.f32 %v374, %v379
      %v382 = vld [vmem:[%s2] sm:$0xf]
      %384 = vset.pattern.permute.xlu0 0
      %385 = vperm.xlu0 %384, %v382
      %v386 = vpop.permute.xlu0 %385
      %v388 = vadd.f32 %v381, %v386
      %v389 = vmax.f32 %v388, 0.0
      %v390 = vpack.c.bf16 %v389, %v389
      %v391 = vld [vmem:[%s3] sm:$0xf]
      %v392 = vld [vmem:[%s4] sm:$0xff]
      %394 = vset.pattern.permute.xlu0 0
      %395 = vperm.xlu0 %394, %v392
      %v396 = vpop.permute.xlu0 %395
      %vm398 = vcmask 31744
      %v400 = vsel %vm398, %v391, 0
      %vm402 = vcmask 1041408
      %v404 = vsel %vm402, %v390, 0
      %406 = vmatprep.subr.bf16.mxu0 0
      %407 = vmatpush1.bf16.msra.mxu0 %v404
      %408 = vmatprep.subr.bf16.mxu0 0
      %409 = vmatpush1.bf16.msra.mxu0 0
      %410 = vmatprep.subr.bf16.mxu0 0
      %411 = vmatpush1.bf16.msra.mxu0 0
      %412 = vmatprep.subr.bf16.mxu0 0
      %413 = vmatpush1.bf16.msra.mxu0 0
      %414 = vmatprep.subr.bf16.mxu0 0
      %415 = vmatpush1.bf16.msra.mxu0 0
      %416 = vmatprep.subr.bf16.mxu0 0
      %417 = vmatpush1.bf16.msra.mxu0 0
      %418 = vmatprep.subr.bf16.mxu0 0
      %419 = vmatpush1.bf16.msra.mxu0 0
      %420 = vmatprep.subr.bf16.mxu0 0
      %421 = vmatpush1.bf16.msra.mxu0 0
      %422 = vmatprep.subr.bf16.mxu0 0
      %423 = vmatpush1.bf16.msra.mxu0 0
      %424 = vmatprep.subr.bf16.mxu0 0
      %425 = vmatpush1.bf16.msra.mxu0 0
      %426 = vmatprep.subr.bf16.mxu0 0
      %427 = vmatpush1.bf16.msra.mxu0 0
      %428 = vmatprep.subr.bf16.mxu0 0
      %429 = vmatpush1.bf16.msra.mxu0 0
      %430 = vmatprep.subr.bf16.mxu0 0
      %431 = vmatpush1.bf16.msra.mxu0 0
      %432 = vmatprep.subr.bf16.mxu0 0
      %433 = vmatpush1.bf16.msra.mxu0 0
      %434 = vmatprep.subr.bf16.mxu0 0
      %435 = vmatpush1.bf16.msra.mxu0 0
      %436 = vmatprep.subr.bf16.mxu0 0
      %437 = vmatpush1.bf16.msra.mxu0 0
      %438 = vmatprep.mubr.bf16.mxu0 0
      %439 = vmatmul.mubr.bf16.gmra.mrb[0].mxu0 %v400
      %v440 = vpop.f32.mrb[0].mxu0
      %v441 = vadd.f32 %v396, %v440
      %v442 = vpop.f32.mrb[0].mxu0
      %v443 = vpop.f32.mrb[0].mxu0
      %v444 = vpop.f32.mrb[0].mxu0
      %445 = vdwg.mxu0
      %v446 = vld [vmem:[%s355] sm:$0xff]
      %v447 = vadd.f32 %v441, %v446
      %v448 = vld [vmem:[%s363] sm:$0xff]
      %v449 = vadd.f32 %v447, %v448
      %450 = vst [vmem:[%s371] sm:$0xff] %v449
      %p451 = scmp.lt.s32.totalorder %s22, 1
      %s452 = scalar_select %p451, %s22, 1
      %p453 = scmp.lt.s32.totalorder %s23, 1
      %s454 = scalar_select %p453, %s23, 1
      %s455 = smul.addr %s452, 2
      %s456 = sadd.s32 %s454, %s455
      %s457 = smul.addr %s456, 8
      %s458 = scalar_lea.vmem %s7, %s457
      // Predicated region
      $region49: #{prm_d_forward.9} parent=47 // pred_check
        %p459 = pneg %p218
      $region50: #{prm_d_forward.9} parent=47 // pred_check_branch
        %461 = sbr.rel (%p459) target = $region52
      $region51: #{prm_d_forward.9} parent=47 // pred_region
        _
      $region52: #{prm_d_forward.9} parent=47 // pred_fallthru
        _
    $region48: #{prm_d_forward.9} parent=5 // pred_fallthru
      _
    %p462 = scmp.le.s32.totalorder 2, %s13
    // Predicated region
    $region53: #{prm_d_forward.9} parent=5 // pred_check
      %p463 = pneg %p462
    $region54: #{prm_d_forward.9} parent=5 // pred_check_branch
      %465 = sbr.rel (%p463) target = $region56
    $region55: #{prm_d_forward.9} parent=5 // pred_region
      %s466 = ssub.s32 %s13, 2
      // Predicated region
      $region57: #{prm_d_forward.9} parent=55 // pred_check
        %p467 = pneg %p224
      $region58: #{prm_d_forward.9} parent=55 // pred_check_branch
        %469 = sbr.rel (%p467) target = $region60
      $region59: #{prm_d_forward.9} parent=55 // pred_region
        %p470 = scmp.lt.s32.totalorder %s24, 1
        %s471 = scalar_select %p470, %s24, 1
        %p472 = scmp.lt.s32.totalorder %s25, 1
        %s473 = scalar_select %p472, %s25, 1
        %s474 = smul.addr %s471, 2
        %s475 = sadd.s32 %s473, %s474
        %s476 = smul.addr %s475, 8
        %s477 = scalar_lea.vmem %s7, %s476
      $region60: #{prm_d_forward.9} parent=55 // pred_fallthru
        _
    $region56: #{prm_d_forward.9} parent=5 // pred_fallthru
      _
  $region6: #{prm_d_forward.9} parent=0 // loop_footer
    %s17 = sadd.s32 1, %s13
  $region7: #{prm_d_forward.9} parent=0 // loop_footer_branch
    %12 = sbr.rel target = $region3
  $region8: #{prm_d_forward.9} parent=0 // loop_exit
    _

// kernel: prm_d_forward.8
$region0: #{prm_d_forward.8}
  #allocation0 [shape = 'u32[]', space=smem, size = 0x4, offset = 0x4, fixed_abs, tag = 'smem constant byte address 0x4 - core index']
  #allocation1 [shape = 'u32[144,128]{1,0:T(1,128)}', space=vmem, size = 0x12000, scoped, tag = 'internal scratch']
  %s0 = inlined_call_operand.vmem [shape: bf16[2,4,584], index: 0, kind: input, shape index: {}]
  %s1 = inlined_call_operand.vmem [shape: f32[1,584], index: 1, kind: input, shape index: {}]
  %s2 = inlined_call_operand.vmem [shape: f32[4,4,1], index: 2, kind: input, shape index: {}]
  %s3 = inlined_call_operand.vmem [shape: f32[4,4,1], index: 3, kind: input, shape index: {}]
  %s4 = inlined_call_operand.vmem [shape: bf16[36,4,4], index: 4, kind: input, shape index: {}]
  %s5 = inlined_call_operand.vmem [shape: f32[4,1], index: 5, kind: input, shape index: {}]
  %s6 = inlined_call_operand.vmem [shape: bf16[2,4,256], index: 6, kind: output, shape index: {0}]
  %s7 = inlined_call_operand.vmem [shape: f32[2,4,2], index: 7, kind: output, shape index: {1}]
  %8 = xla_tuple %s6, %s7
  %s9 = sld [smem:[#allocation0]]
  $region65: #{prm_d_forward.8} parent=0
    _
  %s11 = ssub.s32 1, %s9
  %s12 = scalar_select 0, %s11, %s9
  loop: start=0, step=1, limit=4
  $region2: #{prm_d_forward.8} parent=0 // loop_pre_header
    _
  $region3: #{prm_d_forward.8} parent=0 // loop_header
    %s14 = sphi 0, %s18
    %p15 = scmp.ge.s32.totalorder %s14, 4
    %s24 = sphi 0, %s26
    %s27 = sphi 0, %s24
    %s28 = sphi 0, %s27
    %s44 = sphi 0, %s28
    %s48 = sphi 0, %s48
    %s50 = sphi 0, %s48
    %s51 = sphi 0, %s50
    %s65 = sphi 0, %s51
    %s69 = sphi 0, %s69
    %s71 = sphi 0, %s69
    %s72 = sphi 0, %s71
    %s86 = sphi 0, %s72
    %s90 = sphi 0, %s90
    %s92 = sphi 0, %s90
    %s93 = sphi 0, %s92
    %s107 = sphi 0, %s93
    %s111 = sphi 0, %s111
    %s113 = sphi 0, %s111
    %s114 = sphi 0, %s113
    %s128 = sphi 0, %s114
    %s132 = sphi 0, %s132
    %s134 = sphi 0, %s132
    %s135 = sphi 0, %s134
    %s149 = sphi 0, %s135
    %s155 = sphi 0, %s157
    %s158 = sphi 0, %s155
    %s159 = sphi 0, %s158
    %s175 = sphi 0, %s159
    %s181 = sphi 0, %s183
    %s184 = sphi 0, %s181
    %s185 = sphi 0, %s184
    %s201 = sphi 0, %s185
  $region4: #{prm_d_forward.8} parent=0 // loop_header_branch
    %17 = sbr.rel (%p15) target = $region8
  $region5: #{prm_d_forward.8} parent=0 // loop_body
    %s19 = ssub.s32 %s14, 1
    %s20 = ssub.s32 %s14, 2
    %s21 = sadd.s32 %s14, 1
    %s22 = ssub.s32 %s14, %s21
    %p23 = scmp.eq.s32.totalorder %s22, 0
    %s25 = sadd.s32 %s24, 1
    %s26 = scalar_select %p23, %s24, %s25
    %p29 = pneg %p23
    %p30 = scmp.eq.s32.totalorder %s14, 1
    %p31 = por %p29, %p30
    %p32 = scmp.ne.s32.totalorder %s24, %s27
    %p33 = scmp.eq.s32.totalorder %s14, 0
    %p34 = por %p32, %p33
    %p35 = scmp.ne.s32.totalorder %s24, %s27
    %p36 = scmp.eq.s32.totalorder %s19, 1
    %p37 = por %p35, %p36
    %p38 = scmp.ne.s32.totalorder %s27, %s28
    %p39 = scmp.eq.s32.totalorder %s19, 0
    %p40 = por %p38, %p39
    %p41 = scmp.ne.s32.totalorder %s27, %s28
    %p42 = scmp.eq.s32.totalorder %s20, 1
    %p43 = por %p41, %p42
    %p45 = scmp.ne.s32.totalorder %s28, %s44
    %p46 = scmp.eq.s32.totalorder %s20, 0
    %p47 = por %p45, %p46
    %s49 = sadd.s32 %s48, 1
    %p52 = scmp.eq.s32.totalorder %s14, 1
    %p53 = scmp.ne.s32.totalorder %s48, %s50
    %p54 = scmp.eq.s32.totalorder %s14, 0
    %p55 = por %p53, %p54
    %p56 = scmp.ne.s32.totalorder %s48, %s50
    %p57 = scmp.eq.s32.totalorder %s19, 1
    %p58 = por %p56, %p57
    %p59 = scmp.ne.s32.totalorder %s50, %s51
    %p60 = scmp.eq.s32.totalorder %s19, 0
    %p61 = por %p59, %p60
    %p62 = scmp.ne.s32.totalorder %s50, %s51
    %p63 = scmp.eq.s32.totalorder %s20, 1
    %p64 = por %p62, %p63
    %p66 = scmp.ne.s32.totalorder %s51, %s65
    %p67 = scmp.eq.s32.totalorder %s20, 0
    %p68 = por %p66, %p67
    %s70 = sadd.s32 %s69, 1
    %p73 = scmp.eq.s32.totalorder %s14, 1
    %p74 = scmp.ne.s32.totalorder %s69, %s71
    %p75 = scmp.eq.s32.totalorder %s14, 0
    %p76 = por %p74, %p75
    %p77 = scmp.ne.s32.totalorder %s69, %s71
    %p78 = scmp.eq.s32.totalorder %s19, 1
    %p79 = por %p77, %p78
    %p80 = scmp.ne.s32.totalorder %s71, %s72
    %p81 = scmp.eq.s32.totalorder %s19, 0
    %p82 = por %p80, %p81
    %p83 = scmp.ne.s32.totalorder %s71, %s72
    %p84 = scmp.eq.s32.totalorder %s20, 1
    %p85 = por %p83, %p84
    %p87 = scmp.ne.s32.totalorder %s72, %s86
    %p88 = scmp.eq.s32.totalorder %s20, 0
    %p89 = por %p87, %p88
    %s91 = sadd.s32 %s90, 1
    %p94 = scmp.eq.s32.totalorder %s14, 1
    %p95 = scmp.ne.s32.totalorder %s90, %s92
    %p96 = scmp.eq.s32.totalorder %s14, 0
    %p97 = por %p95, %p96
    %p98 = scmp.ne.s32.totalorder %s90, %s92
    %p99 = scmp.eq.s32.totalorder %s19, 1
    %p100 = por %p98, %p99
    %p101 = scmp.ne.s32.totalorder %s92, %s93
    %p102 = scmp.eq.s32.totalorder %s19, 0
    %p103 = por %p101, %p102
    %p104 = scmp.ne.s32.totalorder %s92, %s93
    %p105 = scmp.eq.s32.totalorder %s20, 1
    %p106 = por %p104, %p105
    %p108 = scmp.ne.s32.totalorder %s93, %s107
    %p109 = scmp.eq.s32.totalorder %s20, 0
    %p110 = por %p108, %p109
    %s112 = sadd.s32 %s111, 1
    %p115 = scmp.eq.s32.totalorder %s14, 1
    %p116 = scmp.ne.s32.totalorder %s111, %s113
    %p117 = scmp.eq.s32.totalorder %s14, 0
    %p118 = por %p116, %p117
    %p119 = scmp.ne.s32.totalorder %s111, %s113
    %p120 = scmp.eq.s32.totalorder %s19, 1
    %p121 = por %p119, %p120
    %p122 = scmp.ne.s32.totalorder %s113, %s114
    %p123 = scmp.eq.s32.totalorder %s19, 0
    %p124 = por %p122, %p123
    %p125 = scmp.ne.s32.totalorder %s113, %s114
    %p126 = scmp.eq.s32.totalorder %s20, 1
    %p127 = por %p125, %p126
    %p129 = scmp.ne.s32.totalorder %s114, %s128
    %p130 = scmp.eq.s32.totalorder %s20, 0
    %p131 = por %p129, %p130
    %s133 = sadd.s32 %s132, 1
    %p136 = scmp.eq.s32.totalorder %s14, 1
    %p137 = scmp.ne.s32.totalorder %s132, %s134
    %p138 = scmp.eq.s32.totalorder %s14, 0
    %p139 = por %p137, %p138
    %p140 = scmp.ne.s32.totalorder %s132, %s134
    %p141 = scmp.eq.s32.totalorder %s19, 1
    %p142 = por %p140, %p141
    %p143 = scmp.ne.s32.totalorder %s134, %s135
    %p144 = scmp.eq.s32.totalorder %s19, 0
    %p145 = por %p143, %p144
    %p146 = scmp.ne.s32.totalorder %s134, %s135
    %p147 = scmp.eq.s32.totalorder %s20, 1
    %p148 = por %p146, %p147
    %p150 = scmp.ne.s32.totalorder %s135, %s149
    %p151 = scmp.eq.s32.totalorder %s20, 0
    %p152 = por %p150, %p151
    %s153 = ssub.s32 %s14, %s21
    %p154 = scmp.eq.s32.totalorder %s153, 0
    %s156 = sadd.s32 %s155, 1
    %s157 = scalar_select %p154, %s155, %s156
    %p160 = pneg %p154
    %p161 = scmp.eq.s32.totalorder %s14, 1
    %p162 = por %p160, %p161
    %p163 = scmp.ne.s32.totalorder %s155, %s158
    %p164 = scmp.eq.s32.totalorder %s14, 0
    %p165 = por %p163, %p164
    %p166 = scmp.ne.s32.totalorder %s155, %s158
    %p167 = scmp.eq.s32.totalorder %s19, 1
    %p168 = por %p166, %p167
    %p169 = scmp.ne.s32.totalorder %s158, %s159
    %p170 = scmp.eq.s32.totalorder %s19, 0
    %p171 = por %p169, %p170
    %p172 = scmp.ne.s32.totalorder %s158, %s159
    %p173 = scmp.eq.s32.totalorder %s20, 1
    %p174 = por %p172, %p173
    %p176 = scmp.ne.s32.totalorder %s159, %s175
    %p177 = scmp.eq.s32.totalorder %s20, 0
    %p178 = por %p176, %p177
    %s179 = ssub.s32 %s14, %s21
    %p180 = scmp.eq.s32.totalorder %s179, 0
    %s182 = sadd.s32 %s181, 1
    %s183 = scalar_select %p180, %s181, %s182
    %p186 = pneg %p180
    %p187 = scmp.eq.s32.totalorder %s14, 1
    %p188 = por %p186, %p187
    %p189 = scmp.ne.s32.totalorder %s181, %s184
    %p190 = scmp.eq.s32.totalorder %s14, 0
    %p191 = por %p189, %p190
    %p192 = scmp.ne.s32.totalorder %s181, %s184
    %p193 = scmp.eq.s32.totalorder %s19, 1
    %p194 = por %p192, %p193
    %p195 = scmp.ne.s32.totalorder %s184, %s185
    %p196 = scmp.eq.s32.totalorder %s19, 0
    %p197 = por %p195, %p196
    %p198 = scmp.ne.s32.totalorder %s184, %s185
    %p199 = scmp.eq.s32.totalorder %s20, 1
    %p200 = por %p198, %p199
    %p202 = scmp.ne.s32.totalorder %s185, %s201
    %p203 = scmp.eq.s32.totalorder %s20, 0
    %p204 = por %p202, %p203
    %p205 = scmp.le.s32.totalorder 1, %s14
    %p206 = scmp.lt.s32.totalorder %s14, 3
    %p207 = pnand %p205, %p206
    %p208 = pneg %p207
    // Predicated region
    $region9: #{prm_d_forward.8} parent=5 // pred_check
      _
    $region10: #{prm_d_forward.8} parent=5 // pred_check_branch
      %210 = sbr.rel (%p207) target = $region12
    $region11: #{prm_d_forward.8} parent=5 // pred_region
      %s211 = ssub.s32 %s14, 1
      // Predicated region
      $region13: #{prm_d_forward.8} parent=11 // pred_check
        %p212 = pneg %p61
      $region14: #{prm_d_forward.8} parent=11 // pred_check_branch
        %214 = sbr.rel (%p212) target = $region16
      $region15: #{prm_d_forward.8} parent=11 // pred_region
        _
      $region16: #{prm_d_forward.8} parent=11 // pred_fallthru
        _
      // Predicated region
      $region17: #{prm_d_forward.8} parent=11 // pred_check
        %p215 = pneg %p82
      $region18: #{prm_d_forward.8} parent=11 // pred_check_branch
        %217 = sbr.rel (%p215) target = $region20
      $region19: #{prm_d_forward.8} parent=11 // pred_region
        _
      $region20: #{prm_d_forward.8} parent=11 // pred_fallthru
        _
      // Predicated region
      $region21: #{prm_d_forward.8} parent=11 // pred_check
        %p218 = pneg %p103
      $region22: #{prm_d_forward.8} parent=11 // pred_check_branch
        %220 = sbr.rel (%p218) target = $region24
      $region23: #{prm_d_forward.8} parent=11 // pred_region
        _
      $region24: #{prm_d_forward.8} parent=11 // pred_fallthru
        _
      // Predicated region
      $region25: #{prm_d_forward.8} parent=11 // pred_check
        %p221 = pneg %p124
      $region26: #{prm_d_forward.8} parent=11 // pred_check_branch
        %223 = sbr.rel (%p221) target = $region28
      $region27: #{prm_d_forward.8} parent=11 // pred_region
        _
      $region28: #{prm_d_forward.8} parent=11 // pred_fallthru
        _
      // Predicated region
      $region29: #{prm_d_forward.8} parent=11 // pred_check
        %p224 = pneg %p145
      $region30: #{prm_d_forward.8} parent=11 // pred_check_branch
        %226 = sbr.rel (%p224) target = $region32
      $region31: #{prm_d_forward.8} parent=11 // pred_region
        _
      $region32: #{prm_d_forward.8} parent=11 // pred_fallthru
        _
    $region12: #{prm_d_forward.8} parent=5 // pred_fallthru
      _
    %p227 = scmp.lt.s32.totalorder %s14, 2
    // Predicated region
    $region33: #{prm_d_forward.8} parent=5 // pred_check
      %p228 = pneg %p227
    $region34: #{prm_d_forward.8} parent=5 // pred_check_branch
      %230 = sbr.rel (%p228) target = $region36
    $region35: #{prm_d_forward.8} parent=5 // pred_region
      // Predicated region
      $region37: #{prm_d_forward.8} parent=35 // pred_check
        %p231 = pneg %p34
      $region38: #{prm_d_forward.8} parent=35 // pred_check_branch
        %233 = sbr.rel (%p231) target = $region40
      $region39: #{prm_d_forward.8} parent=35 // pred_region
        %p234 = scmp.lt.s32.totalorder %s14, 1
        %s235 = scalar_select %p234, %s14, 1
        %s236 = smul.addr %s235, 5
        %s237 = smul.addr %s236, 2
        %s238 = scalar_lea.vmem %s0, %s237
      $region40: #{prm_d_forward.8} parent=35 // pred_fallthru
        _
    $region36: #{prm_d_forward.8} parent=5 // pred_fallthru
      _
    %p239 = scmp.le.s32.totalorder 1, %s14
    %p240 = scmp.lt.s32.totalorder %s14, 3
    %p241 = pnand %p239, %p240
    %p242 = pneg %p241
    // Predicated region
    $region41: #{prm_d_forward.8} parent=5 // pred_check
      _
    $region42: #{prm_d_forward.8} parent=5 // pred_check_branch
      %244 = sbr.rel (%p241) target = $region44
    $region43: #{prm_d_forward.8} parent=5 // pred_region
      %s245 = ssub.s32 %s14, 1
      %p246 = scmp.lt.s32.totalorder %s19, 1
      %s247 = scalar_select %p246, %s19, 1
      %s248 = smul.addr %s247, 5
      %s249 = smul.addr %s248, 2
      %s250 = scalar_lea.vmem %s0, %s249
      %p251 = pneg %p40
      %p252 = pneg %p37
      %p253 = pneg %p61
      %p254 = pneg %p58
      %p255 = pneg %p82
      %p256 = pneg %p79
      %p257 = pneg %p103
      %p258 = pneg %p100
      %p259 = pneg %p124
      %p260 = pneg %p121
      %p261 = pneg %p145
      %p262 = pneg %p142
      %p263 = pneg %p171
      %p264 = pneg %p168
      %p265 = scmp.lt.s32.totalorder %s19, 1
      %s266 = scalar_select %p265, %s19, 1
      %s267 = smul.addr %s266, 2
      %s268 = smul.addr %s267, 2
      %s269 = scalar_lea.vmem %s6, %s268
      %p270 = pneg %p197
      %p271 = pneg %p194
      %p272 = scmp.lt.s32.totalorder %s19, 1
      %s273 = scalar_select %p272, %s19, 1
      %s274 = smul.addr %s273, 4
      %s275 = scalar_lea.vmem %s7, %s274
      %p276 = scmp.lt.s32.totalorder %s19, 1
      %s277 = scalar_select %p276, %s19, 1
      %s278 = smul.addr %s277, 5
      %s279 = smul.addr %s278, 2
      %s280 = scalar_lea.vmem %s0, %s279
      %p281 = scmp.lt.s32.totalorder %s19, 1
      %s282 = scalar_select %p281, %s19, 1
      %s283 = smul.addr %s282, 2
      %s284 = smul.addr %s283, 2
      %s285 = scalar_lea.vmem %s6, %s284
      %p286 = scmp.lt.s32.totalorder %s19, 1
      %s287 = scalar_select %p286, %s19, 1
      %s288 = smul.addr %s287, 4
      %s289 = scalar_lea.vmem %s7, %s288
      %v291 = vld [vmem:[%s280] sm:$0xff]
      %v292 = vld [vmem:[%s280 + $0x8] sm:$0x3]
      %v293 = vunpack.c.l.bf16 %v291
      %v294 = vunpack.c.h.bf16 %v291
      %v295 = vunpack.c.l.bf16 %v292
      %v296 = vld [vmem:[%s1] sm:$0x1f]
      %v297 = vld [vmem:[%s2] sm:$0xf]
      %299 = vset.pattern.permute.xlu0 0
      %300 = vperm.xlu0 %299, %v297
      %v301 = vpop.permute.xlu0 %300
      %v303 = vunpack.c.l.s4 839922192
      %v304 = vunpack.c.0.s8 %v303
      %v305 = vlaneseq
      %v306 = vshrl.u32 %v305, 7
      %v307 = vsub.s32 %v304, %v306
      %v308 = vrot.slane %v301, %v307
      %v310 = vmul.f32 %v293, %v308
      %v311 = vmul.f32 %v294, %v308
      %v312 = vld [vmem:[%s3] sm:$0xf]
      %314 = vset.pattern.permute.xlu0 0
      %315 = vperm.xlu0 %314, %v312
      %v316 = vpop.permute.xlu0 %315
      %v318 = vunpack.c.l.s4 839922192
      %v319 = vunpack.c.0.s8 %v318
      %v320 = vlaneseq
      %v321 = vshrl.u32 %v320, 7
      %v322 = vsub.s32 %v319, %v321
      %v323 = vrot.slane %v316, %v322
      %v325 = vadd.f32 %v310, %v323
      %v326 = vadd.f32 %v311, %v323
      %v327 = vmax.f32 %v325, 0.0
      %v328 = vmax.f32 %v326, 0.0
      %v330 = vlaneseq
      %v331 = vshrl.u32 %v330, 7
      %v332 = vsub.s32 0, %v331
      %v333 = vrot.slane %v296, %v332
      %v334 = vlaneseq
      %v335 = vshrl.u32 %v334, 7
      %v336 = vsub.s32 1, %v335
      %v337 = vrot.slane %v296, %v336
      %v338 = vlaneseq
      %v339 = vshrl.u32 %v338, 7
      %v340 = vsub.s32 2, %v339
      %v341 = vrot.slane %v296, %v340
      %v342 = vlaneseq
      %v343 = vshrl.u32 %v342, 7
      %v344 = vsub.s32 3, %v343
      %v345 = vrot.slane %v296, %v344
      %v346 = vlaneseq
      %v347 = vshrl.u32 %v346, 7
      %v348 = vsub.s32 4, %v347
      %v349 = vrot.slane %v296, %v348
      %v351 = vcombine.low %v333, %v337
      %v352 = vcombine.low %v341, %v345
      %v355 = vmul.f32 %v327, %v351
      %v356 = vmul.f32 %v328, %v352
      %v359 = vcombine.high %v355, %v355
      %v360 = vcombine.high %v356, %v356
      %v363 = vpack.c.bf16 %v355, %v355
      %v364 = vpack.c.bf16 %v359, %v359
      %v365 = vpack.c.bf16 %v356, %v356
      %v366 = vpack.c.bf16 %v360, %v360
      %v367 = vld [vmem:[%s4] sm:$0x3]
      %s368 = scalar_lea.vmem %s4, 2
      %v369 = vld [vmem:[%s368] sm:$0x3]
      %374 = vrot.lane.b32.xlu0 %v363, 52
      %v375 = vpop.permute.xlu0 %374
      %376 = vrot.lane.b32.xlu0 %v364, 52
      %v377 = vpop.permute.xlu0 %376
      %378 = vrot.lane.b32.xlu0 %v365, 52
      %v379 = vpop.permute.xlu0 %378
      %380 = vrot.lane.b32.xlu0 %v366, 52
      %v381 = vpop.permute.xlu0 %380
      %vm382 = vcmask 424960
      %v383 = vsel %vm382, %v375, %v377
      %v384 = vsel %vm382, %v377, %v379
      %v385 = vsel %vm382, %v379, %v381
      %vm386 = vcmask 31744
      %v388 = vsel %vm386, %v369, 0
      %vm390 = vcmask 1041408
      %v392 = vsel %vm390, %v383, 0
      %v395 = vsel %vm390, %v384, 0
      %v398 = vsel %vm390, %v385, 0
      %400 = vmatprep.subr.bf16.mxu0 %v395
      %401 = vmatpush1.bf16.msra.mxu0 %v392
      %402 = vmatprep.subr.bf16.mxu0 0
      %403 = vmatpush1.bf16.msra.mxu0 0
      %404 = vmatprep.subr.bf16.mxu0 0
      %405 = vmatpush1.bf16.msra.mxu0 0
      %406 = vmatprep.subr.bf16.mxu0 0
      %407 = vmatpush1.bf16.msra.mxu0 0
      %408 = vmatprep.subr.bf16.mxu0 0
      %409 = vmatpush1.bf16.msra.mxu0 0
      %410 = vmatprep.subr.bf16.mxu0 0
      %411 = vmatpush1.bf16.msra.mxu0 0
      %412 = vmatprep.subr.bf16.mxu0 0
      %413 = vmatpush1.bf16.msra.mxu0 0
      %414 = vmatprep.subr.bf16.mxu0 0
      %415 = vmatpush1.bf16.msra.mxu0 0
      %416 = vmatprep.subr.bf16.mxu0 0
      %417 = vmatpush1.bf16.msra.mxu0 0
      %418 = vmatprep.subr.bf16.mxu0 0
      %419 = vmatpush1.bf16.msra.mxu0 0
      %420 = vmatprep.subr.bf16.mxu0 0
      %421 = vmatpush1.bf16.msra.mxu0 0
      %422 = vmatprep.subr.bf16.mxu0 0
      %423 = vmatpush1.bf16.msra.mxu0 0
      %424 = vmatprep.subr.bf16.mxu0 0
      %425 = vmatpush1.bf16.msra.mxu0 0
      %426 = vmatprep.subr.bf16.mxu0 0
      %427 = vmatpush1.bf16.msra.mxu0 0
      %428 = vmatprep.subr.bf16.mxu0 0
      %429 = vmatpush1.bf16.msra.mxu0 0
      %430 = vmatprep.subr.bf16.mxu0 0
      %431 = vmatpush1.bf16.msra.mxu0 0
      %432 = vmatprep.mubr.bf16.mxu0 0
      %433 = vmatmul.mubr.bf16.gmra.mrb[0].mxu0 %v388
      %v434 = vpop.f32.mrb[0].mxu0
      %v435 = vadd.f32 0.0, %v434
      %v436 = vpop.f32.mrb[0].mxu0
      %v437 = vadd.f32 0.0, %v436
      %v438 = vpop.f32.mrb[0].mxu0
      %v439 = vpop.f32.mrb[0].mxu0
      %440 = vdwg.mxu0
      %441 = vmatprep.subr.bf16.mxu0 0
      %442 = vmatpush1.bf16.msra.mxu0 %v398
      %443 = vmatprep.subr.bf16.mxu0 0
      %444 = vmatpush1.bf16.msra.mxu0 0
      %445 = vmatprep.subr.bf16.mxu0 0
      %446 = vmatpush1.bf16.msra.mxu0 0
      %447 = vmatprep.subr.bf16.mxu0 0
      %448 = vmatpush1.bf16.msra.mxu0 0
      %449 = vmatprep.subr.bf16.mxu0 0
      %450 = vmatpush1.bf16.msra.mxu0 0
      %451 = vmatprep.subr.bf16.mxu0 0
      %452 = vmatpush1.bf16.msra.mxu0 0
      %453 = vmatprep.subr.bf16.mxu0 0
      %454 = vmatpush1.bf16.msra.mxu0 0
      %455 = vmatprep.subr.bf16.mxu0 0
      %456 = vmatpush1.bf16.msra.mxu0 0
      %457 = vmatprep.subr.bf16.mxu0 0
      %458 = vmatpush1.bf16.msra.mxu0 0
      %459 = vmatprep.subr.bf16.mxu0 0
      %460 = vmatpush1.bf16.msra.mxu0 0
      %461 = vmatprep.subr.bf16.mxu0 0
      %462 = vmatpush1.bf16.msra.mxu0 0
      %463 = vmatprep.subr.bf16.mxu0 0
      %464 = vmatpush1.bf16.msra.mxu0 0
      %465 = vmatprep.subr.bf16.mxu0 0
      %466 = vmatpush1.bf16.msra.mxu0 0
      %467 = vmatprep.subr.bf16.mxu0 0
      %468 = vmatpush1.bf16.msra.mxu0 0
      %469 = vmatprep.subr.bf16.mxu0 0
      %470 = vmatpush1.bf16.msra.mxu0 0
      %471 = vmatprep.subr.bf16.mxu0 0
      %472 = vmatpush1.bf16.msra.mxu0 0
      %473 = vmatprep.mubr.bf16.mxu0 0
      %474 = vmatmul.mubr.bf16.gmra.mrb[0].mxu0 %v388
      %v475 = vpop.f32.mrb[0].mxu0
      %v476 = vadd.f32 0.0, %v475
      %v477 = vpop.f32.mrb[0].mxu0
      %v478 = vpop.f32.mrb[0].mxu0
      %v479 = vpop.f32.mrb[0].mxu0
      %480 = vdwg.mxu0
      %481 = vrot.lane.b32.xlu0 %v363, 53
      %v482 = vpop.permute.xlu0 %481
      %483 = vrot.lane.b32.xlu0 %v364, 53
      %v484 = vpop.permute.xlu0 %483
      %485 = vrot.lane.b32.xlu0 %v365, 53
      %v486 = vpop.permute.xlu0 %485
      %487 = vrot.lane.b32.xlu0 %v366, 53
      %v488 = vpop.permute.xlu0 %487
      %vm489 = vcmask 433152
      %v490 = vsel %vm489, %v482, %v484
      %v491 = vsel %vm489, %v484, %v486
      %v492 = vsel %vm489, %v486, %v488
      %v494 = vsel %vm386, %v367, 0
      %v497 = vsel %vm390, %v490, 0
      %v500 = vsel %vm390, %v491, 0
      %v503 = vsel %vm390, %v492, 0
      %505 = vmatprep.subr.bf16.mxu0 %v500
      %506 = vmatpush1.bf16.msra.mxu0 %v497
      %507 = vmatprep.subr.bf16.mxu0 0
      %508 = vmatpush1.bf16.msra.mxu0 0
      %509 = vmatprep.subr.bf16.mxu0 0
      %510 = vmatpush1.bf16.msra.mxu0 0
      %511 = vmatprep.subr.bf16.mxu0 0
      %512 = vmatpush1.bf16.msra.mxu0 0
      %513 = vmatprep.subr.bf16.mxu0 0
      %514 = vmatpush1.bf16.msra.mxu0 0
      %515 = vmatprep.subr.bf16.mxu0 0
      %516 = vmatpush1.bf16.msra.mxu0 0
      %517 = vmatprep.subr.bf16.mxu0 0
      %518 = vmatpush1.bf16.msra.mxu0 0
      %519 = vmatprep.subr.bf16.mxu0 0
      %520 = vmatpush1.bf16.msra.mxu0 0
      %521 = vmatprep.subr.bf16.mxu0 0
      %522 = vmatpush1.bf16.msra.mxu0 0
      %523 = vmatprep.subr.bf16.mxu0 0
      %524 = vmatpush1.bf16.msra.mxu0 0
      %525 = vmatprep.subr.bf16.mxu0 0
      %526 = vmatpush1.bf16.msra.mxu0 0
      %527 = vmatprep.subr.bf16.mxu0 0
      %528 = vmatpush1.bf16.msra.mxu0 0
      %529 = vmatprep.subr.bf16.mxu0 0
      %530 = vmatpush1.bf16.msra.mxu0 0
      %531 = vmatprep.subr.bf16.mxu0 0
      %532 = vmatpush1.bf16.msra.mxu0 0
      %533 = vmatprep.subr.bf16.mxu0 0
      %534 = vmatpush1.bf16.msra.mxu0 0
      %535 = vmatprep.subr.bf16.mxu0 0
      %536 = vmatpush1.bf16.msra.mxu0 0
      %537 = vmatprep.mubr.bf16.mxu0 0
      %538 = vmatmul.mubr.bf16.gmra.mrb[0].mxu0 %v494
      %v539 = vpop.f32.mrb[0].mxu0
      %v540 = vadd.f32 %v435, %v539
      %v541 = vpop.f32.mrb[0].mxu0
      %v542 = vadd.f32 %v437, %v541
      %v543 = vpop.f32.mrb[0].mxu0
      %v544 = vpop.f32.mrb[0].mxu0
      %545 = vdwg.mxu0
      %546 = vmatprep.subr.bf16.mxu0 0
      %547 = vmatpush1.bf16.msra.mxu0 %v503
      %548 = vmatprep.subr.bf16.mxu0 0
      %549 = vmatpush1.bf16.msra.mxu0 0
      %550 = vmatprep.subr.bf16.mxu0 0
      %551 = vmatpush1.bf16.msra.mxu0 0
      %552 = vmatprep.subr.bf16.mxu0 0
      %553 = vmatpush1.bf16.msra.mxu0 0
      %554 = vmatprep.subr.bf16.mxu0 0
      %555 = vmatpush1.bf16.msra.mxu0 0
      %556 = vmatprep.subr.bf16.mxu0 0
      %557 = vmatpush1.bf16.msra.mxu0 0
      %558 = vmatprep.subr.bf16.mxu0 0
      %559 = vmatpush1.bf16.msra.mxu0 0
      %560 = vmatprep.subr.bf16.mxu0 0
      %561 = vmatpush1.bf16.msra.mxu0 0
      %562 = vmatprep.subr.bf16.mxu0 0
      %563 = vmatpush1.bf16.msra.mxu0 0
      %564 = vmatprep.subr.bf16.mxu0 0
      %565 = vmatpush1.bf16.msra.mxu0 0
      %566 = vmatprep.subr.bf16.mxu0 0
      %567 = vmatpush1.bf16.msra.mxu0 0
      %568 = vmatprep.subr.bf16.mxu0 0
      %569 = vmatpush1.bf16.msra.mxu0 0
      %570 = vmatprep.subr.bf16.mxu0 0
      %571 = vmatpush1.bf16.msra.mxu0 0
      %572 = vmatprep.subr.bf16.mxu0 0
      %573 = vmatpush1.bf16.msra.mxu0 0
      %574 = vmatprep.subr.bf16.mxu0 0
      %575 = vmatpush1.bf16.msra.mxu0 0
      %576 = vmatprep.subr.bf16.mxu0 0
      %577 = vmatpush1.bf16.msra.mxu0 0
      %578 = vmatprep.mubr.bf16.mxu0 0
      %579 = vmatmul.mubr.bf16.gmra.mrb[0].mxu0 %v494
      %v580 = vpop.f32.mrb[0].mxu0
      %v581 = vadd.f32 %v476, %v580
      %v582 = vpop.f32.mrb[0].mxu0
      %v583 = vpop.f32.mrb[0].mxu0
      %v584 = vpop.f32.mrb[0].mxu0
      %585 = vdwg.mxu0
      %s586 = scalar_lea.vmem %s4, 4
      %v587 = vld [vmem:[%s586] sm:$0x3]
      %588 = vrot.lane.b32.xlu0 %v363, 51
      %v589 = vpop.permute.xlu0 %588
      %590 = vrot.lane.b32.xlu0 %v364, 51
      %v591 = vpop.permute.xlu0 %590
      %592 = vrot.lane.b32.xlu0 %v365, 51
      %v593 = vpop.permute.xlu0 %592
      %594 = vrot.lane.b32.xlu0 %v366, 51
      %v595 = vpop.permute.xlu0 %594
      %vm596 = vcmask 416768
      %v597 = vsel %vm596, %v589, %v591
      %v598 = vsel %vm596, %v591, %v593
      %v599 = vsel %vm596, %v593, %v595
      %v601 = vsel %vm386, %v587, 0
      %v604 = vsel %vm390, %v597, 0
      %v607 = vsel %vm390, %v598, 0
      %v610 = vsel %vm390, %v599, 0
      %612 = vmatprep.subr.bf16.mxu0 %v607
      %613 = vmatpush1.bf16.msra.mxu0 %v604
      %614 = vmatprep.subr.bf16.mxu0 0
      %615 = vmatpush1.bf16.msra.mxu0 0
      %616 = vmatprep.subr.bf16.mxu0 0
      %617 = vmatpush1.bf16.msra.mxu0 0
      %618 = vmatprep.subr.bf16.mxu0 0
      %619 = vmatpush1.bf16.msra.mxu0 0
      %620 = vmatprep.subr.bf16.mxu0 0
      %621 = vmatpush1.bf16.msra.mxu0 0
      %622 = vmatprep.subr.bf16.mxu0 0
      %623 = vmatpush1.bf16.msra.mxu0 0
      %624 = vmatprep.subr.bf16.mxu0 0
      %625 = vmatpush1.bf16.msra.mxu0 0
      %626 = vmatprep.subr.bf16.mxu0 0
      %627 = vmatpush1.bf16.msra.mxu0 0
      %628 = vmatprep.subr.bf16.mxu0 0
      %629 = vmatpush1.bf16.msra.mxu0 0
      %630 = vmatprep.subr.bf16.mxu0 0
      %631 = vmatpush1.bf16.msra.mxu0 0
      %632 = vmatprep.subr.bf16.mxu0 0
      %633 = vmatpush1.bf16.msra.mxu0 0
      %634 = vmatprep.subr.bf16.mxu0 0
      %635 = vmatpush1.bf16.msra.mxu0 0
      %636 = vmatprep.subr.bf16.mxu0 0
      %637 = vmatpush1.bf16.msra.mxu0 0
      %638 = vmatprep.subr.bf16.mxu0 0
      %639 = vmatpush1.bf16.msra.mxu0 0
      %640 = vmatprep.subr.bf16.mxu0 0
      %641 = vmatpush1.bf16.msra.mxu0 0
      %642 = vmatprep.subr.bf16.mxu0 0
      %643 = vmatpush1.bf16.msra.mxu0 0
      %644 = vmatprep.mubr.bf16.mxu0 0
      %645 = vmatmul.mubr.bf16.gmra.mrb[0].mxu0 %v601
      %v646 = vpop.f32.mrb[0].mxu0
      %v647 = vadd.f32 0.0, %v646
      %v648 = vpop.f32.mrb[0].mxu0
      %v649 = vadd.f32 0.0, %v648
      %v650 = vpop.f32.mrb[0].mxu0
      %v651 = vpop.f32.mrb[0].mxu0
      %652 = vdwg.mxu0
      %653 = vmatprep.subr.bf16.mxu0 0
      %654 = vmatpush1.bf16.msra.mxu0 %v610
      %655 = vmatprep.subr.bf16.mxu0 0
      %656 = vmatpush1.bf16.msra.mxu0 0
      %657 = vmatprep.subr.bf16.mxu0 0
      %658 = vmatpush1.bf16.msra.mxu0 0
      %659 = vmatprep.subr.bf16.mxu0 0
      %660 = vmatpush1.bf16.msra.mxu0 0
      %661 = vmatprep.subr.bf16.mxu0 0
      %662 = vmatpush1.bf16.msra.mxu0 0
      %663 = vmatprep.subr.bf16.mxu0 0
      %664 = vmatpush1.bf16.msra.mxu0 0
      %665 = vmatprep.subr.bf16.mxu0 0
      %666 = vmatpush1.bf16.msra.mxu0 0
      %667 = vmatprep.subr.bf16.mxu0 0
      %668 = vmatpush1.bf16.msra.mxu0 0
      %669 = vmatprep.subr.bf16.mxu0 0
      %670 = vmatpush1.bf16.msra.mxu0 0
      %671 = vmatprep.subr.bf16.mxu0 0
      %672 = vmatpush1.bf16.msra.mxu0 0
      %673 = vmatprep.subr.bf16.mxu0 0
      %674 = vmatpush1.bf16.msra.mxu0 0
      %675 = vmatprep.subr.bf16.mxu0 0
      %676 = vmatpush1.bf16.msra.mxu0 0
      %677 = vmatprep.subr.bf16.mxu0 0
      %678 = vmatpush1.bf16.msra.mxu0 0
      %679 = vmatprep.subr.bf16.mxu0 0
      %680 = vmatpush1.bf16.msra.mxu0 0
      %681 = vmatprep.subr.bf16.mxu0 0
      %682 = vmatpush1.bf16.msra.mxu0 0
      %683 = vmatprep.subr.bf16.mxu0 0
      %684 = vmatpush1.bf16.msra.mxu0 0
      %685 = vmatprep.mubr.bf16.mxu0 0
      %686 = vmatmul.mubr.bf16.gmra.mrb[0].mxu0 %v601
      %v687 = vpop.f32.mrb[0].mxu0
      %v688 = vadd.f32 0.0, %v687
      %v689 = vpop.f32.mrb[0].mxu0
      %v690 = vpop.f32.mrb[0].mxu0
      %v691 = vpop.f32.mrb[0].mxu0
      %692 = vdwg.mxu0
      %v693 = vadd.f32 %v540, %v647
      %v694 = vadd.f32 %v542, %v649
      %v695 = vadd.f32 %v581, %v688
      %s696 = scalar_lea.vmem %s4, 6
      %v697 = vld [vmem:[%s696] sm:$0x3]
      %698 = vrot.lane.b32.xlu0 %v363, 29
      %v699 = vpop.permute.xlu0 %698
      %700 = vrot.lane.b32.xlu0 %v364, 29
      %v701 = vpop.permute.xlu0 %700
      %702 = vrot.lane.b32.xlu0 %v365, 29
      %v703 = vpop.permute.xlu0 %702
      %704 = vrot.lane.b32.xlu0 %v366, 29
      %v705 = vpop.permute.xlu0 %704
      %vm706 = vcmask 236544
      %v707 = vsel %vm706, %v699, %v701
      %v708 = vsel %vm706, %v701, %v703
      %v709 = vsel %vm706, %v703, %v705
      %v711 = vsel %vm386, %v697, 0
      %v714 = vsel %vm390, %v707, 0
      %v717 = vsel %vm390, %v708, 0
      %v720 = vsel %vm390, %v709, 0
      %722 = vmatprep.subr.bf16.mxu0 %v717
      %723 = vmatpush1.bf16.msra.mxu0 %v714
      %724 = vmatprep.subr.bf16.mxu0 0
      %725 = vmatpush1.bf16.msra.mxu0 0
      %726 = vmatprep.subr.bf16.mxu0 0
      %727 = vmatpush1.bf16.msra.mxu0 0
      %728 = vmatprep.subr.bf16.mxu0 0
      %729 = vmatpush1.bf16.msra.mxu0 0
      %730 = vmatprep.subr.bf16.mxu0 0
      %731 = vmatpush1.bf16.msra.mxu0 0
      %732 = vmatprep.subr.bf16.mxu0 0
      %733 = vmatpush1.bf16.msra.mxu0 0
      %734 = vmatprep.subr.bf16.mxu0 0
      %735 = vmatpush1.bf16.msra.mxu0 0
      %736 = vmatprep.subr.bf16.mxu0 0
      %737 = vmatpush1.bf16.msra.mxu0 0
      %738 = vmatprep.subr.bf16.mxu0 0
      %739 = vmatpush1.bf16.msra.mxu0 0
      %740 = vmatprep.subr.bf16.mxu0 0
      %741 = vmatpush1.bf16.msra.mxu0 0
      %742 = vmatprep.subr.bf16.mxu0 0
      %743 = vmatpush1.bf16.msra.mxu0 0
      %744 = vmatprep.subr.bf16.mxu0 0
      %745 = vmatpush1.bf16.msra.mxu0 0
      %746 = vmatprep.subr.bf16.mxu0 0
      %747 = vmatpush1.bf16.msra.mxu0 0
      %748 = vmatprep.subr.bf16.mxu0 0
      %749 = vmatpush1.bf16.msra.mxu0 0
      %750 = vmatprep.subr.bf16.mxu0 0
      %751 = vmatpush1.bf16.msra.mxu0 0
      %752 = vmatprep.subr.bf16.mxu0 0
      %753 = vmatpush1.bf16.msra.mxu0 0
      %754 = vmatprep.mubr.bf16.mxu0 0
      %755 = vmatmul.mubr.bf16.gmra.mrb[0].mxu0 %v711
      %v756 = vpop.f32.mrb[0].mxu0
      %v757 = vadd.f32 0.0, %v756
      %v758 = vpop.f32.mrb[0].mxu0
      %v759 = vadd.f32 0.0, %v758
      %v760 = vpop.f32.mrb[0].mxu0
      %v761 = vpop.f32.mrb[0].mxu0
      %762 = vdwg.mxu0
      %763 = vmatprep.subr.bf16.mxu0 0
      %764 = vmatpush1.bf16.msra.mxu0 %v720
      %765 = vmatprep.subr.bf16.mxu0 0
      %766 = vmatpush1.bf16.msra.mxu0 0
      %767 = vmatprep.subr.bf16.mxu0 0
      %768 = vmatpush1.bf16.msra.mxu0 0
      %769 = vmatprep.subr.bf16.mxu0 0
      %770 = vmatpush1.bf16.msra.mxu0 0
      %771 = vmatprep.subr.bf16.mxu0 0
      %772 = vmatpush1.bf16.msra.mxu0 0
      %773 = vmatprep.subr.bf16.mxu0 0
      %774 = vmatpush1.bf16.msra.mxu0 0
      %775 = vmatprep.subr.bf16.mxu0 0
      %776 = vmatpush1.bf16.msra.mxu0 0
      %777 = vmatprep.subr.bf16.mxu0 0
      %778 = vmatpush1.bf16.msra.mxu0 0
      %779 = vmatprep.subr.bf16.mxu0 0
      %780 = vmatpush1.bf16.msra.mxu0 0
      %781 = vmatprep.subr.bf16.mxu0 0
      %782 = vmatpush1.bf16.msra.mxu0 0
      %783 = vmatprep.subr.bf16.mxu0 0
      %784 = vmatpush1.bf16.msra.mxu0 0
      %785 = vmatprep.subr.bf16.mxu0 0
      %786 = vmatpush1.bf16.msra.mxu0 0
      %787 = vmatprep.subr.bf16.mxu0 0
      %788 = vmatpush1.bf16.msra.mxu0 0
      %789 = vmatprep.subr.bf16.mxu0 0
      %790 = vmatpush1.bf16.msra.mxu0 0
      %791 = vmatprep.subr.bf16.mxu0 0
      %792 = vmatpush1.bf16.msra.mxu0 0
      %793 = vmatprep.subr.bf16.mxu0 0
      %794 = vmatpush1.bf16.msra.mxu0 0
      %795 = vmatprep.mubr.bf16.mxu0 0
      %796 = vmatmul.mubr.bf16.gmra.mrb[0].mxu0 %v711
      %v797 = vpop.f32.mrb[0].mxu0
      %v798 = vadd.f32 0.0, %v797
      %v799 = vpop.f32.mrb[0].mxu0
      %v800 = vpop.f32.mrb[0].mxu0
      %v801 = vpop.f32.mrb[0].mxu0
      %802 = vdwg.mxu0
      %v803 = vadd.f32 %v693, %v757
      %v804 = vadd.f32 %v694, %v759
      %v805 = vadd.f32 %v695, %v798
      %s806 = scalar_lea.vmem %s4, 8
      %v807 = vld [vmem:[%s806] sm:$0x3]
      %808 = vrot.lane.b32.xlu0 %v363, 28
      %v809 = vpop.permute.xlu0 %808
      %810 = vrot.lane.b32.xlu0 %v364, 28
      %v811 = vpop.permute.xlu0 %810
      %812 = vrot.lane.b32.xlu0 %v365, 28
      %v813 = vpop.permute.xlu0 %812
      %814 = vrot.lane.b32.xlu0 %v366, 28
      %v815 = vpop.permute.xlu0 %814
      %vm816 = vcmask 228352
      %v817 = vsel %vm816, %v809, %v811
      %v818 = vsel %vm816, %v811, %v813
      %v819 = vsel %vm816, %v813, %v815
      %v821 = vsel %vm386, %v807, 0
      %v824 = vsel %vm390, %v817, 0
      %v827 = vsel %vm390, %v818, 0
      %v830 = vsel %vm390, %v819, 0
      %832 = vmatprep.subr.bf16.mxu0 %v827
      %833 = vmatpush1.bf16.msra.mxu0 %v824
      %834 = vmatprep.subr.bf16.mxu0 0
      %835 = vmatpush1.bf16.msra.mxu0 0
      %836 = vmatprep.subr.bf16.mxu0 0
      %837 = vmatpush1.bf16.msra.mxu0 0
      %838 = vmatprep.subr.bf16.mxu0 0
      %839 = vmatpush1.bf16.msra.mxu0 0
      %840 = vmatprep.subr.bf16.mxu0 0
      %841 = vmatpush1.bf16.msra.mxu0 0
      %842 = vmatprep.subr.bf16.mxu0 0
      %843 = vmatpush1.bf16.msra.mxu0 0
      %844 = vmatprep.subr.bf16.mxu0 0
      %845 = vmatpush1.bf16.msra.mxu0 0
      %846 = vmatprep.subr.bf16.mxu0 0
      %847 = vmatpush1.bf16.msra.mxu0 0
      %848 = vmatprep.subr.bf16.mxu0 0
      %849 = vmatpush1.bf16.msra.mxu0 0
      %850 = vmatprep.subr.bf16.mxu0 0
      %851 = vmatpush1.bf16.msra.mxu0 0
      %852 = vmatprep.subr.bf16.mxu0 0
      %853 = vmatpush1.bf16.msra.mxu0 0
      %854 = vmatprep.subr.bf16.mxu0 0
      %855 = vmatpush1.bf16.msra.mxu0 0
      %856 = vmatprep.subr.bf16.mxu0 0
      %857 = vmatpush1.bf16.msra.mxu0 0
      %858 = vmatprep.subr.bf16.mxu0 0
      %859 = vmatpush1.bf16.msra.mxu0 0
      %860 = vmatprep.subr.bf16.mxu0 0
      %861 = vmatpush1.bf16.msra.mxu0 0
      %862 = vmatprep.subr.bf16.mxu0 0
      %863 = vmatpush1.bf16.msra.mxu0 0
      %864 = vmatprep.mubr.bf16.mxu0 0
      %865 = vmatmul.mubr.bf16.gmra.mrb[0].mxu0 %v821
      %v866 = vpop.f32.mrb[0].mxu0
      %v867 = vadd.f32 0.0, %v866
      %v868 = vpop.f32.mrb[0].mxu0
      %v869 = vadd.f32 0.0, %v868
      %v870 = vpop.f32.mrb[0].mxu0
      %v871 = vpop.f32.mrb[0].mxu0
      %872 = vdwg.mxu0
      %873 = vmatprep.subr.bf16.mxu0 0
      %874 = vmatpush1.bf16.msra.mxu0 %v830
      %875 = vmatprep.subr.bf16.mxu0 0
      %876 = vmatpush1.bf16.msra.mxu0 0
      %877 = vmatprep.subr.bf16.mxu0 0
      %878 = vmatpush1.bf16.msra.mxu0 0
      %879 = vmatprep.subr.bf16.mxu0 0
      %880 = vmatpush1.bf16.msra.mxu0 0
      %881 = vmatprep.subr.bf16.mxu0 0
      %882 = vmatpush1.bf16.msra.mxu0 0
      %883 = vmatprep.subr.bf16.mxu0 0
      %884 = vmatpush1.bf16.msra.mxu0 0
      %885 = vmatprep.subr.bf16.mxu0 0
      %886 = vmatpush1.bf16.msra.mxu0 0
      %887 = vmatprep.subr.bf16.mxu0 0
      %888 = vmatpush1.bf16.msra.mxu0 0
      %889 = vmatprep.subr.bf16.mxu0 0
      %890 = vmatpush1.bf16.msra.mxu0 0
      %891 = vmatprep.subr.bf16.mxu0 0
      %892 = vmatpush1.bf16.msra.mxu0 0
      %893 = vmatprep.subr.bf16.mxu0 0
      %894 = vmatpush1.bf16.msra.mxu0 0
      %895 = vmatprep.subr.bf16.mxu0 0
      %896 = vmatpush1.bf16.msra.mxu0 0
      %897 = vmatprep.subr.bf16.mxu0 0
      %898 = vmatpush1.bf16.msra.mxu0 0
      %899 = vmatprep.subr.bf16.mxu0 0
      %900 = vmatpush1.bf16.msra.mxu0 0
      %901 = vmatprep.subr.bf16.mxu0 0
      %902 = vmatpush1.bf16.msra.mxu0 0
      %903 = vmatprep.subr.bf16.mxu0 0
      %904 = vmatpush1.bf16.msra.mxu0 0
      %905 = vmatprep.mubr.bf16.mxu0 0
      %906 = vmatmul.mubr.bf16.gmra.mrb[0].mxu0 %v821
      %v907 = vpop.f32.mrb[0].mxu0
      %v908 = vadd.f32 0.0, %v907
      %v909 = vpop.f32.mrb[0].mxu0
      %v910 = vpop.f32.mrb[0].mxu0
      %v911 = vpop.f32.mrb[0].mxu0
      %912 = vdwg.mxu0
      %v913 = vadd.f32 %v803, %v867
      %v914 = vadd.f32 %v804, %v869
      %v915 = vadd.f32 %v805, %v908
      %s916 = scalar_lea.vmem %s4, 10
      %v917 = vld [vmem:[%s916] sm:$0x3]
      %918 = vrot.lane.b32.xlu0 %v363, 27
      %v919 = vpop.permute.xlu0 %918
      %920 = vrot.lane.b32.xlu0 %v364, 27
      %v921 = vpop.permute.xlu0 %920
      %922 = vrot.lane.b32.xlu0 %v365, 27
      %v923 = vpop.permute.xlu0 %922
      %924 = vrot.lane.b32.xlu0 %v366, 27
      %v925 = vpop.permute.xlu0 %924
      %vm926 = vcmask 220160
      %v927 = vsel %vm926, %v919, %v921
      %v928 = vsel %vm926, %v921, %v923
      %v929 = vsel %vm926, %v923, %v925
      %v931 = vsel %vm386, %v917, 0
      %v934 = vsel %vm390, %v927, 0
      %v937 = vsel %vm390, %v928, 0
      %v940 = vsel %vm390, %v929, 0
      %942 = vmatprep.subr.bf16.mxu0 %v937
      %943 = vmatpush1.bf16.msra.mxu0 %v934
      %944 = vmatprep.subr.bf16.mxu0 0
      %945 = vmatpush1.bf16.msra.mxu0 0
      %946 = vmatprep.subr.bf16.mxu0 0
      %947 = vmatpush1.bf16.msra.mxu0 0
      %948 = vmatprep.subr.bf16.mxu0 0
      %949 = vmatpush1.bf16.msra.mxu0 0
      %950 = vmatprep.subr.bf16.mxu0 0
      %951 = vmatpush1.bf16.msra.mxu0 0
      %952 = vmatprep.subr.bf16.mxu0 0
      %953 = vmatpush1.bf16.msra.mxu0 0
      %954 = vmatprep.subr.bf16.mxu0 0
      %955 = vmatpush1.bf16.msra.mxu0 0
      %956 = vmatprep.subr.bf16.mxu0 0
      %957 = vmatpush1.bf16.msra.mxu0 0
      %958 = vmatprep.subr.bf16.mxu0 0
      %959 = vmatpush1.bf16.msra.mxu0 0
      %960 = vmatprep.subr.bf16.mxu0 0
      %961 = vmatpush1.bf16.msra.mxu0 0
      %962 = vmatprep.subr.bf16.mxu0 0
      %963 = vmatpush1.bf16.msra.mxu0 0
      %964 = vmatprep.subr.bf16.mxu0 0
      %965 = vmatpush1.bf16.msra.mxu0 0
      %966 = vmatprep.subr.bf16.mxu0 0
      %967 = vmatpush1.bf16.msra.mxu0 0
      %968 = vmatprep.subr.bf16.mxu0 0
      %969 = vmatpush1.bf16.msra.mxu0 0
      %970 = vmatprep.subr.bf16.mxu0 0
      %971 = vmatpush1.bf16.msra.mxu0 0
      %972 = vmatprep.subr.bf16.mxu0 0
      %973 = vmatpush1.bf16.msra.mxu0 0
      %974 = vmatprep.mubr.bf16.mxu0 0
      %975 = vmatmul.mubr.bf16.gmra.mrb[0].mxu0 %v931
      %v976 = vpop.f32.mrb[0].mxu0
      %v977 = vadd.f32 0.0, %v976
      %v978 = vpop.f32.mrb[0].mxu0
      %v979 = vadd.f32 0.0, %v978
      %v980 = vpop.f32.mrb[0].mxu0
      %v981 = vpop.f32.mrb[0].mxu0
      %982 = vdwg.mxu0
      %983 = vmatprep.subr.bf16.mxu0 0
      %984 = vmatpush1.bf16.msra.mxu0 %v940
      %985 = vmatprep.subr.bf16.mxu0 0
      %986 = vmatpush1.bf16.msra.mxu0 0
      %987 = vmatprep.subr.bf16.mxu0 0
      %988 = vmatpush1.bf16.msra.mxu0 0
      %989 = vmatprep.subr.bf16.mxu0 0
      %990 = vmatpush1.bf16.msra.mxu0 0
      %991 = vmatprep.subr.bf16.mxu0 0
      %992 = vmatpush1.bf16.msra.mxu0 0
      %993 = vmatprep.subr.bf16.mxu0 0
      %994 = vmatpush1.bf16.msra.mxu0 0
      %995 = vmatprep.subr.bf16.mxu0 0
      %996 = vmatpush1.bf16.msra.mxu0 0
      %997 = vmatprep.subr.bf16.mxu0 0
      %998 = vmatpush1.bf16.msra.mxu0 0
      %999 = vmatprep.subr.bf16.mxu0 0
      %1000 = vmatpush1.bf16.msra.mxu0 0
      %1001 = vmatprep.subr.bf16.mxu0 0
      %1002 = vmatpush1.bf16.msra.mxu0 0
      %1003 = vmatprep.subr.bf16.mxu0 0
      %1004 = vmatpush1.bf16.msra.mxu0 0
      %1005 = vmatprep.subr.bf16.mxu0 0
      %1006 = vmatpush1.bf16.msra.mxu0 0
      %1007 = vmatprep.subr.bf16.mxu0 0
      %1008 = vmatpush1.bf16.msra.mxu0 0
      %1009 = vmatprep.subr.bf16.mxu0 0
      %1010 = vmatpush1.bf16.msra.mxu0 0
      %1011 = vmatprep.subr.bf16.mxu0 0
      %1012 = vmatpush1.bf16.msra.mxu0 0
      %1013 = vmatprep.subr.bf16.mxu0 0
      %1014 = vmatpush1.bf16.msra.mxu0 0
      %1015 = vmatprep.mubr.bf16.mxu0 0
      %1016 = vmatmul.mubr.bf16.gmra.mrb[0].mxu0 %v931
      %v1017 = vpop.f32.mrb[0].mxu0
      %v1018 = vadd.f32 0.0, %v1017
      %v1019 = vpop.f32.mrb[0].mxu0
      %v1020 = vpop.f32.mrb[0].mxu0
      %v1021 = vpop.f32.mrb[0].mxu0
      %1022 = vdwg.mxu0
      %v1023 = vadd.f32 %v913, %v977
      %v1024 = vadd.f32 %v914, %v979
      %v1025 = vadd.f32 %v915, %v1018
      %s1026 = scalar_lea.vmem %s4, 12
      %v1027 = vld [vmem:[%s1026] sm:$0x3]
      %1028 = vrot.lane.b32.xlu0 %v363, 5
      %v1029 = vpop.permute.xlu0 %1028
      %1030 = vrot.lane.b32.xlu0 %v364, 5
      %v1031 = vpop.permute.xlu0 %1030
      %1032 = vrot.lane.b32.xlu0 %v365, 5
      %v1033 = vpop.permute.xlu0 %1032
      %1034 = vrot.lane.b32.xlu0 %v366, 5
      %v1035 = vpop.permute.xlu0 %1034
      %vm1036 = vcmask 39936
      %v1037 = vsel %vm1036, %v1029, %v1031
      %v1038 = vsel %vm1036, %v1031, %v1033
      %v1039 = vsel %vm1036, %v1033, %v1035
      %v1041 = vsel %vm386, %v1027, 0
      %v1044 = vsel %vm390, %v1037, 0
      %v1047 = vsel %vm390, %v1038, 0
      %v1050 = vsel %vm390, %v1039, 0
      %1052 = vmatprep.subr.bf16.mxu0 %v1047
      %1053 = vmatpush1.bf16.msra.mxu0 %v1044
      %1054 = vmatprep.subr.bf16.mxu0 0
      %1055 = vmatpush1.bf16.msra.mxu0 0
      %1056 = vmatprep.subr.bf16.mxu0 0
      %1057 = vmatpush1.bf16.msra.mxu0 0
      %1058 = vmatprep.subr.bf16.mxu0 0
      %1059 = vmatpush1.bf16.msra.mxu0 0
      %1060 = vmatprep.subr.bf16.mxu0 0
      %1061 = vmatpush1.bf16.msra.mxu0 0
      %1062 = vmatprep.subr.bf16.mxu0 0
      %1063 = vmatpush1.bf16.msra.mxu0 0
      %1064 = vmatprep.subr.bf16.mxu0 0
      %1065 = vmatpush1.bf16.msra.mxu0 0
      %1066 = vmatprep.subr.bf16.mxu0 0
      %1067 = vmatpush1.bf16.msra.mxu0 0
      %1068 = vmatprep.subr.bf16.mxu0 0
      %1069 = vmatpush1.bf16.msra.mxu0 0
      %1070 = vmatprep.subr.bf16.mxu0 0
      %1071 = vmatpush1.bf16.msra.mxu0 0
      %1072 = vmatprep.subr.bf16.mxu0 0
      %1073 = vmatpush1.bf16.msra.mxu0 0
      %1074 = vmatprep.subr.bf16.mxu0 0
      %1075 = vmatpush1.bf16.msra.mxu0 0
      %1076 = vmatprep.subr.bf16.mxu0 0
      %1077 = vmatpush1.bf16.msra.mxu0 0
      %1078 = vmatprep.subr.bf16.mxu0 0
      %1079 = vmatpush1.bf16.msra.mxu0 0
      %1080 = vmatprep.subr.bf16.mxu0 0
      %1081 = vmatpush1.bf16.msra.mxu0 0
      %1082 = vmatprep.subr.bf16.mxu0 0
      %1083 = vmatpush1.bf16.msra.mxu0 0
      %1084 = vmatprep.mubr.bf16.mxu0 0
      %1085 = vmatmul.mubr.bf16.gmra.mrb[0].mxu0 %v1041
      %v1086 = vpop.f32.mrb[0].mxu0
      %v1087 = vadd.f32 0.0, %v1086
      %v1088 = vpop.f32.mrb[0].mxu0
      %v1089 = vadd.f32 0.0, %v1088
      %v1090 = vpop.f32.mrb[0].mxu0
      %v1091 = vpop.f32.mrb[0].mxu0
      %1092 = vdwg.mxu0
      %1093 = vmatprep.subr.bf16.mxu0 0
      %1094 = vmatpush1.bf16.msra.mxu0 %v1050
      %1095 = vmatprep.subr.bf16.mxu0 0
      %1096 = vmatpush1.bf16.msra.mxu0 0
      %1097 = vmatprep.subr.bf16.mxu0 0
      %1098 = vmatpush1.bf16.msra.mxu0 0
      %1099 = vmatprep.subr.bf16.mxu0 0
      %1100 = vmatpush1.bf16.msra.mxu0 0
      %1101 = vmatprep.subr.bf16.mxu0 0
      %1102 = vmatpush1.bf16.msra.mxu0 0
      %1103 = vmatprep.subr.bf16.mxu0 0
      %1104 = vmatpush1.bf16.msra.mxu0 0
      %1105 = vmatprep.subr.bf16.mxu0 0
      %1106 = vmatpush1.bf16.msra.mxu0 0
      %1107 = vmatprep.subr.bf16.mxu0 0
      %1108 = vmatpush1.bf16.msra.mxu0 0
      %1109 = vmatprep.subr.bf16.mxu0 0
      %1110 = vmatpush1.bf16.msra.mxu0 0
      %1111 = vmatprep.subr.bf16.mxu0 0
      %1112 = vmatpush1.bf16.msra.mxu0 0
      %1113 = vmatprep.subr.bf16.mxu0 0
      %1114 = vmatpush1.bf16.msra.mxu0 0
      %1115 = vmatprep.subr.bf16.mxu0 0
      %1116 = vmatpush1.bf16.msra.mxu0 0
      %1117 = vmatprep.subr.bf16.mxu0 0
      %1118 = vmatpush1.bf16.msra.mxu0 0
      %1119 = vmatprep.subr.bf16.mxu0 0
      %1120 = vmatpush1.bf16.msra.mxu0 0
      %1121 = vmatprep.subr.bf16.mxu0 0
      %1122 = vmatpush1.bf16.msra.mxu0 0
      %1123 = vmatprep.subr.bf16.mxu0 0
      %1124 = vmatpush1.bf16.msra.mxu0 0
      %1125 = vmatprep.mubr.bf16.mxu0 0
      %1126 = vmatmul.mubr.bf16.gmra.mrb[0].mxu0 %v1041
      %v1127 = vpop.f32.mrb[0].mxu0
      %v1128 = vadd.f32 0.0, %v1127
      %v1129 = vpop.f32.mrb[0].mxu0
      %v1130 = vpop.f32.mrb[0].mxu0
      %v1131 = vpop.f32.mrb[0].mxu0
      %1132 = vdwg.mxu0
      %v1133 = vadd.f32 %v1023, %v1087
      %v1134 = vadd.f32 %v1024, %v1089
      %v1135 = vadd.f32 %v1025, %v1128
      %s1136 = scalar_lea.vmem %s4, 14
      %v1137 = vld [vmem:[%s1136] sm:$0x3]
      %1138 = vrot.lane.b32.xlu0 %v363, 4
      %v1139 = vpop.permute.xlu0 %1138
      %1140 = vrot.lane.b32.xlu0 %v364, 4
      %v1141 = vpop.permute.xlu0 %1140
      %1142 = vrot.lane.b32.xlu0 %v365, 4
      %v1143 = vpop.permute.xlu0 %1142
      %1144 = vrot.lane.b32.xlu0 %v366, 4
      %v1145 = vpop.permute.xlu0 %1144
      %vm1146 = vcmask 31744
      %v1147 = vsel %vm1146, %v1139, %v1141
      %v1148 = vsel %vm1146, %v1141, %v1143
      %v1149 = vsel %vm1146, %v1143, %v1145
      %v1151 = vsel %vm386, %v1137, 0
      %v1154 = vsel %vm390, %v1147, 0
      %v1157 = vsel %vm390, %v1148, 0
      %v1160 = vsel %vm390, %v1149, 0
      %1162 = vmatprep.subr.bf16.mxu0 %v1157
      %1163 = vmatpush1.bf16.msra.mxu0 %v1154
      %1164 = vmatprep.subr.bf16.mxu0 0
      %1165 = vmatpush1.bf16.msra.mxu0 0
      %1166 = vmatprep.subr.bf16.mxu0 0
      %1167 = vmatpush1.bf16.msra.mxu0 0
      %1168 = vmatprep.subr.bf16.mxu0 0
      %1169 = vmatpush1.bf16.msra.mxu0 0
      %1170 = vmatprep.subr.bf16.mxu0 0
      %1171 = vmatpush1.bf16.msra.mxu0 0
      %1172 = vmatprep.subr.bf16.mxu0 0
      %1173 = vmatpush1.bf16.msra.mxu0 0
      %1174 = vmatprep.subr.bf16.mxu0 0
      %1175 = vmatpush1.bf16.msra.mxu0 0
      %1176 = vmatprep.subr.bf16.mxu0 0
      %1177 = vmatpush1.bf16.msra.mxu0 0
      %1178 = vmatprep.subr.bf16.mxu0 0
      %1179 = vmatpush1.bf16.msra.mxu0 0
      %1180 = vmatprep.subr.bf16.mxu0 0
      %1181 = vmatpush1.bf16.msra.mxu0 0
      %1182 = vmatprep.subr.bf16.mxu0 0
      %1183 = vmatpush1.bf16.msra.mxu0 0
      %1184 = vmatprep.subr.bf16.mxu0 0
      %1185 = vmatpush1.bf16.msra.mxu0 0
      %1186 = vmatprep.subr.bf16.mxu0 0
      %1187 = vmatpush1.bf16.msra.mxu0 0
      %1188 = vmatprep.subr.bf16.mxu0 0
      %1189 = vmatpush1.bf16.msra.mxu0 0
      %1190 = vmatprep.subr.bf16.mxu0 0
      %1191 = vmatpush1.bf16.msra.mxu0 0
      %1192 = vmatprep.subr.bf16.mxu0 0
      %1193 = vmatpush1.bf16.msra.mxu0 0
      %1194 = vmatprep.mubr.bf16.mxu0 0
      %1195 = vmatmul.mubr.bf16.gmra.mrb[0].mxu0 %v1151
      %v1196 = vpop.f32.mrb[0].mxu0
      %v1197 = vadd.f32 0.0, %v1196
      %v1198 = vpop.f32.mrb[0].mxu0
      %v1199 = vadd.f32 0.0, %v1198
      %v1200 = vpop.f32.mrb[0].mxu0
      %v1201 = vpop.f32.mrb[0].mxu0
      %1202 = vdwg.mxu0
      %1203 = vmatprep.subr.bf16.mxu0 0
      %1204 = vmatpush1.bf16.msra.mxu0 %v1160
      %1205 = vmatprep.subr.bf16.mxu0 0
      %1206 = vmatpush1.bf16.msra.mxu0 0
      %1207 = vmatprep.subr.bf16.mxu0 0
      %1208 = vmatpush1.bf16.msra.mxu0 0
      %1209 = vmatprep.subr.bf16.mxu0 0
      %1210 = vmatpush1.bf16.msra.mxu0 0
      %1211 = vmatprep.subr.bf16.mxu0 0
      %1212 = vmatpush1.bf16.msra.mxu0 0
      %1213 = vmatprep.subr.bf16.mxu0 0
      %1214 = vmatpush1.bf16.msra.mxu0 0
      %1215 = vmatprep.subr.bf16.mxu0 0
      %1216 = vmatpush1.bf16.msra.mxu0 0
      %1217 = vmatprep.subr.bf16.mxu0 0
      %1218 = vmatpush1.bf16.msra.mxu0 0
      %1219 = vmatprep.subr.bf16.mxu0 0
      %1220 = vmatpush1.bf16.msra.mxu0 0
      %1221 = vmatprep.subr.bf16.mxu0 0
      %1222 = vmatpush1.bf16.msra.mxu0 0
      %1223 = vmatprep.subr.bf16.mxu0 0
      %1224 = vmatpush1.bf16.msra.mxu0 0
      %1225 = vmatprep.subr.bf16.mxu0 0
      %1226 = vmatpush1.bf16.msra.mxu0 0
      %1227 = vmatprep.subr.bf16.mxu0 0
      %1228 = vmatpush1.bf16.msra.mxu0 0
      %1229 = vmatprep.subr.bf16.mxu0 0
      %1230 = vmatpush1.bf16.msra.mxu0 0
      %1231 = vmatprep.subr.bf16.mxu0 0
      %1232 = vmatpush1.bf16.msra.mxu0 0
      %1233 = vmatprep.subr.bf16.mxu0 0
      %1234 = vmatpush1.bf16.msra.mxu0 0
      %1235 = vmatprep.mubr.bf16.mxu0 0
      %1236 = vmatmul.mubr.bf16.gmra.mrb[0].mxu0 %v1151
      %v1237 = vpop.f32.mrb[0].mxu0
      %v1238 = vadd.f32 0.0, %v1237
      %v1239 = vpop.f32.mrb[0].mxu0
      %v1240 = vpop.f32.mrb[0].mxu0
      %v1241 = vpop.f32.mrb[0].mxu0
      %1242 = vdwg.mxu0
      %v1243 = vadd.f32 %v1133, %v1197
      %v1244 = vadd.f32 %v1134, %v1199
      %v1245 = vadd.f32 %v1135, %v1238
      %s1246 = scalar_lea.vmem %s4, 16
      %v1247 = vld [vmem:[%s1246] sm:$0x3]
      %1248 = vrot.lane.b32.xlu0 %v363, 3
      %v1249 = vpop.permute.xlu0 %1248
      %1250 = vrot.lane.b32.xlu0 %v364, 3
      %v1251 = vpop.permute.xlu0 %1250
      %1252 = vrot.lane.b32.xlu0 %v365, 3
      %v1253 = vpop.permute.xlu0 %1252
      %1254 = vrot.lane.b32.xlu0 %v366, 3
      %v1255 = vpop.permute.xlu0 %1254
      %vm1256 = vcmask 23552
      %v1257 = vsel %vm1256, %v1249, %v1251
      %v1258 = vsel %vm1256, %v1251, %v1253
      %v1259 = vsel %vm1256, %v1253, %v1255
      %v1261 = vsel %vm386, %v1247, 0
      %v1264 = vsel %vm390, %v1257, 0
      %v1267 = vsel %vm390, %v1258, 0
      %v1270 = vsel %vm390, %v1259, 0
      %1272 = vmatprep.subr.bf16.mxu0 %v1267
      %1273 = vmatpush1.bf16.msra.mxu0 %v1264
      %1274 = vmatprep.subr.bf16.mxu0 0
      %1275 = vmatpush1.bf16.msra.mxu0 0
      %1276 = vmatprep.subr.bf16.mxu0 0
      %1277 = vmatpush1.bf16.msra.mxu0 0
      %1278 = vmatprep.subr.bf16.mxu0 0
      %1279 = vmatpush1.bf16.msra.mxu0 0
      %1280 = vmatprep.subr.bf16.mxu0 0
      %1281 = vmatpush1.bf16.msra.mxu0 0
      %1282 = vmatprep.subr.bf16.mxu0 0
      %1283 = vmatpush1.bf16.msra.mxu0 0
      %1284 = vmatprep.subr.bf16.mxu0 0
      %1285 = vmatpush1.bf16.msra.mxu0 0
      %1286 = vmatprep.subr.bf16.mxu0 0
      %1287 = vmatpush1.bf16.msra.mxu0 0
      %1288 = vmatprep.subr.bf16.mxu0 0
      %1289 = vmatpush1.bf16.msra.mxu0 0
      %1290 = vmatprep.subr.bf16.mxu0 0
      %1291 = vmatpush1.bf16.msra.mxu0 0
      %1292 = vmatprep.subr.bf16.mxu0 0
      %1293 = vmatpush1.bf16.msra.mxu0 0
      %1294 = vmatprep.subr.bf16.mxu0 0
      %1295 = vmatpush1.bf16.msra.mxu0 0
      %1296 = vmatprep.subr.bf16.mxu0 0
      %1297 = vmatpush1.bf16.msra.mxu0 0
      %1298 = vmatprep.subr.bf16.mxu0 0
      %1299 = vmatpush1.bf16.msra.mxu0 0
      %1300 = vmatprep.subr.bf16.mxu0 0
      %1301 = vmatpush1.bf16.msra.mxu0 0
      %1302 = vmatprep.subr.bf16.mxu0 0
      %1303 = vmatpush1.bf16.msra.mxu0 0
      %1304 = vmatprep.mubr.bf16.mxu0 0
      %1305 = vmatmul.mubr.bf16.gmra.mrb[0].mxu0 %v1261
      %v1306 = vpop.f32.mrb[0].mxu0
      %v1307 = vadd.f32 0.0, %v1306
      %v1308 = vpop.f32.mrb[0].mxu0
      %v1309 = vadd.f32 0.0, %v1308
      %v1310 = vpop.f32.mrb[0].mxu0
      %v1311 = vpop.f32.mrb[0].mxu0
      %1312 = vdwg.mxu0
      %1313 = vmatprep.subr.bf16.mxu0 0
      %1314 = vmatpush1.bf16.msra.mxu0 %v1270
      %1315 = vmatprep.subr.bf16.mxu0 0
      %1316 = vmatpush1.bf16.msra.mxu0 0
      %1317 = vmatprep.subr.bf16.mxu0 0
      %1318 = vmatpush1.bf16.msra.mxu0 0
      %1319 = vmatprep.subr.bf16.mxu0 0
      %1320 = vmatpush1.bf16.msra.mxu0 0
      %1321 = vmatprep.subr.bf16.mxu0 0
      %1322 = vmatpush1.bf16.msra.mxu0 0
      %1323 = vmatprep.subr.bf16.mxu0 0
      %1324 = vmatpush1.bf16.msra.mxu0 0
      %1325 = vmatprep.subr.bf16.mxu0 0
      %1326 = vmatpush1.bf16.msra.mxu0 0
      %1327 = vmatprep.subr.bf16.mxu0 0
      %1328 = vmatpush1.bf16.msra.mxu0 0
      %1329 = vmatprep.subr.bf16.mxu0 0
      %1330 = vmatpush1.bf16.msra.mxu0 0
      %1331 = vmatprep.subr.bf16.mxu0 0
      %1332 = vmatpush1.bf16.msra.mxu0 0
      %1333 = vmatprep.subr.bf16.mxu0 0
      %1334 = vmatpush1.bf16.msra.mxu0 0
      %1335 = vmatprep.subr.bf16.mxu0 0
      %1336 = vmatpush1.bf16.msra.mxu0 0
      %1337 = vmatprep.subr.bf16.mxu0 0
      %1338 = vmatpush1.bf16.msra.mxu0 0
      %1339 = vmatprep.subr.bf16.mxu0 0
      %1340 = vmatpush1.bf16.msra.mxu0 0
      %1341 = vmatprep.subr.bf16.mxu0 0
      %1342 = vmatpush1.bf16.msra.mxu0 0
      %1343 = vmatprep.subr.bf16.mxu0 0
      %1344 = vmatpush1.bf16.msra.mxu0 0
      %1345 = vmatprep.mubr.bf16.mxu0 0
      %1346 = vmatmul.mubr.bf16.gmra.mrb[0].mxu0 %v1261
      %v1347 = vpop.f32.mrb[0].mxu0
      %v1348 = vadd.f32 0.0, %v1347
      %v1349 = vpop.f32.mrb[0].mxu0
      %v1350 = vpop.f32.mrb[0].mxu0
      %v1351 = vpop.f32.mrb[0].mxu0
      %1352 = vdwg.mxu0
      %v1353 = vadd.f32 %v1243, %v1307
      %v1354 = vadd.f32 %v1244, %v1309
      %v1355 = vadd.f32 %v1245, %v1348
      %s1356 = scalar_lea.vmem %s2, 4
      %v1357 = vld [vmem:[%s1356] sm:$0xf]
      %1359 = vset.pattern.permute.xlu0 0
      %1360 = vperm.xlu0 %1359, %v1357
      %v1361 = vpop.permute.xlu0 %1360
      %v1363 = vunpack.c.l.s4 839922192
      %v1364 = vunpack.c.0.s8 %v1363
      %v1365 = vlaneseq
      %v1366 = vshrl.u32 %v1365, 7
      %v1367 = vsub.s32 %v1364, %v1366
      %v1368 = vrot.slane %v1361, %v1367
      %v1370 = vmul.f32 %v293, %v1368
      %v1371 = vmul.f32 %v294, %v1368
      %v1372 = vmul.f32 %v295, %v1368
      %s1373 = scalar_lea.vmem %s3, 4
      %v1374 = vld [vmem:[%s1373] sm:$0xf]
      %1376 = vset.pattern.permute.xlu0 0
      %1377 = vperm.xlu0 %1376, %v1374
      %v1378 = vpop.permute.xlu0 %1377
      %v1380 = vunpack.c.l.s4 839922192
      %v1381 = vunpack.c.0.s8 %v1380
      %v1382 = vlaneseq
      %v1383 = vshrl.u32 %v1382, 7
      %v1384 = vsub.s32 %v1381, %v1383
      %v1385 = vrot.slane %v1378, %v1384
      %v1387 = vadd.f32 %v1370, %v1385
      %v1388 = vadd.f32 %v1371, %v1385
      %v1389 = vadd.f32 %v1372, %v1385
      %v1390 = vmax.f32 %v1387, 0.0
      %v1391 = vmax.f32 %v1388, 0.0
      %v1392 = vmax.f32 %v1389, 0.0
      %v1393 = vmul.f32 %v1390, %v351
      %v1394 = vmul.f32 %v1391, %v352
      %v1395 = vmul.f32 %v1392, %v349
      %v1398 = vcombine.high %v1393, %v1393
      %v1399 = vcombine.high %v1394, %v1394
      %v1402 = vpack.c.bf16 %v1393, %v1393
      %v1403 = vpack.c.bf16 %v1398, %v1398
      %v1404 = vpack.c.bf16 %v1394, %v1394
      %v1405 = vpack.c.bf16 %v1399, %v1399
      %v1406 = vpack.c.bf16 %v1395, %v1395
      %s1407 = scalar_lea.vmem %s4, 18
      %v1408 = vld [vmem:[%s1407] sm:$0x3]
      %1413 = vrot.lane.b32.xlu0 %v1402, 78
      %v1414 = vpop.permute.xlu0 %1413
      %1415 = vrot.lane.b32.xlu0 %v1403, 78
      %v1416 = vpop.permute.xlu0 %1415
      %1417 = vrot.lane.b32.xlu0 %v1404, 78
      %v1418 = vpop.permute.xlu0 %1417
      %1419 = vrot.lane.b32.xlu0 %v1405, 78
      %v1420 = vpop.permute.xlu0 %1419
      %vm1421 = vcmask 637952
      %v1422 = vsel %vm1421, %v1414, %v1416
      %v1423 = vsel %vm1421, %v1416, %v1418
      %v1424 = vsel %vm1421, %v1418, %v1420
      %v1426 = vsel %vm386, %v1408, 0
      %v1429 = vsel %vm390, %v1422, 0
      %v1432 = vsel %vm390, %v1423, 0
      %v1435 = vsel %vm390, %v1424, 0
      %1437 = vmatprep.subr.bf16.mxu0 %v1432
      %1438 = vmatpush1.bf16.msra.mxu0 %v1429
      %1439 = vmatprep.subr.bf16.mxu0 0
      %1440 = vmatpush1.bf16.msra.mxu0 0
      %1441 = vmatprep.subr.bf16.mxu0 0
      %1442 = vmatpush1.bf16.msra.mxu0 0
      %1443 = vmatprep.subr.bf16.mxu0 0
      %1444 = vmatpush1.bf16.msra.mxu0 0
      %1445 = vmatprep.subr.bf16.mxu0 0
      %1446 = vmatpush1.bf16.msra.mxu0 0
      %1447 = vmatprep.subr.bf16.mxu0 0
      %1448 = vmatpush1.bf16.msra.mxu0 0
      %1449 = vmatprep.subr.bf16.mxu0 0
      %1450 = vmatpush1.bf16.msra.mxu0 0
      %1451 = vmatprep.subr.bf16.mxu0 0
      %1452 = vmatpush1.bf16.msra.mxu0 0
      %1453 = vmatprep.subr.bf16.mxu0 0
      %1454 = vmatpush1.bf16.msra.mxu0 0
      %1455 = vmatprep.subr.bf16.mxu0 0
      %1456 = vmatpush1.bf16.msra.mxu0 0
      %1457 = vmatprep.subr.bf16.mxu0 0
      %1458 = vmatpush1.bf16.msra.mxu0 0
      %1459 = vmatprep.subr.bf16.mxu0 0
      %1460 = vmatpush1.bf16.msra.mxu0 0
      %1461 = vmatprep.subr.bf16.mxu0 0
      %1462 = vmatpush1.bf16.msra.mxu0 0
      %1463 = vmatprep.subr.bf16.mxu0 0
      %1464 = vmatpush1.bf16.msra.mxu0 0
      %1465 = vmatprep.subr.bf16.mxu0 0
      %1466 = vmatpush1.bf16.msra.mxu0 0
      %1467 = vmatprep.subr.bf16.mxu0 0
      %1468 = vmatpush1.bf16.msra.mxu0 0
      %1469 = vmatprep.mubr.bf16.mxu0 0
      %1470 = vmatmul.mubr.bf16.gmra.mrb[0].mxu0 %v1426
      %v1471 = vpop.f32.mrb[0].mxu0
      %v1472 = vadd.f32 0.0, %v1471
      %v1473 = vpop.f32.mrb[0].mxu0
      %v1474 = vadd.f32 0.0, %v1473
      %v1475 = vpop.f32.mrb[0].mxu0
      %v1476 = vpop.f32.mrb[0].mxu0
      %1477 = vdwg.mxu0
      %1478 = vmatprep.subr.bf16.mxu0 0
      %1479 = vmatpush1.bf16.msra.mxu0 %v1435
      %1480 = vmatprep.subr.bf16.mxu0 0
      %1481 = vmatpush1.bf16.msra.mxu0 0
      %1482 = vmatprep.subr.bf16.mxu0 0
      %1483 = vmatpush1.bf16.msra.mxu0 0
      %1484 = vmatprep.subr.bf16.mxu0 0
      %1485 = vmatpush1.bf16.msra.mxu0 0
      %1486 = vmatprep.subr.bf16.mxu0 0
      %1487 = vmatpush1.bf16.msra.mxu0 0
      %1488 = vmatprep.subr.bf16.mxu0 0
      %1489 = vmatpush1.bf16.msra.mxu0 0
      %1490 = vmatprep.subr.bf16.mxu0 0
      %1491 = vmatpush1.bf16.msra.mxu0 0
      %1492 = vmatprep.subr.bf16.mxu0 0
      %1493 = vmatpush1.bf16.msra.mxu0 0
      %1494 = vmatprep.subr.bf16.mxu0 0
      %1495 = vmatpush1.bf16.msra.mxu0 0
      %1496 = vmatprep.subr.bf16.mxu0 0
      %1497 = vmatpush1.bf16.msra.mxu0 0
      %1498 = vmatprep.subr.bf16.mxu0 0
      %1499 = vmatpush1.bf16.msra.mxu0 0
      %1500 = vmatprep.subr.bf16.mxu0 0
      %1501 = vmatpush1.bf16.msra.mxu0 0
      %1502 = vmatprep.subr.bf16.mxu0 0
      %1503 = vmatpush1.bf16.msra.mxu0 0
      %1504 = vmatprep.subr.bf16.mxu0 0
      %1505 = vmatpush1.bf16.msra.mxu0 0
      %1506 = vmatprep.subr.bf16.mxu0 0
      %1507 = vmatpush1.bf16.msra.mxu0 0
      %1508 = vmatprep.subr.bf16.mxu0 0
      %1509 = vmatpush1.bf16.msra.mxu0 0
      %1510 = vmatprep.mubr.bf16.mxu0 0
      %1511 = vmatmul.mubr.bf16.gmra.mrb[0].mxu0 %v1426
      %v1512 = vpop.f32.mrb[0].mxu0
      %v1513 = vadd.f32 0.0, %v1512
      %v1514 = vpop.f32.mrb[0].mxu0
      %v1515 = vpop.f32.mrb[0].mxu0
      %v1516 = vpop.f32.mrb[0].mxu0
      %1517 = vdwg.mxu0
      %v1518 = vadd.f32 %v1353, %v1472
      %v1519 = vadd.f32 %v1354, %v1474
      %v1520 = vadd.f32 %v1355, %v1513
      %s1521 = scalar_lea.vmem %s4, 20
      %v1522 = vld [vmem:[%s1521] sm:$0x3]
      %1523 = vrot.lane.b32.xlu0 %v1402, 76
      %v1524 = vpop.permute.xlu0 %1523
      %1525 = vrot.lane.b32.xlu0 %v1403, 76
      %v1526 = vpop.permute.xlu0 %1525
      %1527 = vrot.lane.b32.xlu0 %v1404, 76
      %v1528 = vpop.permute.xlu0 %1527
      %1529 = vrot.lane.b32.xlu0 %v1405, 76
      %v1530 = vpop.permute.xlu0 %1529
      %vm1531 = vcmask 621568
      %v1532 = vsel %vm1531, %v1524, %v1526
      %v1533 = vsel %vm1531, %v1526, %v1528
      %v1534 = vsel %vm1531, %v1528, %v1530
      %v1536 = vsel %vm386, %v1522, 0
      %v1539 = vsel %vm390, %v1532, 0
      %v1542 = vsel %vm390, %v1533, 0
      %v1545 = vsel %vm390, %v1534, 0
      %1547 = vmatprep.subr.bf16.mxu0 %v1542
      %1548 = vmatpush1.bf16.msra.mxu0 %v1539
      %1549 = vmatprep.subr.bf16.mxu0 0
      %1550 = vmatpush1.bf16.msra.mxu0 0
      %1551 = vmatprep.subr.bf16.mxu0 0
      %1552 = vmatpush1.bf16.msra.mxu0 0
      %1553 = vmatprep.subr.bf16.mxu0 0
      %1554 = vmatpush1.bf16.msra.mxu0 0
      %1555 = vmatprep.subr.bf16.mxu0 0
      %1556 = vmatpush1.bf16.msra.mxu0 0
      %1557 = vmatprep.subr.bf16.mxu0 0
      %1558 = vmatpush1.bf16.msra.mxu0 0
      %1559 = vmatprep.subr.bf16.mxu0 0
      %1560 = vmatpush1.bf16.msra.mxu0 0
      %1561 = vmatprep.subr.bf16.mxu0 0
      %1562 = vmatpush1.bf16.msra.mxu0 0
      %1563 = vmatprep.subr.bf16.mxu0 0
      %1564 = vmatpush1.bf16.msra.mxu0 0
      %1565 = vmatprep.subr.bf16.mxu0 0
      %1566 = vmatpush1.bf16.msra.mxu0 0
      %1567 = vmatprep.subr.bf16.mxu0 0
      %1568 = vmatpush1.bf16.msra.mxu0 0
      %1569 = vmatprep.subr.bf16.mxu0 0
      %1570 = vmatpush1.bf16.msra.mxu0 0
      %1571 = vmatprep.subr.bf16.mxu0 0
      %1572 = vmatpush1.bf16.msra.mxu0 0
      %1573 = vmatprep.subr.bf16.mxu0 0
      %1574 = vmatpush1.bf16.msra.mxu0 0
      %1575 = vmatprep.subr.bf16.mxu0 0
      %1576 = vmatpush1.bf16.msra.mxu0 0
      %1577 = vmatprep.subr.bf16.mxu0 0
      %1578 = vmatpush1.bf16.msra.mxu0 0
      %1579 = vmatprep.mubr.bf16.mxu0 0
      %1580 = vmatmul.mubr.bf16.gmra.mrb[0].mxu0 %v1536
      %v1581 = vpop.f32.mrb[0].mxu0
      %v1582 = vadd.f32 0.0, %v1581
      %v1583 = vpop.f32.mrb[0].mxu0
      %v1584 = vadd.f32 0.0, %v1583
      %v1585 = vpop.f32.mrb[0].mxu0
      %v1586 = vpop.f32.mrb[0].mxu0
      %1587 = vdwg.mxu0
      %1588 = vmatprep.subr.bf16.mxu0 0
      %1589 = vmatpush1.bf16.msra.mxu0 %v1545
      %1590 = vmatprep.subr.bf16.mxu0 0
      %1591 = vmatpush1.bf16.msra.mxu0 0
      %1592 = vmatprep.subr.bf16.mxu0 0
      %1593 = vmatpush1.bf16.msra.mxu0 0
      %1594 = vmatprep.subr.bf16.mxu0 0
      %1595 = vmatpush1.bf16.msra.mxu0 0
      %1596 = vmatprep.subr.bf16.mxu0 0
      %1597 = vmatpush1.bf16.msra.mxu0 0
      %1598 = vmatprep.subr.bf16.mxu0 0
      %1599 = vmatpush1.bf16.msra.mxu0 0
      %1600 = vmatprep.subr.bf16.mxu0 0
      %1601 = vmatpush1.bf16.msra.mxu0 0
      %1602 = vmatprep.subr.bf16.mxu0 0
      %1603 = vmatpush1.bf16.msra.mxu0 0
      %1604 = vmatprep.subr.bf16.mxu0 0
      %1605 = vmatpush1.bf16.msra.mxu0 0
      %1606 = vmatprep.subr.bf16.mxu0 0
      %1607 = vmatpush1.bf16.msra.mxu0 0
      %1608 = vmatprep.subr.bf16.mxu0 0
      %1609 = vmatpush1.bf16.msra.mxu0 0
      %1610 = vmatprep.subr.bf16.mxu0 0
      %1611 = vmatpush1.bf16.msra.mxu0 0
      %1612 = vmatprep.subr.bf16.mxu0 0
      %1613 = vmatpush1.bf16.msra.mxu0 0
      %1614 = vmatprep.subr.bf16.mxu0 0
      %1615 = vmatpush1.bf16.msra.mxu0 0
      %1616 = vmatprep.subr.bf16.mxu0 0
      %1617 = vmatpush1.bf16.msra.mxu0 0
      %1618 = vmatprep.subr.bf16.mxu0 0
      %1619 = vmatpush1.bf16.msra.mxu0 0
      %1620 = vmatprep.mubr.bf16.mxu0 0
      %1621 = vmatmul.mubr.bf16.gmra.mrb[0].mxu0 %v1536
      %v1622 = vpop.f32.mrb[0].mxu0
      %v1623 = vadd.f32 0.0, %v1622
      %v1624 = vpop.f32.mrb[0].mxu0
      %v1625 = vpop.f32.mrb[0].mxu0
      %v1626 = vpop.f32.mrb[0].mxu0
      %1627 = vdwg.mxu0
      %v1628 = vadd.f32 %v1518, %v1582
      %v1629 = vadd.f32 %v1519, %v1584
      %v1630 = vadd.f32 %v1520, %v1623
      %s1631 = scalar_lea.vmem %s4, 22
      %v1632 = vld [vmem:[%s1631] sm:$0x3]
      %1633 = vrot.lane.b32.xlu0 %v1402, 74
      %v1634 = vpop.permute.xlu0 %1633
      %1635 = vrot.lane.b32.xlu0 %v1403, 74
      %v1636 = vpop.permute.xlu0 %1635
      %1637 = vrot.lane.b32.xlu0 %v1404, 74
      %v1638 = vpop.permute.xlu0 %1637
      %1639 = vrot.lane.b32.xlu0 %v1405, 74
      %v1640 = vpop.permute.xlu0 %1639
      %vm1641 = vcmask 605184
      %v1642 = vsel %vm1641, %v1634, %v1636
      %v1643 = vsel %vm1641, %v1636, %v1638
      %v1644 = vsel %vm1641, %v1638, %v1640
      %v1646 = vsel %vm386, %v1632, 0
      %v1649 = vsel %vm390, %v1642, 0
      %v1652 = vsel %vm390, %v1643, 0
      %v1655 = vsel %vm390, %v1644, 0
      %1657 = vmatprep.subr.bf16.mxu0 %v1652
      %1658 = vmatpush1.bf16.msra.mxu0 %v1649
      %1659 = vmatprep.subr.bf16.mxu0 0
      %1660 = vmatpush1.bf16.msra.mxu0 0
      %1661 = vmatprep.subr.bf16.mxu0 0
      %1662 = vmatpush1.bf16.msra.mxu0 0
      %1663 = vmatprep.subr.bf16.mxu0 0
      %1664 = vmatpush1.bf16.msra.mxu0 0
      %1665 = vmatprep.subr.bf16.mxu0 0
      %1666 = vmatpush1.bf16.msra.mxu0 0
      %1667 = vmatprep.subr.bf16.mxu0 0
      %1668 = vmatpush1.bf16.msra.mxu0 0
      %1669 = vmatprep.subr.bf16.mxu0 0
      %1670 = vmatpush1.bf16.msra.mxu0 0
      %1671 = vmatprep.subr.bf16.mxu0 0
      %1672 = vmatpush1.bf16.msra.mxu0 0
      %1673 = vmatprep.subr.bf16.mxu0 0
      %1674 = vmatpush1.bf16.msra.mxu0 0
      %1675 = vmatprep.subr.bf16.mxu0 0
      %1676 = vmatpush1.bf16.msra.mxu0 0
      %1677 = vmatprep.subr.bf16.mxu0 0
      %1678 = vmatpush1.bf16.msra.mxu0 0
      %1679 = vmatprep.subr.bf16.mxu0 0
      %1680 = vmatpush1.bf16.msra.mxu0 0
      %1681 = vmatprep.subr.bf16.mxu0 0
      %1682 = vmatpush1.bf16.msra.mxu0 0
      %1683 = vmatprep.subr.bf16.mxu0 0
      %1684 = vmatpush1.bf16.msra.mxu0 0
      %1685 = vmatprep.subr.bf16.mxu0 0
      %1686 = vmatpush1.bf16.msra.mxu0 0
      %1687 = vmatprep.subr.bf16.mxu0 0
      %1688 = vmatpush1.bf16.msra.mxu0 0
      %1689 = vmatprep.mubr.bf16.mxu0 0
      %1690 = vmatmul.mubr.bf16.gmra.mrb[0].mxu0 %v1646
      %v1691 = vpop.f32.mrb[0].mxu0
      %v1692 = vadd.f32 0.0, %v1691
      %v1693 = vpop.f32.mrb[0].mxu0
      %v1694 = vadd.f32 0.0, %v1693
      %v1695 = vpop.f32.mrb[0].mxu0
      %v1696 = vpop.f32.mrb[0].mxu0
      %1697 = vdwg.mxu0
      %1698 = vmatprep.subr.bf16.mxu0 0
      %1699 = vmatpush1.bf16.msra.mxu0 %v1655
      %1700 = vmatprep.subr.bf16.mxu0 0
      %1701 = vmatpush1.bf16.msra.mxu0 0
      %1702 = vmatprep.subr.bf16.mxu0 0
      %1703 = vmatpush1.bf16.msra.mxu0 0
      %1704 = vmatprep.subr.bf16.mxu0 0
      %1705 = vmatpush1.bf16.msra.mxu0 0
      %1706 = vmatprep.subr.bf16.mxu0 0
      %1707 = vmatpush1.bf16.msra.mxu0 0
      %1708 = vmatprep.subr.bf16.mxu0 0
      %1709 = vmatpush1.bf16.msra.mxu0 0
      %1710 = vmatprep.subr.bf16.mxu0 0
      %1711 = vmatpush1.bf16.msra.mxu0 0
      %1712 = vmatprep.subr.bf16.mxu0 0
      %1713 = vmatpush1.bf16.msra.mxu0 0
      %1714 = vmatprep.subr.bf16.mxu0 0
      %1715 = vmatpush1.bf16.msra.mxu0 0
      %1716 = vmatprep.subr.bf16.mxu0 0
      %1717 = vmatpush1.bf16.msra.mxu0 0
      %1718 = vmatprep.subr.bf16.mxu0 0
      %1719 = vmatpush1.bf16.msra.mxu0 0
      %1720 = vmatprep.subr.bf16.mxu0 0
      %1721 = vmatpush1.bf16.msra.mxu0 0
      %1722 = vmatprep.subr.bf16.mxu0 0
      %1723 = vmatpush1.bf16.msra.mxu0 0
      %1724 = vmatprep.subr.bf16.mxu0 0
      %1725 = vmatpush1.bf16.msra.mxu0 0
      %1726 = vmatprep.subr.bf16.mxu0 0
      %1727 = vmatpush1.bf16.msra.mxu0 0
      %1728 = vmatprep.subr.bf16.mxu0 0
      %1729 = vmatpush1.bf16.msra.mxu0 0
      %1730 = vmatprep.mubr.bf16.mxu0 0
      %1731 = vmatmul.mubr.bf16.gmra.mrb[0].mxu0 %v1646
      %v1732 = vpop.f32.mrb[0].mxu0
      %v1733 = vadd.f32 0.0, %v1732
      %v1734 = vpop.f32.mrb[0].mxu0
      %v1735 = vpop.f32.mrb[0].mxu0
      %v1736 = vpop.f32.mrb[0].mxu0
      %1737 = vdwg.mxu0
      %v1738 = vadd.f32 %v1628, %v1692
      %v1739 = vadd.f32 %v1629, %v1694
      %v1740 = vadd.f32 %v1630, %v1733
      %s1741 = scalar_lea.vmem %s4, 24
      %v1742 = vld [vmem:[%s1741] sm:$0x3]
      %1743 = vrot.lane.b32.xlu0 %v1402, 30
      %v1744 = vpop.permute.xlu0 %1743
      %1745 = vrot.lane.b32.xlu0 %v1403, 30
      %v1746 = vpop.permute.xlu0 %1745
      %1747 = vrot.lane.b32.xlu0 %v1404, 30
      %v1748 = vpop.permute.xlu0 %1747
      %1749 = vrot.lane.b32.xlu0 %v1405, 30
      %v1750 = vpop.permute.xlu0 %1749
      %vm1751 = vcmask 244736
      %v1752 = vsel %vm1751, %v1744, %v1746
      %v1753 = vsel %vm1751, %v1746, %v1748
      %v1754 = vsel %vm1751, %v1748, %v1750
      %v1756 = vsel %vm386, %v1742, 0
      %v1759 = vsel %vm390, %v1752, 0
      %v1762 = vsel %vm390, %v1753, 0
      %v1765 = vsel %vm390, %v1754, 0
      %1767 = vmatprep.subr.bf16.mxu0 %v1762
      %1768 = vmatpush1.bf16.msra.mxu0 %v1759
      %1769 = vmatprep.subr.bf16.mxu0 0
      %1770 = vmatpush1.bf16.msra.mxu0 0
      %1771 = vmatprep.subr.bf16.mxu0 0
      %1772 = vmatpush1.bf16.msra.mxu0 0
      %1773 = vmatprep.subr.bf16.mxu0 0
      %1774 = vmatpush1.bf16.msra.mxu0 0
      %1775 = vmatprep.subr.bf16.mxu0 0
      %1776 = vmatpush1.bf16.msra.mxu0 0
      %1777 = vmatprep.subr.bf16.mxu0 0
      %1778 = vmatpush1.bf16.msra.mxu0 0
      %1779 = vmatprep.subr.bf16.mxu0 0
      %1780 = vmatpush1.bf16.msra.mxu0 0
      %1781 = vmatprep.subr.bf16.mxu0 0
      %1782 = vmatpush1.bf16.msra.mxu0 0
      %1783 = vmatprep.subr.bf16.mxu0 0
      %1784 = vmatpush1.bf16.msra.mxu0 0
      %1785 = vmatprep.subr.bf16.mxu0 0
      %1786 = vmatpush1.bf16.msra.mxu0 0
      %1787 = vmatprep.subr.bf16.mxu0 0
      %1788 = vmatpush1.bf16.msra.mxu0 0
      %1789 = vmatprep.subr.bf16.mxu0 0
      %1790 = vmatpush1.bf16.msra.mxu0 0
      %1791 = vmatprep.subr.bf16.mxu0 0
      %1792 = vmatpush1.bf16.msra.mxu0 0
      %1793 = vmatprep.subr.bf16.mxu0 0
      %1794 = vmatpush1.bf16.msra.mxu0 0
      %1795 = vmatprep.subr.bf16.mxu0 0
      %1796 = vmatpush1.bf16.msra.mxu0 0
      %1797 = vmatprep.subr.bf16.mxu0 0
      %1798 = vmatpush1.bf16.msra.mxu0 0
      %1799 = vmatprep.mubr.bf16.mxu0 0
      %1800 = vmatmul.mubr.bf16.gmra.mrb[0].mxu0 %v1756
      %v1801 = vpop.f32.mrb[0].mxu0
      %v1802 = vadd.f32 0.0, %v1801
      %v1803 = vpop.f32.mrb[0].mxu0
      %v1804 = vadd.f32 0.0, %v1803
      %v1805 = vpop.f32.mrb[0].mxu0
      %v1806 = vpop.f32.mrb[0].mxu0
      %1807 = vdwg.mxu0
      %1808 = vmatprep.subr.bf16.mxu0 0
      %1809 = vmatpush1.bf16.msra.mxu0 %v1765
      %1810 = vmatprep.subr.bf16.mxu0 0
      %1811 = vmatpush1.bf16.msra.mxu0 0
      %1812 = vmatprep.subr.bf16.mxu0 0
      %1813 = vmatpush1.bf16.msra.mxu0 0
      %1814 = vmatprep.subr.bf16.mxu0 0
      %1815 = vmatpush1.bf16.msra.mxu0 0
      %1816 = vmatprep.subr.bf16.mxu0 0
      %1817 = vmatpush1.bf16.msra.mxu0 0
      %1818 = vmatprep.subr.bf16.mxu0 0
      %1819 = vmatpush1.bf16.msra.mxu0 0
      %1820 = vmatprep.subr.bf16.mxu0 0
      %1821 = vmatpush1.bf16.msra.mxu0 0
      %1822 = vmatprep.subr.bf16.mxu0 0
      %1823 = vmatpush1.bf16.msra.mxu0 0
      %1824 = vmatprep.subr.bf16.mxu0 0
      %1825 = vmatpush1.bf16.msra.mxu0 0
      %1826 = vmatprep.subr.bf16.mxu0 0
      %1827 = vmatpush1.bf16.msra.mxu0 0
      %1828 = vmatprep.subr.bf16.mxu0 0
      %1829 = vmatpush1.bf16.msra.mxu0 0
      %1830 = vmatprep.subr.bf16.mxu0 0
      %1831 = vmatpush1.bf16.msra.mxu0 0
      %1832 = vmatprep.subr.bf16.mxu0 0
      %1833 = vmatpush1.bf16.msra.mxu0 0
      %1834 = vmatprep.subr.bf16.mxu0 0
      %1835 = vmatpush1.bf16.msra.mxu0 0
      %1836 = vmatprep.subr.bf16.mxu0 0
      %1837 = vmatpush1.bf16.msra.mxu0 0
      %1838 = vmatprep.subr.bf16.mxu0 0
      %1839 = vmatpush1.bf16.msra.mxu0 0
      %1840 = vmatprep.mubr.bf16.mxu0 0
      %1841 = vmatmul.mubr.bf16.gmra.mrb[0].mxu0 %v1756
      %v1842 = vpop.f32.mrb[0].mxu0
      %v1843 = vadd.f32 0.0, %v1842
      %v1844 = vpop.f32.mrb[0].mxu0
      %v1845 = vpop.f32.mrb[0].mxu0
      %v1846 = vpop.f32.mrb[0].mxu0
      %1847 = vdwg.mxu0
      %v1848 = vadd.f32 %v1738, %v1802
      %v1849 = vadd.f32 %v1739, %v1804
      %v1850 = vadd.f32 %v1740, %v1843
      %s1851 = scalar_lea.vmem %s4, 26
      %v1852 = vld [vmem:[%s1851] sm:$0x3]
      %1853 = vrot.lane.b32.xlu0 %v1402, 28
      %v1854 = vpop.permute.xlu0 %1853
      %1855 = vrot.lane.b32.xlu0 %v1403, 28
      %v1856 = vpop.permute.xlu0 %1855
      %1857 = vrot.lane.b32.xlu0 %v1404, 28
      %v1858 = vpop.permute.xlu0 %1857
      %1859 = vrot.lane.b32.xlu0 %v1405, 28
      %v1860 = vpop.permute.xlu0 %1859
      %v1861 = vsel %vm816, %v1854, %v1856
      %v1862 = vsel %vm816, %v1856, %v1858
      %v1863 = vsel %vm816, %v1858, %v1860
      %v1865 = vsel %vm386, %v1852, 0
      %v1868 = vsel %vm390, %v1861, 0
      %v1871 = vsel %vm390, %v1862, 0
      %v1874 = vsel %vm390, %v1863, 0
      %1876 = vmatprep.subr.bf16.mxu0 %v1871
      %1877 = vmatpush1.bf16.msra.mxu0 %v1868
      %1878 = vmatprep.subr.bf16.mxu0 0
      %1879 = vmatpush1.bf16.msra.mxu0 0
      %1880 = vmatprep.subr.bf16.mxu0 0
      %1881 = vmatpush1.bf16.msra.mxu0 0
      %1882 = vmatprep.subr.bf16.mxu0 0
      %1883 = vmatpush1.bf16.msra.mxu0 0
      %1884 = vmatprep.subr.bf16.mxu0 0
      %1885 = vmatpush1.bf16.msra.mxu0 0
      %1886 = vmatprep.subr.bf16.mxu0 0
      %1887 = vmatpush1.bf16.msra.mxu0 0
      %1888 = vmatprep.subr.bf16.mxu0 0
      %1889 = vmatpush1.bf16.msra.mxu0 0
      %1890 = vmatprep.subr.bf16.mxu0 0
      %1891 = vmatpush1.bf16.msra.mxu0 0
      %1892 = vmatprep.subr.bf16.mxu0 0
      %1893 = vmatpush1.bf16.msra.mxu0 0
      %1894 = vmatprep.subr.bf16.mxu0 0
      %1895 = vmatpush1.bf16.msra.mxu0 0
      %1896 = vmatprep.subr.bf16.mxu0 0
      %1897 = vmatpush1.bf16.msra.mxu0 0
      %1898 = vmatprep.subr.bf16.mxu0 0
      %1899 = vmatpush1.bf16.msra.mxu0 0
      %1900 = vmatprep.subr.bf16.mxu0 0
      %1901 = vmatpush1.bf16.msra.mxu0 0
      %1902 = vmatprep.subr.bf16.mxu0 0
      %1903 = vmatpush1.bf16.msra.mxu0 0
      %1904 = vmatprep.subr.bf16.mxu0 0
      %1905 = vmatpush1.bf16.msra.mxu0 0
      %1906 = vmatprep.subr.bf16.mxu0 0
      %1907 = vmatpush1.bf16.msra.mxu0 0
      %1908 = vmatprep.mubr.bf16.mxu0 0
      %1909 = vmatmul.mubr.bf16.gmra.mrb[0].mxu0 %v1865
      %v1910 = vpop.f32.mrb[0].mxu0
      %v1911 = vadd.f32 0.0, %v1910
      %v1912 = vpop.f32.mrb[0].mxu0
      %v1913 = vadd.f32 0.0, %v1912
      %v1914 = vpop.f32.mrb[0].mxu0
      %v1915 = vpop.f32.mrb[0].mxu0
      %1916 = vdwg.mxu0
      %1917 = vmatprep.subr.bf16.mxu0 0
      %1918 = vmatpush1.bf16.msra.mxu0 %v1874
      %1919 = vmatprep.subr.bf16.mxu0 0
      %1920 = vmatpush1.bf16.msra.mxu0 0
      %1921 = vmatprep.subr.bf16.mxu0 0
      %1922 = vmatpush1.bf16.msra.mxu0 0
      %1923 = vmatprep.subr.bf16.mxu0 0
      %1924 = vmatpush1.bf16.msra.mxu0 0
      %1925 = vmatprep.subr.bf16.mxu0 0
      %1926 = vmatpush1.bf16.msra.mxu0 0
      %1927 = vmatprep.subr.bf16.mxu0 0
      %1928 = vmatpush1.bf16.msra.mxu0 0
      %1929 = vmatprep.subr.bf16.mxu0 0
      %1930 = vmatpush1.bf16.msra.mxu0 0
      %1931 = vmatprep.subr.bf16.mxu0 0
      %1932 = vmatpush1.bf16.msra.mxu0 0
      %1933 = vmatprep.subr.bf16.mxu0 0
      %1934 = vmatpush1.bf16.msra.mxu0 0
      %1935 = vmatprep.subr.bf16.mxu0 0
      %1936 = vmatpush1.bf16.msra.mxu0 0
      %1937 = vmatprep.subr.bf16.mxu0 0
      %1938 = vmatpush1.bf16.msra.mxu0 0
      %1939 = vmatprep.subr.bf16.mxu0 0
      %1940 = vmatpush1.bf16.msra.mxu0 0
      %1941 = vmatprep.subr.bf16.mxu0 0
      %1942 = vmatpush1.bf16.msra.mxu0 0
      %1943 = vmatprep.subr.bf16.mxu0 0
      %1944 = vmatpush1.bf16.msra.mxu0 0
      %1945 = vmatprep.subr.bf16.mxu0 0
      %1946 = vmatpush1.bf16.msra.mxu0 0
      %1947 = vmatprep.subr.bf16.mxu0 0
      %1948 = vmatpush1.bf16.msra.mxu0 0
      %1949 = vmatprep.mubr.bf16.mxu0 0
      %1950 = vmatmul.mubr.bf16.gmra.mrb[0].mxu0 %v1865
      %v1951 = vpop.f32.mrb[0].mxu0
      %v1952 = vadd.f32 0.0, %v1951
      %v1953 = vpop.f32.mrb[0].mxu0
      %v1954 = vpop.f32.mrb[0].mxu0
      %v1955 = vpop.f32.mrb[0].mxu0
      %1956 = vdwg.mxu0
      %v1957 = vadd.f32 %v1848, %v1911
      %v1958 = vadd.f32 %v1849, %v1913
      %v1959 = vadd.f32 %v1850, %v1952
      %s1960 = scalar_lea.vmem %s4, 28
      %v1961 = vld [vmem:[%s1960] sm:$0x3]
      %1962 = vrot.lane.b32.xlu0 %v1402, 26
      %v1963 = vpop.permute.xlu0 %1962
      %1964 = vrot.lane.b32.xlu0 %v1403, 26
      %v1965 = vpop.permute.xlu0 %1964
      %1966 = vrot.lane.b32.xlu0 %v1404, 26
      %v1967 = vpop.permute.xlu0 %1966
      %1968 = vrot.lane.b32.xlu0 %v1405, 26
      %v1969 = vpop.permute.xlu0 %1968
      %vm1970 = vcmask 211968
      %v1971 = vsel %vm1970, %v1963, %v1965
      %v1972 = vsel %vm1970, %v1965, %v1967
      %v1973 = vsel %vm1970, %v1967, %v1969
      %v1975 = vsel %vm386, %v1961, 0
      %v1978 = vsel %vm390, %v1971, 0
      %v1981 = vsel %vm390, %v1972, 0
      %v1984 = vsel %vm390, %v1973, 0
      %1986 = vmatprep.subr.bf16.mxu0 %v1981
      %1987 = vmatpush1.bf16.msra.mxu0 %v1978
      %1988 = vmatprep.subr.bf16.mxu0 0
      %1989 = vmatpush1.bf16.msra.mxu0 0
      %1990 = vmatprep.subr.bf16.mxu0 0
      %1991 = vmatpush1.bf16.msra.mxu0 0
      %1992 = vmatprep.subr.bf16.mxu0 0
      %1993 = vmatpush1.bf16.msra.mxu0 0
      %1994 = vmatprep.subr.bf16.mxu0 0
      %1995 = vmatpush1.bf16.msra.mxu0 0
      %1996 = vmatprep.subr.bf16.mxu0 0
      %1997 = vmatpush1.bf16.msra.mxu0 0
      %1998 = vmatprep.subr.bf16.mxu0 0
      %1999 = vmatpush1.bf16.msra.mxu0 0
      %2000 = vmatprep.subr.bf16.mxu0 0
      %2001 = vmatpush1.bf16.msra.mxu0 0
      %2002 = vmatprep.subr.bf16.mxu0 0
      %2003 = vmatpush1.bf16.msra.mxu0 0
      %2004 = vmatprep.subr.bf16.mxu0 0
      %2005 = vmatpush1.bf16.msra.mxu0 0
      %2006 = vmatprep.subr.bf16.mxu0 0
      %2007 = vmatpush1.bf16.msra.mxu0 0
      %2008 = vmatprep.subr.bf16.mxu0 0
      %2009 = vmatpush1.bf16.msra.mxu0 0
      %2010 = vmatprep.subr.bf16.mxu0 0
      %2011 = vmatpush1.bf16.msra.mxu0 0
      %2012 = vmatprep.subr.bf16.mxu0 0
      %2013 = vmatpush1.bf16.msra.mxu0 0
      %2014 = vmatprep.subr.bf16.mxu0 0
      %2015 = vmatpush1.bf16.msra.mxu0 0
      %2016 = vmatprep.subr.bf16.mxu0 0
      %2017 = vmatpush1.bf16.msra.mxu0 0
      %2018 = vmatprep.mubr.bf16.mxu0 0
      %2019 = vmatmul.mubr.bf16.gmra.mrb[0].mxu0 %v1975
      %v2020 = vpop.f32.mrb[0].mxu0
      %v2021 = vadd.f32 0.0, %v2020
      %v2022 = vpop.f32.mrb[0].mxu0
      %v2023 = vadd.f32 0.0, %v2022
      %v2024 = vpop.f32.mrb[0].mxu0
      %v2025 = vpop.f32.mrb[0].mxu0
      %2026 = vdwg.mxu0
      %2027 = vmatprep.subr.bf16.mxu0 0
      %2028 = vmatpush1.bf16.msra.mxu0 %v1984
      %2029 = vmatprep.subr.bf16.mxu0 0
      %2030 = vmatpush1.bf16.msra.mxu0 0
      %2031 = vmatprep.subr.bf16.mxu0 0
      %2032 = vmatpush1.bf16.msra.mxu0 0
      %2033 = vmatprep.subr.bf16.mxu0 0
      %2034 = vmatpush1.bf16.msra.mxu0 0
      %2035 = vmatprep.subr.bf16.mxu0 0
      %2036 = vmatpush1.bf16.msra.mxu0 0
      %2037 = vmatprep.subr.bf16.mxu0 0
      %2038 = vmatpush1.bf16.msra.mxu0 0
      %2039 = vmatprep.subr.bf16.mxu0 0
      %2040 = vmatpush1.bf16.msra.mxu0 0
      %2041 = vmatprep.subr.bf16.mxu0 0
      %2042 = vmatpush1.bf16.msra.mxu0 0
      %2043 = vmatprep.subr.bf16.mxu0 0
      %2044 = vmatpush1.bf16.msra.mxu0 0
      %2045 = vmatprep.subr.bf16.mxu0 0
      %2046 = vmatpush1.bf16.msra.mxu0 0
      %2047 = vmatprep.subr.bf16.mxu0 0
      %2048 = vmatpush1.bf16.msra.mxu0 0
      %2049 = vmatprep.subr.bf16.mxu0 0
      %2050 = vmatpush1.bf16.msra.mxu0 0
      %2051 = vmatprep.subr.bf16.mxu0 0
      %2052 = vmatpush1.bf16.msra.mxu0 0
      %2053 = vmatprep.subr.bf16.mxu0 0
      %2054 = vmatpush1.bf16.msra.mxu0 0
      %2055 = vmatprep.subr.bf16.mxu0 0
      %2056 = vmatpush1.bf16.msra.mxu0 0
      %2057 = vmatprep.subr.bf16.mxu0 0
      %2058 = vmatpush1.bf16.msra.mxu0 0
      %2059 = vmatprep.mubr.bf16.mxu0 0
      %2060 = vmatmul.mubr.bf16.gmra.mrb[0].mxu0 %v1975
      %v2061 = vpop.f32.mrb[0].mxu0
      %v2062 = vadd.f32 0.0, %v2061
      %v2063 = vpop.f32.mrb[0].mxu0
      %v2064 = vpop.f32.mrb[0].mxu0
      %v2065 = vpop.f32.mrb[0].mxu0
      %2066 = vdwg.mxu0
      %v2067 = vadd.f32 %v1957, %v2021
      %v2068 = vadd.f32 %v1958, %v2023
      %v2069 = vadd.f32 %v1959, %v2062
      %s2070 = scalar_lea.vmem %s4, 30
      %v2071 = vld [vmem:[%s2070] sm:$0x3]
      %2073 = vrot.lane.b32.xlu0 %v1403, 110
      %v2074 = vpop.permute.xlu0 %2073
      %2075 = vrot.lane.b32.xlu0 %v1404, 110
      %v2076 = vpop.permute.xlu0 %2075
      %2077 = vrot.lane.b32.xlu0 %v1405, 110
      %v2078 = vpop.permute.xlu0 %2077
      %2079 = vrot.lane.b32.xlu0 %v1406, 110
      %v2080 = vpop.permute.xlu0 %2079
      %vm2081 = vcmask 900096
      %v2082 = vsel %vm2081, %v2074, %v2076
      %v2083 = vsel %vm2081, %v2076, %v2078
      %v2084 = vsel %vm2081, %v2078, %v2080
      %v2086 = vsel %vm386, %v2071, 0
      %v2089 = vsel %vm390, %v2082, 0
      %v2092 = vsel %vm390, %v2083, 0
      %v2095 = vsel %vm390, %v2084, 0
      %2097 = vmatprep.subr.bf16.mxu0 %v2092
      %2098 = vmatpush1.bf16.msra.mxu0 %v2089
      %2099 = vmatprep.subr.bf16.mxu0 0
      %2100 = vmatpush1.bf16.msra.mxu0 0
      %2101 = vmatprep.subr.bf16.mxu0 0
      %2102 = vmatpush1.bf16.msra.mxu0 0
      %2103 = vmatprep.subr.bf16.mxu0 0
      %2104 = vmatpush1.bf16.msra.mxu0 0
      %2105 = vmatprep.subr.bf16.mxu0 0
      %2106 = vmatpush1.bf16.msra.mxu0 0
      %2107 = vmatprep.subr.bf16.mxu0 0
      %2108 = vmatpush1.bf16.msra.mxu0 0
      %2109 = vmatprep.subr.bf16.mxu0 0
      %2110 = vmatpush1.bf16.msra.mxu0 0
      %2111 = vmatprep.subr.bf16.mxu0 0
      %2112 = vmatpush1.bf16.msra.mxu0 0
      %2113 = vmatprep.subr.bf16.mxu0 0
      %2114 = vmatpush1.bf16.msra.mxu0 0
      %2115 = vmatprep.subr.bf16.mxu0 0
      %2116 = vmatpush1.bf16.msra.mxu0 0
      %2117 = vmatprep.subr.bf16.mxu0 0
      %2118 = vmatpush1.bf16.msra.mxu0 0
      %2119 = vmatprep.subr.bf16.mxu0 0
      %2120 = vmatpush1.bf16.msra.mxu0 0
      %2121 = vmatprep.subr.bf16.mxu0 0
      %2122 = vmatpush1.bf16.msra.mxu0 0
      %2123 = vmatprep.subr.bf16.mxu0 0
      %2124 = vmatpush1.bf16.msra.mxu0 0
      %2125 = vmatprep.subr.bf16.mxu0 0
      %2126 = vmatpush1.bf16.msra.mxu0 0
      %2127 = vmatprep.subr.bf16.mxu0 0
      %2128 = vmatpush1.bf16.msra.mxu0 0
      %2129 = vmatprep.mubr.bf16.mxu0 0
      %2130 = vmatmul.mubr.bf16.gmra.mrb[0].mxu0 %v2086
      %v2131 = vpop.f32.mrb[0].mxu0
      %v2132 = vadd.f32 0.0, %v2131
      %v2133 = vpop.f32.mrb[0].mxu0
      %v2134 = vadd.f32 0.0, %v2133
      %v2135 = vpop.f32.mrb[0].mxu0
      %v2136 = vpop.f32.mrb[0].mxu0
      %2137 = vdwg.mxu0
      %2138 = vmatprep.subr.bf16.mxu0 0
      %2139 = vmatpush1.bf16.msra.mxu0 %v2095
      %2140 = vmatprep.subr.bf16.mxu0 0
      %2141 = vmatpush1.bf16.msra.mxu0 0
      %2142 = vmatprep.subr.bf16.mxu0 0
      %2143 = vmatpush1.bf16.msra.mxu0 0
      %2144 = vmatprep.subr.bf16.mxu0 0
      %2145 = vmatpush1.bf16.msra.mxu0 0
      %2146 = vmatprep.subr.bf16.mxu0 0
      %2147 = vmatpush1.bf16.msra.mxu0 0
      %2148 = vmatprep.subr.bf16.mxu0 0
      %2149 = vmatpush1.bf16.msra.mxu0 0
      %2150 = vmatprep.subr.bf16.mxu0 0
      %2151 = vmatpush1.bf16.msra.mxu0 0
      %2152 = vmatprep.subr.bf16.mxu0 0
      %2153 = vmatpush1.bf16.msra.mxu0 0
      %2154 = vmatprep.subr.bf16.mxu0 0
      %2155 = vmatpush1.bf16.msra.mxu0 0
      %2156 = vmatprep.subr.bf16.mxu0 0
      %2157 = vmatpush1.bf16.msra.mxu0 0
      %2158 = vmatprep.subr.bf16.mxu0 0
      %2159 = vmatpush1.bf16.msra.mxu0 0
      %2160 = vmatprep.subr.bf16.mxu0 0
      %2161 = vmatpush1.bf16.msra.mxu0 0
      %2162 = vmatprep.subr.bf16.mxu0 0
      %2163 = vmatpush1.bf16.msra.mxu0 0
      %2164 = vmatprep.subr.bf16.mxu0 0
      %2165 = vmatpush1.bf16.msra.mxu0 0
      %2166 = vmatprep.subr.bf16.mxu0 0
      %2167 = vmatpush1.bf16.msra.mxu0 0
      %2168 = vmatprep.subr.bf16.mxu0 0
      %2169 = vmatpush1.bf16.msra.mxu0 0
      %2170 = vmatprep.mubr.bf16.mxu0 0
      %2171 = vmatmul.mubr.bf16.gmra.mrb[0].mxu0 %v2086
      %v2172 = vpop.f32.mrb[0].mxu0
      %v2173 = vadd.f32 0.0, %v2172
      %v2174 = vpop.f32.mrb[0].mxu0
      %v2175 = vpop.f32.mrb[0].mxu0
      %v2176 = vpop.f32.mrb[0].mxu0
      %2177 = vdwg.mxu0
      %v2178 = vadd.f32 %v2067, %v2132
      %v2179 = vadd.f32 %v2068, %v2134
      %v2180 = vadd.f32 %v2069, %v2173
      %s2181 = scalar_lea.vmem %s4, 32
      %v2182 = vld [vmem:[%s2181] sm:$0x3]
      %2183 = vrot.lane.b32.xlu0 %v1403, 108
      %v2184 = vpop.permute.xlu0 %2183
      %2185 = vrot.lane.b32.xlu0 %v1404, 108
      %v2186 = vpop.permute.xlu0 %2185
      %2187 = vrot.lane.b32.xlu0 %v1405, 108
      %v2188 = vpop.permute.xlu0 %2187
      %2189 = vrot.lane.b32.xlu0 %v1406, 108
      %v2190 = vpop.permute.xlu0 %2189
      %vm2191 = vcmask 883712
      %v2192 = vsel %vm2191, %v2184, %v2186
      %v2193 = vsel %vm2191, %v2186, %v2188
      %v2194 = vsel %vm2191, %v2188, %v2190
      %v2196 = vsel %vm386, %v2182, 0
      %v2199 = vsel %vm390, %v2192, 0
      %v2202 = vsel %vm390, %v2193, 0
      %v2205 = vsel %vm390, %v2194, 0
      %2207 = vmatprep.subr.bf16.mxu0 %v2202
      %2208 = vmatpush1.bf16.msra.mxu0 %v2199
      %2209 = vmatprep.subr.bf16.mxu0 0
      %2210 = vmatpush1.bf16.msra.mxu0 0
      %2211 = vmatprep.subr.bf16.mxu0 0
      %2212 = vmatpush1.bf16.msra.mxu0 0
      %2213 = vmatprep.subr.bf16.mxu0 0
      %2214 = vmatpush1.bf16.msra.mxu0 0
      %2215 = vmatprep.subr.bf16.mxu0 0
      %2216 = vmatpush1.bf16.msra.mxu0 0
      %2217 = vmatprep.subr.bf16.mxu0 0
      %2218 = vmatpush1.bf16.msra.mxu0 0
      %2219 = vmatprep.subr.bf16.mxu0 0
      %2220 = vmatpush1.bf16.msra.mxu0 0
      %2221 = vmatprep.subr.bf16.mxu0 0
      %2222 = vmatpush1.bf16.msra.mxu0 0
      %2223 = vmatprep.subr.bf16.mxu0 0
      %2224 = vmatpush1.bf16.msra.mxu0 0
      %2225 = vmatprep.subr.bf16.mxu0 0
      %2226 = vmatpush1.bf16.msra.mxu0 0
      %2227 = vmatprep.subr.bf16.mxu0 0
      %2228 = vmatpush1.bf16.msra.mxu0 0
      %2229 = vmatprep.subr.bf16.mxu0 0
      %2230 = vmatpush1.bf16.msra.mxu0 0
      %2231 = vmatprep.subr.bf16.mxu0 0
      %2232 = vmatpush1.bf16.msra.mxu0 0
      %2233 = vmatprep.subr.bf16.mxu0 0
      %2234 = vmatpush1.bf16.msra.mxu0 0
      %2235 = vmatprep.subr.bf16.mxu0 0
      %2236 = vmatpush1.bf16.msra.mxu0 0
      %2237 = vmatprep.subr.bf16.mxu0 0
      %2238 = vmatpush1.bf16.msra.mxu0 0
      %2239 = vmatprep.mubr.bf16.mxu0 0
      %2240 = vmatmul.mubr.bf16.gmra.mrb[0].mxu0 %v2196
      %v2241 = vpop.f32.mrb[0].mxu0
      %v2242 = vadd.f32 0.0, %v2241
      %v2243 = vpop.f32.mrb[0].mxu0
      %v2244 = vadd.f32 0.0, %v2243
      %v2245 = vpop.f32.mrb[0].mxu0
      %v2246 = vpop.f32.mrb[0].mxu0
      %2247 = vdwg.mxu0
      %2248 = vmatprep.subr.bf16.mxu0 0
      %2249 = vmatpush1.bf16.msra.mxu0 %v2205
      %2250 = vmatprep.subr.bf16.mxu0 0
      %2251 = vmatpush1.bf16.msra.mxu0 0
      %2252 = vmatprep.subr.bf16.mxu0 0
      %2253 = vmatpush1.bf16.msra.mxu0 0
      %2254 = vmatprep.subr.bf16.mxu0 0
      %2255 = vmatpush1.bf16.msra.mxu0 0
      %2256 = vmatprep.subr.bf16.mxu0 0
      %2257 = vmatpush1.bf16.msra.mxu0 0
      %2258 = vmatprep.subr.bf16.mxu0 0
      %2259 = vmatpush1.bf16.msra.mxu0 0
      %2260 = vmatprep.subr.bf16.mxu0 0
      %2261 = vmatpush1.bf16.msra.mxu0 0
      %2262 = vmatprep.subr.bf16.mxu0 0
      %2263 = vmatpush1.bf16.msra.mxu0 0
      %2264 = vmatprep.subr.bf16.mxu0 0
      %2265 = vmatpush1.bf16.msra.mxu0 0
      %2266 = vmatprep.subr.bf16.mxu0 0
      %2267 = vmatpush1.bf16.msra.mxu0 0
      %2268 = vmatprep.subr.bf16.mxu0 0
      %2269 = vmatpush1.bf16.msra.mxu0 0
      %2270 = vmatprep.subr.bf16.mxu0 0
      %2271 = vmatpush1.bf16.msra.mxu0 0
      %2272 = vmatprep.subr.bf16.mxu0 0
      %2273 = vmatpush1.bf16.msra.mxu0 0
      %2274 = vmatprep.subr.bf16.mxu0 0
      %2275 = vmatpush1.bf16.msra.mxu0 0
      %2276 = vmatprep.subr.bf16.mxu0 0
      %2277 = vmatpush1.bf16.msra.mxu0 0
      %2278 = vmatprep.subr.bf16.mxu0 0
      %2279 = vmatpush1.bf16.msra.mxu0 0
      %2280 = vmatprep.mubr.bf16.mxu0 0
      %2281 = vmatmul.mubr.bf16.gmra.mrb[0].mxu0 %v2196
      %v2282 = vpop.f32.mrb[0].mxu0
      %v2283 = vadd.f32 0.0, %v2282
      %v2284 = vpop.f32.mrb[0].mxu0
      %v2285 = vpop.f32.mrb[0].mxu0
      %v2286 = vpop.f32.mrb[0].mxu0
      %2287 = vdwg.mxu0
      %v2288 = vadd.f32 %v2178, %v2242
      %v2289 = vadd.f32 %v2179, %v2244
      %v2290 = vadd.f32 %v2180, %v2283
      %s2291 = scalar_lea.vmem %s4, 34
      %v2292 = vld [vmem:[%s2291] sm:$0x3]
      %2293 = vrot.lane.b32.xlu0 %v1403, 106
      %v2294 = vpop.permute.xlu0 %2293
      %2295 = vrot.lane.b32.xlu0 %v1404, 106
      %v2296 = vpop.permute.xlu0 %2295
      %2297 = vrot.lane.b32.xlu0 %v1405, 106
      %v2298 = vpop.permute.xlu0 %2297
      %2299 = vrot.lane.b32.xlu0 %v1406, 106
      %v2300 = vpop.permute.xlu0 %2299
      %vm2301 = vcmask 867328
      %v2302 = vsel %vm2301, %v2294, %v2296
      %v2303 = vsel %vm2301, %v2296, %v2298
      %v2304 = vsel %vm2301, %v2298, %v2300
      %v2306 = vsel %vm386, %v2292, 0
      %v2309 = vsel %vm390, %v2302, 0
      %v2312 = vsel %vm390, %v2303, 0
      %v2315 = vsel %vm390, %v2304, 0
      %2317 = vmatprep.subr.bf16.mxu0 %v2312
      %2318 = vmatpush1.bf16.msra.mxu0 %v2309
      %2319 = vmatprep.subr.bf16.mxu0 0
      %2320 = vmatpush1.bf16.msra.mxu0 0
      %2321 = vmatprep.subr.bf16.mxu0 0
      %2322 = vmatpush1.bf16.msra.mxu0 0
      %2323 = vmatprep.subr.bf16.mxu0 0
      %2324 = vmatpush1.bf16.msra.mxu0 0
      %2325 = vmatprep.subr.bf16.mxu0 0
      %2326 = vmatpush1.bf16.msra.mxu0 0
      %2327 = vmatprep.subr.bf16.mxu0 0
      %2328 = vmatpush1.bf16.msra.mxu0 0
      %2329 = vmatprep.subr.bf16.mxu0 0
      %2330 = vmatpush1.bf16.msra.mxu0 0
      %2331 = vmatprep.subr.bf16.mxu0 0
      %2332 = vmatpush1.bf16.msra.mxu0 0
      %2333 = vmatprep.subr.bf16.mxu0 0
      %2334 = vmatpush1.bf16.msra.mxu0 0
      %2335 = vmatprep.subr.bf16.mxu0 0
      %2336 = vmatpush1.bf16.msra.mxu0 0
      %2337 = vmatprep.subr.bf16.mxu0 0
      %2338 = vmatpush1.bf16.msra.mxu0 0
      %2339 = vmatprep.subr.bf16.mxu0 0
      %2340 = vmatpush1.bf16.msra.mxu0 0
      %2341 = vmatprep.subr.bf16.mxu0 0
      %2342 = vmatpush1.bf16.msra.mxu0 0
      %2343 = vmatprep.subr.bf16.mxu0 0
      %2344 = vmatpush1.bf16.msra.mxu0 0
      %2345 = vmatprep.subr.bf16.mxu0 0
      %2346 = vmatpush1.bf16.msra.mxu0 0
      %2347 = vmatprep.subr.bf16.mxu0 0
      %2348 = vmatpush1.bf16.msra.mxu0 0
      %2349 = vmatprep.mubr.bf16.mxu0 0
      %2350 = vmatmul.mubr.bf16.gmra.mrb[0].mxu0 %v2306
      %v2351 = vpop.f32.mrb[0].mxu0
      %v2352 = vadd.f32 0.0, %v2351
      %v2353 = vpop.f32.mrb[0].mxu0
      %v2354 = vadd.f32 0.0, %v2353
      %v2355 = vpop.f32.mrb[0].mxu0
      %v2356 = vpop.f32.mrb[0].mxu0
      %2357 = vdwg.mxu0
      %2358 = vmatprep.subr.bf16.mxu0 0
      %2359 = vmatpush1.bf16.msra.mxu0 %v2315
      %2360 = vmatprep.subr.bf16.mxu0 0
      %2361 = vmatpush1.bf16.msra.mxu0 0
      %2362 = vmatprep.subr.bf16.mxu0 0
      %2363 = vmatpush1.bf16.msra.mxu0 0
      %2364 = vmatprep.subr.bf16.mxu0 0
      %2365 = vmatpush1.bf16.msra.mxu0 0
      %2366 = vmatprep.subr.bf16.mxu0 0
      %2367 = vmatpush1.bf16.msra.mxu0 0
      %2368 = vmatprep.subr.bf16.mxu0 0
      %2369 = vmatpush1.bf16.msra.mxu0 0
      %2370 = vmatprep.subr.bf16.mxu0 0
      %2371 = vmatpush1.bf16.msra.mxu0 0
      %2372 = vmatprep.subr.bf16.mxu0 0
      %2373 = vmatpush1.bf16.msra.mxu0 0
      %2374 = vmatprep.subr.bf16.mxu0 0
      %2375 = vmatpush1.bf16.msra.mxu0 0
      %2376 = vmatprep.subr.bf16.mxu0 0
      %2377 = vmatpush1.bf16.msra.mxu0 0
      %2378 = vmatprep.subr.bf16.mxu0 0
      %2379 = vmatpush1.bf16.msra.mxu0 0
      %2380 = vmatprep.subr.bf16.mxu0 0
      %2381 = vmatpush1.bf16.msra.mxu0 0
      %2382 = vmatprep.subr.bf16.mxu0 0
      %2383 = vmatpush1.bf16.msra.mxu0 0
      %2384 = vmatprep.subr.bf16.mxu0 0
      %2385 = vmatpush1.bf16.msra.mxu0 0
      %2386 = vmatprep.subr.bf16.mxu0 0
      %2387 = vmatpush1.bf16.msra.mxu0 0
      %2388 = vmatprep.subr.bf16.mxu0 0
      %2389 = vmatpush1.bf16.msra.mxu0 0
      %2390 = vmatprep.mubr.bf16.mxu0 0
      %2391 = vmatmul.mubr.bf16.gmra.mrb[0].mxu0 %v2306
      %v2392 = vpop.f32.mrb[0].mxu0
      %v2393 = vadd.f32 0.0, %v2392
      %v2394 = vpop.f32.mrb[0].mxu0
      %v2395 = vpop.f32.mrb[0].mxu0
      %v2396 = vpop.f32.mrb[0].mxu0
      %2397 = vdwg.mxu0
      %v2398 = vadd.f32 %v2288, %v2352
      %v2399 = vadd.f32 %v2289, %v2354
      %v2400 = vadd.f32 %v2290, %v2393
      %s2401 = scalar_lea.vmem %s2, 8
      %v2402 = vld [vmem:[%s2401] sm:$0xf]
      %2404 = vset.pattern.permute.xlu0 0
      %2405 = vperm.xlu0 %2404, %v2402
      %v2406 = vpop.permute.xlu0 %2405
      %v2408 = vunpack.c.l.s4 839922192
      %v2409 = vunpack.c.0.s8 %v2408
      %v2410 = vlaneseq
      %v2411 = vshrl.u32 %v2410, 7
      %v2412 = vsub.s32 %v2409, %v2411
      %v2413 = vrot.slane %v2406, %v2412
      %v2415 = vmul.f32 %v293, %v2413
      %v2416 = vmul.f32 %v294, %v2413
      %v2417 = vmul.f32 %v295, %v2413
      %s2418 = scalar_lea.vmem %s3, 8
      %v2419 = vld [vmem:[%s2418] sm:$0xf]
      %2421 = vset.pattern.permute.xlu0 0
      %2422 = vperm.xlu0 %2421, %v2419
      %v2423 = vpop.permute.xlu0 %2422
      %v2425 = vunpack.c.l.s4 839922192
      %v2426 = vunpack.c.0.s8 %v2425
      %v2427 = vlaneseq
      %v2428 = vshrl.u32 %v2427, 7
      %v2429 = vsub.s32 %v2426, %v2428
      %v2430 = vrot.slane %v2423, %v2429
      %v2432 = vadd.f32 %v2415, %v2430
      %v2433 = vadd.f32 %v2416, %v2430
      %v2434 = vadd.f32 %v2417, %v2430
      %v2435 = vmax.f32 %v2432, 0.0
      %v2436 = vmax.f32 %v2433, 0.0
      %v2437 = vmax.f32 %v2434, 0.0
      %v2438 = vmul.f32 %v2435, %v351
      %v2439 = vmul.f32 %v2436, %v352
      %v2440 = vmul.f32 %v2437, %v349
      %v2443 = vcombine.high %v2438, %v2438
      %v2444 = vcombine.high %v2439, %v2439
      %v2447 = vpack.c.bf16 %v2438, %v2438
      %v2448 = vpack.c.bf16 %v2443, %v2443
      %v2449 = vpack.c.bf16 %v2439, %v2439
      %v2450 = vpack.c.bf16 %v2444, %v2444
      %v2451 = vpack.c.bf16 %v2440, %v2440
      %s2452 = scalar_lea.vmem %s4, 36
      %v2453 = vld [vmem:[%s2452] sm:$0x3]
      %2458 = vrot.lane.b32.xlu0 %v2447, 103
      %v2459 = vpop.permute.xlu0 %2458
      %2460 = vrot.lane.b32.xlu0 %v2448, 103
      %v2461 = vpop.permute.xlu0 %2460
      %2462 = vrot.lane.b32.xlu0 %v2449, 103
      %v2463 = vpop.permute.xlu0 %2462
      %2464 = vrot.lane.b32.xlu0 %v2450, 103
      %v2465 = vpop.permute.xlu0 %2464
      %vm2466 = vcmask 842752
      %v2467 = vsel %vm2466, %v2459, %v2461
      %v2468 = vsel %vm2466, %v2461, %v2463
      %v2469 = vsel %vm2466, %v2463, %v2465
      %v2471 = vsel %vm386, %v2453, 0
      %v2474 = vsel %vm390, %v2467, 0
      %v2477 = vsel %vm390, %v2468, 0
      %v2480 = vsel %vm390, %v2469, 0
      %2482 = vmatprep.subr.bf16.mxu0 %v2477
      %2483 = vmatpush1.bf16.msra.mxu0 %v2474
      %2484 = vmatprep.subr.bf16.mxu0 0
      %2485 = vmatpush1.bf16.msra.mxu0 0
      %2486 = vmatprep.subr.bf16.mxu0 0
      %2487 = vmatpush1.bf16.msra.mxu0 0
      %2488 = vmatprep.subr.bf16.mxu0 0
      %2489 = vmatpush1.bf16.msra.mxu0 0
      %2490 = vmatprep.subr.bf16.mxu0 0
      %2491 = vmatpush1.bf16.msra.mxu0 0
      %2492 = vmatprep.subr.bf16.mxu0 0
      %2493 = vmatpush1.bf16.msra.mxu0 0
      %2494 = vmatprep.subr.bf16.mxu0 0
      %2495 = vmatpush1.bf16.msra.mxu0 0
      %2496 = vmatprep.subr.bf16.mxu0 0
      %2497 = vmatpush1.bf16.msra.mxu0 0
      %2498 = vmatprep.subr.bf16.mxu0 0
      %2499 = vmatpush1.bf16.msra.mxu0 0
      %2500 = vmatprep.subr.bf16.mxu0 0
      %2501 = vmatpush1.bf16.msra.mxu0 0
      %2502 = vmatprep.subr.bf16.mxu0 0
      %2503 = vmatpush1.bf16.msra.mxu0 0
      %2504 = vmatprep.subr.bf16.mxu0 0
      %2505 = vmatpush1.bf16.msra.mxu0 0
      %2506 = vmatprep.subr.bf16.mxu0 0
      %2507 = vmatpush1.bf16.msra.mxu0 0
      %2508 = vmatprep.subr.bf16.mxu0 0
      %2509 = vmatpush1.bf16.msra.mxu0 0
      %2510 = vmatprep.subr.bf16.mxu0 0
      %2511 = vmatpush1.bf16.msra.mxu0 0
      %2512 = vmatprep.subr.bf16.mxu0 0
      %2513 = vmatpush1.bf16.msra.mxu0 0
      %2514 = vmatprep.mubr.bf16.mxu0 0
      %2515 = vmatmul.mubr.bf16.gmra.mrb[0].mxu0 %v2471
      %v2516 = vpop.f32.mrb[0].mxu0
      %v2517 = vadd.f32 0.0, %v2516
      %v2518 = vpop.f32.mrb[0].mxu0
      %v2519 = vadd.f32 0.0, %v2518
      %v2520 = vpop.f32.mrb[0].mxu0
      %v2521 = vpop.f32.mrb[0].mxu0
      %2522 = vdwg.mxu0
      %2523 = vmatprep.subr.bf16.mxu0 0
      %2524 = vmatpush1.bf16.msra.mxu0 %v2480
      %2525 = vmatprep.subr.bf16.mxu0 0
      %2526 = vmatpush1.bf16.msra.mxu0 0
      %2527 = vmatprep.subr.bf16.mxu0 0
      %2528 = vmatpush1.bf16.msra.mxu0 0
      %2529 = vmatprep.subr.bf16.mxu0 0
      %2530 = vmatpush1.bf16.msra.mxu0 0
      %2531 = vmatprep.subr.bf16.mxu0 0
      %2532 = vmatpush1.bf16.msra.mxu0 0
      %2533 = vmatprep.subr.bf16.mxu0 0
      %2534 = vmatpush1.bf16.msra.mxu0 0
      %2535 = vmatprep.subr.bf16.mxu0 0
      %2536 = vmatpush1.bf16.msra.mxu0 0
      %2537 = vmatprep.subr.bf16.mxu0 0
      %2538 = vmatpush1.bf16.msra.mxu0 0
      %2539 = vmatprep.subr.bf16.mxu0 0
      %2540 = vmatpush1.bf16.msra.mxu0 0
      %2541 = vmatprep.subr.bf16.mxu0 0
      %2542 = vmatpush1.bf16.msra.mxu0 0
      %2543 = vmatprep.subr.bf16.mxu0 0
      %2544 = vmatpush1.bf16.msra.mxu0 0
      %2545 = vmatprep.subr.bf16.mxu0 0
      %2546 = vmatpush1.bf16.msra.mxu0 0
      %2547 = vmatprep.subr.bf16.mxu0 0
      %2548 = vmatpush1.bf16.msra.mxu0 0
      %2549 = vmatprep.subr.bf16.mxu0 0
      %2550 = vmatpush1.bf16.msra.mxu0 0
      %2551 = vmatprep.subr.bf16.mxu0 0
      %2552 = vmatpush1.bf16.msra.mxu0 0
      %2553 = vmatprep.subr.bf16.mxu0 0
      %2554 = vmatpush1.bf16.msra.mxu0 0
      %2555 = vmatprep.mubr.bf16.mxu0 0
      %2556 = vmatmul.mubr.bf16.gmra.mrb[0].mxu0 %v2471
      %v2557 = vpop.f32.mrb[0].mxu0
      %v2558 = vadd.f32 0.0, %v2557
      %v2559 = vpop.f32.mrb[0].mxu0
      %v2560 = vpop.f32.mrb[0].mxu0
      %v2561 = vpop.f32.mrb[0].mxu0
      %2562 = vdwg.mxu0
      %v2563 = vadd.f32 %v2398, %v2517
      %v2564 = vadd.f32 %v2399, %v2519
      %v2565 = vadd.f32 %v2400, %v2558
      %s2566 = scalar_lea.vmem %s4, 38
      %v2567 = vld [vmem:[%s2566] sm:$0x3]
      %2568 = vrot.lane.b32.xlu0 %v2447, 100
      %v2569 = vpop.permute.xlu0 %2568
      %2570 = vrot.lane.b32.xlu0 %v2448, 100
      %v2571 = vpop.permute.xlu0 %2570
      %2572 = vrot.lane.b32.xlu0 %v2449, 100
      %v2573 = vpop.permute.xlu0 %2572
      %2574 = vrot.lane.b32.xlu0 %v2450, 100
      %v2575 = vpop.permute.xlu0 %2574
      %vm2576 = vcmask 818176
      %v2577 = vsel %vm2576, %v2569, %v2571
      %v2578 = vsel %vm2576, %v2571, %v2573
      %v2579 = vsel %vm2576, %v2573, %v2575
      %v2581 = vsel %vm386, %v2567, 0
      %v2584 = vsel %vm390, %v2577, 0
      %v2587 = vsel %vm390, %v2578, 0
      %v2590 = vsel %vm390, %v2579, 0
      %2592 = vmatprep.subr.bf16.mxu0 %v2587
      %2593 = vmatpush1.bf16.msra.mxu0 %v2584
      %2594 = vmatprep.subr.bf16.mxu0 0
      %2595 = vmatpush1.bf16.msra.mxu0 0
      %2596 = vmatprep.subr.bf16.mxu0 0
      %2597 = vmatpush1.bf16.msra.mxu0 0
      %2598 = vmatprep.subr.bf16.mxu0 0
      %2599 = vmatpush1.bf16.msra.mxu0 0
      %2600 = vmatprep.subr.bf16.mxu0 0
      %2601 = vmatpush1.bf16.msra.mxu0 0
      %2602 = vmatprep.subr.bf16.mxu0 0
      %2603 = vmatpush1.bf16.msra.mxu0 0
      %2604 = vmatprep.subr.bf16.mxu0 0
      %2605 = vmatpush1.bf16.msra.mxu0 0
      %2606 = vmatprep.subr.bf16.mxu0 0
      %2607 = vmatpush1.bf16.msra.mxu0 0
      %2608 = vmatprep.subr.bf16.mxu0 0
      %2609 = vmatpush1.bf16.msra.mxu0 0
      %2610 = vmatprep.subr.bf16.mxu0 0
      %2611 = vmatpush1.bf16.msra.mxu0 0
      %2612 = vmatprep.subr.bf16.mxu0 0
      %2613 = vmatpush1.bf16.msra.mxu0 0
      %2614 = vmatprep.subr.bf16.mxu0 0
      %2615 = vmatpush1.bf16.msra.mxu0 0
      %2616 = vmatprep.subr.bf16.mxu0 0
      %2617 = vmatpush1.bf16.msra.mxu0 0
      %2618 = vmatprep.subr.bf16.mxu0 0
      %2619 = vmatpush1.bf16.msra.mxu0 0
      %2620 = vmatprep.subr.bf16.mxu0 0
      %2621 = vmatpush1.bf16.msra.mxu0 0
      %2622 = vmatprep.subr.bf16.mxu0 0
      %2623 = vmatpush1.bf16.msra.mxu0 0
      %2624 = vmatprep.mubr.bf16.mxu0 0
      %2625 = vmatmul.mubr.bf16.gmra.mrb[0].mxu0 %v2581
      %v2626 = vpop.f32.mrb[0].mxu0
      %v2627 = vadd.f32 0.0, %v2626
      %v2628 = vpop.f32.mrb[0].mxu0
      %v2629 = vadd.f32 0.0, %v2628
      %v2630 = vpop.f32.mrb[0].mxu0
      %v2631 = vpop.f32.mrb[0].mxu0
      %2632 = vdwg.mxu0
      %2633 = vmatprep.subr.bf16.mxu0 0
      %2634 = vmatpush1.bf16.msra.mxu0 %v2590
      %2635 = vmatprep.subr.bf16.mxu0 0
      %2636 = vmatpush1.bf16.msra.mxu0 0
      %2637 = vmatprep.subr.bf16.mxu0 0
      %2638 = vmatpush1.bf16.msra.mxu0 0
      %2639 = vmatprep.subr.bf16.mxu0 0
      %2640 = vmatpush1.bf16.msra.mxu0 0
      %2641 = vmatprep.subr.bf16.mxu0 0
      %2642 = vmatpush1.bf16.msra.mxu0 0
      %2643 = vmatprep.subr.bf16.mxu0 0
      %2644 = vmatpush1.bf16.msra.mxu0 0
      %2645 = vmatprep.subr.bf16.mxu0 0
      %2646 = vmatpush1.bf16.msra.mxu0 0
      %2647 = vmatprep.subr.bf16.mxu0 0
      %2648 = vmatpush1.bf16.msra.mxu0 0
      %2649 = vmatprep.subr.bf16.mxu0 0
      %2650 = vmatpush1.bf16.msra.mxu0 0
      %2651 = vmatprep.subr.bf16.mxu0 0
      %2652 = vmatpush1.bf16.msra.mxu0 0
      %2653 = vmatprep.subr.bf16.mxu0 0
      %2654 = vmatpush1.bf16.msra.mxu0 0
      %2655 = vmatprep.subr.bf16.mxu0 0
      %2656 = vmatpush1.bf16.msra.mxu0 0
      %2657 = vmatprep.subr.bf16.mxu0 0
      %2658 = vmatpush1.bf16.msra.mxu0 0
      %2659 = vmatprep.subr.bf16.mxu0 0
      %2660 = vmatpush1.bf16.msra.mxu0 0
      %2661 = vmatprep.subr.bf16.mxu0 0
      %2662 = vmatpush1.bf16.msra.mxu0 0
      %2663 = vmatprep.subr.bf16.mxu0 0
      %2664 = vmatpush1.bf16.msra.mxu0 0
      %2665 = vmatprep.mubr.bf16.mxu0 0
      %2666 = vmatmul.mubr.bf16.gmra.mrb[0].mxu0 %v2581
      %v2667 = vpop.f32.mrb[0].mxu0
      %v2668 = vadd.f32 0.0, %v2667
      %v2669 = vpop.f32.mrb[0].mxu0
      %v2670 = vpop.f32.mrb[0].mxu0
      %v2671 = vpop.f32.mrb[0].mxu0
      %2672 = vdwg.mxu0
      %v2673 = vadd.f32 %v2563, %v2627
      %v2674 = vadd.f32 %v2564, %v2629
      %v2675 = vadd.f32 %v2565, %v2668
      %s2676 = scalar_lea.vmem %s4, 40
      %v2677 = vld [vmem:[%s2676] sm:$0x3]
      %2678 = vrot.lane.b32.xlu0 %v2447, 97
      %v2679 = vpop.permute.xlu0 %2678
      %2680 = vrot.lane.b32.xlu0 %v2448, 97
      %v2681 = vpop.permute.xlu0 %2680
      %2682 = vrot.lane.b32.xlu0 %v2449, 97
      %v2683 = vpop.permute.xlu0 %2682
      %2684 = vrot.lane.b32.xlu0 %v2450, 97
      %v2685 = vpop.permute.xlu0 %2684
      %vm2686 = vcmask 793600
      %v2687 = vsel %vm2686, %v2679, %v2681
      %v2688 = vsel %vm2686, %v2681, %v2683
      %v2689 = vsel %vm2686, %v2683, %v2685
      %v2691 = vsel %vm386, %v2677, 0
      %v2694 = vsel %vm390, %v2687, 0
      %v2697 = vsel %vm390, %v2688, 0
      %v2700 = vsel %vm390, %v2689, 0
      %2702 = vmatprep.subr.bf16.mxu0 %v2697
      %2703 = vmatpush1.bf16.msra.mxu0 %v2694
      %2704 = vmatprep.subr.bf16.mxu0 0
      %2705 = vmatpush1.bf16.msra.mxu0 0
      %2706 = vmatprep.subr.bf16.mxu0 0
      %2707 = vmatpush1.bf16.msra.mxu0 0
      %2708 = vmatprep.subr.bf16.mxu0 0
      %2709 = vmatpush1.bf16.msra.mxu0 0
      %2710 = vmatprep.subr.bf16.mxu0 0
      %2711 = vmatpush1.bf16.msra.mxu0 0
      %2712 = vmatprep.subr.bf16.mxu0 0
      %2713 = vmatpush1.bf16.msra.mxu0 0
      %2714 = vmatprep.subr.bf16.mxu0 0
      %2715 = vmatpush1.bf16.msra.mxu0 0
      %2716 = vmatprep.subr.bf16.mxu0 0
      %2717 = vmatpush1.bf16.msra.mxu0 0
      %2718 = vmatprep.subr.bf16.mxu0 0
      %2719 = vmatpush1.bf16.msra.mxu0 0
      %2720 = vmatprep.subr.bf16.mxu0 0
      %2721 = vmatpush1.bf16.msra.mxu0 0
      %2722 = vmatprep.subr.bf16.mxu0 0
      %2723 = vmatpush1.bf16.msra.mxu0 0
      %2724 = vmatprep.subr.bf16.mxu0 0
      %2725 = vmatpush1.bf16.msra.mxu0 0
      %2726 = vmatprep.subr.bf16.mxu0 0
      %2727 = vmatpush1.bf16.msra.mxu0 0
      %2728 = vmatprep.subr.bf16.mxu0 0
      %2729 = vmatpush1.bf16.msra.mxu0 0
      %2730 = vmatprep.subr.bf16.mxu0 0
      %2731 = vmatpush1.bf16.msra.mxu0 0
      %2732 = vmatprep.subr.bf16.mxu0 0
      %2733 = vmatpush1.bf16.msra.mxu0 0
      %2734 = vmatprep.mubr.bf16.mxu0 0
      %2735 = vmatmul.mubr.bf16.gmra.mrb[0].mxu0 %v2691
      %v2736 = vpop.f32.mrb[0].mxu0
      %v2737 = vadd.f32 0.0, %v2736
      %v2738 = vpop.f32.mrb[0].mxu0
      %v2739 = vadd.f32 0.0, %v2738
      %v2740 = vpop.f32.mrb[0].mxu0
      %v2741 = vpop.f32.mrb[0].mxu0
      %2742 = vdwg.mxu0
      %2743 = vmatprep.subr.bf16.mxu0 0
      %2744 = vmatpush1.bf16.msra.mxu0 %v2700
      %2745 = vmatprep.subr.bf16.mxu0 0
      %2746 = vmatpush1.bf16.msra.mxu0 0
      %2747 = vmatprep.subr.bf16.mxu0 0
      %2748 = vmatpush1.bf16.msra.mxu0 0
      %2749 = vmatprep.subr.bf16.mxu0 0
      %2750 = vmatpush1.bf16.msra.mxu0 0
      %2751 = vmatprep.subr.bf16.mxu0 0
      %2752 = vmatpush1.bf16.msra.mxu0 0
      %2753 = vmatprep.subr.bf16.mxu0 0
      %2754 = vmatpush1.bf16.msra.mxu0 0
      %2755 = vmatprep.subr.bf16.mxu0 0
      %2756 = vmatpush1.bf16.msra.mxu0 0
      %2757 = vmatprep.subr.bf16.mxu0 0
      %2758 = vmatpush1.bf16.msra.mxu0 0
      %2759 = vmatprep.subr.bf16.mxu0 0
      %2760 = vmatpush1.bf16.msra.mxu0 0
      %2761 = vmatprep.subr.bf16.mxu0 0
      %2762 = vmatpush1.bf16.msra.mxu0 0
      %2763 = vmatprep.subr.bf16.mxu0 0
      %2764 = vmatpush1.bf16.msra.mxu0 0
      %2765 = vmatprep.subr.bf16.mxu0 0
      %2766 = vmatpush1.bf16.msra.mxu0 0
      %2767 = vmatprep.subr.bf16.mxu0 0
      %2768 = vmatpush1.bf16.msra.mxu0 0
      %2769 = vmatprep.subr.bf16.mxu0 0
      %2770 = vmatpush1.bf16.msra.mxu0 0
      %2771 = vmatprep.subr.bf16.mxu0 0
      %2772 = vmatpush1.bf16.msra.mxu0 0
      %2773 = vmatprep.subr.bf16.mxu0 0
      %2774 = vmatpush1.bf16.msra.mxu0 0
      %2775 = vmatprep.mubr.bf16.mxu0 0
      %2776 = vmatmul.mubr.bf16.gmra.mrb[0].mxu0 %v2691
      %v2777 = vpop.f32.mrb[0].mxu0
      %v2778 = vadd.f32 0.0, %v2777
      %v2779 = vpop.f32.mrb[0].mxu0
      %v2780 = vpop.f32.mrb[0].mxu0
      %v2781 = vpop.f32.mrb[0].mxu0
      %2782 = vdwg.mxu0
      %v2783 = vadd.f32 %v2673, %v2737
      %v2784 = vadd.f32 %v2674, %v2739
      %v2785 = vadd.f32 %v2675, %v2778
      %s2786 = scalar_lea.vmem %s4, 42
      %v2787 = vld [vmem:[%s2786] sm:$0x3]
      %2788 = vrot.lane.b32.xlu0 %v2447, 31
      %v2789 = vpop.permute.xlu0 %2788
      %2790 = vrot.lane.b32.xlu0 %v2448, 31
      %v2791 = vpop.permute.xlu0 %2790
      %2792 = vrot.lane.b32.xlu0 %v2449, 31
      %v2793 = vpop.permute.xlu0 %2792
      %2794 = vrot.lane.b32.xlu0 %v2450, 31
      %v2795 = vpop.permute.xlu0 %2794
      %vm2796 = vcmask 252928
      %v2797 = vsel %vm2796, %v2789, %v2791
      %v2798 = vsel %vm2796, %v2791, %v2793
      %v2799 = vsel %vm2796, %v2793, %v2795
      %v2801 = vsel %vm386, %v2787, 0
      %v2804 = vsel %vm390, %v2797, 0
      %v2807 = vsel %vm390, %v2798, 0
      %v2810 = vsel %vm390, %v2799, 0
      %2812 = vmatprep.subr.bf16.mxu0 %v2807
      %2813 = vmatpush1.bf16.msra.mxu0 %v2804
      %2814 = vmatprep.subr.bf16.mxu0 0
      %2815 = vmatpush1.bf16.msra.mxu0 0
      %2816 = vmatprep.subr.bf16.mxu0 0
      %2817 = vmatpush1.bf16.msra.mxu0 0
      %2818 = vmatprep.subr.bf16.mxu0 0
      %2819 = vmatpush1.bf16.msra.mxu0 0
      %2820 = vmatprep.subr.bf16.mxu0 0
      %2821 = vmatpush1.bf16.msra.mxu0 0
      %2822 = vmatprep.subr.bf16.mxu0 0
      %2823 = vmatpush1.bf16.msra.mxu0 0
      %2824 = vmatprep.subr.bf16.mxu0 0
      %2825 = vmatpush1.bf16.msra.mxu0 0
      %2826 = vmatprep.subr.bf16.mxu0 0
      %2827 = vmatpush1.bf16.msra.mxu0 0
      %2828 = vmatprep.subr.bf16.mxu0 0
      %2829 = vmatpush1.bf16.msra.mxu0 0
      %2830 = vmatprep.subr.bf16.mxu0 0
      %2831 = vmatpush1.bf16.msra.mxu0 0
      %2832 = vmatprep.subr.bf16.mxu0 0
      %2833 = vmatpush1.bf16.msra.mxu0 0
      %2834 = vmatprep.subr.bf16.mxu0 0
      %2835 = vmatpush1.bf16.msra.mxu0 0
      %2836 = vmatprep.subr.bf16.mxu0 0
      %2837 = vmatpush1.bf16.msra.mxu0 0
      %2838 = vmatprep.subr.bf16.mxu0 0
      %2839 = vmatpush1.bf16.msra.mxu0 0
      %2840 = vmatprep.subr.bf16.mxu0 0
      %2841 = vmatpush1.bf16.msra.mxu0 0
      %2842 = vmatprep.subr.bf16.mxu0 0
      %2843 = vmatpush1.bf16.msra.mxu0 0
      %2844 = vmatprep.mubr.bf16.mxu0 0
      %2845 = vmatmul.mubr.bf16.gmra.mrb[0].mxu0 %v2801
      %v2846 = vpop.f32.mrb[0].mxu0
      %v2847 = vadd.f32 0.0, %v2846
      %v2848 = vpop.f32.mrb[0].mxu0
      %v2849 = vadd.f32 0.0, %v2848
      %v2850 = vpop.f32.mrb[0].mxu0
      %v2851 = vpop.f32.mrb[0].mxu0
      %2852 = vdwg.mxu0
      %2853 = vmatprep.subr.bf16.mxu0 0
      %2854 = vmatpush1.bf16.msra.mxu0 %v2810
      %2855 = vmatprep.subr.bf16.mxu0 0
      %2856 = vmatpush1.bf16.msra.mxu0 0
      %2857 = vmatprep.subr.bf16.mxu0 0
      %2858 = vmatpush1.bf16.msra.mxu0 0
      %2859 = vmatprep.subr.bf16.mxu0 0
      %2860 = vmatpush1.bf16.msra.mxu0 0
      %2861 = vmatprep.subr.bf16.mxu0 0
      %2862 = vmatpush1.bf16.msra.mxu0 0
      %2863 = vmatprep.subr.bf16.mxu0 0
      %2864 = vmatpush1.bf16.msra.mxu0 0
      %2865 = vmatprep.subr.bf16.mxu0 0
      %2866 = vmatpush1.bf16.msra.mxu0 0
      %2867 = vmatprep.subr.bf16.mxu0 0
      %2868 = vmatpush1.bf16.msra.mxu0 0
      %2869 = vmatprep.subr.bf16.mxu0 0
      %2870 = vmatpush1.bf16.msra.mxu0 0
      %2871 = vmatprep.subr.bf16.mxu0 0
      %2872 = vmatpush1.bf16.msra.mxu0 0
      %2873 = vmatprep.subr.bf16.mxu0 0
      %2874 = vmatpush1.bf16.msra.mxu0 0
      %2875 = vmatprep.subr.bf16.mxu0 0
      %2876 = vmatpush1.bf16.msra.mxu0 0
      %2877 = vmatprep.subr.bf16.mxu0 0
      %2878 = vmatpush1.bf16.msra.mxu0 0
      %2879 = vmatprep.subr.bf16.mxu0 0
      %2880 = vmatpush1.bf16.msra.mxu0 0
      %2881 = vmatprep.subr.bf16.mxu0 0
      %2882 = vmatpush1.bf16.msra.mxu0 0
      %2883 = vmatprep.subr.bf16.mxu0 0
      %2884 = vmatpush1.bf16.msra.mxu0 0
      %2885 = vmatprep.mubr.bf16.mxu0 0
      %2886 = vmatmul.mubr.bf16.gmra.mrb[0].mxu0 %v2801
      %v2887 = vpop.f32.mrb[0].mxu0
      %v2888 = vadd.f32 0.0, %v2887
      %v2889 = vpop.f32.mrb[0].mxu0
      %v2890 = vpop.f32.mrb[0].mxu0
      %v2891 = vpop.f32.mrb[0].mxu0
      %2892 = vdwg.mxu0
      %v2893 = vadd.f32 %v2783, %v2847
      %v2894 = vadd.f32 %v2784, %v2849
      %v2895 = vadd.f32 %v2785, %v2888
      %s2896 = scalar_lea.vmem %s4, 44
      %v2897 = vld [vmem:[%s2896] sm:$0x3]
      %2898 = vrot.lane.b32.xlu0 %v2447, 28
      %v2899 = vpop.permute.xlu0 %2898
      %2900 = vrot.lane.b32.xlu0 %v2448, 28
      %v2901 = vpop.permute.xlu0 %2900
      %2902 = vrot.lane.b32.xlu0 %v2449, 28
      %v2903 = vpop.permute.xlu0 %2902
      %2904 = vrot.lane.b32.xlu0 %v2450, 28
      %v2905 = vpop.permute.xlu0 %2904
      %v2906 = vsel %vm816, %v2899, %v2901
      %v2907 = vsel %vm816, %v2901, %v2903
      %v2908 = vsel %vm816, %v2903, %v2905
      %v2910 = vsel %vm386, %v2897, 0
      %v2913 = vsel %vm390, %v2906, 0
      %v2916 = vsel %vm390, %v2907, 0
      %v2919 = vsel %vm390, %v2908, 0
      %2921 = vmatprep.subr.bf16.mxu0 %v2916
      %2922 = vmatpush1.bf16.msra.mxu0 %v2913
      %2923 = vmatprep.subr.bf16.mxu0 0
      %2924 = vmatpush1.bf16.msra.mxu0 0
      %2925 = vmatprep.subr.bf16.mxu0 0
      %2926 = vmatpush1.bf16.msra.mxu0 0
      %2927 = vmatprep.subr.bf16.mxu0 0
      %2928 = vmatpush1.bf16.msra.mxu0 0
      %2929 = vmatprep.subr.bf16.mxu0 0
      %2930 = vmatpush1.bf16.msra.mxu0 0
      %2931 = vmatprep.subr.bf16.mxu0 0
      %2932 = vmatpush1.bf16.msra.mxu0 0
      %2933 = vmatprep.subr.bf16.mxu0 0
      %2934 = vmatpush1.bf16.msra.mxu0 0
      %2935 = vmatprep.subr.bf16.mxu0 0
      %2936 = vmatpush1.bf16.msra.mxu0 0
      %2937 = vmatprep.subr.bf16.mxu0 0
      %2938 = vmatpush1.bf16.msra.mxu0 0
      %2939 = vmatprep.subr.bf16.mxu0 0
      %2940 = vmatpush1.bf16.msra.mxu0 0
      %2941 = vmatprep.subr.bf16.mxu0 0
      %2942 = vmatpush1.bf16.msra.mxu0 0
      %2943 = vmatprep.subr.bf16.mxu0 0
      %2944 = vmatpush1.bf16.msra.mxu0 0
      %2945 = vmatprep.subr.bf16.mxu0 0
      %2946 = vmatpush1.bf16.msra.mxu0 0
      %2947 = vmatprep.subr.bf16.mxu0 0
      %2948 = vmatpush1.bf16.msra.mxu0 0
      %2949 = vmatprep.subr.bf16.mxu0 0
      %2950 = vmatpush1.bf16.msra.mxu0 0
      %2951 = vmatprep.subr.bf16.mxu0 0
      %2952 = vmatpush1.bf16.msra.mxu0 0
      %2953 = vmatprep.mubr.bf16.mxu0 0
      %2954 = vmatmul.mubr.bf16.gmra.mrb[0].mxu0 %v2910
      %v2955 = vpop.f32.mrb[0].mxu0
      %v2956 = vadd.f32 0.0, %v2955
      %v2957 = vpop.f32.mrb[0].mxu0
      %v2958 = vadd.f32 0.0, %v2957
      %v2959 = vpop.f32.mrb[0].mxu0
      %v2960 = vpop.f32.mrb[0].mxu0
      %2961 = vdwg.mxu0
      %2962 = vmatprep.subr.bf16.mxu0 0
      %2963 = vmatpush1.bf16.msra.mxu0 %v2919
      %2964 = vmatprep.subr.bf16.mxu0 0
      %2965 = vmatpush1.bf16.msra.mxu0 0
      %2966 = vmatprep.subr.bf16.mxu0 0
      %2967 = vmatpush1.bf16.msra.mxu0 0
      %2968 = vmatprep.subr.bf16.mxu0 0
      %2969 = vmatpush1.bf16.msra.mxu0 0
      %2970 = vmatprep.subr.bf16.mxu0 0
      %2971 = vmatpush1.bf16.msra.mxu0 0
      %2972 = vmatprep.subr.bf16.mxu0 0
      %2973 = vmatpush1.bf16.msra.mxu0 0
      %2974 = vmatprep.subr.bf16.mxu0 0
      %2975 = vmatpush1.bf16.msra.mxu0 0
      %2976 = vmatprep.subr.bf16.mxu0 0
      %2977 = vmatpush1.bf16.msra.mxu0 0
      %2978 = vmatprep.subr.bf16.mxu0 0
      %2979 = vmatpush1.bf16.msra.mxu0 0
      %2980 = vmatprep.subr.bf16.mxu0 0
      %2981 = vmatpush1.bf16.msra.mxu0 0
      %2982 = vmatprep.subr.bf16.mxu0 0
      %2983 = vmatpush1.bf16.msra.mxu0 0
      %2984 = vmatprep.subr.bf16.mxu0 0
      %2985 = vmatpush1.bf16.msra.mxu0 0
      %2986 = vmatprep.subr.bf16.mxu0 0
      %2987 = vmatpush1.bf16.msra.mxu0 0
      %2988 = vmatprep.subr.bf16.mxu0 0
      %2989 = vmatpush1.bf16.msra.mxu0 0
      %2990 = vmatprep.subr.bf16.mxu0 0
      %2991 = vmatpush1.bf16.msra.mxu0 0
      %2992 = vmatprep.subr.bf16.mxu0 0
      %2993 = vmatpush1.bf16.msra.mxu0 0
      %2994 = vmatprep.mubr.bf16.mxu0 0
      %2995 = vmatmul.mubr.bf16.gmra.mrb[0].mxu0 %v2910
      %v2996 = vpop.f32.mrb[0].mxu0
      %v2997 = vadd.f32 0.0, %v2996
      %v2998 = vpop.f32.mrb[0].mxu0
      %v2999 = vpop.f32.mrb[0].mxu0
      %v3000 = vpop.f32.mrb[0].mxu0
      %3001 = vdwg.mxu0
      %v3002 = vadd.f32 %v2893, %v2956
      %v3003 = vadd.f32 %v2894, %v2958
      %v3004 = vadd.f32 %v2895, %v2997
      %s3005 = scalar_lea.vmem %s4, 46
      %v3006 = vld [vmem:[%s3005] sm:$0x3]
      %3007 = vrot.lane.b32.xlu0 %v2447, 25
      %v3008 = vpop.permute.xlu0 %3007
      %3009 = vrot.lane.b32.xlu0 %v2448, 25
      %v3010 = vpop.permute.xlu0 %3009
      %3011 = vrot.lane.b32.xlu0 %v2449, 25
      %v3012 = vpop.permute.xlu0 %3011
      %3013 = vrot.lane.b32.xlu0 %v2450, 25
      %v3014 = vpop.permute.xlu0 %3013
      %vm3015 = vcmask 203776
      %v3016 = vsel %vm3015, %v3008, %v3010
      %v3017 = vsel %vm3015, %v3010, %v3012
      %v3018 = vsel %vm3015, %v3012, %v3014
      %v3020 = vsel %vm386, %v3006, 0
      %v3023 = vsel %vm390, %v3016, 0
      %v3026 = vsel %vm390, %v3017, 0
      %v3029 = vsel %vm390, %v3018, 0
      %3031 = vmatprep.subr.bf16.mxu0 %v3026
      %3032 = vmatpush1.bf16.msra.mxu0 %v3023
      %3033 = vmatprep.subr.bf16.mxu0 0
      %3034 = vmatpush1.bf16.msra.mxu0 0
      %3035 = vmatprep.subr.bf16.mxu0 0
      %3036 = vmatpush1.bf16.msra.mxu0 0
      %3037 = vmatprep.subr.bf16.mxu0 0
      %3038 = vmatpush1.bf16.msra.mxu0 0
      %3039 = vmatprep.subr.bf16.mxu0 0
      %3040 = vmatpush1.bf16.msra.mxu0 0
      %3041 = vmatprep.subr.bf16.mxu0 0
      %3042 = vmatpush1.bf16.msra.mxu0 0
      %3043 = vmatprep.subr.bf16.mxu0 0
      %3044 = vmatpush1.bf16.msra.mxu0 0
      %3045 = vmatprep.subr.bf16.mxu0 0
      %3046 = vmatpush1.bf16.msra.mxu0 0
      %3047 = vmatprep.subr.bf16.mxu0 0
      %3048 = vmatpush1.bf16.msra.mxu0 0
      %3049 = vmatprep.subr.bf16.mxu0 0
      %3050 = vmatpush1.bf16.msra.mxu0 0
      %3051 = vmatprep.subr.bf16.mxu0 0
      %3052 = vmatpush1.bf16.msra.mxu0 0
      %3053 = vmatprep.subr.bf16.mxu0 0
      %3054 = vmatpush1.bf16.msra.mxu0 0
      %3055 = vmatprep.subr.bf16.mxu0 0
      %3056 = vmatpush1.bf16.msra.mxu0 0
      %3057 = vmatprep.subr.bf16.mxu0 0
      %3058 = vmatpush1.bf16.msra.mxu0 0
      %3059 = vmatprep.subr.bf16.mxu0 0
      %3060 = vmatpush1.bf16.msra.mxu0 0
      %3061 = vmatprep.subr.bf16.mxu0 0
      %3062 = vmatpush1.bf16.msra.mxu0 0
      %3063 = vmatprep.mubr.bf16.mxu0 0
      %3064 = vmatmul.mubr.bf16.gmra.mrb[0].mxu0 %v3020
      %v3065 = vpop.f32.mrb[0].mxu0
      %v3066 = vadd.f32 0.0, %v3065
      %v3067 = vpop.f32.mrb[0].mxu0
      %v3068 = vadd.f32 0.0, %v3067
      %v3069 = vpop.f32.mrb[0].mxu0
      %v3070 = vpop.f32.mrb[0].mxu0
      %3071 = vdwg.mxu0
      %3072 = vmatprep.subr.bf16.mxu0 0
      %3073 = vmatpush1.bf16.msra.mxu0 %v3029
      %3074 = vmatprep.subr.bf16.mxu0 0
      %3075 = vmatpush1.bf16.msra.mxu0 0
      %3076 = vmatprep.subr.bf16.mxu0 0
      %3077 = vmatpush1.bf16.msra.mxu0 0
      %3078 = vmatprep.subr.bf16.mxu0 0
      %3079 = vmatpush1.bf16.msra.mxu0 0
      %3080 = vmatprep.subr.bf16.mxu0 0
      %3081 = vmatpush1.bf16.msra.mxu0 0
      %3082 = vmatprep.subr.bf16.mxu0 0
      %3083 = vmatpush1.bf16.msra.mxu0 0
      %3084 = vmatprep.subr.bf16.mxu0 0
      %3085 = vmatpush1.bf16.msra.mxu0 0
      %3086 = vmatprep.subr.bf16.mxu0 0
      %3087 = vmatpush1.bf16.msra.mxu0 0
      %3088 = vmatprep.subr.bf16.mxu0 0
      %3089 = vmatpush1.bf16.msra.mxu0 0
      %3090 = vmatprep.subr.bf16.mxu0 0
      %3091 = vmatpush1.bf16.msra.mxu0 0
      %3092 = vmatprep.subr.bf16.mxu0 0
      %3093 = vmatpush1.bf16.msra.mxu0 0
      %3094 = vmatprep.subr.bf16.mxu0 0
      %3095 = vmatpush1.bf16.msra.mxu0 0
      %3096 = vmatprep.subr.bf16.mxu0 0
      %3097 = vmatpush1.bf16.msra.mxu0 0
      %3098 = vmatprep.subr.bf16.mxu0 0
      %3099 = vmatpush1.bf16.msra.mxu0 0
      %3100 = vmatprep.subr.bf16.mxu0 0
      %3101 = vmatpush1.bf16.msra.mxu0 0
      %3102 = vmatprep.subr.bf16.mxu0 0
      %3103 = vmatpush1.bf16.msra.mxu0 0
      %3104 = vmatprep.mubr.bf16.mxu0 0
      %3105 = vmatmul.mubr.bf16.gmra.mrb[0].mxu0 %v3020
      %v3106 = vpop.f32.mrb[0].mxu0
      %v3107 = vadd.f32 0.0, %v3106
      %v3108 = vpop.f32.mrb[0].mxu0
      %v3109 = vpop.f32.mrb[0].mxu0
      %v3110 = vpop.f32.mrb[0].mxu0
      %3111 = vdwg.mxu0
      %v3112 = vadd.f32 %v3002, %v3066
      %v3113 = vadd.f32 %v3003, %v3068
      %v3114 = vadd.f32 %v3004, %v3107
      %s3115 = scalar_lea.vmem %s4, 48
      %v3116 = vld [vmem:[%s3115] sm:$0x3]
      %3118 = vrot.lane.b32.xlu0 %v2448, 87
      %v3119 = vpop.permute.xlu0 %3118
      %3120 = vrot.lane.b32.xlu0 %v2449, 87
      %v3121 = vpop.permute.xlu0 %3120
      %3122 = vrot.lane.b32.xlu0 %v2450, 87
      %v3123 = vpop.permute.xlu0 %3122
      %3124 = vrot.lane.b32.xlu0 %v2451, 87
      %v3125 = vpop.permute.xlu0 %3124
      %vm3126 = vcmask 711680
      %v3127 = vsel %vm3126, %v3119, %v3121
      %v3128 = vsel %vm3126, %v3121, %v3123
      %v3129 = vsel %vm3126, %v3123, %v3125
      %v3131 = vsel %vm386, %v3116, 0
      %v3134 = vsel %vm390, %v3127, 0
      %v3137 = vsel %vm390, %v3128, 0
      %v3140 = vsel %vm390, %v3129, 0
      %3142 = vmatprep.subr.bf16.mxu0 %v3137
      %3143 = vmatpush1.bf16.msra.mxu0 %v3134
      %3144 = vmatprep.subr.bf16.mxu0 0
      %3145 = vmatpush1.bf16.msra.mxu0 0
      %3146 = vmatprep.subr.bf16.mxu0 0
      %3147 = vmatpush1.bf16.msra.mxu0 0
      %3148 = vmatprep.subr.bf16.mxu0 0
      %3149 = vmatpush1.bf16.msra.mxu0 0
      %3150 = vmatprep.subr.bf16.mxu0 0
      %3151 = vmatpush1.bf16.msra.mxu0 0
      %3152 = vmatprep.subr.bf16.mxu0 0
      %3153 = vmatpush1.bf16.msra.mxu0 0
      %3154 = vmatprep.subr.bf16.mxu0 0
      %3155 = vmatpush1.bf16.msra.mxu0 0
      %3156 = vmatprep.subr.bf16.mxu0 0
      %3157 = vmatpush1.bf16.msra.mxu0 0
      %3158 = vmatprep.subr.bf16.mxu0 0
      %3159 = vmatpush1.bf16.msra.mxu0 0
      %3160 = vmatprep.subr.bf16.mxu0 0
      %3161 = vmatpush1.bf16.msra.mxu0 0
      %3162 = vmatprep.subr.bf16.mxu0 0
      %3163 = vmatpush1.bf16.msra.mxu0 0
      %3164 = vmatprep.subr.bf16.mxu0 0
      %3165 = vmatpush1.bf16.msra.mxu0 0
      %3166 = vmatprep.subr.bf16.mxu0 0
      %3167 = vmatpush1.bf16.msra.mxu0 0
      %3168 = vmatprep.subr.bf16.mxu0 0
      %3169 = vmatpush1.bf16.msra.mxu0 0
      %3170 = vmatprep.subr.bf16.mxu0 0
      %3171 = vmatpush1.bf16.msra.mxu0 0
      %3172 = vmatprep.subr.bf16.mxu0 0
      %3173 = vmatpush1.bf16.msra.mxu0 0
      %3174 = vmatprep.mubr.bf16.mxu0 0
      %3175 = vmatmul.mubr.bf16.gmra.mrb[0].mxu0 %v3131
      %v3176 = vpop.f32.mrb[0].mxu0
      %v3177 = vadd.f32 0.0, %v3176
      %v3178 = vpop.f32.mrb[0].mxu0
      %v3179 = vadd.f32 0.0, %v3178
      %v3180 = vpop.f32.mrb[0].mxu0
      %v3181 = vpop.f32.mrb[0].mxu0
      %3182 = vdwg.mxu0
      %3183 = vmatprep.subr.bf16.mxu0 0
      %3184 = vmatpush1.bf16.msra.mxu0 %v3140
      %3185 = vmatprep.subr.bf16.mxu0 0
      %3186 = vmatpush1.bf16.msra.mxu0 0
      %3187 = vmatprep.subr.bf16.mxu0 0
      %3188 = vmatpush1.bf16.msra.mxu0 0
      %3189 = vmatprep.subr.bf16.mxu0 0
      %3190 = vmatpush1.bf16.msra.mxu0 0
      %3191 = vmatprep.subr.bf16.mxu0 0
      %3192 = vmatpush1.bf16.msra.mxu0 0
      %3193 = vmatprep.subr.bf16.mxu0 0
      %3194 = vmatpush1.bf16.msra.mxu0 0
      %3195 = vmatprep.subr.bf16.mxu0 0
      %3196 = vmatpush1.bf16.msra.mxu0 0
      %3197 = vmatprep.subr.bf16.mxu0 0
      %3198 = vmatpush1.bf16.msra.mxu0 0
      %3199 = vmatprep.subr.bf16.mxu0 0
      %3200 = vmatpush1.bf16.msra.mxu0 0
      %3201 = vmatprep.subr.bf16.mxu0 0
      %3202 = vmatpush1.bf16.msra.mxu0 0
      %3203 = vmatprep.subr.bf16.mxu0 0
      %3204 = vmatpush1.bf16.msra.mxu0 0
      %3205 = vmatprep.subr.bf16.mxu0 0
      %3206 = vmatpush1.bf16.msra.mxu0 0
      %3207 = vmatprep.subr.bf16.mxu0 0
      %3208 = vmatpush1.bf16.msra.mxu0 0
      %3209 = vmatprep.subr.bf16.mxu0 0
      %3210 = vmatpush1.bf16.msra.mxu0 0
      %3211 = vmatprep.subr.bf16.mxu0 0
      %3212 = vmatpush1.bf16.msra.mxu0 0
      %3213 = vmatprep.subr.bf16.mxu0 0
      %3214 = vmatpush1.bf16.msra.mxu0 0
      %3215 = vmatprep.mubr.bf16.mxu0 0
      %3216 = vmatmul.mubr.bf16.gmra.mrb[0].mxu0 %v3131
      %v3217 = vpop.f32.mrb[0].mxu0
      %v3218 = vadd.f32 0.0, %v3217
      %v3219 = vpop.f32.mrb[0].mxu0
      %v3220 = vpop.f32.mrb[0].mxu0
      %v3221 = vpop.f32.mrb[0].mxu0
      %3222 = vdwg.mxu0
      %v3223 = vadd.f32 %v3112, %v3177
      %v3224 = vadd.f32 %v3113, %v3179
      %v3225 = vadd.f32 %v3114, %v3218
      %s3226 = scalar_lea.vmem %s4, 50
      %v3227 = vld [vmem:[%s3226] sm:$0x3]
      %3228 = vrot.lane.b32.xlu0 %v2448, 84
      %v3229 = vpop.permute.xlu0 %3228
      %3230 = vrot.lane.b32.xlu0 %v2449, 84
      %v3231 = vpop.permute.xlu0 %3230
      %3232 = vrot.lane.b32.xlu0 %v2450, 84
      %v3233 = vpop.permute.xlu0 %3232
      %3234 = vrot.lane.b32.xlu0 %v2451, 84
      %v3235 = vpop.permute.xlu0 %3234
      %vm3236 = vcmask 687104
      %v3237 = vsel %vm3236, %v3229, %v3231
      %v3238 = vsel %vm3236, %v3231, %v3233
      %v3239 = vsel %vm3236, %v3233, %v3235
      %v3241 = vsel %vm386, %v3227, 0
      %v3244 = vsel %vm390, %v3237, 0
      %v3247 = vsel %vm390, %v3238, 0
      %v3250 = vsel %vm390, %v3239, 0
      %3252 = vmatprep.subr.bf16.mxu0 %v3247
      %3253 = vmatpush1.bf16.msra.mxu0 %v3244
      %3254 = vmatprep.subr.bf16.mxu0 0
      %3255 = vmatpush1.bf16.msra.mxu0 0
      %3256 = vmatprep.subr.bf16.mxu0 0
      %3257 = vmatpush1.bf16.msra.mxu0 0
      %3258 = vmatprep.subr.bf16.mxu0 0
      %3259 = vmatpush1.bf16.msra.mxu0 0
      %3260 = vmatprep.subr.bf16.mxu0 0
      %3261 = vmatpush1.bf16.msra.mxu0 0
      %3262 = vmatprep.subr.bf16.mxu0 0
      %3263 = vmatpush1.bf16.msra.mxu0 0
      %3264 = vmatprep.subr.bf16.mxu0 0
      %3265 = vmatpush1.bf16.msra.mxu0 0
      %3266 = vmatprep.subr.bf16.mxu0 0
      %3267 = vmatpush1.bf16.msra.mxu0 0
      %3268 = vmatprep.subr.bf16.mxu0 0
      %3269 = vmatpush1.bf16.msra.mxu0 0
      %3270 = vmatprep.subr.bf16.mxu0 0
      %3271 = vmatpush1.bf16.msra.mxu0 0
      %3272 = vmatprep.subr.bf16.mxu0 0
      %3273 = vmatpush1.bf16.msra.mxu0 0
      %3274 = vmatprep.subr.bf16.mxu0 0
      %3275 = vmatpush1.bf16.msra.mxu0 0
      %3276 = vmatprep.subr.bf16.mxu0 0
      %3277 = vmatpush1.bf16.msra.mxu0 0
      %3278 = vmatprep.subr.bf16.mxu0 0
      %3279 = vmatpush1.bf16.msra.mxu0 0
      %3280 = vmatprep.subr.bf16.mxu0 0
      %3281 = vmatpush1.bf16.msra.mxu0 0
      %3282 = vmatprep.subr.bf16.mxu0 0
      %3283 = vmatpush1.bf16.msra.mxu0 0
      %3284 = vmatprep.mubr.bf16.mxu0 0
      %3285 = vmatmul.mubr.bf16.gmra.mrb[0].mxu0 %v3241
      %v3286 = vpop.f32.mrb[0].mxu0
      %v3287 = vadd.f32 0.0, %v3286
      %v3288 = vpop.f32.mrb[0].mxu0
      %v3289 = vadd.f32 0.0, %v3288
      %v3290 = vpop.f32.mrb[0].mxu0
      %v3291 = vpop.f32.mrb[0].mxu0
      %3292 = vdwg.mxu0
      %3293 = vmatprep.subr.bf16.mxu0 0
      %3294 = vmatpush1.bf16.msra.mxu0 %v3250
      %3295 = vmatprep.subr.bf16.mxu0 0
      %3296 = vmatpush1.bf16.msra.mxu0 0
      %3297 = vmatprep.subr.bf16.mxu0 0
      %3298 = vmatpush1.bf16.msra.mxu0 0
      %3299 = vmatprep.subr.bf16.mxu0 0
      %3300 = vmatpush1.bf16.msra.mxu0 0
      %3301 = vmatprep.subr.bf16.mxu0 0
      %3302 = vmatpush1.bf16.msra.mxu0 0
      %3303 = vmatprep.subr.bf16.mxu0 0
      %3304 = vmatpush1.bf16.msra.mxu0 0
      %3305 = vmatprep.subr.bf16.mxu0 0
      %3306 = vmatpush1.bf16.msra.mxu0 0
      %3307 = vmatprep.subr.bf16.mxu0 0
      %3308 = vmatpush1.bf16.msra.mxu0 0
      %3309 = vmatprep.subr.bf16.mxu0 0
      %3310 = vmatpush1.bf16.msra.mxu0 0
      %3311 = vmatprep.subr.bf16.mxu0 0
      %3312 = vmatpush1.bf16.msra.mxu0 0
      %3313 = vmatprep.subr.bf16.mxu0 0
      %3314 = vmatpush1.bf16.msra.mxu0 0
      %3315 = vmatprep.subr.bf16.mxu0 0
      %3316 = vmatpush1.bf16.msra.mxu0 0
      %3317 = vmatprep.subr.bf16.mxu0 0
      %3318 = vmatpush1.bf16.msra.mxu0 0
      %3319 = vmatprep.subr.bf16.mxu0 0
      %3320 = vmatpush1.bf16.msra.mxu0 0
      %3321 = vmatprep.subr.bf16.mxu0 0
      %3322 = vmatpush1.bf16.msra.mxu0 0
      %3323 = vmatprep.subr.bf16.mxu0 0
      %3324 = vmatpush1.bf16.msra.mxu0 0
      %3325 = vmatprep.mubr.bf16.mxu0 0
      %3326 = vmatmul.mubr.bf16.gmra.mrb[0].mxu0 %v3241
      %v3327 = vpop.f32.mrb[0].mxu0
      %v3328 = vadd.f32 0.0, %v3327
      %v3329 = vpop.f32.mrb[0].mxu0
      %v3330 = vpop.f32.mrb[0].mxu0
      %v3331 = vpop.f32.mrb[0].mxu0
      %3332 = vdwg.mxu0
      %v3333 = vadd.f32 %v3223, %v3287
      %v3334 = vadd.f32 %v3224, %v3289
      %v3335 = vadd.f32 %v3225, %v3328
      %s3336 = scalar_lea.vmem %s4, 52
      %v3337 = vld [vmem:[%s3336] sm:$0x3]
      %3338 = vrot.lane.b32.xlu0 %v2448, 81
      %v3339 = vpop.permute.xlu0 %3338
      %3340 = vrot.lane.b32.xlu0 %v2449, 81
      %v3341 = vpop.permute.xlu0 %3340
      %3342 = vrot.lane.b32.xlu0 %v2450, 81
      %v3343 = vpop.permute.xlu0 %3342
      %3344 = vrot.lane.b32.xlu0 %v2451, 81
      %v3345 = vpop.permute.xlu0 %3344
      %vm3346 = vcmask 662528
      %v3347 = vsel %vm3346, %v3339, %v3341
      %v3348 = vsel %vm3346, %v3341, %v3343
      %v3349 = vsel %vm3346, %v3343, %v3345
      %v3351 = vsel %vm386, %v3337, 0
      %v3354 = vsel %vm390, %v3347, 0
      %v3357 = vsel %vm390, %v3348, 0
      %v3360 = vsel %vm390, %v3349, 0
      %3362 = vmatprep.subr.bf16.mxu0 %v3357
      %3363 = vmatpush1.bf16.msra.mxu0 %v3354
      %3364 = vmatprep.subr.bf16.mxu0 0
      %3365 = vmatpush1.bf16.msra.mxu0 0
      %3366 = vmatprep.subr.bf16.mxu0 0
      %3367 = vmatpush1.bf16.msra.mxu0 0
      %3368 = vmatprep.subr.bf16.mxu0 0
      %3369 = vmatpush1.bf16.msra.mxu0 0
      %3370 = vmatprep.subr.bf16.mxu0 0
      %3371 = vmatpush1.bf16.msra.mxu0 0
      %3372 = vmatprep.subr.bf16.mxu0 0
      %3373 = vmatpush1.bf16.msra.mxu0 0
      %3374 = vmatprep.subr.bf16.mxu0 0
      %3375 = vmatpush1.bf16.msra.mxu0 0
      %3376 = vmatprep.subr.bf16.mxu0 0
      %3377 = vmatpush1.bf16.msra.mxu0 0
      %3378 = vmatprep.subr.bf16.mxu0 0
      %3379 = vmatpush1.bf16.msra.mxu0 0
      %3380 = vmatprep.subr.bf16.mxu0 0
      %3381 = vmatpush1.bf16.msra.mxu0 0
      %3382 = vmatprep.subr.bf16.mxu0 0
      %3383 = vmatpush1.bf16.msra.mxu0 0
      %3384 = vmatprep.subr.bf16.mxu0 0
      %3385 = vmatpush1.bf16.msra.mxu0 0
      %3386 = vmatprep.subr.bf16.mxu0 0
      %3387 = vmatpush1.bf16.msra.mxu0 0
      %3388 = vmatprep.subr.bf16.mxu0 0
      %3389 = vmatpush1.bf16.msra.mxu0 0
      %3390 = vmatprep.subr.bf16.mxu0 0
      %3391 = vmatpush1.bf16.msra.mxu0 0
      %3392 = vmatprep.subr.bf16.mxu0 0
      %3393 = vmatpush1.bf16.msra.mxu0 0
      %3394 = vmatprep.mubr.bf16.mxu0 0
      %3395 = vmatmul.mubr.bf16.gmra.mrb[0].mxu0 %v3351
      %v3396 = vpop.f32.mrb[0].mxu0
      %v3397 = vadd.f32 0.0, %v3396
      %v3398 = vpop.f32.mrb[0].mxu0
      %v3399 = vadd.f32 0.0, %v3398
      %v3400 = vpop.f32.mrb[0].mxu0
      %v3401 = vpop.f32.mrb[0].mxu0
      %3402 = vdwg.mxu0
      %3403 = vmatprep.subr.bf16.mxu0 0
      %3404 = vmatpush1.bf16.msra.mxu0 %v3360
      %3405 = vmatprep.subr.bf16.mxu0 0
      %3406 = vmatpush1.bf16.msra.mxu0 0
      %3407 = vmatprep.subr.bf16.mxu0 0
      %3408 = vmatpush1.bf16.msra.mxu0 0
      %3409 = vmatprep.subr.bf16.mxu0 0
      %3410 = vmatpush1.bf16.msra.mxu0 0
      %3411 = vmatprep.subr.bf16.mxu0 0
      %3412 = vmatpush1.bf16.msra.mxu0 0
      %3413 = vmatprep.subr.bf16.mxu0 0
      %3414 = vmatpush1.bf16.msra.mxu0 0
      %3415 = vmatprep.subr.bf16.mxu0 0
      %3416 = vmatpush1.bf16.msra.mxu0 0
      %3417 = vmatprep.subr.bf16.mxu0 0
      %3418 = vmatpush1.bf16.msra.mxu0 0
      %3419 = vmatprep.subr.bf16.mxu0 0
      %3420 = vmatpush1.bf16.msra.mxu0 0
      %3421 = vmatprep.subr.bf16.mxu0 0
      %3422 = vmatpush1.bf16.msra.mxu0 0
      %3423 = vmatprep.subr.bf16.mxu0 0
      %3424 = vmatpush1.bf16.msra.mxu0 0
      %3425 = vmatprep.subr.bf16.mxu0 0
      %3426 = vmatpush1.bf16.msra.mxu0 0
      %3427 = vmatprep.subr.bf16.mxu0 0
      %3428 = vmatpush1.bf16.msra.mxu0 0
      %3429 = vmatprep.subr.bf16.mxu0 0
      %3430 = vmatpush1.bf16.msra.mxu0 0
      %3431 = vmatprep.subr.bf16.mxu0 0
      %3432 = vmatpush1.bf16.msra.mxu0 0
      %3433 = vmatprep.subr.bf16.mxu0 0
      %3434 = vmatpush1.bf16.msra.mxu0 0
      %3435 = vmatprep.mubr.bf16.mxu0 0
      %3436 = vmatmul.mubr.bf16.gmra.mrb[0].mxu0 %v3351
      %v3437 = vpop.f32.mrb[0].mxu0
      %v3438 = vadd.f32 0.0, %v3437
      %v3439 = vpop.f32.mrb[0].mxu0
      %v3440 = vpop.f32.mrb[0].mxu0
      %v3441 = vpop.f32.mrb[0].mxu0
      %3442 = vdwg.mxu0
      %v3443 = vadd.f32 %v3333, %v3397
      %v3444 = vadd.f32 %v3334, %v3399
      %v3445 = vadd.f32 %v3335, %v3438
      %s3446 = scalar_lea.vmem %s2, 12
      %v3447 = vld [vmem:[%s3446] sm:$0xf]
      %3449 = vset.pattern.permute.xlu0 0
      %3450 = vperm.xlu0 %3449, %v3447
      %v3451 = vpop.permute.xlu0 %3450
      %v3453 = vunpack.c.l.s4 839922192
      %v3454 = vunpack.c.0.s8 %v3453
      %v3455 = vlaneseq
      %v3456 = vshrl.u32 %v3455, 7
      %v3457 = vsub.s32 %v3454, %v3456
      %v3458 = vrot.slane %v3451, %v3457
      %v3460 = vmul.f32 %v293, %v3458
      %v3461 = vmul.f32 %v294, %v3458
      %v3462 = vmul.f32 %v295, %v3458
      %s3463 = scalar_lea.vmem %s3, 12
      %v3464 = vld [vmem:[%s3463] sm:$0xf]
      %3466 = vset.pattern.permute.xlu0 0
      %3467 = vperm.xlu0 %3466, %v3464
      %v3468 = vpop.permute.xlu0 %3467
      %v3470 = vunpack.c.l.s4 839922192
      %v3471 = vunpack.c.0.s8 %v3470
      %v3472 = vlaneseq
      %v3473 = vshrl.u32 %v3472, 7
      %v3474 = vsub.s32 %v3471, %v3473
      %v3475 = vrot.slane %v3468, %v3474
      %v3477 = vadd.f32 %v3460, %v3475
      %v3478 = vadd.f32 %v3461, %v3475
      %v3479 = vadd.f32 %v3462, %v3475
      %v3480 = vmax.f32 %v3477, 0.0
      %v3481 = vmax.f32 %v3478, 0.0
      %v3482 = vmax.f32 %v3479, 0.0
      %v3483 = vmul.f32 %v3480, %v351
      %v3484 = vmul.f32 %v3481, %v352
      %v3485 = vmul.f32 %v3482, %v349
      %v3488 = vcombine.high %v3483, %v3483
      %v3489 = vcombine.high %v3484, %v3484
      %v3492 = vpack.c.bf16 %v3483, %v3483
      %v3493 = vpack.c.bf16 %v3488, %v3488
      %v3494 = vpack.c.bf16 %v3484, %v3484
      %v3495 = vpack.c.bf16 %v3489, %v3489
      %v3496 = vpack.c.bf16 %v3485, %v3485
      %s3497 = scalar_lea.vmem %s4, 54
      %v3498 = vld [vmem:[%s3497] sm:$0x3]
      %v3500 = vsel %vm386, %v3498, 0
      %v3503 = vsel %vm390, %v3492, 0
      %v3506 = vsel %vm390, %v3493, 0
      %v3509 = vsel %vm390, %v3494, 0
      %3511 = vmatprep.subr.bf16.mxu0 %v3506
      %3512 = vmatpush1.bf16.msra.mxu0 %v3503
      %3513 = vmatprep.subr.bf16.mxu0 0
      %3514 = vmatpush1.bf16.msra.mxu0 0
      %3515 = vmatprep.subr.bf16.mxu0 0
      %3516 = vmatpush1.bf16.msra.mxu0 0
      %3517 = vmatprep.subr.bf16.mxu0 0
      %3518 = vmatpush1.bf16.msra.mxu0 0
      %3519 = vmatprep.subr.bf16.mxu0 0
      %3520 = vmatpush1.bf16.msra.mxu0 0
      %3521 = vmatprep.subr.bf16.mxu0 0
      %3522 = vmatpush1.bf16.msra.mxu0 0
      %3523 = vmatprep.subr.bf16.mxu0 0
      %3524 = vmatpush1.bf16.msra.mxu0 0
      %3525 = vmatprep.subr.bf16.mxu0 0
      %3526 = vmatpush1.bf16.msra.mxu0 0
      %3527 = vmatprep.subr.bf16.mxu0 0
      %3528 = vmatpush1.bf16.msra.mxu0 0
      %3529 = vmatprep.subr.bf16.mxu0 0
      %3530 = vmatpush1.bf16.msra.mxu0 0
      %3531 = vmatprep.subr.bf16.mxu0 0
      %3532 = vmatpush1.bf16.msra.mxu0 0
      %3533 = vmatprep.subr.bf16.mxu0 0
      %3534 = vmatpush1.bf16.msra.mxu0 0
      %3535 = vmatprep.subr.bf16.mxu0 0
      %3536 = vmatpush1.bf16.msra.mxu0 0
      %3537 = vmatprep.subr.bf16.mxu0 0
      %3538 = vmatpush1.bf16.msra.mxu0 0
      %3539 = vmatprep.subr.bf16.mxu0 0
      %3540 = vmatpush1.bf16.msra.mxu0 0
      %3541 = vmatprep.subr.bf16.mxu0 0
      %3542 = vmatpush1.bf16.msra.mxu0 0
      %3543 = vmatprep.mubr.bf16.mxu0 0
      %3544 = vmatmul.mubr.bf16.gmra.mrb[0].mxu0 %v3500
      %v3545 = vpop.f32.mrb[0].mxu0
      %v3546 = vadd.f32 0.0, %v3545
      %v3547 = vpop.f32.mrb[0].mxu0
      %v3548 = vadd.f32 0.0, %v3547
      %v3549 = vpop.f32.mrb[0].mxu0
      %v3550 = vpop.f32.mrb[0].mxu0
      %3551 = vdwg.mxu0
      %3552 = vmatprep.subr.bf16.mxu0 0
      %3553 = vmatpush1.bf16.msra.mxu0 %v3509
      %3554 = vmatprep.subr.bf16.mxu0 0
      %3555 = vmatpush1.bf16.msra.mxu0 0
      %3556 = vmatprep.subr.bf16.mxu0 0
      %3557 = vmatpush1.bf16.msra.mxu0 0
      %3558 = vmatprep.subr.bf16.mxu0 0
      %3559 = vmatpush1.bf16.msra.mxu0 0
      %3560 = vmatprep.subr.bf16.mxu0 0
      %3561 = vmatpush1.bf16.msra.mxu0 0
      %3562 = vmatprep.subr.bf16.mxu0 0
      %3563 = vmatpush1.bf16.msra.mxu0 0
      %3564 = vmatprep.subr.bf16.mxu0 0
      %3565 = vmatpush1.bf16.msra.mxu0 0
      %3566 = vmatprep.subr.bf16.mxu0 0
      %3567 = vmatpush1.bf16.msra.mxu0 0
      %3568 = vmatprep.subr.bf16.mxu0 0
      %3569 = vmatpush1.bf16.msra.mxu0 0
      %3570 = vmatprep.subr.bf16.mxu0 0
      %3571 = vmatpush1.bf16.msra.mxu0 0
      %3572 = vmatprep.subr.bf16.mxu0 0
      %3573 = vmatpush1.bf16.msra.mxu0 0
      %3574 = vmatprep.subr.bf16.mxu0 0
      %3575 = vmatpush1.bf16.msra.mxu0 0
      %3576 = vmatprep.subr.bf16.mxu0 0
      %3577 = vmatpush1.bf16.msra.mxu0 0
      %3578 = vmatprep.subr.bf16.mxu0 0
      %3579 = vmatpush1.bf16.msra.mxu0 0
      %3580 = vmatprep.subr.bf16.mxu0 0
      %3581 = vmatpush1.bf16.msra.mxu0 0
      %3582 = vmatprep.subr.bf16.mxu0 0
      %3583 = vmatpush1.bf16.msra.mxu0 0
      %3584 = vmatprep.mubr.bf16.mxu0 0
      %3585 = vmatmul.mubr.bf16.gmra.mrb[0].mxu0 %v3500
      %v3586 = vpop.f32.mrb[0].mxu0
      %v3587 = vadd.f32 0.0, %v3586
      %v3588 = vpop.f32.mrb[0].mxu0
      %v3589 = vpop.f32.mrb[0].mxu0
      %v3590 = vpop.f32.mrb[0].mxu0
      %3591 = vdwg.mxu0
      %v3592 = vadd.f32 %v3443, %v3546
      %v3593 = vadd.f32 %v3444, %v3548
      %v3594 = vadd.f32 %v3445, %v3587
      %s3595 = scalar_lea.vmem %s4, 56
      %v3596 = vld [vmem:[%s3595] sm:$0x3]
      %3601 = vrot.lane.b32.xlu0 %v3492, 124
      %v3602 = vpop.permute.xlu0 %3601
      %3603 = vrot.lane.b32.xlu0 %v3493, 124
      %v3604 = vpop.permute.xlu0 %3603
      %3605 = vrot.lane.b32.xlu0 %v3494, 124
      %v3606 = vpop.permute.xlu0 %3605
      %3607 = vrot.lane.b32.xlu0 %v3495, 124
      %v3608 = vpop.permute.xlu0 %3607
      %vm3609 = vcmask 1014784
      %v3610 = vsel %vm3609, %v3602, %v3604
      %v3611 = vsel %vm3609, %v3604, %v3606
      %v3612 = vsel %vm3609, %v3606, %v3608
      %v3614 = vsel %vm386, %v3596, 0
      %v3617 = vsel %vm390, %v3610, 0
      %v3620 = vsel %vm390, %v3611, 0
      %v3623 = vsel %vm390, %v3612, 0
      %3625 = vmatprep.subr.bf16.mxu0 %v3620
      %3626 = vmatpush1.bf16.msra.mxu0 %v3617
      %3627 = vmatprep.subr.bf16.mxu0 0
      %3628 = vmatpush1.bf16.msra.mxu0 0
      %3629 = vmatprep.subr.bf16.mxu0 0
      %3630 = vmatpush1.bf16.msra.mxu0 0
      %3631 = vmatprep.subr.bf16.mxu0 0
      %3632 = vmatpush1.bf16.msra.mxu0 0
      %3633 = vmatprep.subr.bf16.mxu0 0
      %3634 = vmatpush1.bf16.msra.mxu0 0
      %3635 = vmatprep.subr.bf16.mxu0 0
      %3636 = vmatpush1.bf16.msra.mxu0 0
      %3637 = vmatprep.subr.bf16.mxu0 0
      %3638 = vmatpush1.bf16.msra.mxu0 0
      %3639 = vmatprep.subr.bf16.mxu0 0
      %3640 = vmatpush1.bf16.msra.mxu0 0
      %3641 = vmatprep.subr.bf16.mxu0 0
      %3642 = vmatpush1.bf16.msra.mxu0 0
      %3643 = vmatprep.subr.bf16.mxu0 0
      %3644 = vmatpush1.bf16.msra.mxu0 0
      %3645 = vmatprep.subr.bf16.mxu0 0
      %3646 = vmatpush1.bf16.msra.mxu0 0
      %3647 = vmatprep.subr.bf16.mxu0 0
      %3648 = vmatpush1.bf16.msra.mxu0 0
      %3649 = vmatprep.subr.bf16.mxu0 0
      %3650 = vmatpush1.bf16.msra.mxu0 0
      %3651 = vmatprep.subr.bf16.mxu0 0
      %3652 = vmatpush1.bf16.msra.mxu0 0
      %3653 = vmatprep.subr.bf16.mxu0 0
      %3654 = vmatpush1.bf16.msra.mxu0 0
      %3655 = vmatprep.subr.bf16.mxu0 0
      %3656 = vmatpush1.bf16.msra.mxu0 0
      %3657 = vmatprep.mubr.bf16.mxu0 0
      %3658 = vmatmul.mubr.bf16.gmra.mrb[0].mxu0 %v3614
      %v3659 = vpop.f32.mrb[0].mxu0
      %v3660 = vadd.f32 0.0, %v3659
      %v3661 = vpop.f32.mrb[0].mxu0
      %v3662 = vadd.f32 0.0, %v3661
      %v3663 = vpop.f32.mrb[0].mxu0
      %v3664 = vpop.f32.mrb[0].mxu0
      %3665 = vdwg.mxu0
      %3666 = vmatprep.subr.bf16.mxu0 0
      %3667 = vmatpush1.bf16.msra.mxu0 %v3623
      %3668 = vmatprep.subr.bf16.mxu0 0
      %3669 = vmatpush1.bf16.msra.mxu0 0
      %3670 = vmatprep.subr.bf16.mxu0 0
      %3671 = vmatpush1.bf16.msra.mxu0 0
      %3672 = vmatprep.subr.bf16.mxu0 0
      %3673 = vmatpush1.bf16.msra.mxu0 0
      %3674 = vmatprep.subr.bf16.mxu0 0
      %3675 = vmatpush1.bf16.msra.mxu0 0
      %3676 = vmatprep.subr.bf16.mxu0 0
      %3677 = vmatpush1.bf16.msra.mxu0 0
      %3678 = vmatprep.subr.bf16.mxu0 0
      %3679 = vmatpush1.bf16.msra.mxu0 0
      %3680 = vmatprep.subr.bf16.mxu0 0
      %3681 = vmatpush1.bf16.msra.mxu0 0
      %3682 = vmatprep.subr.bf16.mxu0 0
      %3683 = vmatpush1.bf16.msra.mxu0 0
      %3684 = vmatprep.subr.bf16.mxu0 0
      %3685 = vmatpush1.bf16.msra.mxu0 0
      %3686 = vmatprep.subr.bf16.mxu0 0
      %3687 = vmatpush1.bf16.msra.mxu0 0
      %3688 = vmatprep.subr.bf16.mxu0 0
      %3689 = vmatpush1.bf16.msra.mxu0 0
      %3690 = vmatprep.subr.bf16.mxu0 0
      %3691 = vmatpush1.bf16.msra.mxu0 0
      %3692 = vmatprep.subr.bf16.mxu0 0
      %3693 = vmatpush1.bf16.msra.mxu0 0
      %3694 = vmatprep.subr.bf16.mxu0 0
      %3695 = vmatpush1.bf16.msra.mxu0 0
      %3696 = vmatprep.subr.bf16.mxu0 0
      %3697 = vmatpush1.bf16.msra.mxu0 0
      %3698 = vmatprep.mubr.bf16.mxu0 0
      %3699 = vmatmul.mubr.bf16.gmra.mrb[0].mxu0 %v3614
      %v3700 = vpop.f32.mrb[0].mxu0
      %v3701 = vadd.f32 0.0, %v3700
      %v3702 = vpop.f32.mrb[0].mxu0
      %v3703 = vpop.f32.mrb[0].mxu0
      %v3704 = vpop.f32.mrb[0].mxu0
      %3705 = vdwg.mxu0
      %v3706 = vadd.f32 %v3592, %v3660
      %v3707 = vadd.f32 %v3593, %v3662
      %v3708 = vadd.f32 %v3594, %v3701
      %s3709 = scalar_lea.vmem %s4, 58
      %v3710 = vld [vmem:[%s3709] sm:$0x3]
      %3711 = vrot.lane.b32.xlu0 %v3492, 120
      %v3712 = vpop.permute.xlu0 %3711
      %3713 = vrot.lane.b32.xlu0 %v3493, 120
      %v3714 = vpop.permute.xlu0 %3713
      %3715 = vrot.lane.b32.xlu0 %v3494, 120
      %v3716 = vpop.permute.xlu0 %3715
      %3717 = vrot.lane.b32.xlu0 %v3495, 120
      %v3718 = vpop.permute.xlu0 %3717
      %vm3719 = vcmask 982016
      %v3720 = vsel %vm3719, %v3712, %v3714
      %v3721 = vsel %vm3719, %v3714, %v3716
      %v3722 = vsel %vm3719, %v3716, %v3718
      %v3724 = vsel %vm386, %v3710, 0
      %v3727 = vsel %vm390, %v3720, 0
      %v3730 = vsel %vm390, %v3721, 0
      %v3733 = vsel %vm390, %v3722, 0
      %3735 = vmatprep.subr.bf16.mxu0 %v3730
      %3736 = vmatpush1.bf16.msra.mxu0 %v3727
      %3737 = vmatprep.subr.bf16.mxu0 0
      %3738 = vmatpush1.bf16.msra.mxu0 0
      %3739 = vmatprep.subr.bf16.mxu0 0
      %3740 = vmatpush1.bf16.msra.mxu0 0
      %3741 = vmatprep.subr.bf16.mxu0 0
      %3742 = vmatpush1.bf16.msra.mxu0 0
      %3743 = vmatprep.subr.bf16.mxu0 0
      %3744 = vmatpush1.bf16.msra.mxu0 0
      %3745 = vmatprep.subr.bf16.mxu0 0
      %3746 = vmatpush1.bf16.msra.mxu0 0
      %3747 = vmatprep.subr.bf16.mxu0 0
      %3748 = vmatpush1.bf16.msra.mxu0 0
      %3749 = vmatprep.subr.bf16.mxu0 0
      %3750 = vmatpush1.bf16.msra.mxu0 0
      %3751 = vmatprep.subr.bf16.mxu0 0
      %3752 = vmatpush1.bf16.msra.mxu0 0
      %3753 = vmatprep.subr.bf16.mxu0 0
      %3754 = vmatpush1.bf16.msra.mxu0 0
      %3755 = vmatprep.subr.bf16.mxu0 0
      %3756 = vmatpush1.bf16.msra.mxu0 0
      %3757 = vmatprep.subr.bf16.mxu0 0
      %3758 = vmatpush1.bf16.msra.mxu0 0
      %3759 = vmatprep.subr.bf16.mxu0 0
      %3760 = vmatpush1.bf16.msra.mxu0 0
      %3761 = vmatprep.subr.bf16.mxu0 0
      %3762 = vmatpush1.bf16.msra.mxu0 0
      %3763 = vmatprep.subr.bf16.mxu0 0
      %3764 = vmatpush1.bf16.msra.mxu0 0
      %3765 = vmatprep.subr.bf16.mxu0 0
      %3766 = vmatpush1.bf16.msra.mxu0 0
      %3767 = vmatprep.mubr.bf16.mxu0 0
      %3768 = vmatmul.mubr.bf16.gmra.mrb[0].mxu0 %v3724
      %v3769 = vpop.f32.mrb[0].mxu0
      %v3770 = vadd.f32 0.0, %v3769
      %v3771 = vpop.f32.mrb[0].mxu0
      %v3772 = vadd.f32 0.0, %v3771
      %v3773 = vpop.f32.mrb[0].mxu0
      %v3774 = vpop.f32.mrb[0].mxu0
      %3775 = vdwg.mxu0
      %3776 = vmatprep.subr.bf16.mxu0 0
      %3777 = vmatpush1.bf16.msra.mxu0 %v3733
      %3778 = vmatprep.subr.bf16.mxu0 0
      %3779 = vmatpush1.bf16.msra.mxu0 0
      %3780 = vmatprep.subr.bf16.mxu0 0
      %3781 = vmatpush1.bf16.msra.mxu0 0
      %3782 = vmatprep.subr.bf16.mxu0 0
      %3783 = vmatpush1.bf16.msra.mxu0 0
      %3784 = vmatprep.subr.bf16.mxu0 0
      %3785 = vmatpush1.bf16.msra.mxu0 0
      %3786 = vmatprep.subr.bf16.mxu0 0
      %3787 = vmatpush1.bf16.msra.mxu0 0
      %3788 = vmatprep.subr.bf16.mxu0 0
      %3789 = vmatpush1.bf16.msra.mxu0 0
      %3790 = vmatprep.subr.bf16.mxu0 0
      %3791 = vmatpush1.bf16.msra.mxu0 0
      %3792 = vmatprep.subr.bf16.mxu0 0
      %3793 = vmatpush1.bf16.msra.mxu0 0
      %3794 = vmatprep.subr.bf16.mxu0 0
      %3795 = vmatpush1.bf16.msra.mxu0 0
      %3796 = vmatprep.subr.bf16.mxu0 0
      %3797 = vmatpush1.bf16.msra.mxu0 0
      %3798 = vmatprep.subr.bf16.mxu0 0
      %3799 = vmatpush1.bf16.msra.mxu0 0
      %3800 = vmatprep.subr.bf16.mxu0 0
      %3801 = vmatpush1.bf16.msra.mxu0 0
      %3802 = vmatprep.subr.bf16.mxu0 0
      %3803 = vmatpush1.bf16.msra.mxu0 0
      %3804 = vmatprep.subr.bf16.mxu0 0
      %3805 = vmatpush1.bf16.msra.mxu0 0
      %3806 = vmatprep.subr.bf16.mxu0 0
      %3807 = vmatpush1.bf16.msra.mxu0 0
      %3808 = vmatprep.mubr.bf16.mxu0 0
      %3809 = vmatmul.mubr.bf16.gmra.mrb[0].mxu0 %v3724
      %v3810 = vpop.f32.mrb[0].mxu0
      %v3811 = vadd.f32 0.0, %v3810
      %v3812 = vpop.f32.mrb[0].mxu0
      %v3813 = vpop.f32.mrb[0].mxu0
      %v3814 = vpop.f32.mrb[0].mxu0
      %3815 = vdwg.mxu0
      %v3816 = vadd.f32 %v3706, %v3770
      %v3817 = vadd.f32 %v3707, %v3772
      %v3818 = vadd.f32 %v3708, %v3811
      %s3819 = scalar_lea.vmem %s4, 60
      %v3820 = vld [vmem:[%s3819] sm:$0x3]
      %3821 = vrot.lane.b32.xlu0 %v3492, 32
      %v3822 = vpop.permute.xlu0 %3821
      %3823 = vrot.lane.b32.xlu0 %v3493, 32
      %v3824 = vpop.permute.xlu0 %3823
      %3825 = vrot.lane.b32.xlu0 %v3494, 32
      %v3826 = vpop.permute.xlu0 %3825
      %3827 = vrot.lane.b32.xlu0 %v3495, 32
      %v3828 = vpop.permute.xlu0 %3827
      %vm3829 = vcmask 261120
      %v3830 = vsel %vm3829, %v3822, %v3824
      %v3831 = vsel %vm3829, %v3824, %v3826
      %v3832 = vsel %vm3829, %v3826, %v3828
      %v3834 = vsel %vm386, %v3820, 0
      %v3837 = vsel %vm390, %v3830, 0
      %v3840 = vsel %vm390, %v3831, 0
      %v3843 = vsel %vm390, %v3832, 0
      %3845 = vmatprep.subr.bf16.mxu0 %v3840
      %3846 = vmatpush1.bf16.msra.mxu0 %v3837
      %3847 = vmatprep.subr.bf16.mxu0 0
      %3848 = vmatpush1.bf16.msra.mxu0 0
      %3849 = vmatprep.subr.bf16.mxu0 0
      %3850 = vmatpush1.bf16.msra.mxu0 0
      %3851 = vmatprep.subr.bf16.mxu0 0
      %3852 = vmatpush1.bf16.msra.mxu0 0
      %3853 = vmatprep.subr.bf16.mxu0 0
      %3854 = vmatpush1.bf16.msra.mxu0 0
      %3855 = vmatprep.subr.bf16.mxu0 0
      %3856 = vmatpush1.bf16.msra.mxu0 0
      %3857 = vmatprep.subr.bf16.mxu0 0
      %3858 = vmatpush1.bf16.msra.mxu0 0
      %3859 = vmatprep.subr.bf16.mxu0 0
      %3860 = vmatpush1.bf16.msra.mxu0 0
      %3861 = vmatprep.subr.bf16.mxu0 0
      %3862 = vmatpush1.bf16.msra.mxu0 0
      %3863 = vmatprep.subr.bf16.mxu0 0
      %3864 = vmatpush1.bf16.msra.mxu0 0
      %3865 = vmatprep.subr.bf16.mxu0 0
      %3866 = vmatpush1.bf16.msra.mxu0 0
      %3867 = vmatprep.subr.bf16.mxu0 0
      %3868 = vmatpush1.bf16.msra.mxu0 0
      %3869 = vmatprep.subr.bf16.mxu0 0
      %3870 = vmatpush1.bf16.msra.mxu0 0
      %3871 = vmatprep.subr.bf16.mxu0 0
      %3872 = vmatpush1.bf16.msra.mxu0 0
      %3873 = vmatprep.subr.bf16.mxu0 0
      %3874 = vmatpush1.bf16.msra.mxu0 0
      %3875 = vmatprep.subr.bf16.mxu0 0
      %3876 = vmatpush1.bf16.msra.mxu0 0
      %3877 = vmatprep.mubr.bf16.mxu0 0
      %3878 = vmatmul.mubr.bf16.gmra.mrb[0].mxu0 %v3834
      %v3879 = vpop.f32.mrb[0].mxu0
      %v3880 = vadd.f32 0.0, %v3879
      %v3881 = vpop.f32.mrb[0].mxu0
      %v3882 = vadd.f32 0.0, %v3881
      %v3883 = vpop.f32.mrb[0].mxu0
      %v3884 = vpop.f32.mrb[0].mxu0
      %3885 = vdwg.mxu0
      %3886 = vmatprep.subr.bf16.mxu0 0
      %3887 = vmatpush1.bf16.msra.mxu0 %v3843
      %3888 = vmatprep.subr.bf16.mxu0 0
      %3889 = vmatpush1.bf16.msra.mxu0 0
      %3890 = vmatprep.subr.bf16.mxu0 0
      %3891 = vmatpush1.bf16.msra.mxu0 0
      %3892 = vmatprep.subr.bf16.mxu0 0
      %3893 = vmatpush1.bf16.msra.mxu0 0
      %3894 = vmatprep.subr.bf16.mxu0 0
      %3895 = vmatpush1.bf16.msra.mxu0 0
      %3896 = vmatprep.subr.bf16.mxu0 0
      %3897 = vmatpush1.bf16.msra.mxu0 0
      %3898 = vmatprep.subr.bf16.mxu0 0
      %3899 = vmatpush1.bf16.msra.mxu0 0
      %3900 = vmatprep.subr.bf16.mxu0 0
      %3901 = vmatpush1.bf16.msra.mxu0 0
      %3902 = vmatprep.subr.bf16.mxu0 0
      %3903 = vmatpush1.bf16.msra.mxu0 0
      %3904 = vmatprep.subr.bf16.mxu0 0
      %3905 = vmatpush1.bf16.msra.mxu0 0
      %3906 = vmatprep.subr.bf16.mxu0 0
      %3907 = vmatpush1.bf16.msra.mxu0 0
      %3908 = vmatprep.subr.bf16.mxu0 0
      %3909 = vmatpush1.bf16.msra.mxu0 0
      %3910 = vmatprep.subr.bf16.mxu0 0
      %3911 = vmatpush1.bf16.msra.mxu0 0
      %3912 = vmatprep.subr.bf16.mxu0 0
      %3913 = vmatpush1.bf16.msra.mxu0 0
      %3914 = vmatprep.subr.bf16.mxu0 0
      %3915 = vmatpush1.bf16.msra.mxu0 0
      %3916 = vmatprep.subr.bf16.mxu0 0
      %3917 = vmatpush1.bf16.msra.mxu0 0
      %3918 = vmatprep.mubr.bf16.mxu0 0
      %3919 = vmatmul.mubr.bf16.gmra.mrb[0].mxu0 %v3834
      %v3920 = vpop.f32.mrb[0].mxu0
      %v3921 = vadd.f32 0.0, %v3920
      %v3922 = vpop.f32.mrb[0].mxu0
      %v3923 = vpop.f32.mrb[0].mxu0
      %v3924 = vpop.f32.mrb[0].mxu0
      %3925 = vdwg.mxu0
      %v3926 = vadd.f32 %v3816, %v3880
      %v3927 = vadd.f32 %v3817, %v3882
      %v3928 = vadd.f32 %v3818, %v3921
      %s3929 = scalar_lea.vmem %s4, 62
      %v3930 = vld [vmem:[%s3929] sm:$0x3]
      %3931 = vrot.lane.b32.xlu0 %v3492, 28
      %v3932 = vpop.permute.xlu0 %3931
      %3933 = vrot.lane.b32.xlu0 %v3493, 28
      %v3934 = vpop.permute.xlu0 %3933
      %3935 = vrot.lane.b32.xlu0 %v3494, 28
      %v3936 = vpop.permute.xlu0 %3935
      %3937 = vrot.lane.b32.xlu0 %v3495, 28
      %v3938 = vpop.permute.xlu0 %3937
      %v3939 = vsel %vm816, %v3932, %v3934
      %v3940 = vsel %vm816, %v3934, %v3936
      %v3941 = vsel %vm816, %v3936, %v3938
      %v3943 = vsel %vm386, %v3930, 0
      %v3946 = vsel %vm390, %v3939, 0
      %v3949 = vsel %vm390, %v3940, 0
      %v3952 = vsel %vm390, %v3941, 0
      %3954 = vmatprep.subr.bf16.mxu0 %v3949
      %3955 = vmatpush1.bf16.msra.mxu0 %v3946
      %3956 = vmatprep.subr.bf16.mxu0 0
      %3957 = vmatpush1.bf16.msra.mxu0 0
      %3958 = vmatprep.subr.bf16.mxu0 0
      %3959 = vmatpush1.bf16.msra.mxu0 0
      %3960 = vmatprep.subr.bf16.mxu0 0
      %3961 = vmatpush1.bf16.msra.mxu0 0
      %3962 = vmatprep.subr.bf16.mxu0 0
      %3963 = vmatpush1.bf16.msra.mxu0 0
      %3964 = vmatprep.subr.bf16.mxu0 0
      %3965 = vmatpush1.bf16.msra.mxu0 0
      %3966 = vmatprep.subr.bf16.mxu0 0
      %3967 = vmatpush1.bf16.msra.mxu0 0
      %3968 = vmatprep.subr.bf16.mxu0 0
      %3969 = vmatpush1.bf16.msra.mxu0 0
      %3970 = vmatprep.subr.bf16.mxu0 0
      %3971 = vmatpush1.bf16.msra.mxu0 0
      %3972 = vmatprep.subr.bf16.mxu0 0
      %3973 = vmatpush1.bf16.msra.mxu0 0
      %3974 = vmatprep.subr.bf16.mxu0 0
      %3975 = vmatpush1.bf16.msra.mxu0 0
      %3976 = vmatprep.subr.bf16.mxu0 0
      %3977 = vmatpush1.bf16.msra.mxu0 0
      %3978 = vmatprep.subr.bf16.mxu0 0
      %3979 = vmatpush1.bf16.msra.mxu0 0
      %3980 = vmatprep.subr.bf16.mxu0 0
      %3981 = vmatpush1.bf16.msra.mxu0 0
      %3982 = vmatprep.subr.bf16.mxu0 0
      %3983 = vmatpush1.bf16.msra.mxu0 0
      %3984 = vmatprep.subr.bf16.mxu0 0
      %3985 = vmatpush1.bf16.msra.mxu0 0
      %3986 = vmatprep.mubr.bf16.mxu0 0
      %3987 = vmatmul.mubr.bf16.gmra.mrb[0].mxu0 %v3943
      %v3988 = vpop.f32.mrb[0].mxu0
      %v3989 = vadd.f32 0.0, %v3988
      %v3990 = vpop.f32.mrb[0].mxu0
      %v3991 = vadd.f32 0.0, %v3990
      %v3992 = vpop.f32.mrb[0].mxu0
      %v3993 = vpop.f32.mrb[0].mxu0
      %3994 = vdwg.mxu0
      %3995 = vmatprep.subr.bf16.mxu0 0
      %3996 = vmatpush1.bf16.msra.mxu0 %v3952
      %3997 = vmatprep.subr.bf16.mxu0 0
      %3998 = vmatpush1.bf16.msra.mxu0 0
      %3999 = vmatprep.subr.bf16.mxu0 0
      %4000 = vmatpush1.bf16.msra.mxu0 0
      %4001 = vmatprep.subr.bf16.mxu0 0
      %4002 = vmatpush1.bf16.msra.mxu0 0
      %4003 = vmatprep.subr.bf16.mxu0 0
      %4004 = vmatpush1.bf16.msra.mxu0 0
      %4005 = vmatprep.subr.bf16.mxu0 0
      %4006 = vmatpush1.bf16.msra.mxu0 0
      %4007 = vmatprep.subr.bf16.mxu0 0
      %4008 = vmatpush1.bf16.msra.mxu0 0
      %4009 = vmatprep.subr.bf16.mxu0 0
      %4010 = vmatpush1.bf16.msra.mxu0 0
      %4011 = vmatprep.subr.bf16.mxu0 0
      %4012 = vmatpush1.bf16.msra.mxu0 0
      %4013 = vmatprep.subr.bf16.mxu0 0
      %4014 = vmatpush1.bf16.msra.mxu0 0
      %4015 = vmatprep.subr.bf16.mxu0 0
      %4016 = vmatpush1.bf16.msra.mxu0 0
      %4017 = vmatprep.subr.bf16.mxu0 0
      %4018 = vmatpush1.bf16.msra.mxu0 0
      %4019 = vmatprep.subr.bf16.mxu0 0
      %4020 = vmatpush1.bf16.msra.mxu0 0
      %4021 = vmatprep.subr.bf16.mxu0 0
      %4022 = vmatpush1.bf16.msra.mxu0 0
      %4023 = vmatprep.subr.bf16.mxu0 0
      %4024 = vmatpush1.bf16.msra.mxu0 0
      %4025 = vmatprep.subr.bf16.mxu0 0
      %4026 = vmatpush1.bf16.msra.mxu0 0
      %4027 = vmatprep.mubr.bf16.mxu0 0
      %4028 = vmatmul.mubr.bf16.gmra.mrb[0].mxu0 %v3943
      %v4029 = vpop.f32.mrb[0].mxu0
      %v4030 = vadd.f32 0.0, %v4029
      %v4031 = vpop.f32.mrb[0].mxu0
      %v4032 = vpop.f32.mrb[0].mxu0
      %v4033 = vpop.f32.mrb[0].mxu0
      %4034 = vdwg.mxu0
      %v4035 = vadd.f32 %v3926, %v3989
      %v4036 = vadd.f32 %v3927, %v3991
      %v4037 = vadd.f32 %v3928, %v4030
      %s4038 = scalar_lea.vmem %s4, 64
      %v4039 = vld [vmem:[%s4038] sm:$0x3]
      %4040 = vrot.lane.b32.xlu0 %v3492, 24
      %v4041 = vpop.permute.xlu0 %4040
      %4042 = vrot.lane.b32.xlu0 %v3493, 24
      %v4043 = vpop.permute.xlu0 %4042
      %4044 = vrot.lane.b32.xlu0 %v3494, 24
      %v4045 = vpop.permute.xlu0 %4044
      %4046 = vrot.lane.b32.xlu0 %v3495, 24
      %v4047 = vpop.permute.xlu0 %4046
      %vm4048 = vcmask 195584
      %v4049 = vsel %vm4048, %v4041, %v4043
      %v4050 = vsel %vm4048, %v4043, %v4045
      %v4051 = vsel %vm4048, %v4045, %v4047
      %v4053 = vsel %vm386, %v4039, 0
      %v4056 = vsel %vm390, %v4049, 0
      %v4059 = vsel %vm390, %v4050, 0
      %v4062 = vsel %vm390, %v4051, 0
      %4064 = vmatprep.subr.bf16.mxu0 %v4059
      %4065 = vmatpush1.bf16.msra.mxu0 %v4056
      %4066 = vmatprep.subr.bf16.mxu0 0
      %4067 = vmatpush1.bf16.msra.mxu0 0
      %4068 = vmatprep.subr.bf16.mxu0 0
      %4069 = vmatpush1.bf16.msra.mxu0 0
      %4070 = vmatprep.subr.bf16.mxu0 0
      %4071 = vmatpush1.bf16.msra.mxu0 0
      %4072 = vmatprep.subr.bf16.mxu0 0
      %4073 = vmatpush1.bf16.msra.mxu0 0
      %4074 = vmatprep.subr.bf16.mxu0 0
      %4075 = vmatpush1.bf16.msra.mxu0 0
      %4076 = vmatprep.subr.bf16.mxu0 0
      %4077 = vmatpush1.bf16.msra.mxu0 0
      %4078 = vmatprep.subr.bf16.mxu0 0
      %4079 = vmatpush1.bf16.msra.mxu0 0
      %4080 = vmatprep.subr.bf16.mxu0 0
      %4081 = vmatpush1.bf16.msra.mxu0 0
      %4082 = vmatprep.subr.bf16.mxu0 0
      %4083 = vmatpush1.bf16.msra.mxu0 0
      %4084 = vmatprep.subr.bf16.mxu0 0
      %4085 = vmatpush1.bf16.msra.mxu0 0
      %4086 = vmatprep.subr.bf16.mxu0 0
      %4087 = vmatpush1.bf16.msra.mxu0 0
      %4088 = vmatprep.subr.bf16.mxu0 0
      %4089 = vmatpush1.bf16.msra.mxu0 0
      %4090 = vmatprep.subr.bf16.mxu0 0
      %4091 = vmatpush1.bf16.msra.mxu0 0
      %4092 = vmatprep.subr.bf16.mxu0 0
      %4093 = vmatpush1.bf16.msra.mxu0 0
      %4094 = vmatprep.subr.bf16.mxu0 0
      %4095 = vmatpush1.bf16.msra.mxu0 0
      %4096 = vmatprep.mubr.bf16.mxu0 0
      %4097 = vmatmul.mubr.bf16.gmra.mrb[0].mxu0 %v4053
      %v4098 = vpop.f32.mrb[0].mxu0
      %v4099 = vadd.f32 0.0, %v4098
      %v4100 = vpop.f32.mrb[0].mxu0
      %v4101 = vadd.f32 0.0, %v4100
      %v4102 = vpop.f32.mrb[0].mxu0
      %v4103 = vpop.f32.mrb[0].mxu0
      %4104 = vdwg.mxu0
      %4105 = vmatprep.subr.bf16.mxu0 0
      %4106 = vmatpush1.bf16.msra.mxu0 %v4062
      %4107 = vmatprep.subr.bf16.mxu0 0
      %4108 = vmatpush1.bf16.msra.mxu0 0
      %4109 = vmatprep.subr.bf16.mxu0 0
      %4110 = vmatpush1.bf16.msra.mxu0 0
      %4111 = vmatprep.subr.bf16.mxu0 0
      %4112 = vmatpush1.bf16.msra.mxu0 0
      %4113 = vmatprep.subr.bf16.mxu0 0
      %4114 = vmatpush1.bf16.msra.mxu0 0
      %4115 = vmatprep.subr.bf16.mxu0 0
      %4116 = vmatpush1.bf16.msra.mxu0 0
      %4117 = vmatprep.subr.bf16.mxu0 0
      %4118 = vmatpush1.bf16.msra.mxu0 0
      %4119 = vmatprep.subr.bf16.mxu0 0
      %4120 = vmatpush1.bf16.msra.mxu0 0
      %4121 = vmatprep.subr.bf16.mxu0 0
      %4122 = vmatpush1.bf16.msra.mxu0 0
      %4123 = vmatprep.subr.bf16.mxu0 0
      %4124 = vmatpush1.bf16.msra.mxu0 0
      %4125 = vmatprep.subr.bf16.mxu0 0
      %4126 = vmatpush1.bf16.msra.mxu0 0
      %4127 = vmatprep.subr.bf16.mxu0 0
      %4128 = vmatpush1.bf16.msra.mxu0 0
      %4129 = vmatprep.subr.bf16.mxu0 0
      %4130 = vmatpush1.bf16.msra.mxu0 0
      %4131 = vmatprep.subr.bf16.mxu0 0
      %4132 = vmatpush1.bf16.msra.mxu0 0
      %4133 = vmatprep.subr.bf16.mxu0 0
      %4134 = vmatpush1.bf16.msra.mxu0 0
      %4135 = vmatprep.subr.bf16.mxu0 0
      %4136 = vmatpush1.bf16.msra.mxu0 0
      %4137 = vmatprep.mubr.bf16.mxu0 0
      %4138 = vmatmul.mubr.bf16.gmra.mrb[0].mxu0 %v4053
      %v4139 = vpop.f32.mrb[0].mxu0
      %v4140 = vadd.f32 0.0, %v4139
      %v4141 = vpop.f32.mrb[0].mxu0
      %v4142 = vpop.f32.mrb[0].mxu0
      %v4143 = vpop.f32.mrb[0].mxu0
      %4144 = vdwg.mxu0
      %v4145 = vadd.f32 %v4035, %v4099
      %v4146 = vadd.f32 %v4036, %v4101
      %v4147 = vadd.f32 %v4037, %v4140
      %s4148 = scalar_lea.vmem %s4, 66
      %v4149 = vld [vmem:[%s4148] sm:$0x3]
      %4151 = vrot.lane.b32.xlu0 %v3493, 64
      %v4152 = vpop.permute.xlu0 %4151
      %4153 = vrot.lane.b32.xlu0 %v3494, 64
      %v4154 = vpop.permute.xlu0 %4153
      %4155 = vrot.lane.b32.xlu0 %v3495, 64
      %v4156 = vpop.permute.xlu0 %4155
      %4157 = vrot.lane.b32.xlu0 %v3496, 64
      %v4158 = vpop.permute.xlu0 %4157
      %vm4159 = vcmask 523264
      %v4160 = vsel %vm4159, %v4152, %v4154
      %v4161 = vsel %vm4159, %v4154, %v4156
      %v4162 = vsel %vm4159, %v4156, %v4158
      %v4164 = vsel %vm386, %v4149, 0
      %v4167 = vsel %vm390, %v4160, 0
      %v4170 = vsel %vm390, %v4161, 0
      %v4173 = vsel %vm390, %v4162, 0
      %4175 = vmatprep.subr.bf16.mxu0 %v4170
      %4176 = vmatpush1.bf16.msra.mxu0 %v4167
      %4177 = vmatprep.subr.bf16.mxu0 0
      %4178 = vmatpush1.bf16.msra.mxu0 0
      %4179 = vmatprep.subr.bf16.mxu0 0
      %4180 = vmatpush1.bf16.msra.mxu0 0
      %4181 = vmatprep.subr.bf16.mxu0 0
      %4182 = vmatpush1.bf16.msra.mxu0 0
      %4183 = vmatprep.subr.bf16.mxu0 0
      %4184 = vmatpush1.bf16.msra.mxu0 0
      %4185 = vmatprep.subr.bf16.mxu0 0
      %4186 = vmatpush1.bf16.msra.mxu0 0
      %4187 = vmatprep.subr.bf16.mxu0 0
      %4188 = vmatpush1.bf16.msra.mxu0 0
      %4189 = vmatprep.subr.bf16.mxu0 0
      %4190 = vmatpush1.bf16.msra.mxu0 0
      %4191 = vmatprep.subr.bf16.mxu0 0
      %4192 = vmatpush1.bf16.msra.mxu0 0
      %4193 = vmatprep.subr.bf16.mxu0 0
      %4194 = vmatpush1.bf16.msra.mxu0 0
      %4195 = vmatprep.subr.bf16.mxu0 0
      %4196 = vmatpush1.bf16.msra.mxu0 0
      %4197 = vmatprep.subr.bf16.mxu0 0
      %4198 = vmatpush1.bf16.msra.mxu0 0
      %4199 = vmatprep.subr.bf16.mxu0 0
      %4200 = vmatpush1.bf16.msra.mxu0 0
      %4201 = vmatprep.subr.bf16.mxu0 0
      %4202 = vmatpush1.bf16.msra.mxu0 0
      %4203 = vmatprep.subr.bf16.mxu0 0
      %4204 = vmatpush1.bf16.msra.mxu0 0
      %4205 = vmatprep.subr.bf16.mxu0 0
      %4206 = vmatpush1.bf16.msra.mxu0 0
      %4207 = vmatprep.mubr.bf16.mxu0 0
      %4208 = vmatmul.mubr.bf16.gmra.mrb[0].mxu0 %v4164
      %v4209 = vpop.f32.mrb[0].mxu0
      %v4210 = vadd.f32 0.0, %v4209
      %v4211 = vpop.f32.mrb[0].mxu0
      %v4212 = vadd.f32 0.0, %v4211
      %v4213 = vpop.f32.mrb[0].mxu0
      %v4214 = vpop.f32.mrb[0].mxu0
      %4215 = vdwg.mxu0
      %4216 = vmatprep.subr.bf16.mxu0 0
      %4217 = vmatpush1.bf16.msra.mxu0 %v4173
      %4218 = vmatprep.subr.bf16.mxu0 0
      %4219 = vmatpush1.bf16.msra.mxu0 0
      %4220 = vmatprep.subr.bf16.mxu0 0
      %4221 = vmatpush1.bf16.msra.mxu0 0
      %4222 = vmatprep.subr.bf16.mxu0 0
      %4223 = vmatpush1.bf16.msra.mxu0 0
      %4224 = vmatprep.subr.bf16.mxu0 0
      %4225 = vmatpush1.bf16.msra.mxu0 0
      %4226 = vmatprep.subr.bf16.mxu0 0
      %4227 = vmatpush1.bf16.msra.mxu0 0
      %4228 = vmatprep.subr.bf16.mxu0 0
      %4229 = vmatpush1.bf16.msra.mxu0 0
      %4230 = vmatprep.subr.bf16.mxu0 0
      %4231 = vmatpush1.bf16.msra.mxu0 0
      %4232 = vmatprep.subr.bf16.mxu0 0
      %4233 = vmatpush1.bf16.msra.mxu0 0
      %4234 = vmatprep.subr.bf16.mxu0 0
      %4235 = vmatpush1.bf16.msra.mxu0 0
      %4236 = vmatprep.subr.bf16.mxu0 0
      %4237 = vmatpush1.bf16.msra.mxu0 0
      %4238 = vmatprep.subr.bf16.mxu0 0
      %4239 = vmatpush1.bf16.msra.mxu0 0
      %4240 = vmatprep.subr.bf16.mxu0 0
      %4241 = vmatpush1.bf16.msra.mxu0 0
      %4242 = vmatprep.subr.bf16.mxu0 0
      %4243 = vmatpush1.bf16.msra.mxu0 0
      %4244 = vmatprep.subr.bf16.mxu0 0
      %4245 = vmatpush1.bf16.msra.mxu0 0
      %4246 = vmatprep.subr.bf16.mxu0 0
      %4247 = vmatpush1.bf16.msra.mxu0 0
      %4248 = vmatprep.mubr.bf16.mxu0 0
      %4249 = vmatmul.mubr.bf16.gmra.mrb[0].mxu0 %v4164
      %v4250 = vpop.f32.mrb[0].mxu0
      %v4251 = vadd.f32 0.0, %v4250
      %v4252 = vpop.f32.mrb[0].mxu0
      %v4253 = vpop.f32.mrb[0].mxu0
      %v4254 = vpop.f32.mrb[0].mxu0
      %4255 = vdwg.mxu0
      %v4256 = vadd.f32 %v4145, %v4210
      %v4257 = vadd.f32 %v4146, %v4212
      %v4258 = vadd.f32 %v4147, %v4251
      %s4259 = scalar_lea.vmem %s4, 68
      %v4260 = vld [vmem:[%s4259] sm:$0x3]
      %4261 = vrot.lane.b32.xlu0 %v3493, 60
      %v4262 = vpop.permute.xlu0 %4261
      %4263 = vrot.lane.b32.xlu0 %v3494, 60
      %v4264 = vpop.permute.xlu0 %4263
      %4265 = vrot.lane.b32.xlu0 %v3495, 60
      %v4266 = vpop.permute.xlu0 %4265
      %4267 = vrot.lane.b32.xlu0 %v3496, 60
      %v4268 = vpop.permute.xlu0 %4267
      %vm4269 = vcmask 490496
      %v4270 = vsel %vm4269, %v4262, %v4264
      %v4271 = vsel %vm4269, %v4264, %v4266
      %v4272 = vsel %vm4269, %v4266, %v4268
      %v4274 = vsel %vm386, %v4260, 0
      %v4277 = vsel %vm390, %v4270, 0
      %v4280 = vsel %vm390, %v4271, 0
      %v4283 = vsel %vm390, %v4272, 0
      %4285 = vmatprep.subr.bf16.mxu0 %v4280
      %4286 = vmatpush1.bf16.msra.mxu0 %v4277
      %4287 = vmatprep.subr.bf16.mxu0 0
      %4288 = vmatpush1.bf16.msra.mxu0 0
      %4289 = vmatprep.subr.bf16.mxu0 0
      %4290 = vmatpush1.bf16.msra.mxu0 0
      %4291 = vmatprep.subr.bf16.mxu0 0
      %4292 = vmatpush1.bf16.msra.mxu0 0
      %4293 = vmatprep.subr.bf16.mxu0 0
      %4294 = vmatpush1.bf16.msra.mxu0 0
      %4295 = vmatprep.subr.bf16.mxu0 0
      %4296 = vmatpush1.bf16.msra.mxu0 0
      %4297 = vmatprep.subr.bf16.mxu0 0
      %4298 = vmatpush1.bf16.msra.mxu0 0
      %4299 = vmatprep.subr.bf16.mxu0 0
      %4300 = vmatpush1.bf16.msra.mxu0 0
      %4301 = vmatprep.subr.bf16.mxu0 0
      %4302 = vmatpush1.bf16.msra.mxu0 0
      %4303 = vmatprep.subr.bf16.mxu0 0
      %4304 = vmatpush1.bf16.msra.mxu0 0
      %4305 = vmatprep.subr.bf16.mxu0 0
      %4306 = vmatpush1.bf16.msra.mxu0 0
      %4307 = vmatprep.subr.bf16.mxu0 0
      %4308 = vmatpush1.bf16.msra.mxu0 0
      %4309 = vmatprep.subr.bf16.mxu0 0
      %4310 = vmatpush1.bf16.msra.mxu0 0
      %4311 = vmatprep.subr.bf16.mxu0 0
      %4312 = vmatpush1.bf16.msra.mxu0 0
      %4313 = vmatprep.subr.bf16.mxu0 0
      %4314 = vmatpush1.bf16.msra.mxu0 0
      %4315 = vmatprep.subr.bf16.mxu0 0
      %4316 = vmatpush1.bf16.msra.mxu0 0
      %4317 = vmatprep.mubr.bf16.mxu0 0
      %4318 = vmatmul.mubr.bf16.gmra.mrb[0].mxu0 %v4274
      %v4319 = vpop.f32.mrb[0].mxu0
      %v4320 = vadd.f32 0.0, %v4319
      %v4321 = vpop.f32.mrb[0].mxu0
      %v4322 = vadd.f32 0.0, %v4321
      %v4323 = vpop.f32.mrb[0].mxu0
      %v4324 = vpop.f32.mrb[0].mxu0
      %4325 = vdwg.mxu0
      %4326 = vmatprep.subr.bf16.mxu0 0
      %4327 = vmatpush1.bf16.msra.mxu0 %v4283
      %4328 = vmatprep.subr.bf16.mxu0 0
      %4329 = vmatpush1.bf16.msra.mxu0 0
      %4330 = vmatprep.subr.bf16.mxu0 0
      %4331 = vmatpush1.bf16.msra.mxu0 0
      %4332 = vmatprep.subr.bf16.mxu0 0
      %4333 = vmatpush1.bf16.msra.mxu0 0
      %4334 = vmatprep.subr.bf16.mxu0 0
      %4335 = vmatpush1.bf16.msra.mxu0 0
      %4336 = vmatprep.subr.bf16.mxu0 0
      %4337 = vmatpush1.bf16.msra.mxu0 0
      %4338 = vmatprep.subr.bf16.mxu0 0
      %4339 = vmatpush1.bf16.msra.mxu0 0
      %4340 = vmatprep.subr.bf16.mxu0 0
      %4341 = vmatpush1.bf16.msra.mxu0 0
      %4342 = vmatprep.subr.bf16.mxu0 0
      %4343 = vmatpush1.bf16.msra.mxu0 0
      %4344 = vmatprep.subr.bf16.mxu0 0
      %4345 = vmatpush1.bf16.msra.mxu0 0
      %4346 = vmatprep.subr.bf16.mxu0 0
      %4347 = vmatpush1.bf16.msra.mxu0 0
      %4348 = vmatprep.subr.bf16.mxu0 0
      %4349 = vmatpush1.bf16.msra.mxu0 0
      %4350 = vmatprep.subr.bf16.mxu0 0
      %4351 = vmatpush1.bf16.msra.mxu0 0
      %4352 = vmatprep.subr.bf16.mxu0 0
      %4353 = vmatpush1.bf16.msra.mxu0 0
      %4354 = vmatprep.subr.bf16.mxu0 0
      %4355 = vmatpush1.bf16.msra.mxu0 0
      %4356 = vmatprep.subr.bf16.mxu0 0
      %4357 = vmatpush1.bf16.msra.mxu0 0
      %4358 = vmatprep.mubr.bf16.mxu0 0
      %4359 = vmatmul.mubr.bf16.gmra.mrb[0].mxu0 %v4274
      %v4360 = vpop.f32.mrb[0].mxu0
      %v4361 = vadd.f32 0.0, %v4360
      %v4362 = vpop.f32.mrb[0].mxu0
      %v4363 = vpop.f32.mrb[0].mxu0
      %v4364 = vpop.f32.mrb[0].mxu0
      %4365 = vdwg.mxu0
      %v4366 = vadd.f32 %v4256, %v4320
      %v4367 = vadd.f32 %v4257, %v4322
      %v4368 = vadd.f32 %v4258, %v4361
      %s4369 = scalar_lea.vmem %s4, 70
      %v4370 = vld [vmem:[%s4369] sm:$0x3]
      %4371 = vrot.lane.b32.xlu0 %v3493, 56
      %v4372 = vpop.permute.xlu0 %4371
      %4373 = vrot.lane.b32.xlu0 %v3494, 56
      %v4374 = vpop.permute.xlu0 %4373
      %4375 = vrot.lane.b32.xlu0 %v3495, 56
      %v4376 = vpop.permute.xlu0 %4375
      %4377 = vrot.lane.b32.xlu0 %v3496, 56
      %v4378 = vpop.permute.xlu0 %4377
      %vm4379 = vcmask 457728
      %v4380 = vsel %vm4379, %v4372, %v4374
      %v4381 = vsel %vm4379, %v4374, %v4376
      %v4382 = vsel %vm4379, %v4376, %v4378
      %v4384 = vsel %vm386, %v4370, 0
      %v4387 = vsel %vm390, %v4380, 0
      %v4390 = vsel %vm390, %v4381, 0
      %v4393 = vsel %vm390, %v4382, 0
      %4395 = vmatprep.subr.bf16.mxu0 %v4390
      %4396 = vmatpush1.bf16.msra.mxu0 %v4387
      %4397 = vmatprep.subr.bf16.mxu0 0
      %4398 = vmatpush1.bf16.msra.mxu0 0
      %4399 = vmatprep.subr.bf16.mxu0 0
      %4400 = vmatpush1.bf16.msra.mxu0 0
      %4401 = vmatprep.subr.bf16.mxu0 0
      %4402 = vmatpush1.bf16.msra.mxu0 0
      %4403 = vmatprep.subr.bf16.mxu0 0
      %4404 = vmatpush1.bf16.msra.mxu0 0
      %4405 = vmatprep.subr.bf16.mxu0 0
      %4406 = vmatpush1.bf16.msra.mxu0 0
      %4407 = vmatprep.subr.bf16.mxu0 0
      %4408 = vmatpush1.bf16.msra.mxu0 0
      %4409 = vmatprep.subr.bf16.mxu0 0
      %4410 = vmatpush1.bf16.msra.mxu0 0
      %4411 = vmatprep.subr.bf16.mxu0 0
      %4412 = vmatpush1.bf16.msra.mxu0 0
      %4413 = vmatprep.subr.bf16.mxu0 0
      %4414 = vmatpush1.bf16.msra.mxu0 0
      %4415 = vmatprep.subr.bf16.mxu0 0
      %4416 = vmatpush1.bf16.msra.mxu0 0
      %4417 = vmatprep.subr.bf16.mxu0 0
      %4418 = vmatpush1.bf16.msra.mxu0 0
      %4419 = vmatprep.subr.bf16.mxu0 0
      %4420 = vmatpush1.bf16.msra.mxu0 0
      %4421 = vmatprep.subr.bf16.mxu0 0
      %4422 = vmatpush1.bf16.msra.mxu0 0
      %4423 = vmatprep.subr.bf16.mxu0 0
      %4424 = vmatpush1.bf16.msra.mxu0 0
      %4425 = vmatprep.subr.bf16.mxu0 0
      %4426 = vmatpush1.bf16.msra.mxu0 0
      %4427 = vmatprep.mubr.bf16.mxu0 0
      %4428 = vmatmul.mubr.bf16.gmra.mrb[0].mxu0 %v4384
      %v4429 = vpop.f32.mrb[0].mxu0
      %v4430 = vadd.f32 0.0, %v4429
      %v4431 = vpop.f32.mrb[0].mxu0
      %v4432 = vadd.f32 0.0, %v4431
      %v4433 = vpop.f32.mrb[0].mxu0
      %v4434 = vpop.f32.mrb[0].mxu0
      %4435 = vdwg.mxu0
      %4436 = vmatprep.subr.bf16.mxu0 0
      %4437 = vmatpush1.bf16.msra.mxu0 %v4393
      %4438 = vmatprep.subr.bf16.mxu0 0
      %4439 = vmatpush1.bf16.msra.mxu0 0
      %4440 = vmatprep.subr.bf16.mxu0 0
      %4441 = vmatpush1.bf16.msra.mxu0 0
      %4442 = vmatprep.subr.bf16.mxu0 0
      %4443 = vmatpush1.bf16.msra.mxu0 0
      %4444 = vmatprep.subr.bf16.mxu0 0
      %4445 = vmatpush1.bf16.msra.mxu0 0
      %4446 = vmatprep.subr.bf16.mxu0 0
      %4447 = vmatpush1.bf16.msra.mxu0 0
      %4448 = vmatprep.subr.bf16.mxu0 0
      %4449 = vmatpush1.bf16.msra.mxu0 0
      %4450 = vmatprep.subr.bf16.mxu0 0
      %4451 = vmatpush1.bf16.msra.mxu0 0
      %4452 = vmatprep.subr.bf16.mxu0 0
      %4453 = vmatpush1.bf16.msra.mxu0 0
      %4454 = vmatprep.subr.bf16.mxu0 0
      %4455 = vmatpush1.bf16.msra.mxu0 0
      %4456 = vmatprep.subr.bf16.mxu0 0
      %4457 = vmatpush1.bf16.msra.mxu0 0
      %4458 = vmatprep.subr.bf16.mxu0 0
      %4459 = vmatpush1.bf16.msra.mxu0 0
      %4460 = vmatprep.subr.bf16.mxu0 0
      %4461 = vmatpush1.bf16.msra.mxu0 0
      %4462 = vmatprep.subr.bf16.mxu0 0
      %4463 = vmatpush1.bf16.msra.mxu0 0
      %4464 = vmatprep.subr.bf16.mxu0 0
      %4465 = vmatpush1.bf16.msra.mxu0 0
      %4466 = vmatprep.subr.bf16.mxu0 0
      %4467 = vmatpush1.bf16.msra.mxu0 0
      %4468 = vmatprep.mubr.bf16.mxu0 0
      %4469 = vmatmul.mubr.bf16.gmra.mrb[0].mxu0 %v4384
      %v4470 = vpop.f32.mrb[0].mxu0
      %v4471 = vadd.f32 0.0, %v4470
      %v4472 = vpop.f32.mrb[0].mxu0
      %v4473 = vpop.f32.mrb[0].mxu0
      %v4474 = vpop.f32.mrb[0].mxu0
      %4475 = vdwg.mxu0
      %v4476 = vadd.f32 %v4366, %v4430
      %v4477 = vadd.f32 %v4367, %v4432
      %v4478 = vadd.f32 %v4368, %v4471
      %v4479 = vld [vmem:[%s5] sm:$0xf]
      %4481 = vset.pattern.permute.xlu0 0
      %4482 = vperm.xlu0 %4481, %v4479
      %v4483 = vpop.permute.xlu0 %4482
      %v4485 = vadd.f32 %v4476, %v4483
      %v4486 = vadd.f32 %v4477, %v4483
      %v4487 = vadd.f32 %v4478, %v4483
      %4488 = vrot.lane.b32.xlu0 %v333, 28
      %v4489 = vpop.permute.xlu0 %4488
      %4490 = vrot.lane.b32.xlu0 %v337, 28
      %v4491 = vpop.permute.xlu0 %4490
      %4492 = vrot.lane.b32.xlu0 %v341, 28
      %v4493 = vpop.permute.xlu0 %4492
      %4494 = vrot.lane.b32.xlu0 %v345, 28
      %v4495 = vpop.permute.xlu0 %4494
      %vm4496 = vcmask 228352
      %v4497 = vsel %vm4496, %v4489, %v4491
      %v4498 = vsel %vm4496, %v4491, %v4493
      %v4499 = vsel %vm4496, %v4493, %v4495
      %v4503 = vmul.f32 %v4485, %v4497
      %v4504 = vmul.f32 %v4486, %v4498
      %v4505 = vmul.f32 %v4487, %v4499
      %vm4506 = vcmask 1043456
      %v4507 = vsel %vm4506, %v4503, 0.0
      %v4508 = vsel %vm4506, %v4504, 0.0
      %v4509 = vadd.f32 %v4507, %v4508
      %v4510 = vsel %vm4506, %v4505, 0.0
      %v4511 = vadd.f32 %v4509, %v4510
      %4512 = vadd.xlane.f32.xlu0 %v4511
      %v4513 = vpop.xlane.xlu0 %4512
      %vm4514 = vcmask 3072
      %4515 = vst.msk [vmem:[%s289] sm:$0xf] %vm4514, %v4513
      %v4516 = vmul.f32 %v4485, %v4485
      %v4517 = vmul.f32 %v4486, %v4486
      %v4518 = vmul.f32 %v4487, %v4487
      %v4519 = vmul.f32 %v4516, %v4497
      %v4520 = vmul.f32 %v4517, %v4498
      %v4521 = vmul.f32 %v4518, %v4499
      %v4522 = vsel %vm4506, %v4519, 0.0
      %v4523 = vsel %vm4506, %v4520, 0.0
      %v4524 = vadd.f32 %v4522, %v4523
      %v4525 = vsel %vm4506, %v4521, 0.0
      %v4526 = vadd.f32 %v4524, %v4525
      %4527 = vadd.xlane.f32.xlu0 %v4526
      %v4528 = vpop.xlane.xlu0 %4527
      %vm4529 = vcmask 11272
      %4530 = vst.msk [vmem:[%s289] sm:$0xf] %vm4529, %v4528
      %v4531 = vpack.c.bf16 %v4485, %v4485
      %v4532 = vpack.c.bf16 %v4486, %v4486
      %v4533 = vpack.c.bf16 %v4487, %v4487
      %v4536 = vunpack.c.l.s4 1983009808
      %v4537 = vunpack.c.0.s8 %v4536
      %v4538 = vlaneseq
      %v4539 = vshrl.u32 %v4538, 7
      %v4540 = vsub.s32 %v4537, %v4539
      %v4541 = vrot.slane %v4531, %v4540
      %4542 = vrot.lane.b32.xlu0 %v4541, 124
      %v4543 = vpop.permute.xlu0 %4542
      %vm4545 = vcmask 123904
      %4546 = vst.msk [vmem:[%s285] sm:$0x3] %vm4545, %v4543
      %4547 = vrot.lane.b32.xlu0 %v4541, 116
      %v4548 = vpop.permute.xlu0 %4547
      %vm4550 = vcmask 255104
      %4551 = vst.msk [vmem:[%s285] sm:$0x3] %vm4550, %v4548
      %4552 = vrot.lane.b32.xlu0 %v4541, 108
      %v4553 = vpop.permute.xlu0 %4552
      %vm4555 = vcmask 386304
      %4556 = vst.msk [vmem:[%s285] sm:$0x3] %vm4555, %v4553
      %4557 = vrot.lane.b32.xlu0 %v4541, 100
      %v4558 = vpop.permute.xlu0 %4557
      %vm4560 = vcmask 517504
      %4561 = vst.msk [vmem:[%s285] sm:$0x3] %vm4560, %v4558
      %4562 = vrot.lane.b32.xlu0 %v4541, 92
      %v4563 = vpop.permute.xlu0 %4562
      %vm4565 = vcmask 648704
      %4566 = vst.msk [vmem:[%s285] sm:$0x3] %vm4565, %v4563
      %v4568 = vcombine.low %v4531, %v4532
      %v4570 = vunpack.c.l.s4 1983009808
      %v4571 = vunpack.c.0.s8 %v4570
      %v4572 = vlaneseq
      %v4573 = vshrl.u32 %v4572, 7
      %v4574 = vsub.s32 %v4571, %v4573
      %v4575 = vrot.slane %v4568, %v4574
      %4576 = vrot.lane.b32.xlu0 %v4575, 84
      %v4577 = vpop.permute.xlu0 %4576
      %v4578 = vrot.slane %v4577, 2
      %v4579 = vsel %vm3236, %v4577, %v4578
      %vm4581 = vcmask 779904
      %4582 = vst.msk [vmem:[%s285] sm:$0x3] %vm4581, %v4579
      %v4584 = vunpack.c.l.s4 1983009808
      %v4585 = vunpack.c.0.s8 %v4584
      %v4586 = vlaneseq
      %v4587 = vshrl.u32 %v4586, 7
      %v4588 = vsub.s32 %v4585, %v4587
      %v4589 = vrot.slane %v4532, %v4588
      %4590 = vrot.lane.b32.xlu0 %v4589, 76
      %v4591 = vpop.permute.xlu0 %4590
      %vm4593 = vcmask 911104
      %4594 = vst.msk [vmem:[%s285] sm:$0x3] %vm4593, %v4591
      %4595 = vrot.lane.b32.xlu0 %v4589, 68
      %v4596 = vpop.permute.xlu0 %4595
      %vm4598 = vcmask 1042304
      %4599 = vst.msk [vmem:[%s285] sm:$0x3] %vm4598, %v4596
      %4600 = vrot.lane.b32.xlu0 %v4589, 60
      %v4601 = vpop.permute.xlu0 %4600
      %4603 = vst.msk [vmem:[%s285 + $0x2] sm:$0x3] %vm4545, %v4601
      %4604 = vrot.lane.b32.xlu0 %v4589, 52
      %v4605 = vpop.permute.xlu0 %4604
      %4607 = vst.msk [vmem:[%s285 + $0x2] sm:$0x3] %vm4550, %v4605
      %v4609 = vcombine.low %v4532, %v4533
      %v4611 = vunpack.c.l.s4 1983009808
      %v4612 = vunpack.c.0.s8 %v4611
      %v4613 = vlaneseq
      %v4614 = vshrl.u32 %v4613, 7
      %v4615 = vsub.s32 %v4612, %v4614
      %v4616 = vrot.slane %v4609, %v4615
      %4617 = vrot.lane.b32.xlu0 %v4616, 44
      %v4618 = vpop.permute.xlu0 %4617
      %v4619 = vrot.slane %v4618, 2
      %vm4620 = vcmask 359424
      %v4621 = vsel %vm4620, %v4618, %v4619
      %4623 = vst.msk [vmem:[%s285 + $0x2] sm:$0x3] %vm4555, %v4621
      %v4625 = vunpack.c.l.s4 1983009808
      %v4626 = vunpack.c.0.s8 %v4625
      %v4627 = vlaneseq
      %v4628 = vshrl.u32 %v4627, 7
      %v4629 = vsub.s32 %v4626, %v4628
      %v4630 = vrot.slane %v4533, %v4629
      %4631 = vrot.lane.b32.xlu0 %v4630, 36
      %v4632 = vpop.permute.xlu0 %4631
      %4634 = vst.msk [vmem:[%s285 + $0x2] sm:$0x3] %vm4560, %v4632
      %4635 = vrot.lane.b32.xlu0 %v4630, 28
      %v4636 = vpop.permute.xlu0 %4635
      %4638 = vst.msk [vmem:[%s285 + $0x2] sm:$0x3] %vm4565, %v4636
      %4639 = vrot.lane.b32.xlu0 %v4630, 20
      %v4640 = vpop.permute.xlu0 %4639
      %4642 = vst.msk [vmem:[%s285 + $0x2] sm:$0x3] %vm4581, %v4640
      %4643 = vrot.lane.b32.xlu0 %v4630, 12
      %v4644 = vpop.permute.xlu0 %4643
      %4646 = vst.msk [vmem:[%s285 + $0x2] sm:$0x3] %vm4593, %v4644
      %4647 = vrot.lane.b32.xlu0 %v4630, 4
      %v4648 = vpop.permute.xlu0 %4647
      %4650 = vst.msk [vmem:[%s285 + $0x2] sm:$0x3] %vm4598, %v4648
      %p4651 = scmp.lt.s32.totalorder %s19, 1
      %s4652 = scalar_select %p4651, %s19, 1
      %s4653 = smul.addr %s4652, 2
      %s4654 = smul.addr %s4653, 2
      %s4655 = scalar_lea.vmem %s6, %s4654
      %p4656 = scmp.lt.s32.totalorder %s19, 1
      %s4657 = scalar_select %p4656, %s19, 1
      %s4658 = smul.addr %s4657, 4
      %s4659 = scalar_lea.vmem %s7, %s4658
      // Predicated region
      $region45: #{prm_d_forward.8} parent=43 // pred_check
        %p4660 = pneg %p168
      $region46: #{prm_d_forward.8} parent=43 // pred_check_branch
        %4662 = sbr.rel (%p4660) target = $region48
      $region47: #{prm_d_forward.8} parent=43 // pred_region
        _
      $region48: #{prm_d_forward.8} parent=43 // pred_fallthru
        _
      // Predicated region
      $region49: #{prm_d_forward.8} parent=43 // pred_check
        %p4663 = pneg %p194
      $region50: #{prm_d_forward.8} parent=43 // pred_check_branch
        %4665 = sbr.rel (%p4663) target = $region52
      $region51: #{prm_d_forward.8} parent=43 // pred_region
        _
      $region52: #{prm_d_forward.8} parent=43 // pred_fallthru
        _
    $region44: #{prm_d_forward.8} parent=5 // pred_fallthru
      _
    %p4666 = scmp.le.s32.totalorder 2, %s14
    // Predicated region
    $region53: #{prm_d_forward.8} parent=5 // pred_check
      %p4667 = pneg %p4666
    $region54: #{prm_d_forward.8} parent=5 // pred_check_branch
      %4669 = sbr.rel (%p4667) target = $region56
    $region55: #{prm_d_forward.8} parent=5 // pred_region
      %s4670 = ssub.s32 %s14, 2
      // Predicated region
      $region57: #{prm_d_forward.8} parent=55 // pred_check
        %p4671 = pneg %p174
      $region58: #{prm_d_forward.8} parent=55 // pred_check_branch
        %4673 = sbr.rel (%p4671) target = $region60
      $region59: #{prm_d_forward.8} parent=55 // pred_region
        %p4674 = scmp.lt.s32.totalorder %s20, 1
        %s4675 = scalar_select %p4674, %s20, 1
        %s4676 = smul.addr %s4675, 2
        %s4677 = smul.addr %s4676, 2
        %s4678 = scalar_lea.vmem %s6, %s4677
      $region60: #{prm_d_forward.8} parent=55 // pred_fallthru
        _
      // Predicated region
      $region61: #{prm_d_forward.8} parent=55 // pred_check
        %p4679 = pneg %p200
      $region62: #{prm_d_forward.8} parent=55 // pred_check_branch
        %4681 = sbr.rel (%p4679) target = $region64
      $region63: #{prm_d_forward.8} parent=55 // pred_region
        %p4682 = scmp.lt.s32.totalorder %s20, 1
        %s4683 = scalar_select %p4682, %s20, 1
        %s4684 = smul.addr %s4683, 4
        %s4685 = scalar_lea.vmem %s7, %s4684
      $region64: #{prm_d_forward.8} parent=55 // pred_fallthru
        _
    $region56: #{prm_d_forward.8} parent=5 // pred_fallthru
      _
  $region6: #{prm_d_forward.8} parent=0 // loop_footer
    %s18 = sadd.s32 1, %s14
  $region7: #{prm_d_forward.8} parent=0 // loop_footer_branch
    %13 = sbr.rel target = $region3
  $region8: #{prm_d_forward.8} parent=0 // loop_exit
    _

</llo_original>
